<compile_context>
chip_gen: v7x
topology: tpu7x:2x2x1
jax: 0.10.0
libtpu: 0.0.40
codegen_flags: <defaults>
</compile_context>

<pallas_src>
import functools

import jax
import jax.numpy as jnp
from jax import lax
from jax.experimental import pallas as pl
from jax.experimental.pallas import tpu as pltpu

LANE = 128  # TPU lane width: logits are zero-padded to this for dense stores


def _round_up(x: int, m: int) -> int:
    return ((x + m - 1) // m) * m


# ------------------------------ Pallas kernel ------------------------------ #

def _backbone_kernel(x_ref, mask_ref, w1_ref, b1_ref, w2_ref, b2_ref,
                     wfc_ref, bfc_ref, o_ref, y1_scr, *, H, W, W_AL):
    """Fully fused backbone for one image (one grid step).

    x_ref   : (1, H+4, W_AL+2, C) f32  NHWC input, zero halo of 2 (covers both convs)
    mask_ref: (Hp*W_AL, 1)        f32  1.0 on the pad-1 interior of conv1's valid
                                       output, 0.0 on the synthetic border
    w1_ref  : (9, C,  C1) bf16         per-tap conv1 weights (tap = 3*di + dj)
    w2_ref  : (9, C1, C2) bf16         per-tap conv2 weights
    wfc_ref : (C2, LANE)  bf16         classifier, zero-padded to 128 lanes
    b*_ref  : (1, Cout)   f32          biases
    o_ref   : (1, 1, LANE) f32         lane-dense padded logits
    y1_scr  : (Hp, W_AL, C1) f32       VMEM scratch holding conv1's padded output
    """
    Hp = H + 2                                   # conv1 valid-output height
    C = x_ref.shape[-1]
    C1 = y1_scr.shape[-1]
    C2 = w2_ref.shape[-1]

    # ---- conv1: 3x3 conv as a sum of 9 shifted-tap MXU matmuls ----
    acc1 = jnp.zeros((Hp * W_AL, C1), jnp.float32)
    for di in range(3):
        for dj in range(3):
            tap = x_ref[0, di:di + Hp, dj:dj + W_AL, :]        # (Hp, W_AL, C)
            tap = tap.reshape(Hp * W_AL, C).astype(jnp.bfloat16)
            acc1 = acc1 + jnp.dot(tap, w1_ref[3 * di + dj],
                                  preferred_element_type=jnp.float32)
    y1 = jnp.maximum(acc1 + b1_ref[...], 0.0)
    # Zero the synthetic border: y1 becomes the zero-padded conv1 output,
    # which is exactly the halo that conv2 needs (no re-pad, no HBM trip).
    y1 = y1 * mask_ref[...]
    y1_scr[...] = y1.reshape(Hp, W_AL, C1)

    # ---- conv2: same trick, taps read straight from the VMEM scratch ----
    acc2 = jnp.zeros((H * W, C2), jnp.float32)
    for di in range(3):
        for dj in range(3):
            tap = y1_scr[di:di + H, dj:dj + W, :]              # (H, W, C1)
            tap = tap.reshape(H * W, C1).astype(jnp.bfloat16)
            acc2 = acc2 + jnp.dot(tap, w2_ref[3 * di + dj],
                                  preferred_element_type=jnp.float32)
    y2 = jnp.maximum(acc2 + b2_ref[...], 0.0)                  # (H*W, C2)

    # ---- global average pool + classifier epilogue (never leaves VMEM) ----
    pooled = jnp.mean(y2, axis=0, keepdims=True)               # (1, C2)
    logits = jnp.dot(pooled.astype(jnp.bfloat16), wfc_ref[...],
                     preferred_element_type=jnp.float32) + bfc_ref[...]
    o_ref[...] = logits.reshape(o_ref.shape)                   # (1, 1, LANE)


# ------------------------------- Forward wrapper ---------------------------- #

def continual_model_forward(params, x_nchw, *, num_classes=10):
    """Equivalent of ContinualModel.forward(x): backbone logits for NCHW input."""
    N, C, H, W = x_nchw.shape
    assert W % 8 == 0, "spatial width must be a multiple of 8 (sublane aligned)"
    C1 = params["b1"].shape[0]
    C2 = params["b2"].shape[0]
    Hp = H + 2
    W_AL = _round_up(W + 2, 8)            # sublane-aligned conv1 output width

    # Single entry transpose to channels-last; everything downstream is NHWC.
    x = jnp.transpose(x_nchw, (0, 2, 3, 1)).astype(jnp.float32)
    # Zero halo of 2 (enough for both 3x3 convs) + right alignment padding.
    xp = jnp.pad(x, ((0, 0), (2, 2), (2, W_AL - W), (0, 0)))   # (N, H+4, W_AL+2, C)

    # Per-tap (3x3 -> 9) weight slabs, bf16 MXU operands (f32 accumulation).
    w1 = jnp.transpose(params["w1"], (2, 3, 1, 0)).reshape(9, C, C1).astype(jnp.bfloat16)
    w2 = jnp.transpose(params["w2"], (2, 3, 1, 0)).reshape(9, C1, C2).astype(jnp.bfloat16)
    b1 = params["b1"].reshape(1, C1).astype(jnp.float32)
    b2 = params["b2"].reshape(1, C2).astype(jnp.float32)
    # Classifier head padded to a lane-dense 128-wide output.
    wfc = jnp.zeros((C2, LANE), jnp.bfloat16).at[:, :num_classes].set(
        params["wfc"].T.astype(jnp.bfloat16))
    bfc = jnp.zeros((1, LANE), jnp.float32).at[0, :num_classes].set(
        params["bfc"].astype(jnp.float32))

    # Border mask for conv1's valid output (1 inside the pad-1 interior).
    ii = jnp.arange(Hp)[:, None]
    jj = jnp.arange(W_AL)[None, :]
    mask = (((ii >= 1) & (ii <= H) & (jj >= 1) & (jj <= W))
            .astype(jnp.float32).reshape(Hp * W_AL, 1))

    kernel = functools.partial(_backbone_kernel, H=H, W=W, W_AL=W_AL)

    flops = N * 2 * (Hp * W_AL * 9 * C * C1 + H * W * 9 * C1 * C2 + C2 * LANE)
    bytes_accessed = (N * (H + 4) * (W_AL + 2) * C * 4 + Hp * W_AL * 4
                      + (9 * C * C1 + 9 * C1 * C2 + C2 * LANE) * 2
                      + (C1 + C2 + LANE) * 4 + N * LANE * 4)

    out = pl.pallas_call(
        kernel,
        out_shape=jax.ShapeDtypeStruct((N, 1, LANE), jnp.float32),
        grid=(N,),
        in_specs=[
            pl.BlockSpec((1, H + 4, W_AL + 2, C), lambda b: (b, 0, 0, 0)),
            pl.BlockSpec((Hp * W_AL, 1), lambda b: (0, 0)),
            pl.BlockSpec((9, C, C1), lambda b: (0, 0, 0)),
            pl.BlockSpec((1, C1), lambda b: (0, 0)),
            pl.BlockSpec((9, C1, C2), lambda b: (0, 0, 0)),
            pl.BlockSpec((1, C2), lambda b: (0, 0)),
            pl.BlockSpec((C2, LANE), lambda b: (0, 0)),
            pl.BlockSpec((1, LANE), lambda b: (0, 0)),
        ],
        out_specs=pl.BlockSpec((1, 1, LANE), lambda b: (b, 0, 0)),
        scratch_shapes=[pltpu.VMEM((Hp, W_AL, C1), jnp.float32)],
        compiler_params=pltpu.CompilerParams(
            dimension_semantics=("parallel",)),
        cost_estimate=pl.CostEstimate(
            flops=flops, transcendentals=0, bytes_accessed=bytes_accessed),
    )(xp, mask, w1, b1, w2, b2, wfc, bfc)

    return out.reshape(N, LANE)[:, :num_classes]


# ------------------------------ Params & reference -------------------------- #

def init_params(key, c_in=4, c1=8, c2=16, num_classes=10):
    k1, k2, k3, k4, k5, k6 = jax.random.split(key, 6)
    # PyTorch layouts: conv [Cout, Cin, KH, KW], linear [out, in].
    return {
        "w1": jax.random.normal(k1, (c1, c_in, 3, 3), jnp.float32) * 0.1,
        "b1": jax.random.normal(k2, (c1,), jnp.float32) * 0.1,
        "w2": jax.random.normal(k3, (c2, c1, 3, 3), jnp.float32) * 0.1,
        "b2": jax.random.normal(k4, (c2,), jnp.float32) * 0.1,
        "wfc": jax.random.normal(k5, (num_classes, c2), jnp.float32) * 0.1,
        "bfc": jax.random.normal(k6, (num_classes,), jnp.float32) * 0.1,
    }


def reference_forward(params, x_nchw):
    """Pure-JAX f32 reference of the same backbone (numerics check only)."""
    x = jnp.transpose(x_nchw, (0, 2, 3, 1)).astype(jnp.float32)

    def conv_relu(h, w, b):
        out = lax.conv_general_dilated(
            h, jnp.transpose(w, (2, 3, 1, 0)), window_strides=(1, 1),
            padding="SAME", dimension_numbers=("NHWC", "HWIO", "NHWC"))
        return jax.nn.relu(out + b)

    h = conv_relu(x, params["w1"], params["b1"])
    h = conv_relu(h, params["w2"], params["b2"])
    pooled = h.mean(axis=(1, 2))
    return pooled @ params["wfc"].T + params["bfc"]


# --------------------------------- Driver ----------------------------------- #

if __name__ == "__main__":
    key = jax.random.PRNGKey(0)
    kx, kp = jax.random.split(key)

    N, C, H, W = 2, 4, 16, 16
    x = jax.random.normal(kx, (N, C, H, W), jnp.float32)       # NCHW, like PyTorch
    params = init_params(kp, c_in=C)

    logits = jax.jit(continual_model_forward)(params, x)
    jax.block_until_ready(logits)
    assert logits.shape == (N, 10) and logits.dtype == jnp.float32

    ref = reference_forward(params, x)
    err = float(jnp.max(jnp.abs(logits - ref)))
    assert err < 5e-2, f"kernel deviates from f32 reference: max|err|={err}"

    # TODO(synk): ContinualModel's loss / SGD optimizer / observe() / DataParallel
    # are training-time machinery with no forward-pass compute; not translated.
    print("KERNEL_OK")
</pallas_src>

<mosaic_0001>
module attributes {stable_mosaic.version = 11 : i64} {
  func.func @_backbone_kernel(%arg0: i32, %arg1: memref<1x20x26x4xf32, #tpu.memory_space<vmem>>, %arg2: memref<432x1xf32, #tpu.memory_space<vmem>>, %arg3: memref<9x4x8xbf16, #tpu.memory_space<vmem>>, %arg4: memref<1x8xf32, #tpu.memory_space<vmem>>, %arg5: memref<9x8x16xbf16, #tpu.memory_space<vmem>>, %arg6: memref<1x16xf32, #tpu.memory_space<vmem>>, %arg7: memref<16x128xbf16, #tpu.memory_space<vmem>>, %arg8: memref<1x128xf32, #tpu.memory_space<vmem>>, %arg9: memref<1x1x128xf32, #tpu.memory_space<vmem>>, %arg10: memref<18x24x8xf32, #tpu.memory_space<vmem>>) attributes {dimension_semantics = [#tpu.dimension_semantics<parallel>], iteration_bounds = array<i64: 2>, scalar_prefetch = 0 : i64, scratch_operands = 1 : i64, tpu.core_type = #tpu.core_type<tc>, window_params = [{transform_indices = @transform_0, window_bounds = array<i64: 1, 20, 26, 4>}, {pipeline_mode = #tpu.pipeline_mode<synchronous>, transform_indices = @transform_1, window_bounds = array<i64: 432, 1>}, {pipeline_mode = #tpu.pipeline_mode<synchronous>, transform_indices = @transform_2, window_bounds = array<i64: 9, 4, 8>}, {pipeline_mode = #tpu.pipeline_mode<synchronous>, transform_indices = @transform_3, window_bounds = array<i64: 1, 8>}, {pipeline_mode = #tpu.pipeline_mode<synchronous>, transform_indices = @transform_4, window_bounds = array<i64: 9, 8, 16>}, {pipeline_mode = #tpu.pipeline_mode<synchronous>, transform_indices = @transform_5, window_bounds = array<i64: 1, 16>}, {pipeline_mode = #tpu.pipeline_mode<synchronous>, transform_indices = @transform_6, window_bounds = array<i64: 16, 128>}, {pipeline_mode = #tpu.pipeline_mode<synchronous>, transform_indices = @transform_7, window_bounds = array<i64: 1, 128>}, {transform_indices = @transform_8, window_bounds = array<i64: 1, 1, 128>}]} {
    %cst = arith.constant 0.000000e+00 : f32
    %0 = vector.broadcast %cst : f32 to vector<432x8xf32>
    %c0 = arith.constant 0 : index
    %c0_0 = arith.constant 0 : index
    %c0_1 = arith.constant 0 : index
    %c0_2 = arith.constant 0 : index
    %1 = vector.load %arg1[%c0, %c0_0, %c0_1, %c0_2] : memref<1x20x26x4xf32, #tpu.memory_space<vmem>>, vector<1x18x24x4xf32>
    %2 = vector.shape_cast %1 : vector<1x18x24x4xf32> to vector<18x24x4xf32>
    %3 = vector.shape_cast %2 : vector<18x24x4xf32> to vector<432x4xf32>
    %4 = arith.truncf %3 : vector<432x4xf32> to vector<432x4xbf16>
    %c0_3 = arith.constant 0 : index
    %c0_4 = arith.constant 0 : index
    %c0_5 = arith.constant 0 : index
    %5 = vector.load %arg3[%c0_3, %c0_4, %c0_5] : memref<9x4x8xbf16, #tpu.memory_space<vmem>>, vector<1x4x8xbf16>
    %6 = vector.shape_cast %5 : vector<1x4x8xbf16> to vector<4x8xbf16>
    %cst_6 = arith.constant dense<0.000000e+00> : vector<432x8xf32>
    %7 = tpu.matmul %4, %6, %cst_6 {dimension_numbers = #tpu.dot_dimension_numbers<[1], [0], [0], [1], [0, 0, 1, 1], [], []>} : vector<432x4xbf16>, vector<4x8xbf16>, vector<432x8xf32> -> vector<432x8xf32>
    %8 = arith.addf %0, %7 : vector<432x8xf32>
    %c0_7 = arith.constant 0 : index
    %c0_8 = arith.constant 0 : index
    %c1 = arith.constant 1 : index
    %c0_9 = arith.constant 0 : index
    %9 = vector.load %arg1[%c0_7, %c0_8, %c1, %c0_9] : memref<1x20x26x4xf32, #tpu.memory_space<vmem>>, vector<1x18x24x4xf32>
    %10 = vector.shape_cast %9 : vector<1x18x24x4xf32> to vector<18x24x4xf32>
    %11 = vector.shape_cast %10 : vector<18x24x4xf32> to vector<432x4xf32>
    %12 = arith.truncf %11 : vector<432x4xf32> to vector<432x4xbf16>
    %c1_10 = arith.constant 1 : index
    %c0_11 = arith.constant 0 : index
    %c0_12 = arith.constant 0 : index
    %13 = vector.load %arg3[%c1_10, %c0_11, %c0_12] : memref<9x4x8xbf16, #tpu.memory_space<vmem>>, vector<1x4x8xbf16>
    %14 = vector.shape_cast %13 : vector<1x4x8xbf16> to vector<4x8xbf16>
    %cst_13 = arith.constant dense<0.000000e+00> : vector<432x8xf32>
    %15 = tpu.matmul %12, %14, %cst_13 {dimension_numbers = #tpu.dot_dimension_numbers<[1], [0], [0], [1], [0, 0, 1, 1], [], []>} : vector<432x4xbf16>, vector<4x8xbf16>, vector<432x8xf32> -> vector<432x8xf32>
    %16 = arith.addf %8, %15 : vector<432x8xf32>
    %c0_14 = arith.constant 0 : index
    %c0_15 = arith.constant 0 : index
    %c2 = arith.constant 2 : index
    %c0_16 = arith.constant 0 : index
    %17 = vector.load %arg1[%c0_14, %c0_15, %c2, %c0_16] : memref<1x20x26x4xf32, #tpu.memory_space<vmem>>, vector<1x18x24x4xf32>
    %18 = vector.shape_cast %17 : vector<1x18x24x4xf32> to vector<18x24x4xf32>
    %19 = vector.shape_cast %18 : vector<18x24x4xf32> to vector<432x4xf32>
    %20 = arith.truncf %19 : vector<432x4xf32> to vector<432x4xbf16>
    %c2_17 = arith.constant 2 : index
    %c0_18 = arith.constant 0 : index
    %c0_19 = arith.constant 0 : index
    %21 = vector.load %arg3[%c2_17, %c0_18, %c0_19] : memref<9x4x8xbf16, #tpu.memory_space<vmem>>, vector<1x4x8xbf16>
    %22 = vector.shape_cast %21 : vector<1x4x8xbf16> to vector<4x8xbf16>
    %cst_20 = arith.constant dense<0.000000e+00> : vector<432x8xf32>
    %23 = tpu.matmul %20, %22, %cst_20 {dimension_numbers = #tpu.dot_dimension_numbers<[1], [0], [0], [1], [0, 0, 1, 1], [], []>} : vector<432x4xbf16>, vector<4x8xbf16>, vector<432x8xf32> -> vector<432x8xf32>
    %24 = arith.addf %16, %23 : vector<432x8xf32>
    %c0_21 = arith.constant 0 : index
    %c1_22 = arith.constant 1 : index
    %c0_23 = arith.constant 0 : index
    %c0_24 = arith.constant 0 : index
    %25 = vector.load %arg1[%c0_21, %c1_22, %c0_23, %c0_24] : memref<1x20x26x4xf32, #tpu.memory_space<vmem>>, vector<1x18x24x4xf32>
    %26 = vector.shape_cast %25 : vector<1x18x24x4xf32> to vector<18x24x4xf32>
    %27 = vector.shape_cast %26 : vector<18x24x4xf32> to vector<432x4xf32>
    %28 = arith.truncf %27 : vector<432x4xf32> to vector<432x4xbf16>
    %c3 = arith.constant 3 : index
    %c0_25 = arith.constant 0 : index
    %c0_26 = arith.constant 0 : index
    %29 = vector.load %arg3[%c3, %c0_25, %c0_26] : memref<9x4x8xbf16, #tpu.memory_space<vmem>>, vector<1x4x8xbf16>
    %30 = vector.shape_cast %29 : vector<1x4x8xbf16> to vector<4x8xbf16>
    %cst_27 = arith.constant dense<0.000000e+00> : vector<432x8xf32>
    %31 = tpu.matmul %28, %30, %cst_27 {dimension_numbers = #tpu.dot_dimension_numbers<[1], [0], [0], [1], [0, 0, 1, 1], [], []>} : vector<432x4xbf16>, vector<4x8xbf16>, vector<432x8xf32> -> vector<432x8xf32>
    %32 = arith.addf %24, %31 : vector<432x8xf32>
    %c0_28 = arith.constant 0 : index
    %c1_29 = arith.constant 1 : index
    %c1_30 = arith.constant 1 : index
    %c0_31 = arith.constant 0 : index
    %33 = vector.load %arg1[%c0_28, %c1_29, %c1_30, %c0_31] : memref<1x20x26x4xf32, #tpu.memory_space<vmem>>, vector<1x18x24x4xf32>
    %34 = vector.shape_cast %33 : vector<1x18x24x4xf32> to vector<18x24x4xf32>
    %35 = vector.shape_cast %34 : vector<18x24x4xf32> to vector<432x4xf32>
    %36 = arith.truncf %35 : vector<432x4xf32> to vector<432x4xbf16>
    %c4 = arith.constant 4 : index
    %c0_32 = arith.constant 0 : index
    %c0_33 = arith.constant 0 : index
    %37 = vector.load %arg3[%c4, %c0_32, %c0_33] : memref<9x4x8xbf16, #tpu.memory_space<vmem>>, vector<1x4x8xbf16>
    %38 = vector.shape_cast %37 : vector<1x4x8xbf16> to vector<4x8xbf16>
    %cst_34 = arith.constant dense<0.000000e+00> : vector<432x8xf32>
    %39 = tpu.matmul %36, %38, %cst_34 {dimension_numbers = #tpu.dot_dimension_numbers<[1], [0], [0], [1], [0, 0, 1, 1], [], []>} : vector<432x4xbf16>, vector<4x8xbf16>, vector<432x8xf32> -> vector<432x8xf32>
    %40 = arith.addf %32, %39 : vector<432x8xf32>
    %c0_35 = arith.constant 0 : index
    %c1_36 = arith.constant 1 : index
    %c2_37 = arith.constant 2 : index
    %c0_38 = arith.constant 0 : index
    %41 = vector.load %arg1[%c0_35, %c1_36, %c2_37, %c0_38] : memref<1x20x26x4xf32, #tpu.memory_space<vmem>>, vector<1x18x24x4xf32>
    %42 = vector.shape_cast %41 : vector<1x18x24x4xf32> to vector<18x24x4xf32>
    %43 = vector.shape_cast %42 : vector<18x24x4xf32> to vector<432x4xf32>
    %44 = arith.truncf %43 : vector<432x4xf32> to vector<432x4xbf16>
    %c5 = arith.constant 5 : index
    %c0_39 = arith.constant 0 : index
    %c0_40 = arith.constant 0 : index
    %45 = vector.load %arg3[%c5, %c0_39, %c0_40] : memref<9x4x8xbf16, #tpu.memory_space<vmem>>, vector<1x4x8xbf16>
    %46 = vector.shape_cast %45 : vector<1x4x8xbf16> to vector<4x8xbf16>
    %cst_41 = arith.constant dense<0.000000e+00> : vector<432x8xf32>
    %47 = tpu.matmul %44, %46, %cst_41 {dimension_numbers = #tpu.dot_dimension_numbers<[1], [0], [0], [1], [0, 0, 1, 1], [], []>} : vector<432x4xbf16>, vector<4x8xbf16>, vector<432x8xf32> -> vector<432x8xf32>
    %48 = arith.addf %40, %47 : vector<432x8xf32>
    %c0_42 = arith.constant 0 : index
    %c2_43 = arith.constant 2 : index
    %c0_44 = arith.constant 0 : index
    %c0_45 = arith.constant 0 : index
    %49 = vector.load %arg1[%c0_42, %c2_43, %c0_44, %c0_45] : memref<1x20x26x4xf32, #tpu.memory_space<vmem>>, vector<1x18x24x4xf32>
    %50 = vector.shape_cast %49 : vector<1x18x24x4xf32> to vector<18x24x4xf32>
    %51 = vector.shape_cast %50 : vector<18x24x4xf32> to vector<432x4xf32>
    %52 = arith.truncf %51 : vector<432x4xf32> to vector<432x4xbf16>
    %c6 = arith.constant 6 : index
    %c0_46 = arith.constant 0 : index
    %c0_47 = arith.constant 0 : index
    %53 = vector.load %arg3[%c6, %c0_46, %c0_47] : memref<9x4x8xbf16, #tpu.memory_space<vmem>>, vector<1x4x8xbf16>
    %54 = vector.shape_cast %53 : vector<1x4x8xbf16> to vector<4x8xbf16>
    %cst_48 = arith.constant dense<0.000000e+00> : vector<432x8xf32>
    %55 = tpu.matmul %52, %54, %cst_48 {dimension_numbers = #tpu.dot_dimension_numbers<[1], [0], [0], [1], [0, 0, 1, 1], [], []>} : vector<432x4xbf16>, vector<4x8xbf16>, vector<432x8xf32> -> vector<432x8xf32>
    %56 = arith.addf %48, %55 : vector<432x8xf32>
    %c0_49 = arith.constant 0 : index
    %c2_50 = arith.constant 2 : index
    %c1_51 = arith.constant 1 : index
    %c0_52 = arith.constant 0 : index
    %57 = vector.load %arg1[%c0_49, %c2_50, %c1_51, %c0_52] : memref<1x20x26x4xf32, #tpu.memory_space<vmem>>, vector<1x18x24x4xf32>
    %58 = vector.shape_cast %57 : vector<1x18x24x4xf32> to vector<18x24x4xf32>
    %59 = vector.shape_cast %58 : vector<18x24x4xf32> to vector<432x4xf32>
    %60 = arith.truncf %59 : vector<432x4xf32> to vector<432x4xbf16>
    %c7 = arith.constant 7 : index
    %c0_53 = arith.constant 0 : index
    %c0_54 = arith.constant 0 : index
    %61 = vector.load %arg3[%c7, %c0_53, %c0_54] : memref<9x4x8xbf16, #tpu.memory_space<vmem>>, vector<1x4x8xbf16>
    %62 = vector.shape_cast %61 : vector<1x4x8xbf16> to vector<4x8xbf16>
    %cst_55 = arith.constant dense<0.000000e+00> : vector<432x8xf32>
    %63 = tpu.matmul %60, %62, %cst_55 {dimension_numbers = #tpu.dot_dimension_numbers<[1], [0], [0], [1], [0, 0, 1, 1], [], []>} : vector<432x4xbf16>, vector<4x8xbf16>, vector<432x8xf32> -> vector<432x8xf32>
    %64 = arith.addf %56, %63 : vector<432x8xf32>
    %c0_56 = arith.constant 0 : index
    %c2_57 = arith.constant 2 : index
    %c2_58 = arith.constant 2 : index
    %c0_59 = arith.constant 0 : index
    %65 = vector.load %arg1[%c0_56, %c2_57, %c2_58, %c0_59] : memref<1x20x26x4xf32, #tpu.memory_space<vmem>>, vector<1x18x24x4xf32>
    %66 = vector.shape_cast %65 : vector<1x18x24x4xf32> to vector<18x24x4xf32>
    %67 = vector.shape_cast %66 : vector<18x24x4xf32> to vector<432x4xf32>
    %68 = arith.truncf %67 : vector<432x4xf32> to vector<432x4xbf16>
    %c8 = arith.constant 8 : index
    %c0_60 = arith.constant 0 : index
    %c0_61 = arith.constant 0 : index
    %69 = vector.load %arg3[%c8, %c0_60, %c0_61] : memref<9x4x8xbf16, #tpu.memory_space<vmem>>, vector<1x4x8xbf16>
    %70 = vector.shape_cast %69 : vector<1x4x8xbf16> to vector<4x8xbf16>
    %cst_62 = arith.constant dense<0.000000e+00> : vector<432x8xf32>
    %71 = tpu.matmul %68, %70, %cst_62 {dimension_numbers = #tpu.dot_dimension_numbers<[1], [0], [0], [1], [0, 0, 1, 1], [], []>} : vector<432x4xbf16>, vector<4x8xbf16>, vector<432x8xf32> -> vector<432x8xf32>
    %72 = arith.addf %64, %71 : vector<432x8xf32>
    %c0_63 = arith.constant 0 : index
    %c0_64 = arith.constant 0 : index
    %73 = vector.load %arg4[%c0_63, %c0_64] : memref<1x8xf32, #tpu.memory_space<vmem>>, vector<1x8xf32>
    %74 = vector.broadcast %73 : vector<1x8xf32> to vector<432x8xf32>
    %75 = arith.addf %72, %74 : vector<432x8xf32>
    %cst_65 = arith.constant 0.000000e+00 : f32
    %76 = vector.broadcast %cst_65 : f32 to vector<432x8xf32>
    %77 = arith.maximumf %75, %76 : vector<432x8xf32>
    %c0_66 = arith.constant 0 : index
    %c0_67 = arith.constant 0 : index
    %78 = vector.load %arg2[%c0_66, %c0_67] : memref<432x1xf32, #tpu.memory_space<vmem>>, vector<432x1xf32>
    %79 = vector.broadcast %78 : vector<432x1xf32> to vector<432x8xf32>
    %80 = arith.mulf %77, %79 : vector<432x8xf32>
    %81 = vector.shape_cast %80 : vector<432x8xf32> to vector<18x24x8xf32>
    %c0_68 = arith.constant 0 : index
    %c0_69 = arith.constant 0 : index
    %c0_70 = arith.constant 0 : index
    %82 = vector.load %arg10[%c0_68, %c0_69, %c0_70] : memref<18x24x8xf32, #tpu.memory_space<vmem>>, vector<18x24x8xf32>
    tpu.vector_store %arg10[%c0_68, %c0_69, %c0_70], %81 {strides = array<i32>} : memref<18x24x8xf32, #tpu.memory_space<vmem>>, vector<18x24x8xf32>,
    %cst_71 = arith.constant 0.000000e+00 : f32
    %83 = vector.broadcast %cst_71 : f32 to vector<256x16xf32>
    %c0_72 = arith.constant 0 : index
    %c0_73 = arith.constant 0 : index
    %c0_74 = arith.constant 0 : index
    %84 = vector.load %arg10[%c0_72, %c0_73, %c0_74] : memref<18x24x8xf32, #tpu.memory_space<vmem>>, vector<16x16x8xf32>
    %85 = vector.shape_cast %84 : vector<16x16x8xf32> to vector<256x8xf32>
    %86 = arith.truncf %85 : vector<256x8xf32> to vector<256x8xbf16>
    %c0_75 = arith.constant 0 : index
    %c0_76 = arith.constant 0 : index
    %c0_77 = arith.constant 0 : index
    %87 = vector.load %arg5[%c0_75, %c0_76, %c0_77] : memref<9x8x16xbf16, #tpu.memory_space<vmem>>, vector<1x8x16xbf16>
    %88 = vector.shape_cast %87 : vector<1x8x16xbf16> to vector<8x16xbf16>
    %cst_78 = arith.constant dense<0.000000e+00> : vector<256x16xf32>
    %89 = tpu.matmul %86, %88, %cst_78 {dimension_numbers = #tpu.dot_dimension_numbers<[1], [0], [0], [1], [0, 0, 1, 1], [], []>} : vector<256x8xbf16>, vector<8x16xbf16>, vector<256x16xf32> -> vector<256x16xf32>
    %90 = arith.addf %83, %89 : vector<256x16xf32>
    %c0_79 = arith.constant 0 : index
    %c1_80 = arith.constant 1 : index
    %c0_81 = arith.constant 0 : index
    %91 = vector.load %arg10[%c0_79, %c1_80, %c0_81] : memref<18x24x8xf32, #tpu.memory_space<vmem>>, vector<16x16x8xf32>
    %92 = vector.shape_cast %91 : vector<16x16x8xf32> to vector<256x8xf32>
    %93 = arith.truncf %92 : vector<256x8xf32> to vector<256x8xbf16>
    %c1_82 = arith.constant 1 : index
    %c0_83 = arith.constant 0 : index
    %c0_84 = arith.constant 0 : index
    %94 = vector.load %arg5[%c1_82, %c0_83, %c0_84] : memref<9x8x16xbf16, #tpu.memory_space<vmem>>, vector<1x8x16xbf16>
    %95 = vector.shape_cast %94 : vector<1x8x16xbf16> to vector<8x16xbf16>
    %cst_85 = arith.constant dense<0.000000e+00> : vector<256x16xf32>
    %96 = tpu.matmul %93, %95, %cst_85 {dimension_numbers = #tpu.dot_dimension_numbers<[1], [0], [0], [1], [0, 0, 1, 1], [], []>} : vector<256x8xbf16>, vector<8x16xbf16>, vector<256x16xf32> -> vector<256x16xf32>
    %97 = arith.addf %90, %96 : vector<256x16xf32>
    %c0_86 = arith.constant 0 : index
    %c2_87 = arith.constant 2 : index
    %c0_88 = arith.constant 0 : index
    %98 = vector.load %arg10[%c0_86, %c2_87, %c0_88] : memref<18x24x8xf32, #tpu.memory_space<vmem>>, vector<16x16x8xf32>
    %99 = vector.shape_cast %98 : vector<16x16x8xf32> to vector<256x8xf32>
    %100 = arith.truncf %99 : vector<256x8xf32> to vector<256x8xbf16>
    %c2_89 = arith.constant 2 : index
    %c0_90 = arith.constant 0 : index
    %c0_91 = arith.constant 0 : index
    %101 = vector.load %arg5[%c2_89, %c0_90, %c0_91] : memref<9x8x16xbf16, #tpu.memory_space<vmem>>, vector<1x8x16xbf16>
    %102 = vector.shape_cast %101 : vector<1x8x16xbf16> to vector<8x16xbf16>
    %cst_92 = arith.constant dense<0.000000e+00> : vector<256x16xf32>
    %103 = tpu.matmul %100, %102, %cst_92 {dimension_numbers = #tpu.dot_dimension_numbers<[1], [0], [0], [1], [0, 0, 1, 1], [], []>} : vector<256x8xbf16>, vector<8x16xbf16>, vector<256x16xf32> -> vector<256x16xf32>
    %104 = arith.addf %97, %103 : vector<256x16xf32>
    %c1_93 = arith.constant 1 : index
    %c0_94 = arith.constant 0 : index
    %c0_95 = arith.constant 0 : index
    %105 = vector.load %arg10[%c1_93, %c0_94, %c0_95] : memref<18x24x8xf32, #tpu.memory_space<vmem>>, vector<16x16x8xf32>
    %106 = vector.shape_cast %105 : vector<16x16x8xf32> to vector<256x8xf32>
    %107 = arith.truncf %106 : vector<256x8xf32> to vector<256x8xbf16>
    %c3_96 = arith.constant 3 : index
    %c0_97 = arith.constant 0 : index
    %c0_98 = arith.constant 0 : index
    %108 = vector.load %arg5[%c3_96, %c0_97, %c0_98] : memref<9x8x16xbf16, #tpu.memory_space<vmem>>, vector<1x8x16xbf16>
    %109 = vector.shape_cast %108 : vector<1x8x16xbf16> to vector<8x16xbf16>
    %cst_99 = arith.constant dense<0.000000e+00> : vector<256x16xf32>
    %110 = tpu.matmul %107, %109, %cst_99 {dimension_numbers = #tpu.dot_dimension_numbers<[1], [0], [0], [1], [0, 0, 1, 1], [], []>} : vector<256x8xbf16>, vector<8x16xbf16>, vector<256x16xf32> -> vector<256x16xf32>
    %111 = arith.addf %104, %110 : vector<256x16xf32>
    %c1_100 = arith.constant 1 : index
    %c1_101 = arith.constant 1 : index
    %c0_102 = arith.constant 0 : index
    %112 = vector.load %arg10[%c1_100, %c1_101, %c0_102] : memref<18x24x8xf32, #tpu.memory_space<vmem>>, vector<16x16x8xf32>
    %113 = vector.shape_cast %112 : vector<16x16x8xf32> to vector<256x8xf32>
    %114 = arith.truncf %113 : vector<256x8xf32> to vector<256x8xbf16>
    %c4_103 = arith.constant 4 : index
    %c0_104 = arith.constant 0 : index
    %c0_105 = arith.constant 0 : index
    %115 = vector.load %arg5[%c4_103, %c0_104, %c0_105] : memref<9x8x16xbf16, #tpu.memory_space<vmem>>, vector<1x8x16xbf16>
    %116 = vector.shape_cast %115 : vector<1x8x16xbf16> to vector<8x16xbf16>
    %cst_106 = arith.constant dense<0.000000e+00> : vector<256x16xf32>
    %117 = tpu.matmul %114, %116, %cst_106 {dimension_numbers = #tpu.dot_dimension_numbers<[1], [0], [0], [1], [0, 0, 1, 1], [], []>} : vector<256x8xbf16>, vector<8x16xbf16>, vector<256x16xf32> -> vector<256x16xf32>
    %118 = arith.addf %111, %117 : vector<256x16xf32>
    %c1_107 = arith.constant 1 : index
    %c2_108 = arith.constant 2 : index
    %c0_109 = arith.constant 0 : index
    %119 = vector.load %arg10[%c1_107, %c2_108, %c0_109] : memref<18x24x8xf32, #tpu.memory_space<vmem>>, vector<16x16x8xf32>
    %120 = vector.shape_cast %119 : vector<16x16x8xf32> to vector<256x8xf32>
    %121 = arith.truncf %120 : vector<256x8xf32> to vector<256x8xbf16>
    %c5_110 = arith.constant 5 : index
    %c0_111 = arith.constant 0 : index
    %c0_112 = arith.constant 0 : index
    %122 = vector.load %arg5[%c5_110, %c0_111, %c0_112] : memref<9x8x16xbf16, #tpu.memory_space<vmem>>, vector<1x8x16xbf16>
    %123 = vector.shape_cast %122 : vector<1x8x16xbf16> to vector<8x16xbf16>
    %cst_113 = arith.constant dense<0.000000e+00> : vector<256x16xf32>
    %124 = tpu.matmul %121, %123, %cst_113 {dimension_numbers = #tpu.dot_dimension_numbers<[1], [0], [0], [1], [0, 0, 1, 1], [], []>} : vector<256x8xbf16>, vector<8x16xbf16>, vector<256x16xf32> -> vector<256x16xf32>
    %125 = arith.addf %118, %124 : vector<256x16xf32>
    %c2_114 = arith.constant 2 : index
    %c0_115 = arith.constant 0 : index
    %c0_116 = arith.constant 0 : index
    %126 = vector.load %arg10[%c2_114, %c0_115, %c0_116] : memref<18x24x8xf32, #tpu.memory_space<vmem>>, vector<16x16x8xf32>
    %127 = vector.shape_cast %126 : vector<16x16x8xf32> to vector<256x8xf32>
    %128 = arith.truncf %127 : vector<256x8xf32> to vector<256x8xbf16>
    %c6_117 = arith.constant 6 : index
    %c0_118 = arith.constant 0 : index
    %c0_119 = arith.constant 0 : index
    %129 = vector.load %arg5[%c6_117, %c0_118, %c0_119] : memref<9x8x16xbf16, #tpu.memory_space<vmem>>, vector<1x8x16xbf16>
    %130 = vector.shape_cast %129 : vector<1x8x16xbf16> to vector<8x16xbf16>
    %cst_120 = arith.constant dense<0.000000e+00> : vector<256x16xf32>
    %131 = tpu.matmul %128, %130, %cst_120 {dimension_numbers = #tpu.dot_dimension_numbers<[1], [0], [0], [1], [0, 0, 1, 1], [], []>} : vector<256x8xbf16>, vector<8x16xbf16>, vector<256x16xf32> -> vector<256x16xf32>
    %132 = arith.addf %125, %131 : vector<256x16xf32>
    %c2_121 = arith.constant 2 : index
    %c1_122 = arith.constant 1 : index
    %c0_123 = arith.constant 0 : index
    %133 = vector.load %arg10[%c2_121, %c1_122, %c0_123] : memref<18x24x8xf32, #tpu.memory_space<vmem>>, vector<16x16x8xf32>
    %134 = vector.shape_cast %133 : vector<16x16x8xf32> to vector<256x8xf32>
    %135 = arith.truncf %134 : vector<256x8xf32> to vector<256x8xbf16>
    %c7_124 = arith.constant 7 : index
    %c0_125 = arith.constant 0 : index
    %c0_126 = arith.constant 0 : index
    %136 = vector.load %arg5[%c7_124, %c0_125, %c0_126] : memref<9x8x16xbf16, #tpu.memory_space<vmem>>, vector<1x8x16xbf16>
    %137 = vector.shape_cast %136 : vector<1x8x16xbf16> to vector<8x16xbf16>
    %cst_127 = arith.constant dense<0.000000e+00> : vector<256x16xf32>
    %138 = tpu.matmul %135, %137, %cst_127 {dimension_numbers = #tpu.dot_dimension_numbers<[1], [0], [0], [1], [0, 0, 1, 1], [], []>} : vector<256x8xbf16>, vector<8x16xbf16>, vector<256x16xf32> -> vector<256x16xf32>
    %139 = arith.addf %132, %138 : vector<256x16xf32>
    %c2_128 = arith.constant 2 : index
    %c2_129 = arith.constant 2 : index
    %c0_130 = arith.constant 0 : index
    %140 = vector.load %arg10[%c2_128, %c2_129, %c0_130] : memref<18x24x8xf32, #tpu.memory_space<vmem>>, vector<16x16x8xf32>
    %141 = vector.shape_cast %140 : vector<16x16x8xf32> to vector<256x8xf32>
    %142 = arith.truncf %141 : vector<256x8xf32> to vector<256x8xbf16>
    %c8_131 = arith.constant 8 : index
    %c0_132 = arith.constant 0 : index
    %c0_133 = arith.constant 0 : index
    %143 = vector.load %arg5[%c8_131, %c0_132, %c0_133] : memref<9x8x16xbf16, #tpu.memory_space<vmem>>, vector<1x8x16xbf16>
    %144 = vector.shape_cast %143 : vector<1x8x16xbf16> to vector<8x16xbf16>
    %cst_134 = arith.constant dense<0.000000e+00> : vector<256x16xf32>
    %145 = tpu.matmul %142, %144, %cst_134 {dimension_numbers = #tpu.dot_dimension_numbers<[1], [0], [0], [1], [0, 0, 1, 1], [], []>} : vector<256x8xbf16>, vector<8x16xbf16>, vector<256x16xf32> -> vector<256x16xf32>
    %146 = arith.addf %139, %145 : vector<256x16xf32>
    %c0_135 = arith.constant 0 : index
    %c0_136 = arith.constant 0 : index
    %147 = vector.load %arg6[%c0_135, %c0_136] : memref<1x16xf32, #tpu.memory_space<vmem>>, vector<1x16xf32>
    %148 = vector.broadcast %147 : vector<1x16xf32> to vector<256x16xf32>
    %149 = arith.addf %146, %148 : vector<256x16xf32>
    %cst_137 = arith.constant 0.000000e+00 : f32
    %150 = vector.broadcast %cst_137 : f32 to vector<256x16xf32>
    %151 = arith.maximumf %149, %150 : vector<256x16xf32>
    %cst_138 = arith.constant dense<0.000000e+00> : vector<16xf32>
    %152 = vector.multi_reduction <add>, %151, %cst_138 [0] : vector<256x16xf32> to vector<16xf32>
    %153 = vector.shape_cast %152 : vector<16xf32> to vector<1x16xf32>
    %cst_139 = arith.constant 2.560000e+02 : f32
    %154 = vector.broadcast %cst_139 : f32 to vector<1x16xf32>
    %155 = arith.divf %153, %154 : vector<1x16xf32>
    %156 = arith.truncf %155 : vector<1x16xf32> to vector<1x16xbf16>
    %c0_140 = arith.constant 0 : index
    %c0_141 = arith.constant 0 : index
    %157 = vector.load %arg7[%c0_140, %c0_141] : memref<16x128xbf16, #tpu.memory_space<vmem>>, vector<16x128xbf16>
    %cst_142 = arith.constant dense<0.000000e+00> : vector<1x128xf32>
    %158 = tpu.matmul %156, %157, %cst_142 {dimension_numbers = #tpu.dot_dimension_numbers<[1], [0], [0], [1], [0, 0, 1, 1], [], []>} : vector<1x16xbf16>, vector<16x128xbf16>, vector<1x128xf32> -> vector<1x128xf32>
    %c0_143 = arith.constant 0 : index
    %c0_144 = arith.constant 0 : index
    %159 = vector.load %arg8[%c0_143, %c0_144] : memref<1x128xf32, #tpu.memory_space<vmem>>, vector<1x128xf32>
    %160 = arith.addf %158, %159 : vector<1x128xf32>
    %161 = vector.shape_cast %160 : vector<1x128xf32> to vector<1x1x128xf32>
    %c0_145 = arith.constant 0 : index
    %c0_146 = arith.constant 0 : index
    %c0_147 = arith.constant 0 : index
    %162 = vector.load %arg9[%c0_145, %c0_146, %c0_147] : memref<1x1x128xf32, #tpu.memory_space<vmem>>, vector<1x1x128xf32>
    tpu.vector_store %arg9[%c0_145, %c0_146, %c0_147], %161 {strides = array<i32>} : memref<1x1x128xf32, #tpu.memory_space<vmem>>, vector<1x1x128xf32>,
    return
  }
  func.func @transform_0(%arg0: i32) -> (i32, i32, i32, i32) {
    %c0_i32 = arith.constant 0 : i32
    %c0_i32_0 = arith.constant 0 : i32
    %c0_i32_1 = arith.constant 0 : i32
    %c0_i32_2 = arith.constant 0 : i32
    return %arg0, %c0_i32, %c0_i32_0, %c0_i32_1 : i32, i32, i32, i32
  }
  func.func @transform_1(%arg0: i32) -> (i32, i32) {
    %c0_i32 = arith.constant 0 : i32
    %c0_i32_0 = arith.constant 0 : i32
    %c0_i32_1 = arith.constant 0 : i32
    return %c0_i32, %c0_i32_0 : i32, i32
  }
  func.func @transform_2(%arg0: i32) -> (i32, i32, i32) {
    %c0_i32 = arith.constant 0 : i32
    %c0_i32_0 = arith.constant 0 : i32
    %c0_i32_1 = arith.constant 0 : i32
    %c0_i32_2 = arith.constant 0 : i32
    return %c0_i32, %c0_i32_0, %c0_i32_1 : i32, i32, i32
  }
  func.func @transform_3(%arg0: i32) -> (i32, i32) {
    %c0_i32 = arith.constant 0 : i32
    %c0_i32_0 = arith.constant 0 : i32
    %c0_i32_1 = arith.constant 0 : i32
    return %c0_i32, %c0_i32_0 : i32, i32
  }
  func.func @transform_4(%arg0: i32) -> (i32, i32, i32) {
    %c0_i32 = arith.constant 0 : i32
    %c0_i32_0 = arith.constant 0 : i32
    %c0_i32_1 = arith.constant 0 : i32
    %c0_i32_2 = arith.constant 0 : i32
    return %c0_i32, %c0_i32_0, %c0_i32_1 : i32, i32, i32
  }
  func.func @transform_5(%arg0: i32) -> (i32, i32) {
    %c0_i32 = arith.constant 0 : i32
    %c0_i32_0 = arith.constant 0 : i32
    %c0_i32_1 = arith.constant 0 : i32
    return %c0_i32, %c0_i32_0 : i32, i32
  }
  func.func @transform_6(%arg0: i32) -> (i32, i32) {
    %c0_i32 = arith.constant 0 : i32
    %c0_i32_0 = arith.constant 0 : i32
    %c0_i32_1 = arith.constant 0 : i32
    return %c0_i32, %c0_i32_0 : i32, i32
  }
  func.func @transform_7(%arg0: i32) -> (i32, i32) {
    %c0_i32 = arith.constant 0 : i32
    %c0_i32_0 = arith.constant 0 : i32
    %c0_i32_1 = arith.constant 0 : i32
    return %c0_i32, %c0_i32_0 : i32, i32
  }
  func.func @transform_8(%arg0: i32) -> (i32, i32, i32) {
    %c0_i32 = arith.constant 0 : i32
    %c0_i32_0 = arith.constant 0 : i32
    %c0_i32_1 = arith.constant 0 : i32
    return %arg0, %c0_i32, %c0_i32_0 : i32, i32, i32
  }
}

</mosaic_0001>

<llo_original>
// kernel: continual_model_forward.1
$region0: #{continual_model_forward.1}
  #allocation0 [shape = 'u32[]', space=smem, size = 0x4, offset = 0x4, fixed_abs, tag = 'smem constant byte address 0x4 - core index']
  #allocation1 [shape = 'u32[144,128]{1,0:T(1,128)}', space=vmem, size = 0x12000, scoped, tag = 'internal scratch']
  #allocation2 [shape = 'f32[18,24,8]{2,1,0:T(8,128)}', space=vmem, size = 0x36000, scoped, tag = 'scratch operand']
  %s0 = inlined_call_operand.vmem [shape: f32[2,20,26,4], index: 0, kind: input, shape index: {}]
  %s1 = inlined_call_operand.vmem [shape: f32[432,1], index: 1, kind: input, shape index: {}]
  %s2 = inlined_call_operand.vmem [shape: bf16[9,4,8], index: 2, kind: input, shape index: {}]
  %s3 = inlined_call_operand.vmem [shape: f32[1,8], index: 3, kind: input, shape index: {}]
  %s4 = inlined_call_operand.vmem [shape: bf16[9,8,16], index: 4, kind: input, shape index: {}]
  %s5 = inlined_call_operand.vmem [shape: f32[1,16], index: 5, kind: input, shape index: {}]
  %s6 = inlined_call_operand.vmem [shape: bf16[16,128], index: 6, kind: input, shape index: {}]
  %s7 = inlined_call_operand.vmem [shape: f32[1,128], index: 7, kind: input, shape index: {}]
  %s8 = inlined_call_operand.hbm [shape: f32[2,1,128], index: 8, kind: output, shape index: {}]
  %s9 = sld [smem:[#allocation0]]
  $region65: #{continual_model_forward.1} parent=0
    _
  %s11 = ssub.s32 1, %s9
  %s12 = scalar_select 0, %s11, %s9
  $region1: #{continual_model_forward.1} parent=0
    #allocation3 [shape = 'u8[1024]{0}', space=vmem, size = 0x400, scoped, tag = 'output window, operand 0']
    #allocation4 [shape = 's32[2]{0}', space=sflag, size = 0x8, scoped, tag = 'scoped memory for continual_model_forward.1']
    %13 = vsyncpa [#allocation4], 0
    %s14 = scalar_lea.sflag [#allocation4], 1
    %15 = vsyncpa %s14, 0
    loop: start=0, step=1, limit=4
    $region2: #{continual_model_forward.1} parent=1 // loop_pre_header
      _
    $region3: #{continual_model_forward.1} parent=1 // loop_header
      %s17 = sphi 0, %s21
      %p18 = scmp.ge.s32.totalorder %s17, 4
      %s27 = sphi 0, %s29
      %s30 = sphi 0, %s27
      %s31 = sphi 0, %s30
      %s47 = sphi 0, %s31
      %s51 = sphi 0, %s51
      %s53 = sphi 0, %s51
      %s54 = sphi 0, %s53
      %s68 = sphi 0, %s54
      %s72 = sphi 0, %s72
      %s74 = sphi 0, %s72
      %s75 = sphi 0, %s74
      %s89 = sphi 0, %s75
      %s93 = sphi 0, %s93
      %s95 = sphi 0, %s93
      %s96 = sphi 0, %s95
      %s110 = sphi 0, %s96
      %s114 = sphi 0, %s114
      %s116 = sphi 0, %s114
      %s117 = sphi 0, %s116
      %s131 = sphi 0, %s117
      %s135 = sphi 0, %s135
      %s137 = sphi 0, %s135
      %s138 = sphi 0, %s137
      %s152 = sphi 0, %s138
      %s156 = sphi 0, %s156
      %s158 = sphi 0, %s156
      %s159 = sphi 0, %s158
      %s173 = sphi 0, %s159
      %s177 = sphi 0, %s177
      %s179 = sphi 0, %s177
      %s180 = sphi 0, %s179
      %s194 = sphi 0, %s180
      %s200 = sphi 0, %s202
      %s203 = sphi 0, %s200
      %s204 = sphi 0, %s203
      %s220 = sphi 0, %s204
    $region4: #{continual_model_forward.1} parent=1 // loop_header_branch
      %20 = sbr.rel (%p18) target = $region8
    $region5: #{continual_model_forward.1} parent=1 // loop_body
      %s22 = ssub.s32 %s17, 1
      %s23 = ssub.s32 %s17, 2
      %s24 = sadd.s32 %s17, 1
      %s25 = ssub.s32 %s17, %s24
      %p26 = scmp.eq.s32.totalorder %s25, 0
      %s28 = sadd.s32 %s27, 1
      %s29 = scalar_select %p26, %s27, %s28
      %p32 = pneg %p26
      %p33 = scmp.eq.s32.totalorder %s17, 1
      %p34 = por %p32, %p33
      %p35 = scmp.ne.s32.totalorder %s27, %s30
      %p36 = scmp.eq.s32.totalorder %s17, 0
      %p37 = por %p35, %p36
      %p38 = scmp.ne.s32.totalorder %s27, %s30
      %p39 = scmp.eq.s32.totalorder %s22, 1
      %p40 = por %p38, %p39
      %p41 = scmp.ne.s32.totalorder %s30, %s31
      %p42 = scmp.eq.s32.totalorder %s22, 0
      %p43 = por %p41, %p42
      %p44 = scmp.ne.s32.totalorder %s30, %s31
      %p45 = scmp.eq.s32.totalorder %s23, 1
      %p46 = por %p44, %p45
      %p48 = scmp.ne.s32.totalorder %s31, %s47
      %p49 = scmp.eq.s32.totalorder %s23, 0
      %p50 = por %p48, %p49
      %s52 = sadd.s32 %s51, 1
      %p55 = scmp.eq.s32.totalorder %s17, 1
      %p56 = scmp.ne.s32.totalorder %s51, %s53
      %p57 = scmp.eq.s32.totalorder %s17, 0
      %p58 = por %p56, %p57
      %p59 = scmp.ne.s32.totalorder %s51, %s53
      %p60 = scmp.eq.s32.totalorder %s22, 1
      %p61 = por %p59, %p60
      %p62 = scmp.ne.s32.totalorder %s53, %s54
      %p63 = scmp.eq.s32.totalorder %s22, 0
      %p64 = por %p62, %p63
      %p65 = scmp.ne.s32.totalorder %s53, %s54
      %p66 = scmp.eq.s32.totalorder %s23, 1
      %p67 = por %p65, %p66
      %p69 = scmp.ne.s32.totalorder %s54, %s68
      %p70 = scmp.eq.s32.totalorder %s23, 0
      %p71 = por %p69, %p70
      %s73 = sadd.s32 %s72, 1
      %p76 = scmp.eq.s32.totalorder %s17, 1
      %p77 = scmp.ne.s32.totalorder %s72, %s74
      %p78 = scmp.eq.s32.totalorder %s17, 0
      %p79 = por %p77, %p78
      %p80 = scmp.ne.s32.totalorder %s72, %s74
      %p81 = scmp.eq.s32.totalorder %s22, 1
      %p82 = por %p80, %p81
      %p83 = scmp.ne.s32.totalorder %s74, %s75
      %p84 = scmp.eq.s32.totalorder %s22, 0
      %p85 = por %p83, %p84
      %p86 = scmp.ne.s32.totalorder %s74, %s75
      %p87 = scmp.eq.s32.totalorder %s23, 1
      %p88 = por %p86, %p87
      %p90 = scmp.ne.s32.totalorder %s75, %s89
      %p91 = scmp.eq.s32.totalorder %s23, 0
      %p92 = por %p90, %p91
      %s94 = sadd.s32 %s93, 1
      %p97 = scmp.eq.s32.totalorder %s17, 1
      %p98 = scmp.ne.s32.totalorder %s93, %s95
      %p99 = scmp.eq.s32.totalorder %s17, 0
      %p100 = por %p98, %p99
      %p101 = scmp.ne.s32.totalorder %s93, %s95
      %p102 = scmp.eq.s32.totalorder %s22, 1
      %p103 = por %p101, %p102
      %p104 = scmp.ne.s32.totalorder %s95, %s96
      %p105 = scmp.eq.s32.totalorder %s22, 0
      %p106 = por %p104, %p105
      %p107 = scmp.ne.s32.totalorder %s95, %s96
      %p108 = scmp.eq.s32.totalorder %s23, 1
      %p109 = por %p107, %p108
      %p111 = scmp.ne.s32.totalorder %s96, %s110
      %p112 = scmp.eq.s32.totalorder %s23, 0
      %p113 = por %p111, %p112
      %s115 = sadd.s32 %s114, 1
      %p118 = scmp.eq.s32.totalorder %s17, 1
      %p119 = scmp.ne.s32.totalorder %s114, %s116
      %p120 = scmp.eq.s32.totalorder %s17, 0
      %p121 = por %p119, %p120
      %p122 = scmp.ne.s32.totalorder %s114, %s116
      %p123 = scmp.eq.s32.totalorder %s22, 1
      %p124 = por %p122, %p123
      %p125 = scmp.ne.s32.totalorder %s116, %s117
      %p126 = scmp.eq.s32.totalorder %s22, 0
      %p127 = por %p125, %p126
      %p128 = scmp.ne.s32.totalorder %s116, %s117
      %p129 = scmp.eq.s32.totalorder %s23, 1
      %p130 = por %p128, %p129
      %p132 = scmp.ne.s32.totalorder %s117, %s131
      %p133 = scmp.eq.s32.totalorder %s23, 0
      %p134 = por %p132, %p133
      %s136 = sadd.s32 %s135, 1
      %p139 = scmp.eq.s32.totalorder %s17, 1
      %p140 = scmp.ne.s32.totalorder %s135, %s137
      %p141 = scmp.eq.s32.totalorder %s17, 0
      %p142 = por %p140, %p141
      %p143 = scmp.ne.s32.totalorder %s135, %s137
      %p144 = scmp.eq.s32.totalorder %s22, 1
      %p145 = por %p143, %p144
      %p146 = scmp.ne.s32.totalorder %s137, %s138
      %p147 = scmp.eq.s32.totalorder %s22, 0
      %p148 = por %p146, %p147
      %p149 = scmp.ne.s32.totalorder %s137, %s138
      %p150 = scmp.eq.s32.totalorder %s23, 1
      %p151 = por %p149, %p150
      %p153 = scmp.ne.s32.totalorder %s138, %s152
      %p154 = scmp.eq.s32.totalorder %s23, 0
      %p155 = por %p153, %p154
      %s157 = sadd.s32 %s156, 1
      %p160 = scmp.eq.s32.totalorder %s17, 1
      %p161 = scmp.ne.s32.totalorder %s156, %s158
      %p162 = scmp.eq.s32.totalorder %s17, 0
      %p163 = por %p161, %p162
      %p164 = scmp.ne.s32.totalorder %s156, %s158
      %p165 = scmp.eq.s32.totalorder %s22, 1
      %p166 = por %p164, %p165
      %p167 = scmp.ne.s32.totalorder %s158, %s159
      %p168 = scmp.eq.s32.totalorder %s22, 0
      %p169 = por %p167, %p168
      %p170 = scmp.ne.s32.totalorder %s158, %s159
      %p171 = scmp.eq.s32.totalorder %s23, 1
      %p172 = por %p170, %p171
      %p174 = scmp.ne.s32.totalorder %s159, %s173
      %p175 = scmp.eq.s32.totalorder %s23, 0
      %p176 = por %p174, %p175
      %s178 = sadd.s32 %s177, 1
      %p181 = scmp.eq.s32.totalorder %s17, 1
      %p182 = scmp.ne.s32.totalorder %s177, %s179
      %p183 = scmp.eq.s32.totalorder %s17, 0
      %p184 = por %p182, %p183
      %p185 = scmp.ne.s32.totalorder %s177, %s179
      %p186 = scmp.eq.s32.totalorder %s22, 1
      %p187 = por %p185, %p186
      %p188 = scmp.ne.s32.totalorder %s179, %s180
      %p189 = scmp.eq.s32.totalorder %s22, 0
      %p190 = por %p188, %p189
      %p191 = scmp.ne.s32.totalorder %s179, %s180
      %p192 = scmp.eq.s32.totalorder %s23, 1
      %p193 = por %p191, %p192
      %p195 = scmp.ne.s32.totalorder %s180, %s194
      %p196 = scmp.eq.s32.totalorder %s23, 0
      %p197 = por %p195, %p196
      %s198 = ssub.s32 %s17, %s24
      %p199 = scmp.eq.s32.totalorder %s198, 0
      %s201 = sadd.s32 %s200, 1
      %s202 = scalar_select %p199, %s200, %s201
      %p205 = pneg %p199
      %p206 = scmp.eq.s32.totalorder %s17, 1
      %p207 = por %p205, %p206
      %p208 = scmp.ne.s32.totalorder %s200, %s203
      %p209 = scmp.eq.s32.totalorder %s17, 0
      %p210 = por %p208, %p209
      %p211 = scmp.ne.s32.totalorder %s200, %s203
      %p212 = scmp.eq.s32.totalorder %s22, 1
      %p213 = por %p211, %p212
      %p214 = scmp.ne.s32.totalorder %s203, %s204
      %p215 = scmp.eq.s32.totalorder %s22, 0
      %p216 = por %p214, %p215
      %p217 = scmp.ne.s32.totalorder %s203, %s204
      %p218 = scmp.eq.s32.totalorder %s23, 1
      %p219 = por %p217, %p218
      %p221 = scmp.ne.s32.totalorder %s204, %s220
      %p222 = scmp.eq.s32.totalorder %s23, 0
      %p223 = por %p221, %p222
      %p224 = scmp.le.s32.totalorder 1, %s17
      %p225 = scmp.lt.s32.totalorder %s17, 3
      %p226 = pnand %p224, %p225
      %p227 = pneg %p226
      // Predicated region
      $region9: #{continual_model_forward.1} parent=5 // pred_check
        _
      $region10: #{continual_model_forward.1} parent=5 // pred_check_branch
        %229 = sbr.rel (%p226) target = $region12
      $region11: #{continual_model_forward.1} parent=5 // pred_region
        %s230 = ssub.s32 %s17, 1
        // Predicated region
        $region13: #{continual_model_forward.1} parent=11 // pred_check
          %p231 = pneg %p64
        $region14: #{continual_model_forward.1} parent=11 // pred_check_branch
          %233 = sbr.rel (%p231) target = $region16
        $region15: #{continual_model_forward.1} parent=11 // pred_region
          _
        $region16: #{continual_model_forward.1} parent=11 // pred_fallthru
          _
        // Predicated region
        $region17: #{continual_model_forward.1} parent=11 // pred_check
          %p234 = pneg %p85
        $region18: #{continual_model_forward.1} parent=11 // pred_check_branch
          %236 = sbr.rel (%p234) target = $region20
        $region19: #{continual_model_forward.1} parent=11 // pred_region
          _
        $region20: #{continual_model_forward.1} parent=11 // pred_fallthru
          _
        // Predicated region
        $region21: #{continual_model_forward.1} parent=11 // pred_check
          %p237 = pneg %p106
        $region22: #{continual_model_forward.1} parent=11 // pred_check_branch
          %239 = sbr.rel (%p237) target = $region24
        $region23: #{continual_model_forward.1} parent=11 // pred_region
          _
        $region24: #{continual_model_forward.1} parent=11 // pred_fallthru
          _
        // Predicated region
        $region25: #{continual_model_forward.1} parent=11 // pred_check
          %p240 = pneg %p127
        $region26: #{continual_model_forward.1} parent=11 // pred_check_branch
          %242 = sbr.rel (%p240) target = $region28
        $region27: #{continual_model_forward.1} parent=11 // pred_region
          _
        $region28: #{continual_model_forward.1} parent=11 // pred_fallthru
          _
        // Predicated region
        $region29: #{continual_model_forward.1} parent=11 // pred_check
          %p243 = pneg %p148
        $region30: #{continual_model_forward.1} parent=11 // pred_check_branch
          %245 = sbr.rel (%p243) target = $region32
        $region31: #{continual_model_forward.1} parent=11 // pred_region
          _
        $region32: #{continual_model_forward.1} parent=11 // pred_fallthru
          _
        // Predicated region
        $region33: #{continual_model_forward.1} parent=11 // pred_check
          %p246 = pneg %p169
        $region34: #{continual_model_forward.1} parent=11 // pred_check_branch
          %248 = sbr.rel (%p246) target = $region36
        $region35: #{continual_model_forward.1} parent=11 // pred_region
          _
        $region36: #{continual_model_forward.1} parent=11 // pred_fallthru
          _
        // Predicated region
        $region37: #{continual_model_forward.1} parent=11 // pred_check
          %p249 = pneg %p190
        $region38: #{continual_model_forward.1} parent=11 // pred_check_branch
          %251 = sbr.rel (%p249) target = $region40
        $region39: #{continual_model_forward.1} parent=11 // pred_region
          _
        $region40: #{continual_model_forward.1} parent=11 // pred_fallthru
          _
      $region12: #{continual_model_forward.1} parent=5 // pred_fallthru
        _
      %p252 = scmp.lt.s32.totalorder %s17, 2
      // Predicated region
      $region41: #{continual_model_forward.1} parent=5 // pred_check
        %p253 = pneg %p252
      $region42: #{continual_model_forward.1} parent=5 // pred_check_branch
        %255 = sbr.rel (%p253) target = $region44
      $region43: #{continual_model_forward.1} parent=5 // pred_region
        // Predicated region
        $region45: #{continual_model_forward.1} parent=43 // pred_check
          %p256 = pneg %p37
        $region46: #{continual_model_forward.1} parent=43 // pred_check_branch
          %258 = sbr.rel (%p256) target = $region48
        $region47: #{continual_model_forward.1} parent=43 // pred_region
          %p259 = scmp.lt.s32.totalorder %s17, 1
          %s260 = scalar_select %p259, %s17, 1
          %s261 = smul.addr %s260, 80
          %s262 = smul.addr %s261, 8
          %s263 = scalar_lea.vmem %s0, %s262
        $region48: #{continual_model_forward.1} parent=43 // pred_fallthru
          _
      $region44: #{continual_model_forward.1} parent=5 // pred_fallthru
        _
      %p264 = scmp.le.s32.totalorder 1, %s17
      %p265 = scmp.lt.s32.totalorder %s17, 3
      %p266 = pnand %p264, %p265
      %p267 = pneg %p266
      // Predicated region
      $region49: #{continual_model_forward.1} parent=5 // pred_check
        _
      $region50: #{continual_model_forward.1} parent=5 // pred_check_branch
        %269 = sbr.rel (%p266) target = $region52
      $region51: #{continual_model_forward.1} parent=5 // pred_region
        %s270 = ssub.s32 %s17, 1
        %p271 = scmp.lt.s32.totalorder %s22, 1
        %s272 = scalar_select %p271, %s22, 1
        %s273 = smul.addr %s272, 80
        %s274 = smul.addr %s273, 8
        %s275 = scalar_lea.vmem %s0, %s274
        %p276 = pneg %p43
        %p277 = pneg %p40
        %p278 = pneg %p64
        %p279 = pneg %p61
        %p280 = pneg %p85
        %p281 = pneg %p82
        %p282 = pneg %p106
        %p283 = pneg %p103
        %p284 = pneg %p127
        %p285 = pneg %p124
        %p286 = pneg %p148
        %p287 = pneg %p145
        %p288 = pneg %p169
        %p289 = pneg %p166
        %p290 = pneg %p190
        %p291 = pneg %p187
        %p292 = pneg %p216
        %p293 = pneg %p213
        %s294 = sand.u32 %s203, 1
        %s295 = scalar_lea.sflag [#allocation4], %s294
        %s296 = sand.u32 %s203, 1
        %s297 = scalar_lea.vmem [#allocation3], %s296
        %p298 = scmp.lt.s32.totalorder %s22, 1
        %s299 = scalar_select %p298, %s22, 1
        %s300 = smul.addr %s299, 80
        %s301 = smul.addr %s300, 8
        %s302 = scalar_lea.vmem %s0, %s301
        %v304 = vld [vmem:[%s302] sm:$0xff]
        %v305 = vld [vmem:[%s302 + $0x8] sm:$0xff]
        %v306 = vld [vmem:[%s302 + $0x10] sm:$0xff]
        %v307 = vld [vmem:[%s302 + $0x20] sm:$0xff]
        %v308 = vld [vmem:[%s302 + $0x28] sm:$0xff]
        %v309 = vld [vmem:[%s302 + $0x30] sm:$0xff]
        %v310 = vld [vmem:[%s302 + $0x40] sm:$0xff]
        %v311 = vld [vmem:[%s302 + $0x48] sm:$0xff]
        %v312 = vld [vmem:[%s302 + $0x50] sm:$0xff]
        %v313 = vld [vmem:[%s302 + $0x60] sm:$0xff]
        %v314 = vld [vmem:[%s302 + $0x68] sm:$0xff]
        %v315 = vld [vmem:[%s302 + $0x70] sm:$0xff]
        %v316 = vld [vmem:[%s302 + $0x80] sm:$0xff]
        %v317 = vld [vmem:[%s302 + $0x88] sm:$0xff]
        %v318 = vld [vmem:[%s302 + $0x90] sm:$0xff]
        %v319 = vld [vmem:[%s302 + $0xa0] sm:$0xff]
        %v320 = vld [vmem:[%s302 + $0xa8] sm:$0xff]
        %v321 = vld [vmem:[%s302 + $0xb0] sm:$0xff]
        %v322 = vld [vmem:[%s302 + $0xc0] sm:$0xff]
        %v323 = vld [vmem:[%s302 + $0xc8] sm:$0xff]
        %v324 = vld [vmem:[%s302 + $0xd0] sm:$0xff]
        %v325 = vld [vmem:[%s302 + $0xe0] sm:$0xff]
        %v326 = vld [vmem:[%s302 + $0xe8] sm:$0xff]
        %v327 = vld [vmem:[%s302 + $0xf0] sm:$0xff]
        %v328 = vld [vmem:[%s302 + $0x100] sm:$0xff]
        %v329 = vld [vmem:[%s302 + $0x108] sm:$0xff]
        %v330 = vld [vmem:[%s302 + $0x110] sm:$0xff]
        %v331 = vld [vmem:[%s302 + $0x120] sm:$0xff]
        %v332 = vld [vmem:[%s302 + $0x128] sm:$0xff]
        %v333 = vld [vmem:[%s302 + $0x130] sm:$0xff]
        %v334 = vld [vmem:[%s302 + $0x140] sm:$0xff]
        %v335 = vld [vmem:[%s302 + $0x148] sm:$0xff]
        %v336 = vld [vmem:[%s302 + $0x150] sm:$0xff]
        %v337 = vld [vmem:[%s302 + $0x160] sm:$0xff]
        %v338 = vld [vmem:[%s302 + $0x168] sm:$0xff]
        %v339 = vld [vmem:[%s302 + $0x170] sm:$0xff]
        %v340 = vld [vmem:[%s302 + $0x180] sm:$0xff]
        %v341 = vld [vmem:[%s302 + $0x188] sm:$0xff]
        %v342 = vld [vmem:[%s302 + $0x190] sm:$0xff]
        %v343 = vld [vmem:[%s302 + $0x1a0] sm:$0xff]
        %v344 = vld [vmem:[%s302 + $0x1a8] sm:$0xff]
        %v345 = vld [vmem:[%s302 + $0x1b0] sm:$0xff]
        %v346 = vld [vmem:[%s302 + $0x1c0] sm:$0xff]
        %v347 = vld [vmem:[%s302 + $0x1c8] sm:$0xff]
        %v348 = vld [vmem:[%s302 + $0x1d0] sm:$0xff]
        %v349 = vld [vmem:[%s302 + $0x1e0] sm:$0xff]
        %v350 = vld [vmem:[%s302 + $0x1e8] sm:$0xff]
        %v351 = vld [vmem:[%s302 + $0x1f0] sm:$0xff]
        %v352 = vld [vmem:[%s302 + $0x200] sm:$0xff]
        %v353 = vld [vmem:[%s302 + $0x208] sm:$0xff]
        %v354 = vld [vmem:[%s302 + $0x210] sm:$0xff]
        %v355 = vld [vmem:[%s302 + $0x220] sm:$0xff]
        %v356 = vld [vmem:[%s302 + $0x228] sm:$0xff]
        %v357 = vld [vmem:[%s302 + $0x230] sm:$0xff]
        %v358 = vpack.c.bf16 %v305, %v304
        %v359 = vpack.c.bf16 %v307, %v306
        %v360 = vpack.c.bf16 %v309, %v308
        %v361 = vpack.c.bf16 %v311, %v310
        %v362 = vpack.c.bf16 %v313, %v312
        %v363 = vpack.c.bf16 %v315, %v314
        %v364 = vpack.c.bf16 %v317, %v316
        %v365 = vpack.c.bf16 %v319, %v318
        %v366 = vpack.c.bf16 %v321, %v320
        %v367 = vpack.c.bf16 %v323, %v322
        %v368 = vpack.c.bf16 %v325, %v324
        %v369 = vpack.c.bf16 %v327, %v326
        %v370 = vpack.c.bf16 %v329, %v328
        %v371 = vpack.c.bf16 %v331, %v330
        %v372 = vpack.c.bf16 %v333, %v332
        %v373 = vpack.c.bf16 %v335, %v334
        %v374 = vpack.c.bf16 %v337, %v336
        %v375 = vpack.c.bf16 %v339, %v338
        %v376 = vpack.c.bf16 %v341, %v340
        %v377 = vpack.c.bf16 %v343, %v342
        %v378 = vpack.c.bf16 %v345, %v344
        %v379 = vpack.c.bf16 %v347, %v346
        %v380 = vpack.c.bf16 %v349, %v348
        %v381 = vpack.c.bf16 %v351, %v350
        %v382 = vpack.c.bf16 %v353, %v352
        %v383 = vpack.c.bf16 %v355, %v354
        %v384 = vpack.c.bf16 %v357, %v356
        %v385 = vld [vmem:[%s2] sm:$0x3]
        %v386 = vld [vmem:[%s302 + $0x1] sm:$0xff]
        %v387 = vld [vmem:[%s302 + $0x9] sm:$0xff]
        %v388 = vld [vmem:[%s302 + $0x11] sm:$0xff]
        %v389 = vld [vmem:[%s302 + $0x21] sm:$0xff]
        %v390 = vld [vmem:[%s302 + $0x29] sm:$0xff]
        %v391 = vld [vmem:[%s302 + $0x31] sm:$0xff]
        %v392 = vld [vmem:[%s302 + $0x41] sm:$0xff]
        %v393 = vld [vmem:[%s302 + $0x49] sm:$0xff]
        %v394 = vld [vmem:[%s302 + $0x51] sm:$0xff]
        %v395 = vld [vmem:[%s302 + $0x61] sm:$0xff]
        %v396 = vld [vmem:[%s302 + $0x69] sm:$0xff]
        %v397 = vld [vmem:[%s302 + $0x71] sm:$0xff]
        %v398 = vld [vmem:[%s302 + $0x81] sm:$0xff]
        %v399 = vld [vmem:[%s302 + $0x89] sm:$0xff]
        %v400 = vld [vmem:[%s302 + $0x91] sm:$0xff]
        %v401 = vld [vmem:[%s302 + $0xa1] sm:$0xff]
        %v402 = vld [vmem:[%s302 + $0xa9] sm:$0xff]
        %v403 = vld [vmem:[%s302 + $0xb1] sm:$0xff]
        %v404 = vld [vmem:[%s302 + $0xc1] sm:$0xff]
        %v405 = vld [vmem:[%s302 + $0xc9] sm:$0xff]
        %v406 = vld [vmem:[%s302 + $0xd1] sm:$0xff]
        %v407 = vld [vmem:[%s302 + $0xe1] sm:$0xff]
        %v408 = vld [vmem:[%s302 + $0xe9] sm:$0xff]
        %v409 = vld [vmem:[%s302 + $0xf1] sm:$0xff]
        %v410 = vld [vmem:[%s302 + $0x101] sm:$0xff]
        %v411 = vld [vmem:[%s302 + $0x109] sm:$0xff]
        %v412 = vld [vmem:[%s302 + $0x111] sm:$0xff]
        %v413 = vld [vmem:[%s302 + $0x121] sm:$0xff]
        %v414 = vld [vmem:[%s302 + $0x129] sm:$0xff]
        %v415 = vld [vmem:[%s302 + $0x131] sm:$0xff]
        %v416 = vld [vmem:[%s302 + $0x141] sm:$0xff]
        %v417 = vld [vmem:[%s302 + $0x149] sm:$0xff]
        %v418 = vld [vmem:[%s302 + $0x151] sm:$0xff]
        %v419 = vld [vmem:[%s302 + $0x161] sm:$0xff]
        %v420 = vld [vmem:[%s302 + $0x169] sm:$0xff]
        %v421 = vld [vmem:[%s302 + $0x171] sm:$0xff]
        %v422 = vld [vmem:[%s302 + $0x181] sm:$0xff]
        %v423 = vld [vmem:[%s302 + $0x189] sm:$0xff]
        %v424 = vld [vmem:[%s302 + $0x191] sm:$0xff]
        %v425 = vld [vmem:[%s302 + $0x1a1] sm:$0xff]
        %v426 = vld [vmem:[%s302 + $0x1a9] sm:$0xff]
        %v427 = vld [vmem:[%s302 + $0x1b1] sm:$0xff]
        %v428 = vld [vmem:[%s302 + $0x1c1] sm:$0xff]
        %v429 = vld [vmem:[%s302 + $0x1c9] sm:$0xff]
        %v430 = vld [vmem:[%s302 + $0x1d1] sm:$0xff]
        %v431 = vld [vmem:[%s302 + $0x1e1] sm:$0xff]
        %v432 = vld [vmem:[%s302 + $0x1e9] sm:$0xff]
        %v433 = vld [vmem:[%s302 + $0x1f1] sm:$0xff]
        %v434 = vld [vmem:[%s302 + $0x201] sm:$0xff]
        %v435 = vld [vmem:[%s302 + $0x209] sm:$0xff]
        %v436 = vld [vmem:[%s302 + $0x211] sm:$0xff]
        %v437 = vld [vmem:[%s302 + $0x221] sm:$0xff]
        %v438 = vld [vmem:[%s302 + $0x229] sm:$0xff]
        %v439 = vld [vmem:[%s302 + $0x231] sm:$0xff]
        %v440 = vpack.c.bf16 %v387, %v386
        %v441 = vpack.c.bf16 %v389, %v388
        %v442 = vpack.c.bf16 %v391, %v390
        %v443 = vpack.c.bf16 %v393, %v392
        %v444 = vpack.c.bf16 %v395, %v394
        %v445 = vpack.c.bf16 %v397, %v396
        %v446 = vpack.c.bf16 %v399, %v398
        %v447 = vpack.c.bf16 %v401, %v400
        %v448 = vpack.c.bf16 %v403, %v402
        %v449 = vpack.c.bf16 %v405, %v404
        %v450 = vpack.c.bf16 %v407, %v406
        %v451 = vpack.c.bf16 %v409, %v408
        %v452 = vpack.c.bf16 %v411, %v410
        %v453 = vpack.c.bf16 %v413, %v412
        %v454 = vpack.c.bf16 %v415, %v414
        %v455 = vpack.c.bf16 %v417, %v416
        %v456 = vpack.c.bf16 %v419, %v418
        %v457 = vpack.c.bf16 %v421, %v420
        %v458 = vpack.c.bf16 %v423, %v422
        %v459 = vpack.c.bf16 %v425, %v424
        %v460 = vpack.c.bf16 %v427, %v426
        %v461 = vpack.c.bf16 %v429, %v428
        %v462 = vpack.c.bf16 %v431, %v430
        %v463 = vpack.c.bf16 %v433, %v432
        %v464 = vpack.c.bf16 %v435, %v434
        %v465 = vpack.c.bf16 %v437, %v436
        %v466 = vpack.c.bf16 %v439, %v438
        %s467 = scalar_lea.vmem %s2, 2
        %v468 = vld [vmem:[%s467] sm:$0x3]
        %vm469 = vcmask 31744
        %v471 = vsel %vm469, %v440, 0
        %v474 = vsel %vm469, %v441, 0
        %v477 = vsel %vm469, %v442, 0
        %v480 = vsel %vm469, %v443, 0
        %v483 = vsel %vm469, %v444, 0
        %v486 = vsel %vm469, %v445, 0
        %v489 = vsel %vm469, %v446, 0
        %v492 = vsel %vm469, %v447, 0
        %v495 = vsel %vm469, %v448, 0
        %v498 = vsel %vm469, %v449, 0
        %v501 = vsel %vm469, %v450, 0
        %v504 = vsel %vm469, %v451, 0
        %v507 = vsel %vm469, %v452, 0
        %v510 = vsel %vm469, %v453, 0
        %v513 = vsel %vm469, %v454, 0
        %v516 = vsel %vm469, %v455, 0
        %v519 = vsel %vm469, %v456, 0
        %v522 = vsel %vm469, %v457, 0
        %v525 = vsel %vm469, %v458, 0
        %v528 = vsel %vm469, %v459, 0
        %v531 = vsel %vm469, %v460, 0
        %v534 = vsel %vm469, %v461, 0
        %v537 = vsel %vm469, %v462, 0
        %v540 = vsel %vm469, %v463, 0
        %v543 = vsel %vm469, %v464, 0
        %v546 = vsel %vm469, %v465, 0
        %v549 = vsel %vm469, %v466, 0
        %vm551 = vcmask 1041408
        %v553 = vsel %vm551, %v468, 0
        %555 = vmatprep.subr.bf16.mxu0 0
        %556 = vmatpush1.bf16.msra.mxu0 %v553
        %557 = vmatprep.subr.bf16.mxu0 0
        %558 = vmatpush1.bf16.msra.mxu0 0
        %559 = vmatprep.subr.bf16.mxu0 0
        %560 = vmatpush1.bf16.msra.mxu0 0
        %561 = vmatprep.subr.bf16.mxu0 0
        %562 = vmatpush1.bf16.msra.mxu0 0
        %563 = vmatprep.subr.bf16.mxu0 0
        %564 = vmatpush1.bf16.msra.mxu0 0
        %565 = vmatprep.subr.bf16.mxu0 0
        %566 = vmatpush1.bf16.msra.mxu0 0
        %567 = vmatprep.subr.bf16.mxu0 0
        %568 = vmatpush1.bf16.msra.mxu0 0
        %569 = vmatprep.subr.bf16.mxu0 0
        %570 = vmatpush1.bf16.msra.mxu0 0
        %571 = vmatprep.subr.bf16.mxu0 0
        %572 = vmatpush1.bf16.msra.mxu0 0
        %573 = vmatprep.subr.bf16.mxu0 0
        %574 = vmatpush1.bf16.msra.mxu0 0
        %575 = vmatprep.subr.bf16.mxu0 0
        %576 = vmatpush1.bf16.msra.mxu0 0
        %577 = vmatprep.subr.bf16.mxu0 0
        %578 = vmatpush1.bf16.msra.mxu0 0
        %579 = vmatprep.subr.bf16.mxu0 0
        %580 = vmatpush1.bf16.msra.mxu0 0
        %581 = vmatprep.subr.bf16.mxu0 0
        %582 = vmatpush1.bf16.msra.mxu0 0
        %583 = vmatprep.subr.bf16.mxu0 0
        %584 = vmatpush1.bf16.msra.mxu0 0
        %585 = vmatprep.subr.bf16.mxu0 0
        %586 = vmatpush1.bf16.msra.mxu0 0
        %587 = vmatprep.mubr.bf16.mxu0 0
        %588 = vmatmul.mubr.bf16.gmra.mrb[0].mxu0 %v471
        %v589 = vpop.f32.mrb[0].mxu0
        %v590 = vadd.f32 0.0, %v589
        %v591 = vpop.f32.mrb[0].mxu0
        %v592 = vpop.f32.mrb[0].mxu0
        %v593 = vadd.f32 0.0, %v592
        %v594 = vpop.f32.mrb[0].mxu0
        %595 = vmatprep.mubr.bf16.mxu0 0
        %596 = vmatmul.mubr.bf16.gmra.mrb[0].mxu0 %v474
        %v597 = vpop.f32.mrb[0].mxu0
        %v598 = vadd.f32 0.0, %v597
        %v599 = vpop.f32.mrb[0].mxu0
        %v600 = vpop.f32.mrb[0].mxu0
        %v601 = vadd.f32 0.0, %v600
        %v602 = vpop.f32.mrb[0].mxu0
        %603 = vmatprep.mubr.bf16.mxu0 0
        %604 = vmatmul.mubr.bf16.gmra.mrb[0].mxu0 %v477
        %v605 = vpop.f32.mrb[0].mxu0
        %v606 = vadd.f32 0.0, %v605
        %v607 = vpop.f32.mrb[0].mxu0
        %v608 = vpop.f32.mrb[0].mxu0
        %v609 = vadd.f32 0.0, %v608
        %v610 = vpop.f32.mrb[0].mxu0
        %611 = vmatprep.mubr.bf16.mxu0 0
        %612 = vmatmul.mubr.bf16.gmra.mrb[0].mxu0 %v480
        %v613 = vpop.f32.mrb[0].mxu0
        %v614 = vadd.f32 0.0, %v613
        %v615 = vpop.f32.mrb[0].mxu0
        %v616 = vpop.f32.mrb[0].mxu0
        %v617 = vadd.f32 0.0, %v616
        %v618 = vpop.f32.mrb[0].mxu0
        %619 = vmatprep.mubr.bf16.mxu0 0
        %620 = vmatmul.mubr.bf16.gmra.mrb[0].mxu0 %v483
        %v621 = vpop.f32.mrb[0].mxu0
        %v622 = vadd.f32 0.0, %v621
        %v623 = vpop.f32.mrb[0].mxu0
        %v624 = vpop.f32.mrb[0].mxu0
        %v625 = vadd.f32 0.0, %v624
        %v626 = vpop.f32.mrb[0].mxu0
        %627 = vmatprep.mubr.bf16.mxu0 0
        %628 = vmatmul.mubr.bf16.gmra.mrb[0].mxu0 %v486
        %v629 = vpop.f32.mrb[0].mxu0
        %v630 = vadd.f32 0.0, %v629
        %v631 = vpop.f32.mrb[0].mxu0
        %v632 = vpop.f32.mrb[0].mxu0
        %v633 = vadd.f32 0.0, %v632
        %v634 = vpop.f32.mrb[0].mxu0
        %635 = vmatprep.mubr.bf16.mxu0 0
        %636 = vmatmul.mubr.bf16.gmra.mrb[0].mxu0 %v489
        %v637 = vpop.f32.mrb[0].mxu0
        %v638 = vadd.f32 0.0, %v637
        %v639 = vpop.f32.mrb[0].mxu0
        %v640 = vpop.f32.mrb[0].mxu0
        %v641 = vadd.f32 0.0, %v640
        %v642 = vpop.f32.mrb[0].mxu0
        %643 = vmatprep.mubr.bf16.mxu0 0
        %644 = vmatmul.mubr.bf16.gmra.mrb[0].mxu0 %v492
        %v645 = vpop.f32.mrb[0].mxu0
        %v646 = vadd.f32 0.0, %v645
        %v647 = vpop.f32.mrb[0].mxu0
        %v648 = vpop.f32.mrb[0].mxu0
        %v649 = vadd.f32 0.0, %v648
        %v650 = vpop.f32.mrb[0].mxu0
        %651 = vmatprep.mubr.bf16.mxu0 0
        %652 = vmatmul.mubr.bf16.gmra.mrb[0].mxu0 %v495
        %v653 = vpop.f32.mrb[0].mxu0
        %v654 = vadd.f32 0.0, %v653
        %v655 = vpop.f32.mrb[0].mxu0
        %v656 = vpop.f32.mrb[0].mxu0
        %v657 = vadd.f32 0.0, %v656
        %v658 = vpop.f32.mrb[0].mxu0
        %659 = vmatprep.mubr.bf16.mxu0 0
        %660 = vmatmul.mubr.bf16.gmra.mrb[0].mxu0 %v498
        %v661 = vpop.f32.mrb[0].mxu0
        %v662 = vadd.f32 0.0, %v661
        %v663 = vpop.f32.mrb[0].mxu0
        %v664 = vpop.f32.mrb[0].mxu0
        %v665 = vadd.f32 0.0, %v664
        %v666 = vpop.f32.mrb[0].mxu0
        %667 = vmatprep.mubr.bf16.mxu0 0
        %668 = vmatmul.mubr.bf16.gmra.mrb[0].mxu0 %v501
        %v669 = vpop.f32.mrb[0].mxu0
        %v670 = vadd.f32 0.0, %v669
        %v671 = vpop.f32.mrb[0].mxu0
        %v672 = vpop.f32.mrb[0].mxu0
        %v673 = vadd.f32 0.0, %v672
        %v674 = vpop.f32.mrb[0].mxu0
        %675 = vmatprep.mubr.bf16.mxu0 0
        %676 = vmatmul.mubr.bf16.gmra.mrb[0].mxu0 %v504
        %v677 = vpop.f32.mrb[0].mxu0
        %v678 = vadd.f32 0.0, %v677
        %v679 = vpop.f32.mrb[0].mxu0
        %v680 = vpop.f32.mrb[0].mxu0
        %v681 = vadd.f32 0.0, %v680
        %v682 = vpop.f32.mrb[0].mxu0
        %683 = vmatprep.mubr.bf16.mxu0 0
        %684 = vmatmul.mubr.bf16.gmra.mrb[0].mxu0 %v507
        %v685 = vpop.f32.mrb[0].mxu0
        %v686 = vadd.f32 0.0, %v685
        %v687 = vpop.f32.mrb[0].mxu0
        %v688 = vpop.f32.mrb[0].mxu0
        %v689 = vadd.f32 0.0, %v688
        %v690 = vpop.f32.mrb[0].mxu0
        %691 = vmatprep.mubr.bf16.mxu0 0
        %692 = vmatmul.mubr.bf16.gmra.mrb[0].mxu0 %v510
        %v693 = vpop.f32.mrb[0].mxu0
        %v694 = vadd.f32 0.0, %v693
        %v695 = vpop.f32.mrb[0].mxu0
        %v696 = vpop.f32.mrb[0].mxu0
        %v697 = vadd.f32 0.0, %v696
        %v698 = vpop.f32.mrb[0].mxu0
        %699 = vmatprep.mubr.bf16.mxu0 0
        %700 = vmatmul.mubr.bf16.gmra.mrb[0].mxu0 %v513
        %v701 = vpop.f32.mrb[0].mxu0
        %v702 = vadd.f32 0.0, %v701
        %v703 = vpop.f32.mrb[0].mxu0
        %v704 = vpop.f32.mrb[0].mxu0
        %v705 = vadd.f32 0.0, %v704
        %v706 = vpop.f32.mrb[0].mxu0
        %707 = vmatprep.mubr.bf16.mxu0 0
        %708 = vmatmul.mubr.bf16.gmra.mrb[0].mxu0 %v516
        %v709 = vpop.f32.mrb[0].mxu0
        %v710 = vadd.f32 0.0, %v709
        %v711 = vpop.f32.mrb[0].mxu0
        %v712 = vpop.f32.mrb[0].mxu0
        %v713 = vadd.f32 0.0, %v712
        %v714 = vpop.f32.mrb[0].mxu0
        %715 = vmatprep.mubr.bf16.mxu0 0
        %716 = vmatmul.mubr.bf16.gmra.mrb[0].mxu0 %v519
        %v717 = vpop.f32.mrb[0].mxu0
        %v718 = vadd.f32 0.0, %v717
        %v719 = vpop.f32.mrb[0].mxu0
        %v720 = vpop.f32.mrb[0].mxu0
        %v721 = vadd.f32 0.0, %v720
        %v722 = vpop.f32.mrb[0].mxu0
        %723 = vmatprep.mubr.bf16.mxu0 0
        %724 = vmatmul.mubr.bf16.gmra.mrb[0].mxu0 %v522
        %v725 = vpop.f32.mrb[0].mxu0
        %v726 = vadd.f32 0.0, %v725
        %v727 = vpop.f32.mrb[0].mxu0
        %v728 = vpop.f32.mrb[0].mxu0
        %v729 = vadd.f32 0.0, %v728
        %v730 = vpop.f32.mrb[0].mxu0
        %731 = vmatprep.mubr.bf16.mxu0 0
        %732 = vmatmul.mubr.bf16.gmra.mrb[0].mxu0 %v525
        %v733 = vpop.f32.mrb[0].mxu0
        %v734 = vadd.f32 0.0, %v733
        %v735 = vpop.f32.mrb[0].mxu0
        %v736 = vpop.f32.mrb[0].mxu0
        %v737 = vadd.f32 0.0, %v736
        %v738 = vpop.f32.mrb[0].mxu0
        %739 = vmatprep.mubr.bf16.mxu0 0
        %740 = vmatmul.mubr.bf16.gmra.mrb[0].mxu0 %v528
        %v741 = vpop.f32.mrb[0].mxu0
        %v742 = vadd.f32 0.0, %v741
        %v743 = vpop.f32.mrb[0].mxu0
        %v744 = vpop.f32.mrb[0].mxu0
        %v745 = vadd.f32 0.0, %v744
        %v746 = vpop.f32.mrb[0].mxu0
        %747 = vmatprep.mubr.bf16.mxu0 0
        %748 = vmatmul.mubr.bf16.gmra.mrb[0].mxu0 %v531
        %v749 = vpop.f32.mrb[0].mxu0
        %v750 = vadd.f32 0.0, %v749
        %v751 = vpop.f32.mrb[0].mxu0
        %v752 = vpop.f32.mrb[0].mxu0
        %v753 = vadd.f32 0.0, %v752
        %v754 = vpop.f32.mrb[0].mxu0
        %755 = vmatprep.mubr.bf16.mxu0 0
        %756 = vmatmul.mubr.bf16.gmra.mrb[0].mxu0 %v534
        %v757 = vpop.f32.mrb[0].mxu0
        %v758 = vadd.f32 0.0, %v757
        %v759 = vpop.f32.mrb[0].mxu0
        %v760 = vpop.f32.mrb[0].mxu0
        %v761 = vadd.f32 0.0, %v760
        %v762 = vpop.f32.mrb[0].mxu0
        %763 = vmatprep.mubr.bf16.mxu0 0
        %764 = vmatmul.mubr.bf16.gmra.mrb[0].mxu0 %v537
        %v765 = vpop.f32.mrb[0].mxu0
        %v766 = vadd.f32 0.0, %v765
        %v767 = vpop.f32.mrb[0].mxu0
        %v768 = vpop.f32.mrb[0].mxu0
        %v769 = vadd.f32 0.0, %v768
        %v770 = vpop.f32.mrb[0].mxu0
        %771 = vmatprep.mubr.bf16.mxu0 0
        %772 = vmatmul.mubr.bf16.gmra.mrb[0].mxu0 %v540
        %v773 = vpop.f32.mrb[0].mxu0
        %v774 = vadd.f32 0.0, %v773
        %v775 = vpop.f32.mrb[0].mxu0
        %v776 = vpop.f32.mrb[0].mxu0
        %v777 = vadd.f32 0.0, %v776
        %v778 = vpop.f32.mrb[0].mxu0
        %779 = vmatprep.mubr.bf16.mxu0 0
        %780 = vmatmul.mubr.bf16.gmra.mrb[0].mxu0 %v543
        %v781 = vpop.f32.mrb[0].mxu0
        %v782 = vadd.f32 0.0, %v781
        %v783 = vpop.f32.mrb[0].mxu0
        %v784 = vpop.f32.mrb[0].mxu0
        %v785 = vadd.f32 0.0, %v784
        %v786 = vpop.f32.mrb[0].mxu0
        %787 = vmatprep.mubr.bf16.mxu0 0
        %788 = vmatmul.mubr.bf16.gmra.mrb[0].mxu0 %v546
        %v789 = vpop.f32.mrb[0].mxu0
        %v790 = vadd.f32 0.0, %v789
        %v791 = vpop.f32.mrb[0].mxu0
        %v792 = vpop.f32.mrb[0].mxu0
        %v793 = vadd.f32 0.0, %v792
        %v794 = vpop.f32.mrb[0].mxu0
        %795 = vmatprep.mubr.bf16.mxu0 0
        %796 = vmatmul.mubr.bf16.gmra.mrb[0].mxu0 %v549
        %v797 = vpop.f32.mrb[0].mxu0
        %v798 = vadd.f32 0.0, %v797
        %v799 = vpop.f32.mrb[0].mxu0
        %v800 = vpop.f32.mrb[0].mxu0
        %v801 = vadd.f32 0.0, %v800
        %v802 = vpop.f32.mrb[0].mxu0
        %803 = vdwg.mxu0
        %v805 = vsel %vm469, %v358, 0
        %v808 = vsel %vm469, %v359, 0
        %v811 = vsel %vm469, %v360, 0
        %v814 = vsel %vm469, %v361, 0
        %v817 = vsel %vm469, %v362, 0
        %v820 = vsel %vm469, %v363, 0
        %v823 = vsel %vm469, %v364, 0
        %v826 = vsel %vm469, %v365, 0
        %v829 = vsel %vm469, %v366, 0
        %v832 = vsel %vm469, %v367, 0
        %v835 = vsel %vm469, %v368, 0
        %v838 = vsel %vm469, %v369, 0
        %v841 = vsel %vm469, %v370, 0
        %v844 = vsel %vm469, %v371, 0
        %v847 = vsel %vm469, %v372, 0
        %v850 = vsel %vm469, %v373, 0
        %v853 = vsel %vm469, %v374, 0
        %v856 = vsel %vm469, %v375, 0
        %v859 = vsel %vm469, %v376, 0
        %v862 = vsel %vm469, %v377, 0
        %v865 = vsel %vm469, %v378, 0
        %v868 = vsel %vm469, %v379, 0
        %v871 = vsel %vm469, %v380, 0
        %v874 = vsel %vm469, %v381, 0
        %v877 = vsel %vm469, %v382, 0
        %v880 = vsel %vm469, %v383, 0
        %v883 = vsel %vm469, %v384, 0
        %v886 = vsel %vm551, %v385, 0
        %888 = vmatprep.subr.bf16.mxu0 0
        %889 = vmatpush1.bf16.msra.mxu0 %v886
        %890 = vmatprep.subr.bf16.mxu0 0
        %891 = vmatpush1.bf16.msra.mxu0 0
        %892 = vmatprep.subr.bf16.mxu0 0
        %893 = vmatpush1.bf16.msra.mxu0 0
        %894 = vmatprep.subr.bf16.mxu0 0
        %895 = vmatpush1.bf16.msra.mxu0 0
        %896 = vmatprep.subr.bf16.mxu0 0
        %897 = vmatpush1.bf16.msra.mxu0 0
        %898 = vmatprep.subr.bf16.mxu0 0
        %899 = vmatpush1.bf16.msra.mxu0 0
        %900 = vmatprep.subr.bf16.mxu0 0
        %901 = vmatpush1.bf16.msra.mxu0 0
        %902 = vmatprep.subr.bf16.mxu0 0
        %903 = vmatpush1.bf16.msra.mxu0 0
        %904 = vmatprep.subr.bf16.mxu0 0
        %905 = vmatpush1.bf16.msra.mxu0 0
        %906 = vmatprep.subr.bf16.mxu0 0
        %907 = vmatpush1.bf16.msra.mxu0 0
        %908 = vmatprep.subr.bf16.mxu0 0
        %909 = vmatpush1.bf16.msra.mxu0 0
        %910 = vmatprep.subr.bf16.mxu0 0
        %911 = vmatpush1.bf16.msra.mxu0 0
        %912 = vmatprep.subr.bf16.mxu0 0
        %913 = vmatpush1.bf16.msra.mxu0 0
        %914 = vmatprep.subr.bf16.mxu0 0
        %915 = vmatpush1.bf16.msra.mxu0 0
        %916 = vmatprep.subr.bf16.mxu0 0
        %917 = vmatpush1.bf16.msra.mxu0 0
        %918 = vmatprep.subr.bf16.mxu0 0
        %919 = vmatpush1.bf16.msra.mxu0 0
        %920 = vmatprep.mubr.bf16.mxu0 0
        %921 = vmatmul.mubr.bf16.gmra.mrb[0].mxu0 %v805
        %v922 = vpop.f32.mrb[0].mxu0
        %v923 = vadd.f32 %v590, %v922
        %v924 = vpop.f32.mrb[0].mxu0
        %v925 = vpop.f32.mrb[0].mxu0
        %v926 = vadd.f32 %v593, %v925
        %v927 = vpop.f32.mrb[0].mxu0
        %928 = vmatprep.mubr.bf16.mxu0 0
        %929 = vmatmul.mubr.bf16.gmra.mrb[0].mxu0 %v808
        %v930 = vpop.f32.mrb[0].mxu0
        %v931 = vadd.f32 %v598, %v930
        %v932 = vpop.f32.mrb[0].mxu0
        %v933 = vpop.f32.mrb[0].mxu0
        %v934 = vadd.f32 %v601, %v933
        %v935 = vpop.f32.mrb[0].mxu0
        %936 = vmatprep.mubr.bf16.mxu0 0
        %937 = vmatmul.mubr.bf16.gmra.mrb[0].mxu0 %v811
        %v938 = vpop.f32.mrb[0].mxu0
        %v939 = vadd.f32 %v606, %v938
        %v940 = vpop.f32.mrb[0].mxu0
        %v941 = vpop.f32.mrb[0].mxu0
        %v942 = vadd.f32 %v609, %v941
        %v943 = vpop.f32.mrb[0].mxu0
        %944 = vmatprep.mubr.bf16.mxu0 0
        %945 = vmatmul.mubr.bf16.gmra.mrb[0].mxu0 %v814
        %v946 = vpop.f32.mrb[0].mxu0
        %v947 = vadd.f32 %v614, %v946
        %v948 = vpop.f32.mrb[0].mxu0
        %v949 = vpop.f32.mrb[0].mxu0
        %v950 = vadd.f32 %v617, %v949
        %v951 = vpop.f32.mrb[0].mxu0
        %952 = vmatprep.mubr.bf16.mxu0 0
        %953 = vmatmul.mubr.bf16.gmra.mrb[0].mxu0 %v817
        %v954 = vpop.f32.mrb[0].mxu0
        %v955 = vadd.f32 %v622, %v954
        %v956 = vpop.f32.mrb[0].mxu0
        %v957 = vpop.f32.mrb[0].mxu0
        %v958 = vadd.f32 %v625, %v957
        %v959 = vpop.f32.mrb[0].mxu0
        %960 = vmatprep.mubr.bf16.mxu0 0
        %961 = vmatmul.mubr.bf16.gmra.mrb[0].mxu0 %v820
        %v962 = vpop.f32.mrb[0].mxu0
        %v963 = vadd.f32 %v630, %v962
        %v964 = vpop.f32.mrb[0].mxu0
        %v965 = vpop.f32.mrb[0].mxu0
        %v966 = vadd.f32 %v633, %v965
        %v967 = vpop.f32.mrb[0].mxu0
        %968 = vmatprep.mubr.bf16.mxu0 0
        %969 = vmatmul.mubr.bf16.gmra.mrb[0].mxu0 %v823
        %v970 = vpop.f32.mrb[0].mxu0
        %v971 = vadd.f32 %v638, %v970
        %v972 = vpop.f32.mrb[0].mxu0
        %v973 = vpop.f32.mrb[0].mxu0
        %v974 = vadd.f32 %v641, %v973
        %v975 = vpop.f32.mrb[0].mxu0
        %976 = vmatprep.mubr.bf16.mxu0 0
        %977 = vmatmul.mubr.bf16.gmra.mrb[0].mxu0 %v826
        %v978 = vpop.f32.mrb[0].mxu0
        %v979 = vadd.f32 %v646, %v978
        %v980 = vpop.f32.mrb[0].mxu0
        %v981 = vpop.f32.mrb[0].mxu0
        %v982 = vadd.f32 %v649, %v981
        %v983 = vpop.f32.mrb[0].mxu0
        %984 = vmatprep.mubr.bf16.mxu0 0
        %985 = vmatmul.mubr.bf16.gmra.mrb[0].mxu0 %v829
        %v986 = vpop.f32.mrb[0].mxu0
        %v987 = vadd.f32 %v654, %v986
        %v988 = vpop.f32.mrb[0].mxu0
        %v989 = vpop.f32.mrb[0].mxu0
        %v990 = vadd.f32 %v657, %v989
        %v991 = vpop.f32.mrb[0].mxu0
        %992 = vmatprep.mubr.bf16.mxu0 0
        %993 = vmatmul.mubr.bf16.gmra.mrb[0].mxu0 %v832
        %v994 = vpop.f32.mrb[0].mxu0
        %v995 = vadd.f32 %v662, %v994
        %v996 = vpop.f32.mrb[0].mxu0
        %v997 = vpop.f32.mrb[0].mxu0
        %v998 = vadd.f32 %v665, %v997
        %v999 = vpop.f32.mrb[0].mxu0
        %1000 = vmatprep.mubr.bf16.mxu0 0
        %1001 = vmatmul.mubr.bf16.gmra.mrb[0].mxu0 %v835
        %v1002 = vpop.f32.mrb[0].mxu0
        %v1003 = vadd.f32 %v670, %v1002
        %v1004 = vpop.f32.mrb[0].mxu0
        %v1005 = vpop.f32.mrb[0].mxu0
        %v1006 = vadd.f32 %v673, %v1005
        %v1007 = vpop.f32.mrb[0].mxu0
        %1008 = vmatprep.mubr.bf16.mxu0 0
        %1009 = vmatmul.mubr.bf16.gmra.mrb[0].mxu0 %v838
        %v1010 = vpop.f32.mrb[0].mxu0
        %v1011 = vadd.f32 %v678, %v1010
        %v1012 = vpop.f32.mrb[0].mxu0
        %v1013 = vpop.f32.mrb[0].mxu0
        %v1014 = vadd.f32 %v681, %v1013
        %v1015 = vpop.f32.mrb[0].mxu0
        %1016 = vmatprep.mubr.bf16.mxu0 0
        %1017 = vmatmul.mubr.bf16.gmra.mrb[0].mxu0 %v841
        %v1018 = vpop.f32.mrb[0].mxu0
        %v1019 = vadd.f32 %v686, %v1018
        %v1020 = vpop.f32.mrb[0].mxu0
        %v1021 = vpop.f32.mrb[0].mxu0
        %v1022 = vadd.f32 %v689, %v1021
        %v1023 = vpop.f32.mrb[0].mxu0
        %1024 = vmatprep.mubr.bf16.mxu0 0
        %1025 = vmatmul.mubr.bf16.gmra.mrb[0].mxu0 %v844
        %v1026 = vpop.f32.mrb[0].mxu0
        %v1027 = vadd.f32 %v694, %v1026
        %v1028 = vpop.f32.mrb[0].mxu0
        %v1029 = vpop.f32.mrb[0].mxu0
        %v1030 = vadd.f32 %v697, %v1029
        %v1031 = vpop.f32.mrb[0].mxu0
        %1032 = vmatprep.mubr.bf16.mxu0 0
        %1033 = vmatmul.mubr.bf16.gmra.mrb[0].mxu0 %v847
        %v1034 = vpop.f32.mrb[0].mxu0
        %v1035 = vadd.f32 %v702, %v1034
        %v1036 = vpop.f32.mrb[0].mxu0
        %v1037 = vpop.f32.mrb[0].mxu0
        %v1038 = vadd.f32 %v705, %v1037
        %v1039 = vpop.f32.mrb[0].mxu0
        %1040 = vmatprep.mubr.bf16.mxu0 0
        %1041 = vmatmul.mubr.bf16.gmra.mrb[0].mxu0 %v850
        %v1042 = vpop.f32.mrb[0].mxu0
        %v1043 = vadd.f32 %v710, %v1042
        %v1044 = vpop.f32.mrb[0].mxu0
        %v1045 = vpop.f32.mrb[0].mxu0
        %v1046 = vadd.f32 %v713, %v1045
        %v1047 = vpop.f32.mrb[0].mxu0
        %1048 = vmatprep.mubr.bf16.mxu0 0
        %1049 = vmatmul.mubr.bf16.gmra.mrb[0].mxu0 %v853
        %v1050 = vpop.f32.mrb[0].mxu0
        %v1051 = vadd.f32 %v718, %v1050
        %v1052 = vpop.f32.mrb[0].mxu0
        %v1053 = vpop.f32.mrb[0].mxu0
        %v1054 = vadd.f32 %v721, %v1053
        %v1055 = vpop.f32.mrb[0].mxu0
        %1056 = vmatprep.mubr.bf16.mxu0 0
        %1057 = vmatmul.mubr.bf16.gmra.mrb[0].mxu0 %v856
        %v1058 = vpop.f32.mrb[0].mxu0
        %v1059 = vadd.f32 %v726, %v1058
        %v1060 = vpop.f32.mrb[0].mxu0
        %v1061 = vpop.f32.mrb[0].mxu0
        %v1062 = vadd.f32 %v729, %v1061
        %v1063 = vpop.f32.mrb[0].mxu0
        %1064 = vmatprep.mubr.bf16.mxu0 0
        %1065 = vmatmul.mubr.bf16.gmra.mrb[0].mxu0 %v859
        %v1066 = vpop.f32.mrb[0].mxu0
        %v1067 = vadd.f32 %v734, %v1066
        %v1068 = vpop.f32.mrb[0].mxu0
        %v1069 = vpop.f32.mrb[0].mxu0
        %v1070 = vadd.f32 %v737, %v1069
        %v1071 = vpop.f32.mrb[0].mxu0
        %1072 = vmatprep.mubr.bf16.mxu0 0
        %1073 = vmatmul.mubr.bf16.gmra.mrb[0].mxu0 %v862
        %v1074 = vpop.f32.mrb[0].mxu0
        %v1075 = vadd.f32 %v742, %v1074
        %v1076 = vpop.f32.mrb[0].mxu0
        %v1077 = vpop.f32.mrb[0].mxu0
        %v1078 = vadd.f32 %v745, %v1077
        %v1079 = vpop.f32.mrb[0].mxu0
        %1080 = vmatprep.mubr.bf16.mxu0 0
        %1081 = vmatmul.mubr.bf16.gmra.mrb[0].mxu0 %v865
        %v1082 = vpop.f32.mrb[0].mxu0
        %v1083 = vadd.f32 %v750, %v1082
        %v1084 = vpop.f32.mrb[0].mxu0
        %v1085 = vpop.f32.mrb[0].mxu0
        %v1086 = vadd.f32 %v753, %v1085
        %v1087 = vpop.f32.mrb[0].mxu0
        %1088 = vmatprep.mubr.bf16.mxu0 0
        %1089 = vmatmul.mubr.bf16.gmra.mrb[0].mxu0 %v868
        %v1090 = vpop.f32.mrb[0].mxu0
        %v1091 = vadd.f32 %v758, %v1090
        %v1092 = vpop.f32.mrb[0].mxu0
        %v1093 = vpop.f32.mrb[0].mxu0
        %v1094 = vadd.f32 %v761, %v1093
        %v1095 = vpop.f32.mrb[0].mxu0
        %1096 = vmatprep.mubr.bf16.mxu0 0
        %1097 = vmatmul.mubr.bf16.gmra.mrb[0].mxu0 %v871
        %v1098 = vpop.f32.mrb[0].mxu0
        %v1099 = vadd.f32 %v766, %v1098
        %v1100 = vpop.f32.mrb[0].mxu0
        %v1101 = vpop.f32.mrb[0].mxu0
        %v1102 = vadd.f32 %v769, %v1101
        %v1103 = vpop.f32.mrb[0].mxu0
        %1104 = vmatprep.mubr.bf16.mxu0 0
        %1105 = vmatmul.mubr.bf16.gmra.mrb[0].mxu0 %v874
        %v1106 = vpop.f32.mrb[0].mxu0
        %v1107 = vadd.f32 %v774, %v1106
        %v1108 = vpop.f32.mrb[0].mxu0
        %v1109 = vpop.f32.mrb[0].mxu0
        %v1110 = vadd.f32 %v777, %v1109
        %v1111 = vpop.f32.mrb[0].mxu0
        %1112 = vmatprep.mubr.bf16.mxu0 0
        %1113 = vmatmul.mubr.bf16.gmra.mrb[0].mxu0 %v877
        %v1114 = vpop.f32.mrb[0].mxu0
        %v1115 = vadd.f32 %v782, %v1114
        %v1116 = vpop.f32.mrb[0].mxu0
        %v1117 = vpop.f32.mrb[0].mxu0
        %v1118 = vadd.f32 %v785, %v1117
        %v1119 = vpop.f32.mrb[0].mxu0
        %1120 = vmatprep.mubr.bf16.mxu0 0
        %1121 = vmatmul.mubr.bf16.gmra.mrb[0].mxu0 %v880
        %v1122 = vpop.f32.mrb[0].mxu0
        %v1123 = vadd.f32 %v790, %v1122
        %v1124 = vpop.f32.mrb[0].mxu0
        %v1125 = vpop.f32.mrb[0].mxu0
        %v1126 = vadd.f32 %v793, %v1125
        %v1127 = vpop.f32.mrb[0].mxu0
        %1128 = vmatprep.mubr.bf16.mxu0 0
        %1129 = vmatmul.mubr.bf16.gmra.mrb[0].mxu0 %v883
        %v1130 = vpop.f32.mrb[0].mxu0
        %v1131 = vadd.f32 %v798, %v1130
        %v1132 = vpop.f32.mrb[0].mxu0
        %v1133 = vpop.f32.mrb[0].mxu0
        %v1134 = vadd.f32 %v801, %v1133
        %v1135 = vpop.f32.mrb[0].mxu0
        %1136 = vdwg.mxu0
        %v1137 = vld [vmem:[%s302 + $0x2] sm:$0xff]
        %v1138 = vld [vmem:[%s302 + $0xa] sm:$0xff]
        %v1139 = vld [vmem:[%s302 + $0x12] sm:$0xff]
        %v1140 = vld [vmem:[%s302 + $0x22] sm:$0xff]
        %v1141 = vld [vmem:[%s302 + $0x2a] sm:$0xff]
        %v1142 = vld [vmem:[%s302 + $0x32] sm:$0xff]
        %v1143 = vld [vmem:[%s302 + $0x42] sm:$0xff]
        %v1144 = vld [vmem:[%s302 + $0x4a] sm:$0xff]
        %v1145 = vld [vmem:[%s302 + $0x52] sm:$0xff]
        %v1146 = vld [vmem:[%s302 + $0x62] sm:$0xff]
        %v1147 = vld [vmem:[%s302 + $0x6a] sm:$0xff]
        %v1148 = vld [vmem:[%s302 + $0x72] sm:$0xff]
        %v1149 = vld [vmem:[%s302 + $0x82] sm:$0xff]
        %v1150 = vld [vmem:[%s302 + $0x8a] sm:$0xff]
        %v1151 = vld [vmem:[%s302 + $0x92] sm:$0xff]
        %v1152 = vld [vmem:[%s302 + $0xa2] sm:$0xff]
        %v1153 = vld [vmem:[%s302 + $0xaa] sm:$0xff]
        %v1154 = vld [vmem:[%s302 + $0xb2] sm:$0xff]
        %v1155 = vld [vmem:[%s302 + $0xc2] sm:$0xff]
        %v1156 = vld [vmem:[%s302 + $0xca] sm:$0xff]
        %v1157 = vld [vmem:[%s302 + $0xd2] sm:$0xff]
        %v1158 = vld [vmem:[%s302 + $0xe2] sm:$0xff]
        %v1159 = vld [vmem:[%s302 + $0xea] sm:$0xff]
        %v1160 = vld [vmem:[%s302 + $0xf2] sm:$0xff]
        %v1161 = vld [vmem:[%s302 + $0x102] sm:$0xff]
        %v1162 = vld [vmem:[%s302 + $0x10a] sm:$0xff]
        %v1163 = vld [vmem:[%s302 + $0x112] sm:$0xff]
        %v1164 = vld [vmem:[%s302 + $0x122] sm:$0xff]
        %v1165 = vld [vmem:[%s302 + $0x12a] sm:$0xff]
        %v1166 = vld [vmem:[%s302 + $0x132] sm:$0xff]
        %v1167 = vld [vmem:[%s302 + $0x142] sm:$0xff]
        %v1168 = vld [vmem:[%s302 + $0x14a] sm:$0xff]
        %v1169 = vld [vmem:[%s302 + $0x152] sm:$0xff]
        %v1170 = vld [vmem:[%s302 + $0x162] sm:$0xff]
        %v1171 = vld [vmem:[%s302 + $0x16a] sm:$0xff]
        %v1172 = vld [vmem:[%s302 + $0x172] sm:$0xff]
        %v1173 = vld [vmem:[%s302 + $0x182] sm:$0xff]
        %v1174 = vld [vmem:[%s302 + $0x18a] sm:$0xff]
        %v1175 = vld [vmem:[%s302 + $0x192] sm:$0xff]
        %v1176 = vld [vmem:[%s302 + $0x1a2] sm:$0xff]
        %v1177 = vld [vmem:[%s302 + $0x1aa] sm:$0xff]
        %v1178 = vld [vmem:[%s302 + $0x1b2] sm:$0xff]
        %v1179 = vld [vmem:[%s302 + $0x1c2] sm:$0xff]
        %v1180 = vld [vmem:[%s302 + $0x1ca] sm:$0xff]
        %v1181 = vld [vmem:[%s302 + $0x1d2] sm:$0xff]
        %v1182 = vld [vmem:[%s302 + $0x1e2] sm:$0xff]
        %v1183 = vld [vmem:[%s302 + $0x1ea] sm:$0xff]
        %v1184 = vld [vmem:[%s302 + $0x1f2] sm:$0xff]
        %v1185 = vld [vmem:[%s302 + $0x202] sm:$0xff]
        %v1186 = vld [vmem:[%s302 + $0x20a] sm:$0xff]
        %v1187 = vld [vmem:[%s302 + $0x212] sm:$0xff]
        %v1188 = vld [vmem:[%s302 + $0x222] sm:$0xff]
        %v1189 = vld [vmem:[%s302 + $0x22a] sm:$0xff]
        %v1190 = vld [vmem:[%s302 + $0x232] sm:$0xff]
        %v1191 = vpack.c.bf16 %v1138, %v1137
        %v1192 = vpack.c.bf16 %v1140, %v1139
        %v1193 = vpack.c.bf16 %v1142, %v1141
        %v1194 = vpack.c.bf16 %v1144, %v1143
        %v1195 = vpack.c.bf16 %v1146, %v1145
        %v1196 = vpack.c.bf16 %v1148, %v1147
        %v1197 = vpack.c.bf16 %v1150, %v1149
        %v1198 = vpack.c.bf16 %v1152, %v1151
        %v1199 = vpack.c.bf16 %v1154, %v1153
        %v1200 = vpack.c.bf16 %v1156, %v1155
        %v1201 = vpack.c.bf16 %v1158, %v1157
        %v1202 = vpack.c.bf16 %v1160, %v1159
        %v1203 = vpack.c.bf16 %v1162, %v1161
        %v1204 = vpack.c.bf16 %v1164, %v1163
        %v1205 = vpack.c.bf16 %v1166, %v1165
        %v1206 = vpack.c.bf16 %v1168, %v1167
        %v1207 = vpack.c.bf16 %v1170, %v1169
        %v1208 = vpack.c.bf16 %v1172, %v1171
        %v1209 = vpack.c.bf16 %v1174, %v1173
        %v1210 = vpack.c.bf16 %v1176, %v1175
        %v1211 = vpack.c.bf16 %v1178, %v1177
        %v1212 = vpack.c.bf16 %v1180, %v1179
        %v1213 = vpack.c.bf16 %v1182, %v1181
        %v1214 = vpack.c.bf16 %v1184, %v1183
        %v1215 = vpack.c.bf16 %v1186, %v1185
        %v1216 = vpack.c.bf16 %v1188, %v1187
        %v1217 = vpack.c.bf16 %v1190, %v1189
        %s1218 = scalar_lea.vmem %s2, 4
        %v1219 = vld [vmem:[%s1218] sm:$0x3]
        %v1221 = vsel %vm469, %v1191, 0
        %v1224 = vsel %vm469, %v1192, 0
        %v1227 = vsel %vm469, %v1193, 0
        %v1230 = vsel %vm469, %v1194, 0
        %v1233 = vsel %vm469, %v1195, 0
        %v1236 = vsel %vm469, %v1196, 0
        %v1239 = vsel %vm469, %v1197, 0
        %v1242 = vsel %vm469, %v1198, 0
        %v1245 = vsel %vm469, %v1199, 0
        %v1248 = vsel %vm469, %v1200, 0
        %v1251 = vsel %vm469, %v1201, 0
        %v1254 = vsel %vm469, %v1202, 0
        %v1257 = vsel %vm469, %v1203, 0
        %v1260 = vsel %vm469, %v1204, 0
        %v1263 = vsel %vm469, %v1205, 0
        %v1266 = vsel %vm469, %v1206, 0
        %v1269 = vsel %vm469, %v1207, 0
        %v1272 = vsel %vm469, %v1208, 0
        %v1275 = vsel %vm469, %v1209, 0
        %v1278 = vsel %vm469, %v1210, 0
        %v1281 = vsel %vm469, %v1211, 0
        %v1284 = vsel %vm469, %v1212, 0
        %v1287 = vsel %vm469, %v1213, 0
        %v1290 = vsel %vm469, %v1214, 0
        %v1293 = vsel %vm469, %v1215, 0
        %v1296 = vsel %vm469, %v1216, 0
        %v1299 = vsel %vm469, %v1217, 0
        %v1302 = vsel %vm551, %v1219, 0
        %1304 = vmatprep.subr.bf16.mxu0 0
        %1305 = vmatpush1.bf16.msra.mxu0 %v1302
        %1306 = vmatprep.subr.bf16.mxu0 0
        %1307 = vmatpush1.bf16.msra.mxu0 0
        %1308 = vmatprep.subr.bf16.mxu0 0
        %1309 = vmatpush1.bf16.msra.mxu0 0
        %1310 = vmatprep.subr.bf16.mxu0 0
        %1311 = vmatpush1.bf16.msra.mxu0 0
        %1312 = vmatprep.subr.bf16.mxu0 0
        %1313 = vmatpush1.bf16.msra.mxu0 0
        %1314 = vmatprep.subr.bf16.mxu0 0
        %1315 = vmatpush1.bf16.msra.mxu0 0
        %1316 = vmatprep.subr.bf16.mxu0 0
        %1317 = vmatpush1.bf16.msra.mxu0 0
        %1318 = vmatprep.subr.bf16.mxu0 0
        %1319 = vmatpush1.bf16.msra.mxu0 0
        %1320 = vmatprep.subr.bf16.mxu0 0
        %1321 = vmatpush1.bf16.msra.mxu0 0
        %1322 = vmatprep.subr.bf16.mxu0 0
        %1323 = vmatpush1.bf16.msra.mxu0 0
        %1324 = vmatprep.subr.bf16.mxu0 0
        %1325 = vmatpush1.bf16.msra.mxu0 0
        %1326 = vmatprep.subr.bf16.mxu0 0
        %1327 = vmatpush1.bf16.msra.mxu0 0
        %1328 = vmatprep.subr.bf16.mxu0 0
        %1329 = vmatpush1.bf16.msra.mxu0 0
        %1330 = vmatprep.subr.bf16.mxu0 0
        %1331 = vmatpush1.bf16.msra.mxu0 0
        %1332 = vmatprep.subr.bf16.mxu0 0
        %1333 = vmatpush1.bf16.msra.mxu0 0
        %1334 = vmatprep.subr.bf16.mxu0 0
        %1335 = vmatpush1.bf16.msra.mxu0 0
        %1336 = vmatprep.mubr.bf16.mxu0 0
        %1337 = vmatmul.mubr.bf16.gmra.mrb[0].mxu0 %v1221
        %v1338 = vpop.f32.mrb[0].mxu0
        %v1339 = vadd.f32 0.0, %v1338
        %v1340 = vpop.f32.mrb[0].mxu0
        %v1341 = vpop.f32.mrb[0].mxu0
        %v1342 = vadd.f32 0.0, %v1341
        %v1343 = vpop.f32.mrb[0].mxu0
        %1344 = vmatprep.mubr.bf16.mxu0 0
        %1345 = vmatmul.mubr.bf16.gmra.mrb[0].mxu0 %v1224
        %v1346 = vpop.f32.mrb[0].mxu0
        %v1347 = vadd.f32 0.0, %v1346
        %v1348 = vpop.f32.mrb[0].mxu0
        %v1349 = vpop.f32.mrb[0].mxu0
        %v1350 = vadd.f32 0.0, %v1349
        %v1351 = vpop.f32.mrb[0].mxu0
        %1352 = vmatprep.mubr.bf16.mxu0 0
        %1353 = vmatmul.mubr.bf16.gmra.mrb[0].mxu0 %v1227
        %v1354 = vpop.f32.mrb[0].mxu0
        %v1355 = vadd.f32 0.0, %v1354
        %v1356 = vpop.f32.mrb[0].mxu0
        %v1357 = vpop.f32.mrb[0].mxu0
        %v1358 = vadd.f32 0.0, %v1357
        %v1359 = vpop.f32.mrb[0].mxu0
        %1360 = vmatprep.mubr.bf16.mxu0 0
        %1361 = vmatmul.mubr.bf16.gmra.mrb[0].mxu0 %v1230
        %v1362 = vpop.f32.mrb[0].mxu0
        %v1363 = vadd.f32 0.0, %v1362
        %v1364 = vpop.f32.mrb[0].mxu0
        %v1365 = vpop.f32.mrb[0].mxu0
        %v1366 = vadd.f32 0.0, %v1365
        %v1367 = vpop.f32.mrb[0].mxu0
        %1368 = vmatprep.mubr.bf16.mxu0 0
        %1369 = vmatmul.mubr.bf16.gmra.mrb[0].mxu0 %v1233
        %v1370 = vpop.f32.mrb[0].mxu0
        %v1371 = vadd.f32 0.0, %v1370
        %v1372 = vpop.f32.mrb[0].mxu0
        %v1373 = vpop.f32.mrb[0].mxu0
        %v1374 = vadd.f32 0.0, %v1373
        %v1375 = vpop.f32.mrb[0].mxu0
        %1376 = vmatprep.mubr.bf16.mxu0 0
        %1377 = vmatmul.mubr.bf16.gmra.mrb[0].mxu0 %v1236
        %v1378 = vpop.f32.mrb[0].mxu0
        %v1379 = vadd.f32 0.0, %v1378
        %v1380 = vpop.f32.mrb[0].mxu0
        %v1381 = vpop.f32.mrb[0].mxu0
        %v1382 = vadd.f32 0.0, %v1381
        %v1383 = vpop.f32.mrb[0].mxu0
        %1384 = vmatprep.mubr.bf16.mxu0 0
        %1385 = vmatmul.mubr.bf16.gmra.mrb[0].mxu0 %v1239
        %v1386 = vpop.f32.mrb[0].mxu0
        %v1387 = vadd.f32 0.0, %v1386
        %v1388 = vpop.f32.mrb[0].mxu0
        %v1389 = vpop.f32.mrb[0].mxu0
        %v1390 = vadd.f32 0.0, %v1389
        %v1391 = vpop.f32.mrb[0].mxu0
        %1392 = vmatprep.mubr.bf16.mxu0 0
        %1393 = vmatmul.mubr.bf16.gmra.mrb[0].mxu0 %v1242
        %v1394 = vpop.f32.mrb[0].mxu0
        %v1395 = vadd.f32 0.0, %v1394
        %v1396 = vpop.f32.mrb[0].mxu0
        %v1397 = vpop.f32.mrb[0].mxu0
        %v1398 = vadd.f32 0.0, %v1397
        %v1399 = vpop.f32.mrb[0].mxu0
        %1400 = vmatprep.mubr.bf16.mxu0 0
        %1401 = vmatmul.mubr.bf16.gmra.mrb[0].mxu0 %v1245
        %v1402 = vpop.f32.mrb[0].mxu0
        %v1403 = vadd.f32 0.0, %v1402
        %v1404 = vpop.f32.mrb[0].mxu0
        %v1405 = vpop.f32.mrb[0].mxu0
        %v1406 = vadd.f32 0.0, %v1405
        %v1407 = vpop.f32.mrb[0].mxu0
        %1408 = vmatprep.mubr.bf16.mxu0 0
        %1409 = vmatmul.mubr.bf16.gmra.mrb[0].mxu0 %v1248
        %v1410 = vpop.f32.mrb[0].mxu0
        %v1411 = vadd.f32 0.0, %v1410
        %v1412 = vpop.f32.mrb[0].mxu0
        %v1413 = vpop.f32.mrb[0].mxu0
        %v1414 = vadd.f32 0.0, %v1413
        %v1415 = vpop.f32.mrb[0].mxu0
        %1416 = vmatprep.mubr.bf16.mxu0 0
        %1417 = vmatmul.mubr.bf16.gmra.mrb[0].mxu0 %v1251
        %v1418 = vpop.f32.mrb[0].mxu0
        %v1419 = vadd.f32 0.0, %v1418
        %v1420 = vpop.f32.mrb[0].mxu0
        %v1421 = vpop.f32.mrb[0].mxu0
        %v1422 = vadd.f32 0.0, %v1421
        %v1423 = vpop.f32.mrb[0].mxu0
        %1424 = vmatprep.mubr.bf16.mxu0 0
        %1425 = vmatmul.mubr.bf16.gmra.mrb[0].mxu0 %v1254
        %v1426 = vpop.f32.mrb[0].mxu0
        %v1427 = vadd.f32 0.0, %v1426
        %v1428 = vpop.f32.mrb[0].mxu0
        %v1429 = vpop.f32.mrb[0].mxu0
        %v1430 = vadd.f32 0.0, %v1429
        %v1431 = vpop.f32.mrb[0].mxu0
        %1432 = vmatprep.mubr.bf16.mxu0 0
        %1433 = vmatmul.mubr.bf16.gmra.mrb[0].mxu0 %v1257
        %v1434 = vpop.f32.mrb[0].mxu0
        %v1435 = vadd.f32 0.0, %v1434
        %v1436 = vpop.f32.mrb[0].mxu0
        %v1437 = vpop.f32.mrb[0].mxu0
        %v1438 = vadd.f32 0.0, %v1437
        %v1439 = vpop.f32.mrb[0].mxu0
        %1440 = vmatprep.mubr.bf16.mxu0 0
        %1441 = vmatmul.mubr.bf16.gmra.mrb[0].mxu0 %v1260
        %v1442 = vpop.f32.mrb[0].mxu0
        %v1443 = vadd.f32 0.0, %v1442
        %v1444 = vpop.f32.mrb[0].mxu0
        %v1445 = vpop.f32.mrb[0].mxu0
        %v1446 = vadd.f32 0.0, %v1445
        %v1447 = vpop.f32.mrb[0].mxu0
        %1448 = vmatprep.mubr.bf16.mxu0 0
        %1449 = vmatmul.mubr.bf16.gmra.mrb[0].mxu0 %v1263
        %v1450 = vpop.f32.mrb[0].mxu0
        %v1451 = vadd.f32 0.0, %v1450
        %v1452 = vpop.f32.mrb[0].mxu0
        %v1453 = vpop.f32.mrb[0].mxu0
        %v1454 = vadd.f32 0.0, %v1453
        %v1455 = vpop.f32.mrb[0].mxu0
        %1456 = vmatprep.mubr.bf16.mxu0 0
        %1457 = vmatmul.mubr.bf16.gmra.mrb[0].mxu0 %v1266
        %v1458 = vpop.f32.mrb[0].mxu0
        %v1459 = vadd.f32 0.0, %v1458
        %v1460 = vpop.f32.mrb[0].mxu0
        %v1461 = vpop.f32.mrb[0].mxu0
        %v1462 = vadd.f32 0.0, %v1461
        %v1463 = vpop.f32.mrb[0].mxu0
        %1464 = vmatprep.mubr.bf16.mxu0 0
        %1465 = vmatmul.mubr.bf16.gmra.mrb[0].mxu0 %v1269
        %v1466 = vpop.f32.mrb[0].mxu0
        %v1467 = vadd.f32 0.0, %v1466
        %v1468 = vpop.f32.mrb[0].mxu0
        %v1469 = vpop.f32.mrb[0].mxu0
        %v1470 = vadd.f32 0.0, %v1469
        %v1471 = vpop.f32.mrb[0].mxu0
        %1472 = vmatprep.mubr.bf16.mxu0 0
        %1473 = vmatmul.mubr.bf16.gmra.mrb[0].mxu0 %v1272
        %v1474 = vpop.f32.mrb[0].mxu0
        %v1475 = vadd.f32 0.0, %v1474
        %v1476 = vpop.f32.mrb[0].mxu0
        %v1477 = vpop.f32.mrb[0].mxu0
        %v1478 = vadd.f32 0.0, %v1477
        %v1479 = vpop.f32.mrb[0].mxu0
        %1480 = vmatprep.mubr.bf16.mxu0 0
        %1481 = vmatmul.mubr.bf16.gmra.mrb[0].mxu0 %v1275
        %v1482 = vpop.f32.mrb[0].mxu0
        %v1483 = vadd.f32 0.0, %v1482
        %v1484 = vpop.f32.mrb[0].mxu0
        %v1485 = vpop.f32.mrb[0].mxu0
        %v1486 = vadd.f32 0.0, %v1485
        %v1487 = vpop.f32.mrb[0].mxu0
        %1488 = vmatprep.mubr.bf16.mxu0 0
        %1489 = vmatmul.mubr.bf16.gmra.mrb[0].mxu0 %v1278
        %v1490 = vpop.f32.mrb[0].mxu0
        %v1491 = vadd.f32 0.0, %v1490
        %v1492 = vpop.f32.mrb[0].mxu0
        %v1493 = vpop.f32.mrb[0].mxu0
        %v1494 = vadd.f32 0.0, %v1493
        %v1495 = vpop.f32.mrb[0].mxu0
        %1496 = vmatprep.mubr.bf16.mxu0 0
        %1497 = vmatmul.mubr.bf16.gmra.mrb[0].mxu0 %v1281
        %v1498 = vpop.f32.mrb[0].mxu0
        %v1499 = vadd.f32 0.0, %v1498
        %v1500 = vpop.f32.mrb[0].mxu0
        %v1501 = vpop.f32.mrb[0].mxu0
        %v1502 = vadd.f32 0.0, %v1501
        %v1503 = vpop.f32.mrb[0].mxu0
        %1504 = vmatprep.mubr.bf16.mxu0 0
        %1505 = vmatmul.mubr.bf16.gmra.mrb[0].mxu0 %v1284
        %v1506 = vpop.f32.mrb[0].mxu0
        %v1507 = vadd.f32 0.0, %v1506
        %v1508 = vpop.f32.mrb[0].mxu0
        %v1509 = vpop.f32.mrb[0].mxu0
        %v1510 = vadd.f32 0.0, %v1509
        %v1511 = vpop.f32.mrb[0].mxu0
        %1512 = vmatprep.mubr.bf16.mxu0 0
        %1513 = vmatmul.mubr.bf16.gmra.mrb[0].mxu0 %v1287
        %v1514 = vpop.f32.mrb[0].mxu0
        %v1515 = vadd.f32 0.0, %v1514
        %v1516 = vpop.f32.mrb[0].mxu0
        %v1517 = vpop.f32.mrb[0].mxu0
        %v1518 = vadd.f32 0.0, %v1517
        %v1519 = vpop.f32.mrb[0].mxu0
        %1520 = vmatprep.mubr.bf16.mxu0 0
        %1521 = vmatmul.mubr.bf16.gmra.mrb[0].mxu0 %v1290
        %v1522 = vpop.f32.mrb[0].mxu0
        %v1523 = vadd.f32 0.0, %v1522
        %v1524 = vpop.f32.mrb[0].mxu0
        %v1525 = vpop.f32.mrb[0].mxu0
        %v1526 = vadd.f32 0.0, %v1525
        %v1527 = vpop.f32.mrb[0].mxu0
        %1528 = vmatprep.mubr.bf16.mxu0 0
        %1529 = vmatmul.mubr.bf16.gmra.mrb[0].mxu0 %v1293
        %v1530 = vpop.f32.mrb[0].mxu0
        %v1531 = vadd.f32 0.0, %v1530
        %v1532 = vpop.f32.mrb[0].mxu0
        %v1533 = vpop.f32.mrb[0].mxu0
        %v1534 = vadd.f32 0.0, %v1533
        %v1535 = vpop.f32.mrb[0].mxu0
        %1536 = vmatprep.mubr.bf16.mxu0 0
        %1537 = vmatmul.mubr.bf16.gmra.mrb[0].mxu0 %v1296
        %v1538 = vpop.f32.mrb[0].mxu0
        %v1539 = vadd.f32 0.0, %v1538
        %v1540 = vpop.f32.mrb[0].mxu0
        %v1541 = vpop.f32.mrb[0].mxu0
        %v1542 = vadd.f32 0.0, %v1541
        %v1543 = vpop.f32.mrb[0].mxu0
        %1544 = vmatprep.mubr.bf16.mxu0 0
        %1545 = vmatmul.mubr.bf16.gmra.mrb[0].mxu0 %v1299
        %v1546 = vpop.f32.mrb[0].mxu0
        %v1547 = vadd.f32 0.0, %v1546
        %v1548 = vpop.f32.mrb[0].mxu0
        %v1549 = vpop.f32.mrb[0].mxu0
        %v1550 = vadd.f32 0.0, %v1549
        %v1551 = vpop.f32.mrb[0].mxu0
        %1552 = vdwg.mxu0
        %v1553 = vadd.f32 %v923, %v1339
        %v1554 = vadd.f32 %v926, %v1342
        %v1555 = vadd.f32 %v931, %v1347
        %v1556 = vadd.f32 %v934, %v1350
        %v1557 = vadd.f32 %v939, %v1355
        %v1558 = vadd.f32 %v942, %v1358
        %v1559 = vadd.f32 %v947, %v1363
        %v1560 = vadd.f32 %v950, %v1366
        %v1561 = vadd.f32 %v955, %v1371
        %v1562 = vadd.f32 %v958, %v1374
        %v1563 = vadd.f32 %v963, %v1379
        %v1564 = vadd.f32 %v966, %v1382
        %v1565 = vadd.f32 %v971, %v1387
        %v1566 = vadd.f32 %v974, %v1390
        %v1567 = vadd.f32 %v979, %v1395
        %v1568 = vadd.f32 %v982, %v1398
        %v1569 = vadd.f32 %v987, %v1403
        %v1570 = vadd.f32 %v990, %v1406
        %v1571 = vadd.f32 %v995, %v1411
        %v1572 = vadd.f32 %v998, %v1414
        %v1573 = vadd.f32 %v1003, %v1419
        %v1574 = vadd.f32 %v1006, %v1422
        %v1575 = vadd.f32 %v1011, %v1427
        %v1576 = vadd.f32 %v1014, %v1430
        %v1577 = vadd.f32 %v1019, %v1435
        %v1578 = vadd.f32 %v1022, %v1438
        %v1579 = vadd.f32 %v1027, %v1443
        %v1580 = vadd.f32 %v1030, %v1446
        %v1581 = vadd.f32 %v1035, %v1451
        %v1582 = vadd.f32 %v1038, %v1454
        %v1583 = vadd.f32 %v1043, %v1459
        %v1584 = vadd.f32 %v1046, %v1462
        %v1585 = vadd.f32 %v1051, %v1467
        %v1586 = vadd.f32 %v1054, %v1470
        %v1587 = vadd.f32 %v1059, %v1475
        %v1588 = vadd.f32 %v1062, %v1478
        %v1589 = vadd.f32 %v1067, %v1483
        %v1590 = vadd.f32 %v1070, %v1486
        %v1591 = vadd.f32 %v1075, %v1491
        %v1592 = vadd.f32 %v1078, %v1494
        %v1593 = vadd.f32 %v1083, %v1499
        %v1594 = vadd.f32 %v1086, %v1502
        %v1595 = vadd.f32 %v1091, %v1507
        %v1596 = vadd.f32 %v1094, %v1510
        %v1597 = vadd.f32 %v1099, %v1515
        %v1598 = vadd.f32 %v1102, %v1518
        %v1599 = vadd.f32 %v1107, %v1523
        %v1600 = vadd.f32 %v1110, %v1526
        %v1601 = vadd.f32 %v1115, %v1531
        %v1602 = vadd.f32 %v1118, %v1534
        %v1603 = vadd.f32 %v1123, %v1539
        %v1604 = vadd.f32 %v1126, %v1542
        %v1605 = vadd.f32 %v1131, %v1547
        %v1606 = vadd.f32 %v1134, %v1550
        %s1607 = scalar_lea.vmem %s302, 32
        %v1608 = vld [vmem:[%s1607] sm:$0xff]
        %v1609 = vld [vmem:[%s1607 + $0x8] sm:$0xff]
        %v1610 = vld [vmem:[%s1607 + $0x10] sm:$0xff]
        %v1611 = vld [vmem:[%s1607 + $0x20] sm:$0xff]
        %v1612 = vld [vmem:[%s1607 + $0x28] sm:$0xff]
        %v1613 = vld [vmem:[%s1607 + $0x30] sm:$0xff]
        %v1614 = vld [vmem:[%s1607 + $0x40] sm:$0xff]
        %v1615 = vld [vmem:[%s1607 + $0x48] sm:$0xff]
        %v1616 = vld [vmem:[%s1607 + $0x50] sm:$0xff]
        %v1617 = vld [vmem:[%s1607 + $0x60] sm:$0xff]
        %v1618 = vld [vmem:[%s1607 + $0x68] sm:$0xff]
        %v1619 = vld [vmem:[%s1607 + $0x70] sm:$0xff]
        %v1620 = vld [vmem:[%s1607 + $0x80] sm:$0xff]
        %v1621 = vld [vmem:[%s1607 + $0x88] sm:$0xff]
        %v1622 = vld [vmem:[%s1607 + $0x90] sm:$0xff]
        %v1623 = vld [vmem:[%s1607 + $0xa0] sm:$0xff]
        %v1624 = vld [vmem:[%s1607 + $0xa8] sm:$0xff]
        %v1625 = vld [vmem:[%s1607 + $0xb0] sm:$0xff]
        %v1626 = vld [vmem:[%s1607 + $0xc0] sm:$0xff]
        %v1627 = vld [vmem:[%s1607 + $0xc8] sm:$0xff]
        %v1628 = vld [vmem:[%s1607 + $0xd0] sm:$0xff]
        %v1629 = vld [vmem:[%s1607 + $0xe0] sm:$0xff]
        %v1630 = vld [vmem:[%s1607 + $0xe8] sm:$0xff]
        %v1631 = vld [vmem:[%s1607 + $0xf0] sm:$0xff]
        %v1632 = vld [vmem:[%s1607 + $0x100] sm:$0xff]
        %v1633 = vld [vmem:[%s1607 + $0x108] sm:$0xff]
        %v1634 = vld [vmem:[%s1607 + $0x110] sm:$0xff]
        %v1635 = vld [vmem:[%s1607 + $0x120] sm:$0xff]
        %v1636 = vld [vmem:[%s1607 + $0x128] sm:$0xff]
        %v1637 = vld [vmem:[%s1607 + $0x130] sm:$0xff]
        %v1638 = vld [vmem:[%s1607 + $0x140] sm:$0xff]
        %v1639 = vld [vmem:[%s1607 + $0x148] sm:$0xff]
        %v1640 = vld [vmem:[%s1607 + $0x150] sm:$0xff]
        %v1641 = vld [vmem:[%s1607 + $0x160] sm:$0xff]
        %v1642 = vld [vmem:[%s1607 + $0x168] sm:$0xff]
        %v1643 = vld [vmem:[%s1607 + $0x170] sm:$0xff]
        %v1644 = vld [vmem:[%s1607 + $0x180] sm:$0xff]
        %v1645 = vld [vmem:[%s1607 + $0x188] sm:$0xff]
        %v1646 = vld [vmem:[%s1607 + $0x190] sm:$0xff]
        %v1647 = vld [vmem:[%s1607 + $0x1a0] sm:$0xff]
        %v1648 = vld [vmem:[%s1607 + $0x1a8] sm:$0xff]
        %v1649 = vld [vmem:[%s1607 + $0x1b0] sm:$0xff]
        %v1650 = vld [vmem:[%s1607 + $0x1c0] sm:$0xff]
        %v1651 = vld [vmem:[%s1607 + $0x1c8] sm:$0xff]
        %v1652 = vld [vmem:[%s1607 + $0x1d0] sm:$0xff]
        %v1653 = vld [vmem:[%s1607 + $0x1e0] sm:$0xff]
        %v1654 = vld [vmem:[%s1607 + $0x1e8] sm:$0xff]
        %v1655 = vld [vmem:[%s1607 + $0x1f0] sm:$0xff]
        %v1656 = vld [vmem:[%s1607 + $0x200] sm:$0xff]
        %v1657 = vld [vmem:[%s1607 + $0x208] sm:$0xff]
        %v1658 = vld [vmem:[%s1607 + $0x210] sm:$0xff]
        %v1659 = vld [vmem:[%s1607 + $0x220] sm:$0xff]
        %v1660 = vld [vmem:[%s1607 + $0x228] sm:$0xff]
        %v1661 = vld [vmem:[%s1607 + $0x230] sm:$0xff]
        %v1662 = vpack.c.bf16 %v1609, %v1608
        %v1663 = vpack.c.bf16 %v1611, %v1610
        %v1664 = vpack.c.bf16 %v1613, %v1612
        %v1665 = vpack.c.bf16 %v1615, %v1614
        %v1666 = vpack.c.bf16 %v1617, %v1616
        %v1667 = vpack.c.bf16 %v1619, %v1618
        %v1668 = vpack.c.bf16 %v1621, %v1620
        %v1669 = vpack.c.bf16 %v1623, %v1622
        %v1670 = vpack.c.bf16 %v1625, %v1624
        %v1671 = vpack.c.bf16 %v1627, %v1626
        %v1672 = vpack.c.bf16 %v1629, %v1628
        %v1673 = vpack.c.bf16 %v1631, %v1630
        %v1674 = vpack.c.bf16 %v1633, %v1632
        %v1675 = vpack.c.bf16 %v1635, %v1634
        %v1676 = vpack.c.bf16 %v1637, %v1636
        %v1677 = vpack.c.bf16 %v1639, %v1638
        %v1678 = vpack.c.bf16 %v1641, %v1640
        %v1679 = vpack.c.bf16 %v1643, %v1642
        %v1680 = vpack.c.bf16 %v1645, %v1644
        %v1681 = vpack.c.bf16 %v1647, %v1646
        %v1682 = vpack.c.bf16 %v1649, %v1648
        %v1683 = vpack.c.bf16 %v1651, %v1650
        %v1684 = vpack.c.bf16 %v1653, %v1652
        %v1685 = vpack.c.bf16 %v1655, %v1654
        %v1686 = vpack.c.bf16 %v1657, %v1656
        %v1687 = vpack.c.bf16 %v1659, %v1658
        %v1688 = vpack.c.bf16 %v1661, %v1660
        %s1689 = scalar_lea.vmem %s2, 6
        %v1690 = vld [vmem:[%s1689] sm:$0x3]
        %v1692 = vsel %vm469, %v1662, 0
        %v1695 = vsel %vm469, %v1663, 0
        %v1698 = vsel %vm469, %v1664, 0
        %v1701 = vsel %vm469, %v1665, 0
        %v1704 = vsel %vm469, %v1666, 0
        %v1707 = vsel %vm469, %v1667, 0
        %v1710 = vsel %vm469, %v1668, 0
        %v1713 = vsel %vm469, %v1669, 0
        %v1716 = vsel %vm469, %v1670, 0
        %v1719 = vsel %vm469, %v1671, 0
        %v1722 = vsel %vm469, %v1672, 0
        %v1725 = vsel %vm469, %v1673, 0
        %v1728 = vsel %vm469, %v1674, 0
        %v1731 = vsel %vm469, %v1675, 0
        %v1734 = vsel %vm469, %v1676, 0
        %v1737 = vsel %vm469, %v1677, 0
        %v1740 = vsel %vm469, %v1678, 0
        %v1743 = vsel %vm469, %v1679, 0
        %v1746 = vsel %vm469, %v1680, 0
        %v1749 = vsel %vm469, %v1681, 0
        %v1752 = vsel %vm469, %v1682, 0
        %v1755 = vsel %vm469, %v1683, 0
        %v1758 = vsel %vm469, %v1684, 0
        %v1761 = vsel %vm469, %v1685, 0
        %v1764 = vsel %vm469, %v1686, 0
        %v1767 = vsel %vm469, %v1687, 0
        %v1770 = vsel %vm469, %v1688, 0
        %v1773 = vsel %vm551, %v1690, 0
        %1775 = vmatprep.subr.bf16.mxu0 0
        %1776 = vmatpush1.bf16.msra.mxu0 %v1773
        %1777 = vmatprep.subr.bf16.mxu0 0
        %1778 = vmatpush1.bf16.msra.mxu0 0
        %1779 = vmatprep.subr.bf16.mxu0 0
        %1780 = vmatpush1.bf16.msra.mxu0 0
        %1781 = vmatprep.subr.bf16.mxu0 0
        %1782 = vmatpush1.bf16.msra.mxu0 0
        %1783 = vmatprep.subr.bf16.mxu0 0
        %1784 = vmatpush1.bf16.msra.mxu0 0
        %1785 = vmatprep.subr.bf16.mxu0 0
        %1786 = vmatpush1.bf16.msra.mxu0 0
        %1787 = vmatprep.subr.bf16.mxu0 0
        %1788 = vmatpush1.bf16.msra.mxu0 0
        %1789 = vmatprep.subr.bf16.mxu0 0
        %1790 = vmatpush1.bf16.msra.mxu0 0
        %1791 = vmatprep.subr.bf16.mxu0 0
        %1792 = vmatpush1.bf16.msra.mxu0 0
        %1793 = vmatprep.subr.bf16.mxu0 0
        %1794 = vmatpush1.bf16.msra.mxu0 0
        %1795 = vmatprep.subr.bf16.mxu0 0
        %1796 = vmatpush1.bf16.msra.mxu0 0
        %1797 = vmatprep.subr.bf16.mxu0 0
        %1798 = vmatpush1.bf16.msra.mxu0 0
        %1799 = vmatprep.subr.bf16.mxu0 0
        %1800 = vmatpush1.bf16.msra.mxu0 0
        %1801 = vmatprep.subr.bf16.mxu0 0
        %1802 = vmatpush1.bf16.msra.mxu0 0
        %1803 = vmatprep.subr.bf16.mxu0 0
        %1804 = vmatpush1.bf16.msra.mxu0 0
        %1805 = vmatprep.subr.bf16.mxu0 0
        %1806 = vmatpush1.bf16.msra.mxu0 0
        %1807 = vmatprep.mubr.bf16.mxu0 0
        %1808 = vmatmul.mubr.bf16.gmra.mrb[0].mxu0 %v1692
        %v1809 = vpop.f32.mrb[0].mxu0
        %v1810 = vadd.f32 0.0, %v1809
        %v1811 = vpop.f32.mrb[0].mxu0
        %v1812 = vpop.f32.mrb[0].mxu0
        %v1813 = vadd.f32 0.0, %v1812
        %v1814 = vpop.f32.mrb[0].mxu0
        %1815 = vmatprep.mubr.bf16.mxu0 0
        %1816 = vmatmul.mubr.bf16.gmra.mrb[0].mxu0 %v1695
        %v1817 = vpop.f32.mrb[0].mxu0
        %v1818 = vadd.f32 0.0, %v1817
        %v1819 = vpop.f32.mrb[0].mxu0
        %v1820 = vpop.f32.mrb[0].mxu0
        %v1821 = vadd.f32 0.0, %v1820
        %v1822 = vpop.f32.mrb[0].mxu0
        %1823 = vmatprep.mubr.bf16.mxu0 0
        %1824 = vmatmul.mubr.bf16.gmra.mrb[0].mxu0 %v1698
        %v1825 = vpop.f32.mrb[0].mxu0
        %v1826 = vadd.f32 0.0, %v1825
        %v1827 = vpop.f32.mrb[0].mxu0
        %v1828 = vpop.f32.mrb[0].mxu0
        %v1829 = vadd.f32 0.0, %v1828
        %v1830 = vpop.f32.mrb[0].mxu0
        %1831 = vmatprep.mubr.bf16.mxu0 0
        %1832 = vmatmul.mubr.bf16.gmra.mrb[0].mxu0 %v1701
        %v1833 = vpop.f32.mrb[0].mxu0
        %v1834 = vadd.f32 0.0, %v1833
        %v1835 = vpop.f32.mrb[0].mxu0
        %v1836 = vpop.f32.mrb[0].mxu0
        %v1837 = vadd.f32 0.0, %v1836
        %v1838 = vpop.f32.mrb[0].mxu0
        %1839 = vmatprep.mubr.bf16.mxu0 0
        %1840 = vmatmul.mubr.bf16.gmra.mrb[0].mxu0 %v1704
        %v1841 = vpop.f32.mrb[0].mxu0
        %v1842 = vadd.f32 0.0, %v1841
        %v1843 = vpop.f32.mrb[0].mxu0
        %v1844 = vpop.f32.mrb[0].mxu0
        %v1845 = vadd.f32 0.0, %v1844
        %v1846 = vpop.f32.mrb[0].mxu0
        %1847 = vmatprep.mubr.bf16.mxu0 0
        %1848 = vmatmul.mubr.bf16.gmra.mrb[0].mxu0 %v1707
        %v1849 = vpop.f32.mrb[0].mxu0
        %v1850 = vadd.f32 0.0, %v1849
        %v1851 = vpop.f32.mrb[0].mxu0
        %v1852 = vpop.f32.mrb[0].mxu0
        %v1853 = vadd.f32 0.0, %v1852
        %v1854 = vpop.f32.mrb[0].mxu0
        %1855 = vmatprep.mubr.bf16.mxu0 0
        %1856 = vmatmul.mubr.bf16.gmra.mrb[0].mxu0 %v1710
        %v1857 = vpop.f32.mrb[0].mxu0
        %v1858 = vadd.f32 0.0, %v1857
        %v1859 = vpop.f32.mrb[0].mxu0
        %v1860 = vpop.f32.mrb[0].mxu0
        %v1861 = vadd.f32 0.0, %v1860
        %v1862 = vpop.f32.mrb[0].mxu0
        %1863 = vmatprep.mubr.bf16.mxu0 0
        %1864 = vmatmul.mubr.bf16.gmra.mrb[0].mxu0 %v1713
        %v1865 = vpop.f32.mrb[0].mxu0
        %v1866 = vadd.f32 0.0, %v1865
        %v1867 = vpop.f32.mrb[0].mxu0
        %v1868 = vpop.f32.mrb[0].mxu0
        %v1869 = vadd.f32 0.0, %v1868
        %v1870 = vpop.f32.mrb[0].mxu0
        %1871 = vmatprep.mubr.bf16.mxu0 0
        %1872 = vmatmul.mubr.bf16.gmra.mrb[0].mxu0 %v1716
        %v1873 = vpop.f32.mrb[0].mxu0
        %v1874 = vadd.f32 0.0, %v1873
        %v1875 = vpop.f32.mrb[0].mxu0
        %v1876 = vpop.f32.mrb[0].mxu0
        %v1877 = vadd.f32 0.0, %v1876
        %v1878 = vpop.f32.mrb[0].mxu0
        %1879 = vmatprep.mubr.bf16.mxu0 0
        %1880 = vmatmul.mubr.bf16.gmra.mrb[0].mxu0 %v1719
        %v1881 = vpop.f32.mrb[0].mxu0
        %v1882 = vadd.f32 0.0, %v1881
        %v1883 = vpop.f32.mrb[0].mxu0
        %v1884 = vpop.f32.mrb[0].mxu0
        %v1885 = vadd.f32 0.0, %v1884
        %v1886 = vpop.f32.mrb[0].mxu0
        %1887 = vmatprep.mubr.bf16.mxu0 0
        %1888 = vmatmul.mubr.bf16.gmra.mrb[0].mxu0 %v1722
        %v1889 = vpop.f32.mrb[0].mxu0
        %v1890 = vadd.f32 0.0, %v1889
        %v1891 = vpop.f32.mrb[0].mxu0
        %v1892 = vpop.f32.mrb[0].mxu0
        %v1893 = vadd.f32 0.0, %v1892
        %v1894 = vpop.f32.mrb[0].mxu0
        %1895 = vmatprep.mubr.bf16.mxu0 0
        %1896 = vmatmul.mubr.bf16.gmra.mrb[0].mxu0 %v1725
        %v1897 = vpop.f32.mrb[0].mxu0
        %v1898 = vadd.f32 0.0, %v1897
        %v1899 = vpop.f32.mrb[0].mxu0
        %v1900 = vpop.f32.mrb[0].mxu0
        %v1901 = vadd.f32 0.0, %v1900
        %v1902 = vpop.f32.mrb[0].mxu0
        %1903 = vmatprep.mubr.bf16.mxu0 0
        %1904 = vmatmul.mubr.bf16.gmra.mrb[0].mxu0 %v1728
        %v1905 = vpop.f32.mrb[0].mxu0
        %v1906 = vadd.f32 0.0, %v1905
        %v1907 = vpop.f32.mrb[0].mxu0
        %v1908 = vpop.f32.mrb[0].mxu0
        %v1909 = vadd.f32 0.0, %v1908
        %v1910 = vpop.f32.mrb[0].mxu0
        %1911 = vmatprep.mubr.bf16.mxu0 0
        %1912 = vmatmul.mubr.bf16.gmra.mrb[0].mxu0 %v1731
        %v1913 = vpop.f32.mrb[0].mxu0
        %v1914 = vadd.f32 0.0, %v1913
        %v1915 = vpop.f32.mrb[0].mxu0
        %v1916 = vpop.f32.mrb[0].mxu0
        %v1917 = vadd.f32 0.0, %v1916
        %v1918 = vpop.f32.mrb[0].mxu0
        %1919 = vmatprep.mubr.bf16.mxu0 0
        %1920 = vmatmul.mubr.bf16.gmra.mrb[0].mxu0 %v1734
        %v1921 = vpop.f32.mrb[0].mxu0
        %v1922 = vadd.f32 0.0, %v1921
        %v1923 = vpop.f32.mrb[0].mxu0
        %v1924 = vpop.f32.mrb[0].mxu0
        %v1925 = vadd.f32 0.0, %v1924
        %v1926 = vpop.f32.mrb[0].mxu0
        %1927 = vmatprep.mubr.bf16.mxu0 0
        %1928 = vmatmul.mubr.bf16.gmra.mrb[0].mxu0 %v1737
        %v1929 = vpop.f32.mrb[0].mxu0
        %v1930 = vadd.f32 0.0, %v1929
        %v1931 = vpop.f32.mrb[0].mxu0
        %v1932 = vpop.f32.mrb[0].mxu0
        %v1933 = vadd.f32 0.0, %v1932
        %v1934 = vpop.f32.mrb[0].mxu0
        %1935 = vmatprep.mubr.bf16.mxu0 0
        %1936 = vmatmul.mubr.bf16.gmra.mrb[0].mxu0 %v1740
        %v1937 = vpop.f32.mrb[0].mxu0
        %v1938 = vadd.f32 0.0, %v1937
        %v1939 = vpop.f32.mrb[0].mxu0
        %v1940 = vpop.f32.mrb[0].mxu0
        %v1941 = vadd.f32 0.0, %v1940
        %v1942 = vpop.f32.mrb[0].mxu0
        %1943 = vmatprep.mubr.bf16.mxu0 0
        %1944 = vmatmul.mubr.bf16.gmra.mrb[0].mxu0 %v1743
        %v1945 = vpop.f32.mrb[0].mxu0
        %v1946 = vadd.f32 0.0, %v1945
        %v1947 = vpop.f32.mrb[0].mxu0
        %v1948 = vpop.f32.mrb[0].mxu0
        %v1949 = vadd.f32 0.0, %v1948
        %v1950 = vpop.f32.mrb[0].mxu0
        %1951 = vmatprep.mubr.bf16.mxu0 0
        %1952 = vmatmul.mubr.bf16.gmra.mrb[0].mxu0 %v1746
        %v1953 = vpop.f32.mrb[0].mxu0
        %v1954 = vadd.f32 0.0, %v1953
        %v1955 = vpop.f32.mrb[0].mxu0
        %v1956 = vpop.f32.mrb[0].mxu0
        %v1957 = vadd.f32 0.0, %v1956
        %v1958 = vpop.f32.mrb[0].mxu0
        %1959 = vmatprep.mubr.bf16.mxu0 0
        %1960 = vmatmul.mubr.bf16.gmra.mrb[0].mxu0 %v1749
        %v1961 = vpop.f32.mrb[0].mxu0
        %v1962 = vadd.f32 0.0, %v1961
        %v1963 = vpop.f32.mrb[0].mxu0
        %v1964 = vpop.f32.mrb[0].mxu0
        %v1965 = vadd.f32 0.0, %v1964
        %v1966 = vpop.f32.mrb[0].mxu0
        %1967 = vmatprep.mubr.bf16.mxu0 0
        %1968 = vmatmul.mubr.bf16.gmra.mrb[0].mxu0 %v1752
        %v1969 = vpop.f32.mrb[0].mxu0
        %v1970 = vadd.f32 0.0, %v1969
        %v1971 = vpop.f32.mrb[0].mxu0
        %v1972 = vpop.f32.mrb[0].mxu0
        %v1973 = vadd.f32 0.0, %v1972
        %v1974 = vpop.f32.mrb[0].mxu0
        %1975 = vmatprep.mubr.bf16.mxu0 0
        %1976 = vmatmul.mubr.bf16.gmra.mrb[0].mxu0 %v1755
        %v1977 = vpop.f32.mrb[0].mxu0
        %v1978 = vadd.f32 0.0, %v1977
        %v1979 = vpop.f32.mrb[0].mxu0
        %v1980 = vpop.f32.mrb[0].mxu0
        %v1981 = vadd.f32 0.0, %v1980
        %v1982 = vpop.f32.mrb[0].mxu0
        %1983 = vmatprep.mubr.bf16.mxu0 0
        %1984 = vmatmul.mubr.bf16.gmra.mrb[0].mxu0 %v1758
        %v1985 = vpop.f32.mrb[0].mxu0
        %v1986 = vadd.f32 0.0, %v1985
        %v1987 = vpop.f32.mrb[0].mxu0
        %v1988 = vpop.f32.mrb[0].mxu0
        %v1989 = vadd.f32 0.0, %v1988
        %v1990 = vpop.f32.mrb[0].mxu0
        %1991 = vmatprep.mubr.bf16.mxu0 0
        %1992 = vmatmul.mubr.bf16.gmra.mrb[0].mxu0 %v1761
        %v1993 = vpop.f32.mrb[0].mxu0
        %v1994 = vadd.f32 0.0, %v1993
        %v1995 = vpop.f32.mrb[0].mxu0
        %v1996 = vpop.f32.mrb[0].mxu0
        %v1997 = vadd.f32 0.0, %v1996
        %v1998 = vpop.f32.mrb[0].mxu0
        %1999 = vmatprep.mubr.bf16.mxu0 0
        %2000 = vmatmul.mubr.bf16.gmra.mrb[0].mxu0 %v1764
        %v2001 = vpop.f32.mrb[0].mxu0
        %v2002 = vadd.f32 0.0, %v2001
        %v2003 = vpop.f32.mrb[0].mxu0
        %v2004 = vpop.f32.mrb[0].mxu0
        %v2005 = vadd.f32 0.0, %v2004
        %v2006 = vpop.f32.mrb[0].mxu0
        %2007 = vmatprep.mubr.bf16.mxu0 0
        %2008 = vmatmul.mubr.bf16.gmra.mrb[0].mxu0 %v1767
        %v2009 = vpop.f32.mrb[0].mxu0
        %v2010 = vadd.f32 0.0, %v2009
        %v2011 = vpop.f32.mrb[0].mxu0
        %v2012 = vpop.f32.mrb[0].mxu0
        %v2013 = vadd.f32 0.0, %v2012
        %v2014 = vpop.f32.mrb[0].mxu0
        %2015 = vmatprep.mubr.bf16.mxu0 0
        %2016 = vmatmul.mubr.bf16.gmra.mrb[0].mxu0 %v1770
        %v2017 = vpop.f32.mrb[0].mxu0
        %v2018 = vadd.f32 0.0, %v2017
        %v2019 = vpop.f32.mrb[0].mxu0
        %v2020 = vpop.f32.mrb[0].mxu0
        %v2021 = vadd.f32 0.0, %v2020
        %v2022 = vpop.f32.mrb[0].mxu0
        %2023 = vdwg.mxu0
        %v2024 = vadd.f32 %v1553, %v1810
        %v2025 = vadd.f32 %v1554, %v1813
        %v2026 = vadd.f32 %v1555, %v1818
        %v2027 = vadd.f32 %v1556, %v1821
        %v2028 = vadd.f32 %v1557, %v1826
        %v2029 = vadd.f32 %v1558, %v1829
        %v2030 = vadd.f32 %v1559, %v1834
        %v2031 = vadd.f32 %v1560, %v1837
        %v2032 = vadd.f32 %v1561, %v1842
        %v2033 = vadd.f32 %v1562, %v1845
        %v2034 = vadd.f32 %v1563, %v1850
        %v2035 = vadd.f32 %v1564, %v1853
        %v2036 = vadd.f32 %v1565, %v1858
        %v2037 = vadd.f32 %v1566, %v1861
        %v2038 = vadd.f32 %v1567, %v1866
        %v2039 = vadd.f32 %v1568, %v1869
        %v2040 = vadd.f32 %v1569, %v1874
        %v2041 = vadd.f32 %v1570, %v1877
        %v2042 = vadd.f32 %v1571, %v1882
        %v2043 = vadd.f32 %v1572, %v1885
        %v2044 = vadd.f32 %v1573, %v1890
        %v2045 = vadd.f32 %v1574, %v1893
        %v2046 = vadd.f32 %v1575, %v1898
        %v2047 = vadd.f32 %v1576, %v1901
        %v2048 = vadd.f32 %v1577, %v1906
        %v2049 = vadd.f32 %v1578, %v1909
        %v2050 = vadd.f32 %v1579, %v1914
        %v2051 = vadd.f32 %v1580, %v1917
        %v2052 = vadd.f32 %v1581, %v1922
        %v2053 = vadd.f32 %v1582, %v1925
        %v2054 = vadd.f32 %v1583, %v1930
        %v2055 = vadd.f32 %v1584, %v1933
        %v2056 = vadd.f32 %v1585, %v1938
        %v2057 = vadd.f32 %v1586, %v1941
        %v2058 = vadd.f32 %v1587, %v1946
        %v2059 = vadd.f32 %v1588, %v1949
        %v2060 = vadd.f32 %v1589, %v1954
        %v2061 = vadd.f32 %v1590, %v1957
        %v2062 = vadd.f32 %v1591, %v1962
        %v2063 = vadd.f32 %v1592, %v1965
        %v2064 = vadd.f32 %v1593, %v1970
        %v2065 = vadd.f32 %v1594, %v1973
        %v2066 = vadd.f32 %v1595, %v1978
        %v2067 = vadd.f32 %v1596, %v1981
        %v2068 = vadd.f32 %v1597, %v1986
        %v2069 = vadd.f32 %v1598, %v1989
        %v2070 = vadd.f32 %v1599, %v1994
        %v2071 = vadd.f32 %v1600, %v1997
        %v2072 = vadd.f32 %v1601, %v2002
        %v2073 = vadd.f32 %v1602, %v2005
        %v2074 = vadd.f32 %v1603, %v2010
        %v2075 = vadd.f32 %v1604, %v2013
        %v2076 = vadd.f32 %v1605, %v2018
        %v2077 = vadd.f32 %v1606, %v2021
        %v2078 = vld [vmem:[%s1607 + $0x1] sm:$0xff]
        %v2079 = vld [vmem:[%s1607 + $0x9] sm:$0xff]
        %v2080 = vld [vmem:[%s1607 + $0x11] sm:$0xff]
        %v2081 = vld [vmem:[%s1607 + $0x21] sm:$0xff]
        %v2082 = vld [vmem:[%s1607 + $0x29] sm:$0xff]
        %v2083 = vld [vmem:[%s1607 + $0x31] sm:$0xff]
        %v2084 = vld [vmem:[%s1607 + $0x41] sm:$0xff]
        %v2085 = vld [vmem:[%s1607 + $0x49] sm:$0xff]
        %v2086 = vld [vmem:[%s1607 + $0x51] sm:$0xff]
        %v2087 = vld [vmem:[%s1607 + $0x61] sm:$0xff]
        %v2088 = vld [vmem:[%s1607 + $0x69] sm:$0xff]
        %v2089 = vld [vmem:[%s1607 + $0x71] sm:$0xff]
        %v2090 = vld [vmem:[%s1607 + $0x81] sm:$0xff]
        %v2091 = vld [vmem:[%s1607 + $0x89] sm:$0xff]
        %v2092 = vld [vmem:[%s1607 + $0x91] sm:$0xff]
        %v2093 = vld [vmem:[%s1607 + $0xa1] sm:$0xff]
        %v2094 = vld [vmem:[%s1607 + $0xa9] sm:$0xff]
        %v2095 = vld [vmem:[%s1607 + $0xb1] sm:$0xff]
        %v2096 = vld [vmem:[%s1607 + $0xc1] sm:$0xff]
        %v2097 = vld [vmem:[%s1607 + $0xc9] sm:$0xff]
        %v2098 = vld [vmem:[%s1607 + $0xd1] sm:$0xff]
        %v2099 = vld [vmem:[%s1607 + $0xe1] sm:$0xff]
        %v2100 = vld [vmem:[%s1607 + $0xe9] sm:$0xff]
        %v2101 = vld [vmem:[%s1607 + $0xf1] sm:$0xff]
        %v2102 = vld [vmem:[%s1607 + $0x101] sm:$0xff]
        %v2103 = vld [vmem:[%s1607 + $0x109] sm:$0xff]
        %v2104 = vld [vmem:[%s1607 + $0x111] sm:$0xff]
        %v2105 = vld [vmem:[%s1607 + $0x121] sm:$0xff]
        %v2106 = vld [vmem:[%s1607 + $0x129] sm:$0xff]
        %v2107 = vld [vmem:[%s1607 + $0x131] sm:$0xff]
        %v2108 = vld [vmem:[%s1607 + $0x141] sm:$0xff]
        %v2109 = vld [vmem:[%s1607 + $0x149] sm:$0xff]
        %v2110 = vld [vmem:[%s1607 + $0x151] sm:$0xff]
        %v2111 = vld [vmem:[%s1607 + $0x161] sm:$0xff]
        %v2112 = vld [vmem:[%s1607 + $0x169] sm:$0xff]
        %v2113 = vld [vmem:[%s1607 + $0x171] sm:$0xff]
        %v2114 = vld [vmem:[%s1607 + $0x181] sm:$0xff]
        %v2115 = vld [vmem:[%s1607 + $0x189] sm:$0xff]
        %v2116 = vld [vmem:[%s1607 + $0x191] sm:$0xff]
        %v2117 = vld [vmem:[%s1607 + $0x1a1] sm:$0xff]
        %v2118 = vld [vmem:[%s1607 + $0x1a9] sm:$0xff]
        %v2119 = vld [vmem:[%s1607 + $0x1b1] sm:$0xff]
        %v2120 = vld [vmem:[%s1607 + $0x1c1] sm:$0xff]
        %v2121 = vld [vmem:[%s1607 + $0x1c9] sm:$0xff]
        %v2122 = vld [vmem:[%s1607 + $0x1d1] sm:$0xff]
        %v2123 = vld [vmem:[%s1607 + $0x1e1] sm:$0xff]
        %v2124 = vld [vmem:[%s1607 + $0x1e9] sm:$0xff]
        %v2125 = vld [vmem:[%s1607 + $0x1f1] sm:$0xff]
        %v2126 = vld [vmem:[%s1607 + $0x201] sm:$0xff]
        %v2127 = vld [vmem:[%s1607 + $0x209] sm:$0xff]
        %v2128 = vld [vmem:[%s1607 + $0x211] sm:$0xff]
        %v2129 = vld [vmem:[%s1607 + $0x221] sm:$0xff]
        %v2130 = vld [vmem:[%s1607 + $0x229] sm:$0xff]
        %v2131 = vld [vmem:[%s1607 + $0x231] sm:$0xff]
        %v2132 = vpack.c.bf16 %v2079, %v2078
        %v2133 = vpack.c.bf16 %v2081, %v2080
        %v2134 = vpack.c.bf16 %v2083, %v2082
        %v2135 = vpack.c.bf16 %v2085, %v2084
        %v2136 = vpack.c.bf16 %v2087, %v2086
        %v2137 = vpack.c.bf16 %v2089, %v2088
        %v2138 = vpack.c.bf16 %v2091, %v2090
        %v2139 = vpack.c.bf16 %v2093, %v2092
        %v2140 = vpack.c.bf16 %v2095, %v2094
        %v2141 = vpack.c.bf16 %v2097, %v2096
        %v2142 = vpack.c.bf16 %v2099, %v2098
        %v2143 = vpack.c.bf16 %v2101, %v2100
        %v2144 = vpack.c.bf16 %v2103, %v2102
        %v2145 = vpack.c.bf16 %v2105, %v2104
        %v2146 = vpack.c.bf16 %v2107, %v2106
        %v2147 = vpack.c.bf16 %v2109, %v2108
        %v2148 = vpack.c.bf16 %v2111, %v2110
        %v2149 = vpack.c.bf16 %v2113, %v2112
        %v2150 = vpack.c.bf16 %v2115, %v2114
        %v2151 = vpack.c.bf16 %v2117, %v2116
        %v2152 = vpack.c.bf16 %v2119, %v2118
        %v2153 = vpack.c.bf16 %v2121, %v2120
        %v2154 = vpack.c.bf16 %v2123, %v2122
        %v2155 = vpack.c.bf16 %v2125, %v2124
        %v2156 = vpack.c.bf16 %v2127, %v2126
        %v2157 = vpack.c.bf16 %v2129, %v2128
        %v2158 = vpack.c.bf16 %v2131, %v2130
        %s2159 = scalar_lea.vmem %s2, 8
        %v2160 = vld [vmem:[%s2159] sm:$0x3]
        %v2162 = vsel %vm469, %v2132, 0
        %v2165 = vsel %vm469, %v2133, 0
        %v2168 = vsel %vm469, %v2134, 0
        %v2171 = vsel %vm469, %v2135, 0
        %v2174 = vsel %vm469, %v2136, 0
        %v2177 = vsel %vm469, %v2137, 0
        %v2180 = vsel %vm469, %v2138, 0
        %v2183 = vsel %vm469, %v2139, 0
        %v2186 = vsel %vm469, %v2140, 0
        %v2189 = vsel %vm469, %v2141, 0
        %v2192 = vsel %vm469, %v2142, 0
        %v2195 = vsel %vm469, %v2143, 0
        %v2198 = vsel %vm469, %v2144, 0
        %v2201 = vsel %vm469, %v2145, 0
        %v2204 = vsel %vm469, %v2146, 0
        %v2207 = vsel %vm469, %v2147, 0
        %v2210 = vsel %vm469, %v2148, 0
        %v2213 = vsel %vm469, %v2149, 0
        %v2216 = vsel %vm469, %v2150, 0
        %v2219 = vsel %vm469, %v2151, 0
        %v2222 = vsel %vm469, %v2152, 0
        %v2225 = vsel %vm469, %v2153, 0
        %v2228 = vsel %vm469, %v2154, 0
        %v2231 = vsel %vm469, %v2155, 0
        %v2234 = vsel %vm469, %v2156, 0
        %v2237 = vsel %vm469, %v2157, 0
        %v2240 = vsel %vm469, %v2158, 0
        %v2243 = vsel %vm551, %v2160, 0
        %2245 = vmatprep.subr.bf16.mxu0 0
        %2246 = vmatpush1.bf16.msra.mxu0 %v2243
        %2247 = vmatprep.subr.bf16.mxu0 0
        %2248 = vmatpush1.bf16.msra.mxu0 0
        %2249 = vmatprep.subr.bf16.mxu0 0
        %2250 = vmatpush1.bf16.msra.mxu0 0
        %2251 = vmatprep.subr.bf16.mxu0 0
        %2252 = vmatpush1.bf16.msra.mxu0 0
        %2253 = vmatprep.subr.bf16.mxu0 0
        %2254 = vmatpush1.bf16.msra.mxu0 0
        %2255 = vmatprep.subr.bf16.mxu0 0
        %2256 = vmatpush1.bf16.msra.mxu0 0
        %2257 = vmatprep.subr.bf16.mxu0 0
        %2258 = vmatpush1.bf16.msra.mxu0 0
        %2259 = vmatprep.subr.bf16.mxu0 0
        %2260 = vmatpush1.bf16.msra.mxu0 0
        %2261 = vmatprep.subr.bf16.mxu0 0
        %2262 = vmatpush1.bf16.msra.mxu0 0
        %2263 = vmatprep.subr.bf16.mxu0 0
        %2264 = vmatpush1.bf16.msra.mxu0 0
        %2265 = vmatprep.subr.bf16.mxu0 0
        %2266 = vmatpush1.bf16.msra.mxu0 0
        %2267 = vmatprep.subr.bf16.mxu0 0
        %2268 = vmatpush1.bf16.msra.mxu0 0
        %2269 = vmatprep.subr.bf16.mxu0 0
        %2270 = vmatpush1.bf16.msra.mxu0 0
        %2271 = vmatprep.subr.bf16.mxu0 0
        %2272 = vmatpush1.bf16.msra.mxu0 0
        %2273 = vmatprep.subr.bf16.mxu0 0
        %2274 = vmatpush1.bf16.msra.mxu0 0
        %2275 = vmatprep.subr.bf16.mxu0 0
        %2276 = vmatpush1.bf16.msra.mxu0 0
        %2277 = vmatprep.mubr.bf16.mxu0 0
        %2278 = vmatmul.mubr.bf16.gmra.mrb[0].mxu0 %v2162
        %v2279 = vpop.f32.mrb[0].mxu0
        %v2280 = vadd.f32 0.0, %v2279
        %v2281 = vpop.f32.mrb[0].mxu0
        %v2282 = vpop.f32.mrb[0].mxu0
        %v2283 = vadd.f32 0.0, %v2282
        %v2284 = vpop.f32.mrb[0].mxu0
        %2285 = vmatprep.mubr.bf16.mxu0 0
        %2286 = vmatmul.mubr.bf16.gmra.mrb[0].mxu0 %v2165
        %v2287 = vpop.f32.mrb[0].mxu0
        %v2288 = vadd.f32 0.0, %v2287
        %v2289 = vpop.f32.mrb[0].mxu0
        %v2290 = vpop.f32.mrb[0].mxu0
        %v2291 = vadd.f32 0.0, %v2290
        %v2292 = vpop.f32.mrb[0].mxu0
        %2293 = vmatprep.mubr.bf16.mxu0 0
        %2294 = vmatmul.mubr.bf16.gmra.mrb[0].mxu0 %v2168
        %v2295 = vpop.f32.mrb[0].mxu0
        %v2296 = vadd.f32 0.0, %v2295
        %v2297 = vpop.f32.mrb[0].mxu0
        %v2298 = vpop.f32.mrb[0].mxu0
        %v2299 = vadd.f32 0.0, %v2298
        %v2300 = vpop.f32.mrb[0].mxu0
        %2301 = vmatprep.mubr.bf16.mxu0 0
        %2302 = vmatmul.mubr.bf16.gmra.mrb[0].mxu0 %v2171
        %v2303 = vpop.f32.mrb[0].mxu0
        %v2304 = vadd.f32 0.0, %v2303
        %v2305 = vpop.f32.mrb[0].mxu0
        %v2306 = vpop.f32.mrb[0].mxu0
        %v2307 = vadd.f32 0.0, %v2306
        %v2308 = vpop.f32.mrb[0].mxu0
        %2309 = vmatprep.mubr.bf16.mxu0 0
        %2310 = vmatmul.mubr.bf16.gmra.mrb[0].mxu0 %v2174
        %v2311 = vpop.f32.mrb[0].mxu0
        %v2312 = vadd.f32 0.0, %v2311
        %v2313 = vpop.f32.mrb[0].mxu0
        %v2314 = vpop.f32.mrb[0].mxu0
        %v2315 = vadd.f32 0.0, %v2314
        %v2316 = vpop.f32.mrb[0].mxu0
        %2317 = vmatprep.mubr.bf16.mxu0 0
        %2318 = vmatmul.mubr.bf16.gmra.mrb[0].mxu0 %v2177
        %v2319 = vpop.f32.mrb[0].mxu0
        %v2320 = vadd.f32 0.0, %v2319
        %v2321 = vpop.f32.mrb[0].mxu0
        %v2322 = vpop.f32.mrb[0].mxu0
        %v2323 = vadd.f32 0.0, %v2322
        %v2324 = vpop.f32.mrb[0].mxu0
        %2325 = vmatprep.mubr.bf16.mxu0 0
        %2326 = vmatmul.mubr.bf16.gmra.mrb[0].mxu0 %v2180
        %v2327 = vpop.f32.mrb[0].mxu0
        %v2328 = vadd.f32 0.0, %v2327
        %v2329 = vpop.f32.mrb[0].mxu0
        %v2330 = vpop.f32.mrb[0].mxu0
        %v2331 = vadd.f32 0.0, %v2330
        %v2332 = vpop.f32.mrb[0].mxu0
        %2333 = vmatprep.mubr.bf16.mxu0 0
        %2334 = vmatmul.mubr.bf16.gmra.mrb[0].mxu0 %v2183
        %v2335 = vpop.f32.mrb[0].mxu0
        %v2336 = vadd.f32 0.0, %v2335
        %v2337 = vpop.f32.mrb[0].mxu0
        %v2338 = vpop.f32.mrb[0].mxu0
        %v2339 = vadd.f32 0.0, %v2338
        %v2340 = vpop.f32.mrb[0].mxu0
        %2341 = vmatprep.mubr.bf16.mxu0 0
        %2342 = vmatmul.mubr.bf16.gmra.mrb[0].mxu0 %v2186
        %v2343 = vpop.f32.mrb[0].mxu0
        %v2344 = vadd.f32 0.0, %v2343
        %v2345 = vpop.f32.mrb[0].mxu0
        %v2346 = vpop.f32.mrb[0].mxu0
        %v2347 = vadd.f32 0.0, %v2346
        %v2348 = vpop.f32.mrb[0].mxu0
        %2349 = vmatprep.mubr.bf16.mxu0 0
        %2350 = vmatmul.mubr.bf16.gmra.mrb[0].mxu0 %v2189
        %v2351 = vpop.f32.mrb[0].mxu0
        %v2352 = vadd.f32 0.0, %v2351
        %v2353 = vpop.f32.mrb[0].mxu0
        %v2354 = vpop.f32.mrb[0].mxu0
        %v2355 = vadd.f32 0.0, %v2354
        %v2356 = vpop.f32.mrb[0].mxu0
        %2357 = vmatprep.mubr.bf16.mxu0 0
        %2358 = vmatmul.mubr.bf16.gmra.mrb[0].mxu0 %v2192
        %v2359 = vpop.f32.mrb[0].mxu0
        %v2360 = vadd.f32 0.0, %v2359
        %v2361 = vpop.f32.mrb[0].mxu0
        %v2362 = vpop.f32.mrb[0].mxu0
        %v2363 = vadd.f32 0.0, %v2362
        %v2364 = vpop.f32.mrb[0].mxu0
        %2365 = vmatprep.mubr.bf16.mxu0 0
        %2366 = vmatmul.mubr.bf16.gmra.mrb[0].mxu0 %v2195
        %v2367 = vpop.f32.mrb[0].mxu0
        %v2368 = vadd.f32 0.0, %v2367
        %v2369 = vpop.f32.mrb[0].mxu0
        %v2370 = vpop.f32.mrb[0].mxu0
        %v2371 = vadd.f32 0.0, %v2370
        %v2372 = vpop.f32.mrb[0].mxu0
        %2373 = vmatprep.mubr.bf16.mxu0 0
        %2374 = vmatmul.mubr.bf16.gmra.mrb[0].mxu0 %v2198
        %v2375 = vpop.f32.mrb[0].mxu0
        %v2376 = vadd.f32 0.0, %v2375
        %v2377 = vpop.f32.mrb[0].mxu0
        %v2378 = vpop.f32.mrb[0].mxu0
        %v2379 = vadd.f32 0.0, %v2378
        %v2380 = vpop.f32.mrb[0].mxu0
        %2381 = vmatprep.mubr.bf16.mxu0 0
        %2382 = vmatmul.mubr.bf16.gmra.mrb[0].mxu0 %v2201
        %v2383 = vpop.f32.mrb[0].mxu0
        %v2384 = vadd.f32 0.0, %v2383
        %v2385 = vpop.f32.mrb[0].mxu0
        %v2386 = vpop.f32.mrb[0].mxu0
        %v2387 = vadd.f32 0.0, %v2386
        %v2388 = vpop.f32.mrb[0].mxu0
        %2389 = vmatprep.mubr.bf16.mxu0 0
        %2390 = vmatmul.mubr.bf16.gmra.mrb[0].mxu0 %v2204
        %v2391 = vpop.f32.mrb[0].mxu0
        %v2392 = vadd.f32 0.0, %v2391
        %v2393 = vpop.f32.mrb[0].mxu0
        %v2394 = vpop.f32.mrb[0].mxu0
        %v2395 = vadd.f32 0.0, %v2394
        %v2396 = vpop.f32.mrb[0].mxu0
        %2397 = vmatprep.mubr.bf16.mxu0 0
        %2398 = vmatmul.mubr.bf16.gmra.mrb[0].mxu0 %v2207
        %v2399 = vpop.f32.mrb[0].mxu0
        %v2400 = vadd.f32 0.0, %v2399
        %v2401 = vpop.f32.mrb[0].mxu0
        %v2402 = vpop.f32.mrb[0].mxu0
        %v2403 = vadd.f32 0.0, %v2402
        %v2404 = vpop.f32.mrb[0].mxu0
        %2405 = vmatprep.mubr.bf16.mxu0 0
        %2406 = vmatmul.mubr.bf16.gmra.mrb[0].mxu0 %v2210
        %v2407 = vpop.f32.mrb[0].mxu0
        %v2408 = vadd.f32 0.0, %v2407
        %v2409 = vpop.f32.mrb[0].mxu0
        %v2410 = vpop.f32.mrb[0].mxu0
        %v2411 = vadd.f32 0.0, %v2410
        %v2412 = vpop.f32.mrb[0].mxu0
        %2413 = vmatprep.mubr.bf16.mxu0 0
        %2414 = vmatmul.mubr.bf16.gmra.mrb[0].mxu0 %v2213
        %v2415 = vpop.f32.mrb[0].mxu0
        %v2416 = vadd.f32 0.0, %v2415
        %v2417 = vpop.f32.mrb[0].mxu0
        %v2418 = vpop.f32.mrb[0].mxu0
        %v2419 = vadd.f32 0.0, %v2418
        %v2420 = vpop.f32.mrb[0].mxu0
        %2421 = vmatprep.mubr.bf16.mxu0 0
        %2422 = vmatmul.mubr.bf16.gmra.mrb[0].mxu0 %v2216
        %v2423 = vpop.f32.mrb[0].mxu0
        %v2424 = vadd.f32 0.0, %v2423
        %v2425 = vpop.f32.mrb[0].mxu0
        %v2426 = vpop.f32.mrb[0].mxu0
        %v2427 = vadd.f32 0.0, %v2426
        %v2428 = vpop.f32.mrb[0].mxu0
        %2429 = vmatprep.mubr.bf16.mxu0 0
        %2430 = vmatmul.mubr.bf16.gmra.mrb[0].mxu0 %v2219
        %v2431 = vpop.f32.mrb[0].mxu0
        %v2432 = vadd.f32 0.0, %v2431
        %v2433 = vpop.f32.mrb[0].mxu0
        %v2434 = vpop.f32.mrb[0].mxu0
        %v2435 = vadd.f32 0.0, %v2434
        %v2436 = vpop.f32.mrb[0].mxu0
        %2437 = vmatprep.mubr.bf16.mxu0 0
        %2438 = vmatmul.mubr.bf16.gmra.mrb[0].mxu0 %v2222
        %v2439 = vpop.f32.mrb[0].mxu0
        %v2440 = vadd.f32 0.0, %v2439
        %v2441 = vpop.f32.mrb[0].mxu0
        %v2442 = vpop.f32.mrb[0].mxu0
        %v2443 = vadd.f32 0.0, %v2442
        %v2444 = vpop.f32.mrb[0].mxu0
        %2445 = vmatprep.mubr.bf16.mxu0 0
        %2446 = vmatmul.mubr.bf16.gmra.mrb[0].mxu0 %v2225
        %v2447 = vpop.f32.mrb[0].mxu0
        %v2448 = vadd.f32 0.0, %v2447
        %v2449 = vpop.f32.mrb[0].mxu0
        %v2450 = vpop.f32.mrb[0].mxu0
        %v2451 = vadd.f32 0.0, %v2450
        %v2452 = vpop.f32.mrb[0].mxu0
        %2453 = vmatprep.mubr.bf16.mxu0 0
        %2454 = vmatmul.mubr.bf16.gmra.mrb[0].mxu0 %v2228
        %v2455 = vpop.f32.mrb[0].mxu0
        %v2456 = vadd.f32 0.0, %v2455
        %v2457 = vpop.f32.mrb[0].mxu0
        %v2458 = vpop.f32.mrb[0].mxu0
        %v2459 = vadd.f32 0.0, %v2458
        %v2460 = vpop.f32.mrb[0].mxu0
        %2461 = vmatprep.mubr.bf16.mxu0 0
        %2462 = vmatmul.mubr.bf16.gmra.mrb[0].mxu0 %v2231
        %v2463 = vpop.f32.mrb[0].mxu0
        %v2464 = vadd.f32 0.0, %v2463
        %v2465 = vpop.f32.mrb[0].mxu0
        %v2466 = vpop.f32.mrb[0].mxu0
        %v2467 = vadd.f32 0.0, %v2466
        %v2468 = vpop.f32.mrb[0].mxu0
        %2469 = vmatprep.mubr.bf16.mxu0 0
        %2470 = vmatmul.mubr.bf16.gmra.mrb[0].mxu0 %v2234
        %v2471 = vpop.f32.mrb[0].mxu0
        %v2472 = vadd.f32 0.0, %v2471
        %v2473 = vpop.f32.mrb[0].mxu0
        %v2474 = vpop.f32.mrb[0].mxu0
        %v2475 = vadd.f32 0.0, %v2474
        %v2476 = vpop.f32.mrb[0].mxu0
        %2477 = vmatprep.mubr.bf16.mxu0 0
        %2478 = vmatmul.mubr.bf16.gmra.mrb[0].mxu0 %v2237
        %v2479 = vpop.f32.mrb[0].mxu0
        %v2480 = vadd.f32 0.0, %v2479
        %v2481 = vpop.f32.mrb[0].mxu0
        %v2482 = vpop.f32.mrb[0].mxu0
        %v2483 = vadd.f32 0.0, %v2482
        %v2484 = vpop.f32.mrb[0].mxu0
        %2485 = vmatprep.mubr.bf16.mxu0 0
        %2486 = vmatmul.mubr.bf16.gmra.mrb[0].mxu0 %v2240
        %v2487 = vpop.f32.mrb[0].mxu0
        %v2488 = vadd.f32 0.0, %v2487
        %v2489 = vpop.f32.mrb[0].mxu0
        %v2490 = vpop.f32.mrb[0].mxu0
        %v2491 = vadd.f32 0.0, %v2490
        %v2492 = vpop.f32.mrb[0].mxu0
        %2493 = vdwg.mxu0
        %v2494 = vadd.f32 %v2024, %v2280
        %v2495 = vadd.f32 %v2025, %v2283
        %v2496 = vadd.f32 %v2026, %v2288
        %v2497 = vadd.f32 %v2027, %v2291
        %v2498 = vadd.f32 %v2028, %v2296
        %v2499 = vadd.f32 %v2029, %v2299
        %v2500 = vadd.f32 %v2030, %v2304
        %v2501 = vadd.f32 %v2031, %v2307
        %v2502 = vadd.f32 %v2032, %v2312
        %v2503 = vadd.f32 %v2033, %v2315
        %v2504 = vadd.f32 %v2034, %v2320
        %v2505 = vadd.f32 %v2035, %v2323
        %v2506 = vadd.f32 %v2036, %v2328
        %v2507 = vadd.f32 %v2037, %v2331
        %v2508 = vadd.f32 %v2038, %v2336
        %v2509 = vadd.f32 %v2039, %v2339
        %v2510 = vadd.f32 %v2040, %v2344
        %v2511 = vadd.f32 %v2041, %v2347
        %v2512 = vadd.f32 %v2042, %v2352
        %v2513 = vadd.f32 %v2043, %v2355
        %v2514 = vadd.f32 %v2044, %v2360
        %v2515 = vadd.f32 %v2045, %v2363
        %v2516 = vadd.f32 %v2046, %v2368
        %v2517 = vadd.f32 %v2047, %v2371
        %v2518 = vadd.f32 %v2048, %v2376
        %v2519 = vadd.f32 %v2049, %v2379
        %v2520 = vadd.f32 %v2050, %v2384
        %v2521 = vadd.f32 %v2051, %v2387
        %v2522 = vadd.f32 %v2052, %v2392
        %v2523 = vadd.f32 %v2053, %v2395
        %v2524 = vadd.f32 %v2054, %v2400
        %v2525 = vadd.f32 %v2055, %v2403
        %v2526 = vadd.f32 %v2056, %v2408
        %v2527 = vadd.f32 %v2057, %v2411
        %v2528 = vadd.f32 %v2058, %v2416
        %v2529 = vadd.f32 %v2059, %v2419
        %v2530 = vadd.f32 %v2060, %v2424
        %v2531 = vadd.f32 %v2061, %v2427
        %v2532 = vadd.f32 %v2062, %v2432
        %v2533 = vadd.f32 %v2063, %v2435
        %v2534 = vadd.f32 %v2064, %v2440
        %v2535 = vadd.f32 %v2065, %v2443
        %v2536 = vadd.f32 %v2066, %v2448
        %v2537 = vadd.f32 %v2067, %v2451
        %v2538 = vadd.f32 %v2068, %v2456
        %v2539 = vadd.f32 %v2069, %v2459
        %v2540 = vadd.f32 %v2070, %v2464
        %v2541 = vadd.f32 %v2071, %v2467
        %v2542 = vadd.f32 %v2072, %v2472
        %v2543 = vadd.f32 %v2073, %v2475
        %v2544 = vadd.f32 %v2074, %v2480
        %v2545 = vadd.f32 %v2075, %v2483
        %v2546 = vadd.f32 %v2076, %v2488
        %v2547 = vadd.f32 %v2077, %v2491
        %v2548 = vld [vmem:[%s1607 + $0x2] sm:$0xff]
        %v2549 = vld [vmem:[%s1607 + $0xa] sm:$0xff]
        %v2550 = vld [vmem:[%s1607 + $0x12] sm:$0xff]
        %v2551 = vld [vmem:[%s1607 + $0x22] sm:$0xff]
        %v2552 = vld [vmem:[%s1607 + $0x2a] sm:$0xff]
        %v2553 = vld [vmem:[%s1607 + $0x32] sm:$0xff]
        %v2554 = vld [vmem:[%s1607 + $0x42] sm:$0xff]
        %v2555 = vld [vmem:[%s1607 + $0x4a] sm:$0xff]
        %v2556 = vld [vmem:[%s1607 + $0x52] sm:$0xff]
        %v2557 = vld [vmem:[%s1607 + $0x62] sm:$0xff]
        %v2558 = vld [vmem:[%s1607 + $0x6a] sm:$0xff]
        %v2559 = vld [vmem:[%s1607 + $0x72] sm:$0xff]
        %v2560 = vld [vmem:[%s1607 + $0x82] sm:$0xff]
        %v2561 = vld [vmem:[%s1607 + $0x8a] sm:$0xff]
        %v2562 = vld [vmem:[%s1607 + $0x92] sm:$0xff]
        %v2563 = vld [vmem:[%s1607 + $0xa2] sm:$0xff]
        %v2564 = vld [vmem:[%s1607 + $0xaa] sm:$0xff]
        %v2565 = vld [vmem:[%s1607 + $0xb2] sm:$0xff]
        %v2566 = vld [vmem:[%s1607 + $0xc2] sm:$0xff]
        %v2567 = vld [vmem:[%s1607 + $0xca] sm:$0xff]
        %v2568 = vld [vmem:[%s1607 + $0xd2] sm:$0xff]
        %v2569 = vld [vmem:[%s1607 + $0xe2] sm:$0xff]
        %v2570 = vld [vmem:[%s1607 + $0xea] sm:$0xff]
        %v2571 = vld [vmem:[%s1607 + $0xf2] sm:$0xff]
        %v2572 = vld [vmem:[%s1607 + $0x102] sm:$0xff]
        %v2573 = vld [vmem:[%s1607 + $0x10a] sm:$0xff]
        %v2574 = vld [vmem:[%s1607 + $0x112] sm:$0xff]
        %v2575 = vld [vmem:[%s1607 + $0x122] sm:$0xff]
        %v2576 = vld [vmem:[%s1607 + $0x12a] sm:$0xff]
        %v2577 = vld [vmem:[%s1607 + $0x132] sm:$0xff]
        %v2578 = vld [vmem:[%s1607 + $0x142] sm:$0xff]
        %v2579 = vld [vmem:[%s1607 + $0x14a] sm:$0xff]
        %v2580 = vld [vmem:[%s1607 + $0x152] sm:$0xff]
        %v2581 = vld [vmem:[%s1607 + $0x162] sm:$0xff]
        %v2582 = vld [vmem:[%s1607 + $0x16a] sm:$0xff]
        %v2583 = vld [vmem:[%s1607 + $0x172] sm:$0xff]
        %v2584 = vld [vmem:[%s1607 + $0x182] sm:$0xff]
        %v2585 = vld [vmem:[%s1607 + $0x18a] sm:$0xff]
        %v2586 = vld [vmem:[%s1607 + $0x192] sm:$0xff]
        %v2587 = vld [vmem:[%s1607 + $0x1a2] sm:$0xff]
        %v2588 = vld [vmem:[%s1607 + $0x1aa] sm:$0xff]
        %v2589 = vld [vmem:[%s1607 + $0x1b2] sm:$0xff]
        %v2590 = vld [vmem:[%s1607 + $0x1c2] sm:$0xff]
        %v2591 = vld [vmem:[%s1607 + $0x1ca] sm:$0xff]
        %v2592 = vld [vmem:[%s1607 + $0x1d2] sm:$0xff]
        %v2593 = vld [vmem:[%s1607 + $0x1e2] sm:$0xff]
        %v2594 = vld [vmem:[%s1607 + $0x1ea] sm:$0xff]
        %v2595 = vld [vmem:[%s1607 + $0x1f2] sm:$0xff]
        %v2596 = vld [vmem:[%s1607 + $0x202] sm:$0xff]
        %v2597 = vld [vmem:[%s1607 + $0x20a] sm:$0xff]
        %v2598 = vld [vmem:[%s1607 + $0x212] sm:$0xff]
        %v2599 = vld [vmem:[%s1607 + $0x222] sm:$0xff]
        %v2600 = vld [vmem:[%s1607 + $0x22a] sm:$0xff]
        %v2601 = vld [vmem:[%s1607 + $0x232] sm:$0xff]
        %v2602 = vpack.c.bf16 %v2549, %v2548
        %v2603 = vpack.c.bf16 %v2551, %v2550
        %v2604 = vpack.c.bf16 %v2553, %v2552
        %v2605 = vpack.c.bf16 %v2555, %v2554
        %v2606 = vpack.c.bf16 %v2557, %v2556
        %v2607 = vpack.c.bf16 %v2559, %v2558
        %v2608 = vpack.c.bf16 %v2561, %v2560
        %v2609 = vpack.c.bf16 %v2563, %v2562
        %v2610 = vpack.c.bf16 %v2565, %v2564
        %v2611 = vpack.c.bf16 %v2567, %v2566
        %v2612 = vpack.c.bf16 %v2569, %v2568
        %v2613 = vpack.c.bf16 %v2571, %v2570
        %v2614 = vpack.c.bf16 %v2573, %v2572
        %v2615 = vpack.c.bf16 %v2575, %v2574
        %v2616 = vpack.c.bf16 %v2577, %v2576
        %v2617 = vpack.c.bf16 %v2579, %v2578
        %v2618 = vpack.c.bf16 %v2581, %v2580
        %v2619 = vpack.c.bf16 %v2583, %v2582
        %v2620 = vpack.c.bf16 %v2585, %v2584
        %v2621 = vpack.c.bf16 %v2587, %v2586
        %v2622 = vpack.c.bf16 %v2589, %v2588
        %v2623 = vpack.c.bf16 %v2591, %v2590
        %v2624 = vpack.c.bf16 %v2593, %v2592
        %v2625 = vpack.c.bf16 %v2595, %v2594
        %v2626 = vpack.c.bf16 %v2597, %v2596
        %v2627 = vpack.c.bf16 %v2599, %v2598
        %v2628 = vpack.c.bf16 %v2601, %v2600
        %s2629 = scalar_lea.vmem %s2, 10
        %v2630 = vld [vmem:[%s2629] sm:$0x3]
        %v2632 = vsel %vm469, %v2602, 0
        %v2635 = vsel %vm469, %v2603, 0
        %v2638 = vsel %vm469, %v2604, 0
        %v2641 = vsel %vm469, %v2605, 0
        %v2644 = vsel %vm469, %v2606, 0
        %v2647 = vsel %vm469, %v2607, 0
        %v2650 = vsel %vm469, %v2608, 0
        %v2653 = vsel %vm469, %v2609, 0
        %v2656 = vsel %vm469, %v2610, 0
        %v2659 = vsel %vm469, %v2611, 0
        %v2662 = vsel %vm469, %v2612, 0
        %v2665 = vsel %vm469, %v2613, 0
        %v2668 = vsel %vm469, %v2614, 0
        %v2671 = vsel %vm469, %v2615, 0
        %v2674 = vsel %vm469, %v2616, 0
        %v2677 = vsel %vm469, %v2617, 0
        %v2680 = vsel %vm469, %v2618, 0
        %v2683 = vsel %vm469, %v2619, 0
        %v2686 = vsel %vm469, %v2620, 0
        %v2689 = vsel %vm469, %v2621, 0
        %v2692 = vsel %vm469, %v2622, 0
        %v2695 = vsel %vm469, %v2623, 0
        %v2698 = vsel %vm469, %v2624, 0
        %v2701 = vsel %vm469, %v2625, 0
        %v2704 = vsel %vm469, %v2626, 0
        %v2707 = vsel %vm469, %v2627, 0
        %v2710 = vsel %vm469, %v2628, 0
        %v2713 = vsel %vm551, %v2630, 0
        %2715 = vmatprep.subr.bf16.mxu0 0
        %2716 = vmatpush1.bf16.msra.mxu0 %v2713
        %2717 = vmatprep.subr.bf16.mxu0 0
        %2718 = vmatpush1.bf16.msra.mxu0 0
        %2719 = vmatprep.subr.bf16.mxu0 0
        %2720 = vmatpush1.bf16.msra.mxu0 0
        %2721 = vmatprep.subr.bf16.mxu0 0
        %2722 = vmatpush1.bf16.msra.mxu0 0
        %2723 = vmatprep.subr.bf16.mxu0 0
        %2724 = vmatpush1.bf16.msra.mxu0 0
        %2725 = vmatprep.subr.bf16.mxu0 0
        %2726 = vmatpush1.bf16.msra.mxu0 0
        %2727 = vmatprep.subr.bf16.mxu0 0
        %2728 = vmatpush1.bf16.msra.mxu0 0
        %2729 = vmatprep.subr.bf16.mxu0 0
        %2730 = vmatpush1.bf16.msra.mxu0 0
        %2731 = vmatprep.subr.bf16.mxu0 0
        %2732 = vmatpush1.bf16.msra.mxu0 0
        %2733 = vmatprep.subr.bf16.mxu0 0
        %2734 = vmatpush1.bf16.msra.mxu0 0
        %2735 = vmatprep.subr.bf16.mxu0 0
        %2736 = vmatpush1.bf16.msra.mxu0 0
        %2737 = vmatprep.subr.bf16.mxu0 0
        %2738 = vmatpush1.bf16.msra.mxu0 0
        %2739 = vmatprep.subr.bf16.mxu0 0
        %2740 = vmatpush1.bf16.msra.mxu0 0
        %2741 = vmatprep.subr.bf16.mxu0 0
        %2742 = vmatpush1.bf16.msra.mxu0 0
        %2743 = vmatprep.subr.bf16.mxu0 0
        %2744 = vmatpush1.bf16.msra.mxu0 0
        %2745 = vmatprep.subr.bf16.mxu0 0
        %2746 = vmatpush1.bf16.msra.mxu0 0
        %2747 = vmatprep.mubr.bf16.mxu0 0
        %2748 = vmatmul.mubr.bf16.gmra.mrb[0].mxu0 %v2632
        %v2749 = vpop.f32.mrb[0].mxu0
        %v2750 = vadd.f32 0.0, %v2749
        %v2751 = vpop.f32.mrb[0].mxu0
        %v2752 = vpop.f32.mrb[0].mxu0
        %v2753 = vadd.f32 0.0, %v2752
        %v2754 = vpop.f32.mrb[0].mxu0
        %2755 = vmatprep.mubr.bf16.mxu0 0
        %2756 = vmatmul.mubr.bf16.gmra.mrb[0].mxu0 %v2635
        %v2757 = vpop.f32.mrb[0].mxu0
        %v2758 = vadd.f32 0.0, %v2757
        %v2759 = vpop.f32.mrb[0].mxu0
        %v2760 = vpop.f32.mrb[0].mxu0
        %v2761 = vadd.f32 0.0, %v2760
        %v2762 = vpop.f32.mrb[0].mxu0
        %2763 = vmatprep.mubr.bf16.mxu0 0
        %2764 = vmatmul.mubr.bf16.gmra.mrb[0].mxu0 %v2638
        %v2765 = vpop.f32.mrb[0].mxu0
        %v2766 = vadd.f32 0.0, %v2765
        %v2767 = vpop.f32.mrb[0].mxu0
        %v2768 = vpop.f32.mrb[0].mxu0
        %v2769 = vadd.f32 0.0, %v2768
        %v2770 = vpop.f32.mrb[0].mxu0
        %2771 = vmatprep.mubr.bf16.mxu0 0
        %2772 = vmatmul.mubr.bf16.gmra.mrb[0].mxu0 %v2641
        %v2773 = vpop.f32.mrb[0].mxu0
        %v2774 = vadd.f32 0.0, %v2773
        %v2775 = vpop.f32.mrb[0].mxu0
        %v2776 = vpop.f32.mrb[0].mxu0
        %v2777 = vadd.f32 0.0, %v2776
        %v2778 = vpop.f32.mrb[0].mxu0
        %2779 = vmatprep.mubr.bf16.mxu0 0
        %2780 = vmatmul.mubr.bf16.gmra.mrb[0].mxu0 %v2644
        %v2781 = vpop.f32.mrb[0].mxu0
        %v2782 = vadd.f32 0.0, %v2781
        %v2783 = vpop.f32.mrb[0].mxu0
        %v2784 = vpop.f32.mrb[0].mxu0
        %v2785 = vadd.f32 0.0, %v2784
        %v2786 = vpop.f32.mrb[0].mxu0
        %2787 = vmatprep.mubr.bf16.mxu0 0
        %2788 = vmatmul.mubr.bf16.gmra.mrb[0].mxu0 %v2647
        %v2789 = vpop.f32.mrb[0].mxu0
        %v2790 = vadd.f32 0.0, %v2789
        %v2791 = vpop.f32.mrb[0].mxu0
        %v2792 = vpop.f32.mrb[0].mxu0
        %v2793 = vadd.f32 0.0, %v2792
        %v2794 = vpop.f32.mrb[0].mxu0
        %2795 = vmatprep.mubr.bf16.mxu0 0
        %2796 = vmatmul.mubr.bf16.gmra.mrb[0].mxu0 %v2650
        %v2797 = vpop.f32.mrb[0].mxu0
        %v2798 = vadd.f32 0.0, %v2797
        %v2799 = vpop.f32.mrb[0].mxu0
        %v2800 = vpop.f32.mrb[0].mxu0
        %v2801 = vadd.f32 0.0, %v2800
        %v2802 = vpop.f32.mrb[0].mxu0
        %2803 = vmatprep.mubr.bf16.mxu0 0
        %2804 = vmatmul.mubr.bf16.gmra.mrb[0].mxu0 %v2653
        %v2805 = vpop.f32.mrb[0].mxu0
        %v2806 = vadd.f32 0.0, %v2805
        %v2807 = vpop.f32.mrb[0].mxu0
        %v2808 = vpop.f32.mrb[0].mxu0
        %v2809 = vadd.f32 0.0, %v2808
        %v2810 = vpop.f32.mrb[0].mxu0
        %2811 = vmatprep.mubr.bf16.mxu0 0
        %2812 = vmatmul.mubr.bf16.gmra.mrb[0].mxu0 %v2656
        %v2813 = vpop.f32.mrb[0].mxu0
        %v2814 = vadd.f32 0.0, %v2813
        %v2815 = vpop.f32.mrb[0].mxu0
        %v2816 = vpop.f32.mrb[0].mxu0
        %v2817 = vadd.f32 0.0, %v2816
        %v2818 = vpop.f32.mrb[0].mxu0
        %2819 = vmatprep.mubr.bf16.mxu0 0
        %2820 = vmatmul.mubr.bf16.gmra.mrb[0].mxu0 %v2659
        %v2821 = vpop.f32.mrb[0].mxu0
        %v2822 = vadd.f32 0.0, %v2821
        %v2823 = vpop.f32.mrb[0].mxu0
        %v2824 = vpop.f32.mrb[0].mxu0
        %v2825 = vadd.f32 0.0, %v2824
        %v2826 = vpop.f32.mrb[0].mxu0
        %2827 = vmatprep.mubr.bf16.mxu0 0
        %2828 = vmatmul.mubr.bf16.gmra.mrb[0].mxu0 %v2662
        %v2829 = vpop.f32.mrb[0].mxu0
        %v2830 = vadd.f32 0.0, %v2829
        %v2831 = vpop.f32.mrb[0].mxu0
        %v2832 = vpop.f32.mrb[0].mxu0
        %v2833 = vadd.f32 0.0, %v2832
        %v2834 = vpop.f32.mrb[0].mxu0
        %2835 = vmatprep.mubr.bf16.mxu0 0
        %2836 = vmatmul.mubr.bf16.gmra.mrb[0].mxu0 %v2665
        %v2837 = vpop.f32.mrb[0].mxu0
        %v2838 = vadd.f32 0.0, %v2837
        %v2839 = vpop.f32.mrb[0].mxu0
        %v2840 = vpop.f32.mrb[0].mxu0
        %v2841 = vadd.f32 0.0, %v2840
        %v2842 = vpop.f32.mrb[0].mxu0
        %2843 = vmatprep.mubr.bf16.mxu0 0
        %2844 = vmatmul.mubr.bf16.gmra.mrb[0].mxu0 %v2668
        %v2845 = vpop.f32.mrb[0].mxu0
        %v2846 = vadd.f32 0.0, %v2845
        %v2847 = vpop.f32.mrb[0].mxu0
        %v2848 = vpop.f32.mrb[0].mxu0
        %v2849 = vadd.f32 0.0, %v2848
        %v2850 = vpop.f32.mrb[0].mxu0
        %2851 = vmatprep.mubr.bf16.mxu0 0
        %2852 = vmatmul.mubr.bf16.gmra.mrb[0].mxu0 %v2671
        %v2853 = vpop.f32.mrb[0].mxu0
        %v2854 = vadd.f32 0.0, %v2853
        %v2855 = vpop.f32.mrb[0].mxu0
        %v2856 = vpop.f32.mrb[0].mxu0
        %v2857 = vadd.f32 0.0, %v2856
        %v2858 = vpop.f32.mrb[0].mxu0
        %2859 = vmatprep.mubr.bf16.mxu0 0
        %2860 = vmatmul.mubr.bf16.gmra.mrb[0].mxu0 %v2674
        %v2861 = vpop.f32.mrb[0].mxu0
        %v2862 = vadd.f32 0.0, %v2861
        %v2863 = vpop.f32.mrb[0].mxu0
        %v2864 = vpop.f32.mrb[0].mxu0
        %v2865 = vadd.f32 0.0, %v2864
        %v2866 = vpop.f32.mrb[0].mxu0
        %2867 = vmatprep.mubr.bf16.mxu0 0
        %2868 = vmatmul.mubr.bf16.gmra.mrb[0].mxu0 %v2677
        %v2869 = vpop.f32.mrb[0].mxu0
        %v2870 = vadd.f32 0.0, %v2869
        %v2871 = vpop.f32.mrb[0].mxu0
        %v2872 = vpop.f32.mrb[0].mxu0
        %v2873 = vadd.f32 0.0, %v2872
        %v2874 = vpop.f32.mrb[0].mxu0
        %2875 = vmatprep.mubr.bf16.mxu0 0
        %2876 = vmatmul.mubr.bf16.gmra.mrb[0].mxu0 %v2680
        %v2877 = vpop.f32.mrb[0].mxu0
        %v2878 = vadd.f32 0.0, %v2877
        %v2879 = vpop.f32.mrb[0].mxu0
        %v2880 = vpop.f32.mrb[0].mxu0
        %v2881 = vadd.f32 0.0, %v2880
        %v2882 = vpop.f32.mrb[0].mxu0
        %2883 = vmatprep.mubr.bf16.mxu0 0
        %2884 = vmatmul.mubr.bf16.gmra.mrb[0].mxu0 %v2683
        %v2885 = vpop.f32.mrb[0].mxu0
        %v2886 = vadd.f32 0.0, %v2885
        %v2887 = vpop.f32.mrb[0].mxu0
        %v2888 = vpop.f32.mrb[0].mxu0
        %v2889 = vadd.f32 0.0, %v2888
        %v2890 = vpop.f32.mrb[0].mxu0
        %2891 = vmatprep.mubr.bf16.mxu0 0
        %2892 = vmatmul.mubr.bf16.gmra.mrb[0].mxu0 %v2686
        %v2893 = vpop.f32.mrb[0].mxu0
        %v2894 = vadd.f32 0.0, %v2893
        %v2895 = vpop.f32.mrb[0].mxu0
        %v2896 = vpop.f32.mrb[0].mxu0
        %v2897 = vadd.f32 0.0, %v2896
        %v2898 = vpop.f32.mrb[0].mxu0
        %2899 = vmatprep.mubr.bf16.mxu0 0
        %2900 = vmatmul.mubr.bf16.gmra.mrb[0].mxu0 %v2689
        %v2901 = vpop.f32.mrb[0].mxu0
        %v2902 = vadd.f32 0.0, %v2901
        %v2903 = vpop.f32.mrb[0].mxu0
        %v2904 = vpop.f32.mrb[0].mxu0
        %v2905 = vadd.f32 0.0, %v2904
        %v2906 = vpop.f32.mrb[0].mxu0
        %2907 = vmatprep.mubr.bf16.mxu0 0
        %2908 = vmatmul.mubr.bf16.gmra.mrb[0].mxu0 %v2692
        %v2909 = vpop.f32.mrb[0].mxu0
        %v2910 = vadd.f32 0.0, %v2909
        %v2911 = vpop.f32.mrb[0].mxu0
        %v2912 = vpop.f32.mrb[0].mxu0
        %v2913 = vadd.f32 0.0, %v2912
        %v2914 = vpop.f32.mrb[0].mxu0
        %2915 = vmatprep.mubr.bf16.mxu0 0
        %2916 = vmatmul.mubr.bf16.gmra.mrb[0].mxu0 %v2695
        %v2917 = vpop.f32.mrb[0].mxu0
        %v2918 = vadd.f32 0.0, %v2917
        %v2919 = vpop.f32.mrb[0].mxu0
        %v2920 = vpop.f32.mrb[0].mxu0
        %v2921 = vadd.f32 0.0, %v2920
        %v2922 = vpop.f32.mrb[0].mxu0
        %2923 = vmatprep.mubr.bf16.mxu0 0
        %2924 = vmatmul.mubr.bf16.gmra.mrb[0].mxu0 %v2698
        %v2925 = vpop.f32.mrb[0].mxu0
        %v2926 = vadd.f32 0.0, %v2925
        %v2927 = vpop.f32.mrb[0].mxu0
        %v2928 = vpop.f32.mrb[0].mxu0
        %v2929 = vadd.f32 0.0, %v2928
        %v2930 = vpop.f32.mrb[0].mxu0
        %2931 = vmatprep.mubr.bf16.mxu0 0
        %2932 = vmatmul.mubr.bf16.gmra.mrb[0].mxu0 %v2701
        %v2933 = vpop.f32.mrb[0].mxu0
        %v2934 = vadd.f32 0.0, %v2933
        %v2935 = vpop.f32.mrb[0].mxu0
        %v2936 = vpop.f32.mrb[0].mxu0
        %v2937 = vadd.f32 0.0, %v2936
        %v2938 = vpop.f32.mrb[0].mxu0
        %2939 = vmatprep.mubr.bf16.mxu0 0
        %2940 = vmatmul.mubr.bf16.gmra.mrb[0].mxu0 %v2704
        %v2941 = vpop.f32.mrb[0].mxu0
        %v2942 = vadd.f32 0.0, %v2941
        %v2943 = vpop.f32.mrb[0].mxu0
        %v2944 = vpop.f32.mrb[0].mxu0
        %v2945 = vadd.f32 0.0, %v2944
        %v2946 = vpop.f32.mrb[0].mxu0
        %2947 = vmatprep.mubr.bf16.mxu0 0
        %2948 = vmatmul.mubr.bf16.gmra.mrb[0].mxu0 %v2707
        %v2949 = vpop.f32.mrb[0].mxu0
        %v2950 = vadd.f32 0.0, %v2949
        %v2951 = vpop.f32.mrb[0].mxu0
        %v2952 = vpop.f32.mrb[0].mxu0
        %v2953 = vadd.f32 0.0, %v2952
        %v2954 = vpop.f32.mrb[0].mxu0
        %2955 = vmatprep.mubr.bf16.mxu0 0
        %2956 = vmatmul.mubr.bf16.gmra.mrb[0].mxu0 %v2710
        %v2957 = vpop.f32.mrb[0].mxu0
        %v2958 = vadd.f32 0.0, %v2957
        %v2959 = vpop.f32.mrb[0].mxu0
        %v2960 = vpop.f32.mrb[0].mxu0
        %v2961 = vadd.f32 0.0, %v2960
        %v2962 = vpop.f32.mrb[0].mxu0
        %2963 = vdwg.mxu0
        %v2964 = vadd.f32 %v2494, %v2750
        %v2965 = vadd.f32 %v2495, %v2753
        %v2966 = vadd.f32 %v2496, %v2758
        %v2967 = vadd.f32 %v2497, %v2761
        %v2968 = vadd.f32 %v2498, %v2766
        %v2969 = vadd.f32 %v2499, %v2769
        %v2970 = vadd.f32 %v2500, %v2774
        %v2971 = vadd.f32 %v2501, %v2777
        %v2972 = vadd.f32 %v2502, %v2782
        %v2973 = vadd.f32 %v2503, %v2785
        %v2974 = vadd.f32 %v2504, %v2790
        %v2975 = vadd.f32 %v2505, %v2793
        %v2976 = vadd.f32 %v2506, %v2798
        %v2977 = vadd.f32 %v2507, %v2801
        %v2978 = vadd.f32 %v2508, %v2806
        %v2979 = vadd.f32 %v2509, %v2809
        %v2980 = vadd.f32 %v2510, %v2814
        %v2981 = vadd.f32 %v2511, %v2817
        %v2982 = vadd.f32 %v2512, %v2822
        %v2983 = vadd.f32 %v2513, %v2825
        %v2984 = vadd.f32 %v2514, %v2830
        %v2985 = vadd.f32 %v2515, %v2833
        %v2986 = vadd.f32 %v2516, %v2838
        %v2987 = vadd.f32 %v2517, %v2841
        %v2988 = vadd.f32 %v2518, %v2846
        %v2989 = vadd.f32 %v2519, %v2849
        %v2990 = vadd.f32 %v2520, %v2854
        %v2991 = vadd.f32 %v2521, %v2857
        %v2992 = vadd.f32 %v2522, %v2862
        %v2993 = vadd.f32 %v2523, %v2865
        %v2994 = vadd.f32 %v2524, %v2870
        %v2995 = vadd.f32 %v2525, %v2873
        %v2996 = vadd.f32 %v2526, %v2878
        %v2997 = vadd.f32 %v2527, %v2881
        %v2998 = vadd.f32 %v2528, %v2886
        %v2999 = vadd.f32 %v2529, %v2889
        %v3000 = vadd.f32 %v2530, %v2894
        %v3001 = vadd.f32 %v2531, %v2897
        %v3002 = vadd.f32 %v2532, %v2902
        %v3003 = vadd.f32 %v2533, %v2905
        %v3004 = vadd.f32 %v2534, %v2910
        %v3005 = vadd.f32 %v2535, %v2913
        %v3006 = vadd.f32 %v2536, %v2918
        %v3007 = vadd.f32 %v2537, %v2921
        %v3008 = vadd.f32 %v2538, %v2926
        %v3009 = vadd.f32 %v2539, %v2929
        %v3010 = vadd.f32 %v2540, %v2934
        %v3011 = vadd.f32 %v2541, %v2937
        %v3012 = vadd.f32 %v2542, %v2942
        %v3013 = vadd.f32 %v2543, %v2945
        %v3014 = vadd.f32 %v2544, %v2950
        %v3015 = vadd.f32 %v2545, %v2953
        %v3016 = vadd.f32 %v2546, %v2958
        %v3017 = vadd.f32 %v2547, %v2961
        %s3018 = scalar_lea.vmem %s302, 64
        %v3019 = vld [vmem:[%s3018] sm:$0xff]
        %v3020 = vld [vmem:[%s3018 + $0x8] sm:$0xff]
        %v3021 = vld [vmem:[%s3018 + $0x10] sm:$0xff]
        %v3022 = vld [vmem:[%s3018 + $0x20] sm:$0xff]
        %v3023 = vld [vmem:[%s3018 + $0x28] sm:$0xff]
        %v3024 = vld [vmem:[%s3018 + $0x30] sm:$0xff]
        %v3025 = vld [vmem:[%s3018 + $0x40] sm:$0xff]
        %v3026 = vld [vmem:[%s3018 + $0x48] sm:$0xff]
        %v3027 = vld [vmem:[%s3018 + $0x50] sm:$0xff]
        %v3028 = vld [vmem:[%s3018 + $0x60] sm:$0xff]
        %v3029 = vld [vmem:[%s3018 + $0x68] sm:$0xff]
        %v3030 = vld [vmem:[%s3018 + $0x70] sm:$0xff]
        %v3031 = vld [vmem:[%s3018 + $0x80] sm:$0xff]
        %v3032 = vld [vmem:[%s3018 + $0x88] sm:$0xff]
        %v3033 = vld [vmem:[%s3018 + $0x90] sm:$0xff]
        %v3034 = vld [vmem:[%s3018 + $0xa0] sm:$0xff]
        %v3035 = vld [vmem:[%s3018 + $0xa8] sm:$0xff]
        %v3036 = vld [vmem:[%s3018 + $0xb0] sm:$0xff]
        %v3037 = vld [vmem:[%s3018 + $0xc0] sm:$0xff]
        %v3038 = vld [vmem:[%s3018 + $0xc8] sm:$0xff]
        %v3039 = vld [vmem:[%s3018 + $0xd0] sm:$0xff]
        %v3040 = vld [vmem:[%s3018 + $0xe0] sm:$0xff]
        %v3041 = vld [vmem:[%s3018 + $0xe8] sm:$0xff]
        %v3042 = vld [vmem:[%s3018 + $0xf0] sm:$0xff]
        %v3043 = vld [vmem:[%s3018 + $0x100] sm:$0xff]
        %v3044 = vld [vmem:[%s3018 + $0x108] sm:$0xff]
        %v3045 = vld [vmem:[%s3018 + $0x110] sm:$0xff]
        %v3046 = vld [vmem:[%s3018 + $0x120] sm:$0xff]
        %v3047 = vld [vmem:[%s3018 + $0x128] sm:$0xff]
        %v3048 = vld [vmem:[%s3018 + $0x130] sm:$0xff]
        %v3049 = vld [vmem:[%s3018 + $0x140] sm:$0xff]
        %v3050 = vld [vmem:[%s3018 + $0x148] sm:$0xff]
        %v3051 = vld [vmem:[%s3018 + $0x150] sm:$0xff]
        %v3052 = vld [vmem:[%s3018 + $0x160] sm:$0xff]
        %v3053 = vld [vmem:[%s3018 + $0x168] sm:$0xff]
        %v3054 = vld [vmem:[%s3018 + $0x170] sm:$0xff]
        %v3055 = vld [vmem:[%s3018 + $0x180] sm:$0xff]
        %v3056 = vld [vmem:[%s3018 + $0x188] sm:$0xff]
        %v3057 = vld [vmem:[%s3018 + $0x190] sm:$0xff]
        %v3058 = vld [vmem:[%s3018 + $0x1a0] sm:$0xff]
        %v3059 = vld [vmem:[%s3018 + $0x1a8] sm:$0xff]
        %v3060 = vld [vmem:[%s3018 + $0x1b0] sm:$0xff]
        %v3061 = vld [vmem:[%s3018 + $0x1c0] sm:$0xff]
        %v3062 = vld [vmem:[%s3018 + $0x1c8] sm:$0xff]
        %v3063 = vld [vmem:[%s3018 + $0x1d0] sm:$0xff]
        %v3064 = vld [vmem:[%s3018 + $0x1e0] sm:$0xff]
        %v3065 = vld [vmem:[%s3018 + $0x1e8] sm:$0xff]
        %v3066 = vld [vmem:[%s3018 + $0x1f0] sm:$0xff]
        %v3067 = vld [vmem:[%s3018 + $0x200] sm:$0xff]
        %v3068 = vld [vmem:[%s3018 + $0x208] sm:$0xff]
        %v3069 = vld [vmem:[%s3018 + $0x210] sm:$0xff]
        %v3070 = vld [vmem:[%s3018 + $0x220] sm:$0xff]
        %v3071 = vld [vmem:[%s3018 + $0x228] sm:$0xff]
        %v3072 = vld [vmem:[%s3018 + $0x230] sm:$0xff]
        %v3073 = vpack.c.bf16 %v3020, %v3019
        %v3074 = vpack.c.bf16 %v3022, %v3021
        %v3075 = vpack.c.bf16 %v3024, %v3023
        %v3076 = vpack.c.bf16 %v3026, %v3025
        %v3077 = vpack.c.bf16 %v3028, %v3027
        %v3078 = vpack.c.bf16 %v3030, %v3029
        %v3079 = vpack.c.bf16 %v3032, %v3031
        %v3080 = vpack.c.bf16 %v3034, %v3033
        %v3081 = vpack.c.bf16 %v3036, %v3035
        %v3082 = vpack.c.bf16 %v3038, %v3037
        %v3083 = vpack.c.bf16 %v3040, %v3039
        %v3084 = vpack.c.bf16 %v3042, %v3041
        %v3085 = vpack.c.bf16 %v3044, %v3043
        %v3086 = vpack.c.bf16 %v3046, %v3045
        %v3087 = vpack.c.bf16 %v3048, %v3047
        %v3088 = vpack.c.bf16 %v3050, %v3049
        %v3089 = vpack.c.bf16 %v3052, %v3051
        %v3090 = vpack.c.bf16 %v3054, %v3053
        %v3091 = vpack.c.bf16 %v3056, %v3055
        %v3092 = vpack.c.bf16 %v3058, %v3057
        %v3093 = vpack.c.bf16 %v3060, %v3059
        %v3094 = vpack.c.bf16 %v3062, %v3061
        %v3095 = vpack.c.bf16 %v3064, %v3063
        %v3096 = vpack.c.bf16 %v3066, %v3065
        %v3097 = vpack.c.bf16 %v3068, %v3067
        %v3098 = vpack.c.bf16 %v3070, %v3069
        %v3099 = vpack.c.bf16 %v3072, %v3071
        %s3100 = scalar_lea.vmem %s2, 12
        %v3101 = vld [vmem:[%s3100] sm:$0x3]
        %v3103 = vsel %vm469, %v3073, 0
        %v3106 = vsel %vm469, %v3074, 0
        %v3109 = vsel %vm469, %v3075, 0
        %v3112 = vsel %vm469, %v3076, 0
        %v3115 = vsel %vm469, %v3077, 0
        %v3118 = vsel %vm469, %v3078, 0
        %v3121 = vsel %vm469, %v3079, 0
        %v3124 = vsel %vm469, %v3080, 0
        %v3127 = vsel %vm469, %v3081, 0
        %v3130 = vsel %vm469, %v3082, 0
        %v3133 = vsel %vm469, %v3083, 0
        %v3136 = vsel %vm469, %v3084, 0
        %v3139 = vsel %vm469, %v3085, 0
        %v3142 = vsel %vm469, %v3086, 0
        %v3145 = vsel %vm469, %v3087, 0
        %v3148 = vsel %vm469, %v3088, 0
        %v3151 = vsel %vm469, %v3089, 0
        %v3154 = vsel %vm469, %v3090, 0
        %v3157 = vsel %vm469, %v3091, 0
        %v3160 = vsel %vm469, %v3092, 0
        %v3163 = vsel %vm469, %v3093, 0
        %v3166 = vsel %vm469, %v3094, 0
        %v3169 = vsel %vm469, %v3095, 0
        %v3172 = vsel %vm469, %v3096, 0
        %v3175 = vsel %vm469, %v3097, 0
        %v3178 = vsel %vm469, %v3098, 0
        %v3181 = vsel %vm469, %v3099, 0
        %v3184 = vsel %vm551, %v3101, 0
        %3186 = vmatprep.subr.bf16.mxu0 0
        %3187 = vmatpush1.bf16.msra.mxu0 %v3184
        %3188 = vmatprep.subr.bf16.mxu0 0
        %3189 = vmatpush1.bf16.msra.mxu0 0
        %3190 = vmatprep.subr.bf16.mxu0 0
        %3191 = vmatpush1.bf16.msra.mxu0 0
        %3192 = vmatprep.subr.bf16.mxu0 0
        %3193 = vmatpush1.bf16.msra.mxu0 0
        %3194 = vmatprep.subr.bf16.mxu0 0
        %3195 = vmatpush1.bf16.msra.mxu0 0
        %3196 = vmatprep.subr.bf16.mxu0 0
        %3197 = vmatpush1.bf16.msra.mxu0 0
        %3198 = vmatprep.subr.bf16.mxu0 0
        %3199 = vmatpush1.bf16.msra.mxu0 0
        %3200 = vmatprep.subr.bf16.mxu0 0
        %3201 = vmatpush1.bf16.msra.mxu0 0
        %3202 = vmatprep.subr.bf16.mxu0 0
        %3203 = vmatpush1.bf16.msra.mxu0 0
        %3204 = vmatprep.subr.bf16.mxu0 0
        %3205 = vmatpush1.bf16.msra.mxu0 0
        %3206 = vmatprep.subr.bf16.mxu0 0
        %3207 = vmatpush1.bf16.msra.mxu0 0
        %3208 = vmatprep.subr.bf16.mxu0 0
        %3209 = vmatpush1.bf16.msra.mxu0 0
        %3210 = vmatprep.subr.bf16.mxu0 0
        %3211 = vmatpush1.bf16.msra.mxu0 0
        %3212 = vmatprep.subr.bf16.mxu0 0
        %3213 = vmatpush1.bf16.msra.mxu0 0
        %3214 = vmatprep.subr.bf16.mxu0 0
        %3215 = vmatpush1.bf16.msra.mxu0 0
        %3216 = vmatprep.subr.bf16.mxu0 0
        %3217 = vmatpush1.bf16.msra.mxu0 0
        %3218 = vmatprep.mubr.bf16.mxu0 0
        %3219 = vmatmul.mubr.bf16.gmra.mrb[0].mxu0 %v3103
        %v3220 = vpop.f32.mrb[0].mxu0
        %v3221 = vadd.f32 0.0, %v3220
        %v3222 = vpop.f32.mrb[0].mxu0
        %v3223 = vpop.f32.mrb[0].mxu0
        %v3224 = vadd.f32 0.0, %v3223
        %v3225 = vpop.f32.mrb[0].mxu0
        %3226 = vmatprep.mubr.bf16.mxu0 0
        %3227 = vmatmul.mubr.bf16.gmra.mrb[0].mxu0 %v3106
        %v3228 = vpop.f32.mrb[0].mxu0
        %v3229 = vadd.f32 0.0, %v3228
        %v3230 = vpop.f32.mrb[0].mxu0
        %v3231 = vpop.f32.mrb[0].mxu0
        %v3232 = vadd.f32 0.0, %v3231
        %v3233 = vpop.f32.mrb[0].mxu0
        %3234 = vmatprep.mubr.bf16.mxu0 0
        %3235 = vmatmul.mubr.bf16.gmra.mrb[0].mxu0 %v3109
        %v3236 = vpop.f32.mrb[0].mxu0
        %v3237 = vadd.f32 0.0, %v3236
        %v3238 = vpop.f32.mrb[0].mxu0
        %v3239 = vpop.f32.mrb[0].mxu0
        %v3240 = vadd.f32 0.0, %v3239
        %v3241 = vpop.f32.mrb[0].mxu0
        %3242 = vmatprep.mubr.bf16.mxu0 0
        %3243 = vmatmul.mubr.bf16.gmra.mrb[0].mxu0 %v3112
        %v3244 = vpop.f32.mrb[0].mxu0
        %v3245 = vadd.f32 0.0, %v3244
        %v3246 = vpop.f32.mrb[0].mxu0
        %v3247 = vpop.f32.mrb[0].mxu0
        %v3248 = vadd.f32 0.0, %v3247
        %v3249 = vpop.f32.mrb[0].mxu0
        %3250 = vmatprep.mubr.bf16.mxu0 0
        %3251 = vmatmul.mubr.bf16.gmra.mrb[0].mxu0 %v3115
        %v3252 = vpop.f32.mrb[0].mxu0
        %v3253 = vadd.f32 0.0, %v3252
        %v3254 = vpop.f32.mrb[0].mxu0
        %v3255 = vpop.f32.mrb[0].mxu0
        %v3256 = vadd.f32 0.0, %v3255
        %v3257 = vpop.f32.mrb[0].mxu0
        %3258 = vmatprep.mubr.bf16.mxu0 0
        %3259 = vmatmul.mubr.bf16.gmra.mrb[0].mxu0 %v3118
        %v3260 = vpop.f32.mrb[0].mxu0
        %v3261 = vadd.f32 0.0, %v3260
        %v3262 = vpop.f32.mrb[0].mxu0
        %v3263 = vpop.f32.mrb[0].mxu0
        %v3264 = vadd.f32 0.0, %v3263
        %v3265 = vpop.f32.mrb[0].mxu0
        %3266 = vmatprep.mubr.bf16.mxu0 0
        %3267 = vmatmul.mubr.bf16.gmra.mrb[0].mxu0 %v3121
        %v3268 = vpop.f32.mrb[0].mxu0
        %v3269 = vadd.f32 0.0, %v3268
        %v3270 = vpop.f32.mrb[0].mxu0
        %v3271 = vpop.f32.mrb[0].mxu0
        %v3272 = vadd.f32 0.0, %v3271
        %v3273 = vpop.f32.mrb[0].mxu0
        %3274 = vmatprep.mubr.bf16.mxu0 0
        %3275 = vmatmul.mubr.bf16.gmra.mrb[0].mxu0 %v3124
        %v3276 = vpop.f32.mrb[0].mxu0
        %v3277 = vadd.f32 0.0, %v3276
        %v3278 = vpop.f32.mrb[0].mxu0
        %v3279 = vpop.f32.mrb[0].mxu0
        %v3280 = vadd.f32 0.0, %v3279
        %v3281 = vpop.f32.mrb[0].mxu0
        %3282 = vmatprep.mubr.bf16.mxu0 0
        %3283 = vmatmul.mubr.bf16.gmra.mrb[0].mxu0 %v3127
        %v3284 = vpop.f32.mrb[0].mxu0
        %v3285 = vadd.f32 0.0, %v3284
        %v3286 = vpop.f32.mrb[0].mxu0
        %v3287 = vpop.f32.mrb[0].mxu0
        %v3288 = vadd.f32 0.0, %v3287
        %v3289 = vpop.f32.mrb[0].mxu0
        %3290 = vmatprep.mubr.bf16.mxu0 0
        %3291 = vmatmul.mubr.bf16.gmra.mrb[0].mxu0 %v3130
        %v3292 = vpop.f32.mrb[0].mxu0
        %v3293 = vadd.f32 0.0, %v3292
        %v3294 = vpop.f32.mrb[0].mxu0
        %v3295 = vpop.f32.mrb[0].mxu0
        %v3296 = vadd.f32 0.0, %v3295
        %v3297 = vpop.f32.mrb[0].mxu0
        %3298 = vmatprep.mubr.bf16.mxu0 0
        %3299 = vmatmul.mubr.bf16.gmra.mrb[0].mxu0 %v3133
        %v3300 = vpop.f32.mrb[0].mxu0
        %v3301 = vadd.f32 0.0, %v3300
        %v3302 = vpop.f32.mrb[0].mxu0
        %v3303 = vpop.f32.mrb[0].mxu0
        %v3304 = vadd.f32 0.0, %v3303
        %v3305 = vpop.f32.mrb[0].mxu0
        %3306 = vmatprep.mubr.bf16.mxu0 0
        %3307 = vmatmul.mubr.bf16.gmra.mrb[0].mxu0 %v3136
        %v3308 = vpop.f32.mrb[0].mxu0
        %v3309 = vadd.f32 0.0, %v3308
        %v3310 = vpop.f32.mrb[0].mxu0
        %v3311 = vpop.f32.mrb[0].mxu0
        %v3312 = vadd.f32 0.0, %v3311
        %v3313 = vpop.f32.mrb[0].mxu0
        %3314 = vmatprep.mubr.bf16.mxu0 0
        %3315 = vmatmul.mubr.bf16.gmra.mrb[0].mxu0 %v3139
        %v3316 = vpop.f32.mrb[0].mxu0
        %v3317 = vadd.f32 0.0, %v3316
        %v3318 = vpop.f32.mrb[0].mxu0
        %v3319 = vpop.f32.mrb[0].mxu0
        %v3320 = vadd.f32 0.0, %v3319
        %v3321 = vpop.f32.mrb[0].mxu0
        %3322 = vmatprep.mubr.bf16.mxu0 0
        %3323 = vmatmul.mubr.bf16.gmra.mrb[0].mxu0 %v3142
        %v3324 = vpop.f32.mrb[0].mxu0
        %v3325 = vadd.f32 0.0, %v3324
        %v3326 = vpop.f32.mrb[0].mxu0
        %v3327 = vpop.f32.mrb[0].mxu0
        %v3328 = vadd.f32 0.0, %v3327
        %v3329 = vpop.f32.mrb[0].mxu0
        %3330 = vmatprep.mubr.bf16.mxu0 0
        %3331 = vmatmul.mubr.bf16.gmra.mrb[0].mxu0 %v3145
        %v3332 = vpop.f32.mrb[0].mxu0
        %v3333 = vadd.f32 0.0, %v3332
        %v3334 = vpop.f32.mrb[0].mxu0
        %v3335 = vpop.f32.mrb[0].mxu0
        %v3336 = vadd.f32 0.0, %v3335
        %v3337 = vpop.f32.mrb[0].mxu0
        %3338 = vmatprep.mubr.bf16.mxu0 0
        %3339 = vmatmul.mubr.bf16.gmra.mrb[0].mxu0 %v3148
        %v3340 = vpop.f32.mrb[0].mxu0
        %v3341 = vadd.f32 0.0, %v3340
        %v3342 = vpop.f32.mrb[0].mxu0
        %v3343 = vpop.f32.mrb[0].mxu0
        %v3344 = vadd.f32 0.0, %v3343
        %v3345 = vpop.f32.mrb[0].mxu0
        %3346 = vmatprep.mubr.bf16.mxu0 0
        %3347 = vmatmul.mubr.bf16.gmra.mrb[0].mxu0 %v3151
        %v3348 = vpop.f32.mrb[0].mxu0
        %v3349 = vadd.f32 0.0, %v3348
        %v3350 = vpop.f32.mrb[0].mxu0
        %v3351 = vpop.f32.mrb[0].mxu0
        %v3352 = vadd.f32 0.0, %v3351
        %v3353 = vpop.f32.mrb[0].mxu0
        %3354 = vmatprep.mubr.bf16.mxu0 0
        %3355 = vmatmul.mubr.bf16.gmra.mrb[0].mxu0 %v3154
        %v3356 = vpop.f32.mrb[0].mxu0
        %v3357 = vadd.f32 0.0, %v3356
        %v3358 = vpop.f32.mrb[0].mxu0
        %v3359 = vpop.f32.mrb[0].mxu0
        %v3360 = vadd.f32 0.0, %v3359
        %v3361 = vpop.f32.mrb[0].mxu0
        %3362 = vmatprep.mubr.bf16.mxu0 0
        %3363 = vmatmul.mubr.bf16.gmra.mrb[0].mxu0 %v3157
        %v3364 = vpop.f32.mrb[0].mxu0
        %v3365 = vadd.f32 0.0, %v3364
        %v3366 = vpop.f32.mrb[0].mxu0
        %v3367 = vpop.f32.mrb[0].mxu0
        %v3368 = vadd.f32 0.0, %v3367
        %v3369 = vpop.f32.mrb[0].mxu0
        %3370 = vmatprep.mubr.bf16.mxu0 0
        %3371 = vmatmul.mubr.bf16.gmra.mrb[0].mxu0 %v3160
        %v3372 = vpop.f32.mrb[0].mxu0
        %v3373 = vadd.f32 0.0, %v3372
        %v3374 = vpop.f32.mrb[0].mxu0
        %v3375 = vpop.f32.mrb[0].mxu0
        %v3376 = vadd.f32 0.0, %v3375
        %v3377 = vpop.f32.mrb[0].mxu0
        %3378 = vmatprep.mubr.bf16.mxu0 0
        %3379 = vmatmul.mubr.bf16.gmra.mrb[0].mxu0 %v3163
        %v3380 = vpop.f32.mrb[0].mxu0
        %v3381 = vadd.f32 0.0, %v3380
        %v3382 = vpop.f32.mrb[0].mxu0
        %v3383 = vpop.f32.mrb[0].mxu0
        %v3384 = vadd.f32 0.0, %v3383
        %v3385 = vpop.f32.mrb[0].mxu0
        %3386 = vmatprep.mubr.bf16.mxu0 0
        %3387 = vmatmul.mubr.bf16.gmra.mrb[0].mxu0 %v3166
        %v3388 = vpop.f32.mrb[0].mxu0
        %v3389 = vadd.f32 0.0, %v3388
        %v3390 = vpop.f32.mrb[0].mxu0
        %v3391 = vpop.f32.mrb[0].mxu0
        %v3392 = vadd.f32 0.0, %v3391
        %v3393 = vpop.f32.mrb[0].mxu0
        %3394 = vmatprep.mubr.bf16.mxu0 0
        %3395 = vmatmul.mubr.bf16.gmra.mrb[0].mxu0 %v3169
        %v3396 = vpop.f32.mrb[0].mxu0
        %v3397 = vadd.f32 0.0, %v3396
        %v3398 = vpop.f32.mrb[0].mxu0
        %v3399 = vpop.f32.mrb[0].mxu0
        %v3400 = vadd.f32 0.0, %v3399
        %v3401 = vpop.f32.mrb[0].mxu0
        %3402 = vmatprep.mubr.bf16.mxu0 0
        %3403 = vmatmul.mubr.bf16.gmra.mrb[0].mxu0 %v3172
        %v3404 = vpop.f32.mrb[0].mxu0
        %v3405 = vadd.f32 0.0, %v3404
        %v3406 = vpop.f32.mrb[0].mxu0
        %v3407 = vpop.f32.mrb[0].mxu0
        %v3408 = vadd.f32 0.0, %v3407
        %v3409 = vpop.f32.mrb[0].mxu0
        %3410 = vmatprep.mubr.bf16.mxu0 0
        %3411 = vmatmul.mubr.bf16.gmra.mrb[0].mxu0 %v3175
        %v3412 = vpop.f32.mrb[0].mxu0
        %v3413 = vadd.f32 0.0, %v3412
        %v3414 = vpop.f32.mrb[0].mxu0
        %v3415 = vpop.f32.mrb[0].mxu0
        %v3416 = vadd.f32 0.0, %v3415
        %v3417 = vpop.f32.mrb[0].mxu0
        %3418 = vmatprep.mubr.bf16.mxu0 0
        %3419 = vmatmul.mubr.bf16.gmra.mrb[0].mxu0 %v3178
        %v3420 = vpop.f32.mrb[0].mxu0
        %v3421 = vadd.f32 0.0, %v3420
        %v3422 = vpop.f32.mrb[0].mxu0
        %v3423 = vpop.f32.mrb[0].mxu0
        %v3424 = vadd.f32 0.0, %v3423
        %v3425 = vpop.f32.mrb[0].mxu0
        %3426 = vmatprep.mubr.bf16.mxu0 0
        %3427 = vmatmul.mubr.bf16.gmra.mrb[0].mxu0 %v3181
        %v3428 = vpop.f32.mrb[0].mxu0
        %v3429 = vadd.f32 0.0, %v3428
        %v3430 = vpop.f32.mrb[0].mxu0
        %v3431 = vpop.f32.mrb[0].mxu0
        %v3432 = vadd.f32 0.0, %v3431
        %v3433 = vpop.f32.mrb[0].mxu0
        %3434 = vdwg.mxu0
        %v3435 = vadd.f32 %v2964, %v3221
        %v3436 = vadd.f32 %v2965, %v3224
        %v3437 = vadd.f32 %v2966, %v3229
        %v3438 = vadd.f32 %v2967, %v3232
        %v3439 = vadd.f32 %v2968, %v3237
        %v3440 = vadd.f32 %v2969, %v3240
        %v3441 = vadd.f32 %v2970, %v3245
        %v3442 = vadd.f32 %v2971, %v3248
        %v3443 = vadd.f32 %v2972, %v3253
        %v3444 = vadd.f32 %v2973, %v3256
        %v3445 = vadd.f32 %v2974, %v3261
        %v3446 = vadd.f32 %v2975, %v3264
        %v3447 = vadd.f32 %v2976, %v3269
        %v3448 = vadd.f32 %v2977, %v3272
        %v3449 = vadd.f32 %v2978, %v3277
        %v3450 = vadd.f32 %v2979, %v3280
        %v3451 = vadd.f32 %v2980, %v3285
        %v3452 = vadd.f32 %v2981, %v3288
        %v3453 = vadd.f32 %v2982, %v3293
        %v3454 = vadd.f32 %v2983, %v3296
        %v3455 = vadd.f32 %v2984, %v3301
        %v3456 = vadd.f32 %v2985, %v3304
        %v3457 = vadd.f32 %v2986, %v3309
        %v3458 = vadd.f32 %v2987, %v3312
        %v3459 = vadd.f32 %v2988, %v3317
        %v3460 = vadd.f32 %v2989, %v3320
        %v3461 = vadd.f32 %v2990, %v3325
        %v3462 = vadd.f32 %v2991, %v3328
        %v3463 = vadd.f32 %v2992, %v3333
        %v3464 = vadd.f32 %v2993, %v3336
        %v3465 = vadd.f32 %v2994, %v3341
        %v3466 = vadd.f32 %v2995, %v3344
        %v3467 = vadd.f32 %v2996, %v3349
        %v3468 = vadd.f32 %v2997, %v3352
        %v3469 = vadd.f32 %v2998, %v3357
        %v3470 = vadd.f32 %v2999, %v3360
        %v3471 = vadd.f32 %v3000, %v3365
        %v3472 = vadd.f32 %v3001, %v3368
        %v3473 = vadd.f32 %v3002, %v3373
        %v3474 = vadd.f32 %v3003, %v3376
        %v3475 = vadd.f32 %v3004, %v3381
        %v3476 = vadd.f32 %v3005, %v3384
        %v3477 = vadd.f32 %v3006, %v3389
        %v3478 = vadd.f32 %v3007, %v3392
        %v3479 = vadd.f32 %v3008, %v3397
        %v3480 = vadd.f32 %v3009, %v3400
        %v3481 = vadd.f32 %v3010, %v3405
        %v3482 = vadd.f32 %v3011, %v3408
        %v3483 = vadd.f32 %v3012, %v3413
        %v3484 = vadd.f32 %v3013, %v3416
        %v3485 = vadd.f32 %v3014, %v3421
        %v3486 = vadd.f32 %v3015, %v3424
        %v3487 = vadd.f32 %v3016, %v3429
        %v3488 = vadd.f32 %v3017, %v3432
        %v3489 = vld [vmem:[%s3018 + $0x1] sm:$0xff]
        %v3490 = vld [vmem:[%s3018 + $0x9] sm:$0xff]
        %v3491 = vld [vmem:[%s3018 + $0x11] sm:$0xff]
        %v3492 = vld [vmem:[%s3018 + $0x21] sm:$0xff]
        %v3493 = vld [vmem:[%s3018 + $0x29] sm:$0xff]
        %v3494 = vld [vmem:[%s3018 + $0x31] sm:$0xff]
        %v3495 = vld [vmem:[%s3018 + $0x41] sm:$0xff]
        %v3496 = vld [vmem:[%s3018 + $0x49] sm:$0xff]
        %v3497 = vld [vmem:[%s3018 + $0x51] sm:$0xff]
        %v3498 = vld [vmem:[%s3018 + $0x61] sm:$0xff]
        %v3499 = vld [vmem:[%s3018 + $0x69] sm:$0xff]
        %v3500 = vld [vmem:[%s3018 + $0x71] sm:$0xff]
        %v3501 = vld [vmem:[%s3018 + $0x81] sm:$0xff]
        %v3502 = vld [vmem:[%s3018 + $0x89] sm:$0xff]
        %v3503 = vld [vmem:[%s3018 + $0x91] sm:$0xff]
        %v3504 = vld [vmem:[%s3018 + $0xa1] sm:$0xff]
        %v3505 = vld [vmem:[%s3018 + $0xa9] sm:$0xff]
        %v3506 = vld [vmem:[%s3018 + $0xb1] sm:$0xff]
        %v3507 = vld [vmem:[%s3018 + $0xc1] sm:$0xff]
        %v3508 = vld [vmem:[%s3018 + $0xc9] sm:$0xff]
        %v3509 = vld [vmem:[%s3018 + $0xd1] sm:$0xff]
        %v3510 = vld [vmem:[%s3018 + $0xe1] sm:$0xff]
        %v3511 = vld [vmem:[%s3018 + $0xe9] sm:$0xff]
        %v3512 = vld [vmem:[%s3018 + $0xf1] sm:$0xff]
        %v3513 = vld [vmem:[%s3018 + $0x101] sm:$0xff]
        %v3514 = vld [vmem:[%s3018 + $0x109] sm:$0xff]
        %v3515 = vld [vmem:[%s3018 + $0x111] sm:$0xff]
        %v3516 = vld [vmem:[%s3018 + $0x121] sm:$0xff]
        %v3517 = vld [vmem:[%s3018 + $0x129] sm:$0xff]
        %v3518 = vld [vmem:[%s3018 + $0x131] sm:$0xff]
        %v3519 = vld [vmem:[%s3018 + $0x141] sm:$0xff]
        %v3520 = vld [vmem:[%s3018 + $0x149] sm:$0xff]
        %v3521 = vld [vmem:[%s3018 + $0x151] sm:$0xff]
        %v3522 = vld [vmem:[%s3018 + $0x161] sm:$0xff]
        %v3523 = vld [vmem:[%s3018 + $0x169] sm:$0xff]
        %v3524 = vld [vmem:[%s3018 + $0x171] sm:$0xff]
        %v3525 = vld [vmem:[%s3018 + $0x181] sm:$0xff]
        %v3526 = vld [vmem:[%s3018 + $0x189] sm:$0xff]
        %v3527 = vld [vmem:[%s3018 + $0x191] sm:$0xff]
        %v3528 = vld [vmem:[%s3018 + $0x1a1] sm:$0xff]
        %v3529 = vld [vmem:[%s3018 + $0x1a9] sm:$0xff]
        %v3530 = vld [vmem:[%s3018 + $0x1b1] sm:$0xff]
        %v3531 = vld [vmem:[%s3018 + $0x1c1] sm:$0xff]
        %v3532 = vld [vmem:[%s3018 + $0x1c9] sm:$0xff]
        %v3533 = vld [vmem:[%s3018 + $0x1d1] sm:$0xff]
        %v3534 = vld [vmem:[%s3018 + $0x1e1] sm:$0xff]
        %v3535 = vld [vmem:[%s3018 + $0x1e9] sm:$0xff]
        %v3536 = vld [vmem:[%s3018 + $0x1f1] sm:$0xff]
        %v3537 = vld [vmem:[%s3018 + $0x201] sm:$0xff]
        %v3538 = vld [vmem:[%s3018 + $0x209] sm:$0xff]
        %v3539 = vld [vmem:[%s3018 + $0x211] sm:$0xff]
        %v3540 = vld [vmem:[%s3018 + $0x221] sm:$0xff]
        %v3541 = vld [vmem:[%s3018 + $0x229] sm:$0xff]
        %v3542 = vld [vmem:[%s3018 + $0x231] sm:$0xff]
        %v3543 = vpack.c.bf16 %v3490, %v3489
        %v3544 = vpack.c.bf16 %v3492, %v3491
        %v3545 = vpack.c.bf16 %v3494, %v3493
        %v3546 = vpack.c.bf16 %v3496, %v3495
        %v3547 = vpack.c.bf16 %v3498, %v3497
        %v3548 = vpack.c.bf16 %v3500, %v3499
        %v3549 = vpack.c.bf16 %v3502, %v3501
        %v3550 = vpack.c.bf16 %v3504, %v3503
        %v3551 = vpack.c.bf16 %v3506, %v3505
        %v3552 = vpack.c.bf16 %v3508, %v3507
        %v3553 = vpack.c.bf16 %v3510, %v3509
        %v3554 = vpack.c.bf16 %v3512, %v3511
        %v3555 = vpack.c.bf16 %v3514, %v3513
        %v3556 = vpack.c.bf16 %v3516, %v3515
        %v3557 = vpack.c.bf16 %v3518, %v3517
        %v3558 = vpack.c.bf16 %v3520, %v3519
        %v3559 = vpack.c.bf16 %v3522, %v3521
        %v3560 = vpack.c.bf16 %v3524, %v3523
        %v3561 = vpack.c.bf16 %v3526, %v3525
        %v3562 = vpack.c.bf16 %v3528, %v3527
        %v3563 = vpack.c.bf16 %v3530, %v3529
        %v3564 = vpack.c.bf16 %v3532, %v3531
        %v3565 = vpack.c.bf16 %v3534, %v3533
        %v3566 = vpack.c.bf16 %v3536, %v3535
        %v3567 = vpack.c.bf16 %v3538, %v3537
        %v3568 = vpack.c.bf16 %v3540, %v3539
        %v3569 = vpack.c.bf16 %v3542, %v3541
        %s3570 = scalar_lea.vmem %s2, 14
        %v3571 = vld [vmem:[%s3570] sm:$0x3]
        %v3573 = vsel %vm469, %v3543, 0
        %v3576 = vsel %vm469, %v3544, 0
        %v3579 = vsel %vm469, %v3545, 0
        %v3582 = vsel %vm469, %v3546, 0
        %v3585 = vsel %vm469, %v3547, 0
        %v3588 = vsel %vm469, %v3548, 0
        %v3591 = vsel %vm469, %v3549, 0
        %v3594 = vsel %vm469, %v3550, 0
        %v3597 = vsel %vm469, %v3551, 0
        %v3600 = vsel %vm469, %v3552, 0
        %v3603 = vsel %vm469, %v3553, 0
        %v3606 = vsel %vm469, %v3554, 0
        %v3609 = vsel %vm469, %v3555, 0
        %v3612 = vsel %vm469, %v3556, 0
        %v3615 = vsel %vm469, %v3557, 0
        %v3618 = vsel %vm469, %v3558, 0
        %v3621 = vsel %vm469, %v3559, 0
        %v3624 = vsel %vm469, %v3560, 0
        %v3627 = vsel %vm469, %v3561, 0
        %v3630 = vsel %vm469, %v3562, 0
        %v3633 = vsel %vm469, %v3563, 0
        %v3636 = vsel %vm469, %v3564, 0
        %v3639 = vsel %vm469, %v3565, 0
        %v3642 = vsel %vm469, %v3566, 0
        %v3645 = vsel %vm469, %v3567, 0
        %v3648 = vsel %vm469, %v3568, 0
        %v3651 = vsel %vm469, %v3569, 0
        %v3654 = vsel %vm551, %v3571, 0
        %3656 = vmatprep.subr.bf16.mxu0 0
        %3657 = vmatpush1.bf16.msra.mxu0 %v3654
        %3658 = vmatprep.subr.bf16.mxu0 0
        %3659 = vmatpush1.bf16.msra.mxu0 0
        %3660 = vmatprep.subr.bf16.mxu0 0
        %3661 = vmatpush1.bf16.msra.mxu0 0
        %3662 = vmatprep.subr.bf16.mxu0 0
        %3663 = vmatpush1.bf16.msra.mxu0 0
        %3664 = vmatprep.subr.bf16.mxu0 0
        %3665 = vmatpush1.bf16.msra.mxu0 0
        %3666 = vmatprep.subr.bf16.mxu0 0
        %3667 = vmatpush1.bf16.msra.mxu0 0
        %3668 = vmatprep.subr.bf16.mxu0 0
        %3669 = vmatpush1.bf16.msra.mxu0 0
        %3670 = vmatprep.subr.bf16.mxu0 0
        %3671 = vmatpush1.bf16.msra.mxu0 0
        %3672 = vmatprep.subr.bf16.mxu0 0
        %3673 = vmatpush1.bf16.msra.mxu0 0
        %3674 = vmatprep.subr.bf16.mxu0 0
        %3675 = vmatpush1.bf16.msra.mxu0 0
        %3676 = vmatprep.subr.bf16.mxu0 0
        %3677 = vmatpush1.bf16.msra.mxu0 0
        %3678 = vmatprep.subr.bf16.mxu0 0
        %3679 = vmatpush1.bf16.msra.mxu0 0
        %3680 = vmatprep.subr.bf16.mxu0 0
        %3681 = vmatpush1.bf16.msra.mxu0 0
        %3682 = vmatprep.subr.bf16.mxu0 0
        %3683 = vmatpush1.bf16.msra.mxu0 0
        %3684 = vmatprep.subr.bf16.mxu0 0
        %3685 = vmatpush1.bf16.msra.mxu0 0
        %3686 = vmatprep.subr.bf16.mxu0 0
        %3687 = vmatpush1.bf16.msra.mxu0 0
        %3688 = vmatprep.mubr.bf16.mxu0 0
        %3689 = vmatmul.mubr.bf16.gmra.mrb[0].mxu0 %v3573
        %v3690 = vpop.f32.mrb[0].mxu0
        %v3691 = vadd.f32 0.0, %v3690
        %v3692 = vpop.f32.mrb[0].mxu0
        %v3693 = vpop.f32.mrb[0].mxu0
        %v3694 = vadd.f32 0.0, %v3693
        %v3695 = vpop.f32.mrb[0].mxu0
        %3696 = vmatprep.mubr.bf16.mxu0 0
        %3697 = vmatmul.mubr.bf16.gmra.mrb[0].mxu0 %v3576
        %v3698 = vpop.f32.mrb[0].mxu0
        %v3699 = vadd.f32 0.0, %v3698
        %v3700 = vpop.f32.mrb[0].mxu0
        %v3701 = vpop.f32.mrb[0].mxu0
        %v3702 = vadd.f32 0.0, %v3701
        %v3703 = vpop.f32.mrb[0].mxu0
        %3704 = vmatprep.mubr.bf16.mxu0 0
        %3705 = vmatmul.mubr.bf16.gmra.mrb[0].mxu0 %v3579
        %v3706 = vpop.f32.mrb[0].mxu0
        %v3707 = vadd.f32 0.0, %v3706
        %v3708 = vpop.f32.mrb[0].mxu0
        %v3709 = vpop.f32.mrb[0].mxu0
        %v3710 = vadd.f32 0.0, %v3709
        %v3711 = vpop.f32.mrb[0].mxu0
        %3712 = vmatprep.mubr.bf16.mxu0 0
        %3713 = vmatmul.mubr.bf16.gmra.mrb[0].mxu0 %v3582
        %v3714 = vpop.f32.mrb[0].mxu0
        %v3715 = vadd.f32 0.0, %v3714
        %v3716 = vpop.f32.mrb[0].mxu0
        %v3717 = vpop.f32.mrb[0].mxu0
        %v3718 = vadd.f32 0.0, %v3717
        %v3719 = vpop.f32.mrb[0].mxu0
        %3720 = vmatprep.mubr.bf16.mxu0 0
        %3721 = vmatmul.mubr.bf16.gmra.mrb[0].mxu0 %v3585
        %v3722 = vpop.f32.mrb[0].mxu0
        %v3723 = vadd.f32 0.0, %v3722
        %v3724 = vpop.f32.mrb[0].mxu0
        %v3725 = vpop.f32.mrb[0].mxu0
        %v3726 = vadd.f32 0.0, %v3725
        %v3727 = vpop.f32.mrb[0].mxu0
        %3728 = vmatprep.mubr.bf16.mxu0 0
        %3729 = vmatmul.mubr.bf16.gmra.mrb[0].mxu0 %v3588
        %v3730 = vpop.f32.mrb[0].mxu0
        %v3731 = vadd.f32 0.0, %v3730
        %v3732 = vpop.f32.mrb[0].mxu0
        %v3733 = vpop.f32.mrb[0].mxu0
        %v3734 = vadd.f32 0.0, %v3733
        %v3735 = vpop.f32.mrb[0].mxu0
        %3736 = vmatprep.mubr.bf16.mxu0 0
        %3737 = vmatmul.mubr.bf16.gmra.mrb[0].mxu0 %v3591
        %v3738 = vpop.f32.mrb[0].mxu0
        %v3739 = vadd.f32 0.0, %v3738
        %v3740 = vpop.f32.mrb[0].mxu0
        %v3741 = vpop.f32.mrb[0].mxu0
        %v3742 = vadd.f32 0.0, %v3741
        %v3743 = vpop.f32.mrb[0].mxu0
        %3744 = vmatprep.mubr.bf16.mxu0 0
        %3745 = vmatmul.mubr.bf16.gmra.mrb[0].mxu0 %v3594
        %v3746 = vpop.f32.mrb[0].mxu0
        %v3747 = vadd.f32 0.0, %v3746
        %v3748 = vpop.f32.mrb[0].mxu0
        %v3749 = vpop.f32.mrb[0].mxu0
        %v3750 = vadd.f32 0.0, %v3749
        %v3751 = vpop.f32.mrb[0].mxu0
        %3752 = vmatprep.mubr.bf16.mxu0 0
        %3753 = vmatmul.mubr.bf16.gmra.mrb[0].mxu0 %v3597
        %v3754 = vpop.f32.mrb[0].mxu0
        %v3755 = vadd.f32 0.0, %v3754
        %v3756 = vpop.f32.mrb[0].mxu0
        %v3757 = vpop.f32.mrb[0].mxu0
        %v3758 = vadd.f32 0.0, %v3757
        %v3759 = vpop.f32.mrb[0].mxu0
        %3760 = vmatprep.mubr.bf16.mxu0 0
        %3761 = vmatmul.mubr.bf16.gmra.mrb[0].mxu0 %v3600
        %v3762 = vpop.f32.mrb[0].mxu0
        %v3763 = vadd.f32 0.0, %v3762
        %v3764 = vpop.f32.mrb[0].mxu0
        %v3765 = vpop.f32.mrb[0].mxu0
        %v3766 = vadd.f32 0.0, %v3765
        %v3767 = vpop.f32.mrb[0].mxu0
        %3768 = vmatprep.mubr.bf16.mxu0 0
        %3769 = vmatmul.mubr.bf16.gmra.mrb[0].mxu0 %v3603
        %v3770 = vpop.f32.mrb[0].mxu0
        %v3771 = vadd.f32 0.0, %v3770
        %v3772 = vpop.f32.mrb[0].mxu0
        %v3773 = vpop.f32.mrb[0].mxu0
        %v3774 = vadd.f32 0.0, %v3773
        %v3775 = vpop.f32.mrb[0].mxu0
        %3776 = vmatprep.mubr.bf16.mxu0 0
        %3777 = vmatmul.mubr.bf16.gmra.mrb[0].mxu0 %v3606
        %v3778 = vpop.f32.mrb[0].mxu0
        %v3779 = vadd.f32 0.0, %v3778
        %v3780 = vpop.f32.mrb[0].mxu0
        %v3781 = vpop.f32.mrb[0].mxu0
        %v3782 = vadd.f32 0.0, %v3781
        %v3783 = vpop.f32.mrb[0].mxu0
        %3784 = vmatprep.mubr.bf16.mxu0 0
        %3785 = vmatmul.mubr.bf16.gmra.mrb[0].mxu0 %v3609
        %v3786 = vpop.f32.mrb[0].mxu0
        %v3787 = vadd.f32 0.0, %v3786
        %v3788 = vpop.f32.mrb[0].mxu0
        %v3789 = vpop.f32.mrb[0].mxu0
        %v3790 = vadd.f32 0.0, %v3789
        %v3791 = vpop.f32.mrb[0].mxu0
        %3792 = vmatprep.mubr.bf16.mxu0 0
        %3793 = vmatmul.mubr.bf16.gmra.mrb[0].mxu0 %v3612
        %v3794 = vpop.f32.mrb[0].mxu0
        %v3795 = vadd.f32 0.0, %v3794
        %v3796 = vpop.f32.mrb[0].mxu0
        %v3797 = vpop.f32.mrb[0].mxu0
        %v3798 = vadd.f32 0.0, %v3797
        %v3799 = vpop.f32.mrb[0].mxu0
        %3800 = vmatprep.mubr.bf16.mxu0 0
        %3801 = vmatmul.mubr.bf16.gmra.mrb[0].mxu0 %v3615
        %v3802 = vpop.f32.mrb[0].mxu0
        %v3803 = vadd.f32 0.0, %v3802
        %v3804 = vpop.f32.mrb[0].mxu0
        %v3805 = vpop.f32.mrb[0].mxu0
        %v3806 = vadd.f32 0.0, %v3805
        %v3807 = vpop.f32.mrb[0].mxu0
        %3808 = vmatprep.mubr.bf16.mxu0 0
        %3809 = vmatmul.mubr.bf16.gmra.mrb[0].mxu0 %v3618
        %v3810 = vpop.f32.mrb[0].mxu0
        %v3811 = vadd.f32 0.0, %v3810
        %v3812 = vpop.f32.mrb[0].mxu0
        %v3813 = vpop.f32.mrb[0].mxu0
        %v3814 = vadd.f32 0.0, %v3813
        %v3815 = vpop.f32.mrb[0].mxu0
        %3816 = vmatprep.mubr.bf16.mxu0 0
        %3817 = vmatmul.mubr.bf16.gmra.mrb[0].mxu0 %v3621
        %v3818 = vpop.f32.mrb[0].mxu0
        %v3819 = vadd.f32 0.0, %v3818
        %v3820 = vpop.f32.mrb[0].mxu0
        %v3821 = vpop.f32.mrb[0].mxu0
        %v3822 = vadd.f32 0.0, %v3821
        %v3823 = vpop.f32.mrb[0].mxu0
        %3824 = vmatprep.mubr.bf16.mxu0 0
        %3825 = vmatmul.mubr.bf16.gmra.mrb[0].mxu0 %v3624
        %v3826 = vpop.f32.mrb[0].mxu0
        %v3827 = vadd.f32 0.0, %v3826
        %v3828 = vpop.f32.mrb[0].mxu0
        %v3829 = vpop.f32.mrb[0].mxu0
        %v3830 = vadd.f32 0.0, %v3829
        %v3831 = vpop.f32.mrb[0].mxu0
        %3832 = vmatprep.mubr.bf16.mxu0 0
        %3833 = vmatmul.mubr.bf16.gmra.mrb[0].mxu0 %v3627
        %v3834 = vpop.f32.mrb[0].mxu0
        %v3835 = vadd.f32 0.0, %v3834
        %v3836 = vpop.f32.mrb[0].mxu0
        %v3837 = vpop.f32.mrb[0].mxu0
        %v3838 = vadd.f32 0.0, %v3837
        %v3839 = vpop.f32.mrb[0].mxu0
        %3840 = vmatprep.mubr.bf16.mxu0 0
        %3841 = vmatmul.mubr.bf16.gmra.mrb[0].mxu0 %v3630
        %v3842 = vpop.f32.mrb[0].mxu0
        %v3843 = vadd.f32 0.0, %v3842
        %v3844 = vpop.f32.mrb[0].mxu0
        %v3845 = vpop.f32.mrb[0].mxu0
        %v3846 = vadd.f32 0.0, %v3845
        %v3847 = vpop.f32.mrb[0].mxu0
        %3848 = vmatprep.mubr.bf16.mxu0 0
        %3849 = vmatmul.mubr.bf16.gmra.mrb[0].mxu0 %v3633
        %v3850 = vpop.f32.mrb[0].mxu0
        %v3851 = vadd.f32 0.0, %v3850
        %v3852 = vpop.f32.mrb[0].mxu0
        %v3853 = vpop.f32.mrb[0].mxu0
        %v3854 = vadd.f32 0.0, %v3853
        %v3855 = vpop.f32.mrb[0].mxu0
        %3856 = vmatprep.mubr.bf16.mxu0 0
        %3857 = vmatmul.mubr.bf16.gmra.mrb[0].mxu0 %v3636
        %v3858 = vpop.f32.mrb[0].mxu0
        %v3859 = vadd.f32 0.0, %v3858
        %v3860 = vpop.f32.mrb[0].mxu0
        %v3861 = vpop.f32.mrb[0].mxu0
        %v3862 = vadd.f32 0.0, %v3861
        %v3863 = vpop.f32.mrb[0].mxu0
        %3864 = vmatprep.mubr.bf16.mxu0 0
        %3865 = vmatmul.mubr.bf16.gmra.mrb[0].mxu0 %v3639
        %v3866 = vpop.f32.mrb[0].mxu0
        %v3867 = vadd.f32 0.0, %v3866
        %v3868 = vpop.f32.mrb[0].mxu0
        %v3869 = vpop.f32.mrb[0].mxu0
        %v3870 = vadd.f32 0.0, %v3869
        %v3871 = vpop.f32.mrb[0].mxu0
        %3872 = vmatprep.mubr.bf16.mxu0 0
        %3873 = vmatmul.mubr.bf16.gmra.mrb[0].mxu0 %v3642
        %v3874 = vpop.f32.mrb[0].mxu0
        %v3875 = vadd.f32 0.0, %v3874
        %v3876 = vpop.f32.mrb[0].mxu0
        %v3877 = vpop.f32.mrb[0].mxu0
        %v3878 = vadd.f32 0.0, %v3877
        %v3879 = vpop.f32.mrb[0].mxu0
        %3880 = vmatprep.mubr.bf16.mxu0 0
        %3881 = vmatmul.mubr.bf16.gmra.mrb[0].mxu0 %v3645
        %v3882 = vpop.f32.mrb[0].mxu0
        %v3883 = vadd.f32 0.0, %v3882
        %v3884 = vpop.f32.mrb[0].mxu0
        %v3885 = vpop.f32.mrb[0].mxu0
        %v3886 = vadd.f32 0.0, %v3885
        %v3887 = vpop.f32.mrb[0].mxu0
        %3888 = vmatprep.mubr.bf16.mxu0 0
        %3889 = vmatmul.mubr.bf16.gmra.mrb[0].mxu0 %v3648
        %v3890 = vpop.f32.mrb[0].mxu0
        %v3891 = vadd.f32 0.0, %v3890
        %v3892 = vpop.f32.mrb[0].mxu0
        %v3893 = vpop.f32.mrb[0].mxu0
        %v3894 = vadd.f32 0.0, %v3893
        %v3895 = vpop.f32.mrb[0].mxu0
        %3896 = vmatprep.mubr.bf16.mxu0 0
        %3897 = vmatmul.mubr.bf16.gmra.mrb[0].mxu0 %v3651
        %v3898 = vpop.f32.mrb[0].mxu0
        %v3899 = vadd.f32 0.0, %v3898
        %v3900 = vpop.f32.mrb[0].mxu0
        %v3901 = vpop.f32.mrb[0].mxu0
        %v3902 = vadd.f32 0.0, %v3901
        %v3903 = vpop.f32.mrb[0].mxu0
        %3904 = vdwg.mxu0
        %v3905 = vadd.f32 %v3435, %v3691
        %v3906 = vadd.f32 %v3436, %v3694
        %v3907 = vadd.f32 %v3437, %v3699
        %v3908 = vadd.f32 %v3438, %v3702
        %v3909 = vadd.f32 %v3439, %v3707
        %v3910 = vadd.f32 %v3440, %v3710
        %v3911 = vadd.f32 %v3441, %v3715
        %v3912 = vadd.f32 %v3442, %v3718
        %v3913 = vadd.f32 %v3443, %v3723
        %v3914 = vadd.f32 %v3444, %v3726
        %v3915 = vadd.f32 %v3445, %v3731
        %v3916 = vadd.f32 %v3446, %v3734
        %v3917 = vadd.f32 %v3447, %v3739
        %v3918 = vadd.f32 %v3448, %v3742
        %v3919 = vadd.f32 %v3449, %v3747
        %v3920 = vadd.f32 %v3450, %v3750
        %v3921 = vadd.f32 %v3451, %v3755
        %v3922 = vadd.f32 %v3452, %v3758
        %v3923 = vadd.f32 %v3453, %v3763
        %v3924 = vadd.f32 %v3454, %v3766
        %v3925 = vadd.f32 %v3455, %v3771
        %v3926 = vadd.f32 %v3456, %v3774
        %v3927 = vadd.f32 %v3457, %v3779
        %v3928 = vadd.f32 %v3458, %v3782
        %v3929 = vadd.f32 %v3459, %v3787
        %v3930 = vadd.f32 %v3460, %v3790
        %v3931 = vadd.f32 %v3461, %v3795
        %v3932 = vadd.f32 %v3462, %v3798
        %v3933 = vadd.f32 %v3463, %v3803
        %v3934 = vadd.f32 %v3464, %v3806
        %v3935 = vadd.f32 %v3465, %v3811
        %v3936 = vadd.f32 %v3466, %v3814
        %v3937 = vadd.f32 %v3467, %v3819
        %v3938 = vadd.f32 %v3468, %v3822
        %v3939 = vadd.f32 %v3469, %v3827
        %v3940 = vadd.f32 %v3470, %v3830
        %v3941 = vadd.f32 %v3471, %v3835
        %v3942 = vadd.f32 %v3472, %v3838
        %v3943 = vadd.f32 %v3473, %v3843
        %v3944 = vadd.f32 %v3474, %v3846
        %v3945 = vadd.f32 %v3475, %v3851
        %v3946 = vadd.f32 %v3476, %v3854
        %v3947 = vadd.f32 %v3477, %v3859
        %v3948 = vadd.f32 %v3478, %v3862
        %v3949 = vadd.f32 %v3479, %v3867
        %v3950 = vadd.f32 %v3480, %v3870
        %v3951 = vadd.f32 %v3481, %v3875
        %v3952 = vadd.f32 %v3482, %v3878
        %v3953 = vadd.f32 %v3483, %v3883
        %v3954 = vadd.f32 %v3484, %v3886
        %v3955 = vadd.f32 %v3485, %v3891
        %v3956 = vadd.f32 %v3486, %v3894
        %v3957 = vadd.f32 %v3487, %v3899
        %v3958 = vadd.f32 %v3488, %v3902
        %v3959 = vld [vmem:[%s3018 + $0x2] sm:$0xff]
        %v3960 = vld [vmem:[%s3018 + $0xa] sm:$0xff]
        %v3961 = vld [vmem:[%s3018 + $0x12] sm:$0xff]
        %v3962 = vld [vmem:[%s3018 + $0x22] sm:$0xff]
        %v3963 = vld [vmem:[%s3018 + $0x2a] sm:$0xff]
        %v3964 = vld [vmem:[%s3018 + $0x32] sm:$0xff]
        %v3965 = vld [vmem:[%s3018 + $0x42] sm:$0xff]
        %v3966 = vld [vmem:[%s3018 + $0x4a] sm:$0xff]
        %v3967 = vld [vmem:[%s3018 + $0x52] sm:$0xff]
        %v3968 = vld [vmem:[%s3018 + $0x62] sm:$0xff]
        %v3969 = vld [vmem:[%s3018 + $0x6a] sm:$0xff]
        %v3970 = vld [vmem:[%s3018 + $0x72] sm:$0xff]
        %v3971 = vld [vmem:[%s3018 + $0x82] sm:$0xff]
        %v3972 = vld [vmem:[%s3018 + $0x8a] sm:$0xff]
        %v3973 = vld [vmem:[%s3018 + $0x92] sm:$0xff]
        %v3974 = vld [vmem:[%s3018 + $0xa2] sm:$0xff]
        %v3975 = vld [vmem:[%s3018 + $0xaa] sm:$0xff]
        %v3976 = vld [vmem:[%s3018 + $0xb2] sm:$0xff]
        %v3977 = vld [vmem:[%s3018 + $0xc2] sm:$0xff]
        %v3978 = vld [vmem:[%s3018 + $0xca] sm:$0xff]
        %v3979 = vld [vmem:[%s3018 + $0xd2] sm:$0xff]
        %v3980 = vld [vmem:[%s3018 + $0xe2] sm:$0xff]
        %v3981 = vld [vmem:[%s3018 + $0xea] sm:$0xff]
        %v3982 = vld [vmem:[%s3018 + $0xf2] sm:$0xff]
        %v3983 = vld [vmem:[%s3018 + $0x102] sm:$0xff]
        %v3984 = vld [vmem:[%s3018 + $0x10a] sm:$0xff]
        %v3985 = vld [vmem:[%s3018 + $0x112] sm:$0xff]
        %v3986 = vld [vmem:[%s3018 + $0x122] sm:$0xff]
        %v3987 = vld [vmem:[%s3018 + $0x12a] sm:$0xff]
        %v3988 = vld [vmem:[%s3018 + $0x132] sm:$0xff]
        %v3989 = vld [vmem:[%s3018 + $0x142] sm:$0xff]
        %v3990 = vld [vmem:[%s3018 + $0x14a] sm:$0xff]
        %v3991 = vld [vmem:[%s3018 + $0x152] sm:$0xff]
        %v3992 = vld [vmem:[%s3018 + $0x162] sm:$0xff]
        %v3993 = vld [vmem:[%s3018 + $0x16a] sm:$0xff]
        %v3994 = vld [vmem:[%s3018 + $0x172] sm:$0xff]
        %v3995 = vld [vmem:[%s3018 + $0x182] sm:$0xff]
        %v3996 = vld [vmem:[%s3018 + $0x18a] sm:$0xff]
        %v3997 = vld [vmem:[%s3018 + $0x192] sm:$0xff]
        %v3998 = vld [vmem:[%s3018 + $0x1a2] sm:$0xff]
        %v3999 = vld [vmem:[%s3018 + $0x1aa] sm:$0xff]
        %v4000 = vld [vmem:[%s3018 + $0x1b2] sm:$0xff]
        %v4001 = vld [vmem:[%s3018 + $0x1c2] sm:$0xff]
        %v4002 = vld [vmem:[%s3018 + $0x1ca] sm:$0xff]
        %v4003 = vld [vmem:[%s3018 + $0x1d2] sm:$0xff]
        %v4004 = vld [vmem:[%s3018 + $0x1e2] sm:$0xff]
        %v4005 = vld [vmem:[%s3018 + $0x1ea] sm:$0xff]
        %v4006 = vld [vmem:[%s3018 + $0x1f2] sm:$0xff]
        %v4007 = vld [vmem:[%s3018 + $0x202] sm:$0xff]
        %v4008 = vld [vmem:[%s3018 + $0x20a] sm:$0xff]
        %v4009 = vld [vmem:[%s3018 + $0x212] sm:$0xff]
        %v4010 = vld [vmem:[%s3018 + $0x222] sm:$0xff]
        %v4011 = vld [vmem:[%s3018 + $0x22a] sm:$0xff]
        %v4012 = vld [vmem:[%s3018 + $0x232] sm:$0xff]
        %v4013 = vpack.c.bf16 %v3960, %v3959
        %v4014 = vpack.c.bf16 %v3962, %v3961
        %v4015 = vpack.c.bf16 %v3964, %v3963
        %v4016 = vpack.c.bf16 %v3966, %v3965
        %v4017 = vpack.c.bf16 %v3968, %v3967
        %v4018 = vpack.c.bf16 %v3970, %v3969
        %v4019 = vpack.c.bf16 %v3972, %v3971
        %v4020 = vpack.c.bf16 %v3974, %v3973
        %v4021 = vpack.c.bf16 %v3976, %v3975
        %v4022 = vpack.c.bf16 %v3978, %v3977
        %v4023 = vpack.c.bf16 %v3980, %v3979
        %v4024 = vpack.c.bf16 %v3982, %v3981
        %v4025 = vpack.c.bf16 %v3984, %v3983
        %v4026 = vpack.c.bf16 %v3986, %v3985
        %v4027 = vpack.c.bf16 %v3988, %v3987
        %v4028 = vpack.c.bf16 %v3990, %v3989
        %v4029 = vpack.c.bf16 %v3992, %v3991
        %v4030 = vpack.c.bf16 %v3994, %v3993
        %v4031 = vpack.c.bf16 %v3996, %v3995
        %v4032 = vpack.c.bf16 %v3998, %v3997
        %v4033 = vpack.c.bf16 %v4000, %v3999
        %v4034 = vpack.c.bf16 %v4002, %v4001
        %v4035 = vpack.c.bf16 %v4004, %v4003
        %v4036 = vpack.c.bf16 %v4006, %v4005
        %v4037 = vpack.c.bf16 %v4008, %v4007
        %v4038 = vpack.c.bf16 %v4010, %v4009
        %v4039 = vpack.c.bf16 %v4012, %v4011
        %s4040 = scalar_lea.vmem %s2, 16
        %v4041 = vld [vmem:[%s4040] sm:$0x3]
        %v4043 = vsel %vm469, %v4013, 0
        %v4046 = vsel %vm469, %v4014, 0
        %v4049 = vsel %vm469, %v4015, 0
        %v4052 = vsel %vm469, %v4016, 0
        %v4055 = vsel %vm469, %v4017, 0
        %v4058 = vsel %vm469, %v4018, 0
        %v4061 = vsel %vm469, %v4019, 0
        %v4064 = vsel %vm469, %v4020, 0
        %v4067 = vsel %vm469, %v4021, 0
        %v4070 = vsel %vm469, %v4022, 0
        %v4073 = vsel %vm469, %v4023, 0
        %v4076 = vsel %vm469, %v4024, 0
        %v4079 = vsel %vm469, %v4025, 0
        %v4082 = vsel %vm469, %v4026, 0
        %v4085 = vsel %vm469, %v4027, 0
        %v4088 = vsel %vm469, %v4028, 0
        %v4091 = vsel %vm469, %v4029, 0
        %v4094 = vsel %vm469, %v4030, 0
        %v4097 = vsel %vm469, %v4031, 0
        %v4100 = vsel %vm469, %v4032, 0
        %v4103 = vsel %vm469, %v4033, 0
        %v4106 = vsel %vm469, %v4034, 0
        %v4109 = vsel %vm469, %v4035, 0
        %v4112 = vsel %vm469, %v4036, 0
        %v4115 = vsel %vm469, %v4037, 0
        %v4118 = vsel %vm469, %v4038, 0
        %v4121 = vsel %vm469, %v4039, 0
        %v4124 = vsel %vm551, %v4041, 0
        %4126 = vmatprep.subr.bf16.mxu0 0
        %4127 = vmatpush1.bf16.msra.mxu0 %v4124
        %4128 = vmatprep.subr.bf16.mxu0 0
        %4129 = vmatpush1.bf16.msra.mxu0 0
        %4130 = vmatprep.subr.bf16.mxu0 0
        %4131 = vmatpush1.bf16.msra.mxu0 0
        %4132 = vmatprep.subr.bf16.mxu0 0
        %4133 = vmatpush1.bf16.msra.mxu0 0
        %4134 = vmatprep.subr.bf16.mxu0 0
        %4135 = vmatpush1.bf16.msra.mxu0 0
        %4136 = vmatprep.subr.bf16.mxu0 0
        %4137 = vmatpush1.bf16.msra.mxu0 0
        %4138 = vmatprep.subr.bf16.mxu0 0
        %4139 = vmatpush1.bf16.msra.mxu0 0
        %4140 = vmatprep.subr.bf16.mxu0 0
        %4141 = vmatpush1.bf16.msra.mxu0 0
        %4142 = vmatprep.subr.bf16.mxu0 0
        %4143 = vmatpush1.bf16.msra.mxu0 0
        %4144 = vmatprep.subr.bf16.mxu0 0
        %4145 = vmatpush1.bf16.msra.mxu0 0
        %4146 = vmatprep.subr.bf16.mxu0 0
        %4147 = vmatpush1.bf16.msra.mxu0 0
        %4148 = vmatprep.subr.bf16.mxu0 0
        %4149 = vmatpush1.bf16.msra.mxu0 0
        %4150 = vmatprep.subr.bf16.mxu0 0
        %4151 = vmatpush1.bf16.msra.mxu0 0
        %4152 = vmatprep.subr.bf16.mxu0 0
        %4153 = vmatpush1.bf16.msra.mxu0 0
        %4154 = vmatprep.subr.bf16.mxu0 0
        %4155 = vmatpush1.bf16.msra.mxu0 0
        %4156 = vmatprep.subr.bf16.mxu0 0
        %4157 = vmatpush1.bf16.msra.mxu0 0
        %4158 = vmatprep.mubr.bf16.mxu0 0
        %4159 = vmatmul.mubr.bf16.gmra.mrb[0].mxu0 %v4043
        %v4160 = vpop.f32.mrb[0].mxu0
        %v4161 = vadd.f32 0.0, %v4160
        %v4162 = vpop.f32.mrb[0].mxu0
        %v4163 = vpop.f32.mrb[0].mxu0
        %v4164 = vadd.f32 0.0, %v4163
        %v4165 = vpop.f32.mrb[0].mxu0
        %4166 = vmatprep.mubr.bf16.mxu0 0
        %4167 = vmatmul.mubr.bf16.gmra.mrb[0].mxu0 %v4046
        %v4168 = vpop.f32.mrb[0].mxu0
        %v4169 = vadd.f32 0.0, %v4168
        %v4170 = vpop.f32.mrb[0].mxu0
        %v4171 = vpop.f32.mrb[0].mxu0
        %v4172 = vadd.f32 0.0, %v4171
        %v4173 = vpop.f32.mrb[0].mxu0
        %4174 = vmatprep.mubr.bf16.mxu0 0
        %4175 = vmatmul.mubr.bf16.gmra.mrb[0].mxu0 %v4049
        %v4176 = vpop.f32.mrb[0].mxu0
        %v4177 = vadd.f32 0.0, %v4176
        %v4178 = vpop.f32.mrb[0].mxu0
        %v4179 = vpop.f32.mrb[0].mxu0
        %v4180 = vadd.f32 0.0, %v4179
        %v4181 = vpop.f32.mrb[0].mxu0
        %4182 = vmatprep.mubr.bf16.mxu0 0
        %4183 = vmatmul.mubr.bf16.gmra.mrb[0].mxu0 %v4052
        %v4184 = vpop.f32.mrb[0].mxu0
        %v4185 = vadd.f32 0.0, %v4184
        %v4186 = vpop.f32.mrb[0].mxu0
        %v4187 = vpop.f32.mrb[0].mxu0
        %v4188 = vadd.f32 0.0, %v4187
        %v4189 = vpop.f32.mrb[0].mxu0
        %4190 = vmatprep.mubr.bf16.mxu0 0
        %4191 = vmatmul.mubr.bf16.gmra.mrb[0].mxu0 %v4055
        %v4192 = vpop.f32.mrb[0].mxu0
        %v4193 = vadd.f32 0.0, %v4192
        %v4194 = vpop.f32.mrb[0].mxu0
        %v4195 = vpop.f32.mrb[0].mxu0
        %v4196 = vadd.f32 0.0, %v4195
        %v4197 = vpop.f32.mrb[0].mxu0
        %4198 = vmatprep.mubr.bf16.mxu0 0
        %4199 = vmatmul.mubr.bf16.gmra.mrb[0].mxu0 %v4058
        %v4200 = vpop.f32.mrb[0].mxu0
        %v4201 = vadd.f32 0.0, %v4200
        %v4202 = vpop.f32.mrb[0].mxu0
        %v4203 = vpop.f32.mrb[0].mxu0
        %v4204 = vadd.f32 0.0, %v4203
        %v4205 = vpop.f32.mrb[0].mxu0
        %4206 = vmatprep.mubr.bf16.mxu0 0
        %4207 = vmatmul.mubr.bf16.gmra.mrb[0].mxu0 %v4061
        %v4208 = vpop.f32.mrb[0].mxu0
        %v4209 = vadd.f32 0.0, %v4208
        %v4210 = vpop.f32.mrb[0].mxu0
        %v4211 = vpop.f32.mrb[0].mxu0
        %v4212 = vadd.f32 0.0, %v4211
        %v4213 = vpop.f32.mrb[0].mxu0
        %4214 = vmatprep.mubr.bf16.mxu0 0
        %4215 = vmatmul.mubr.bf16.gmra.mrb[0].mxu0 %v4064
        %v4216 = vpop.f32.mrb[0].mxu0
        %v4217 = vadd.f32 0.0, %v4216
        %v4218 = vpop.f32.mrb[0].mxu0
        %v4219 = vpop.f32.mrb[0].mxu0
        %v4220 = vadd.f32 0.0, %v4219
        %v4221 = vpop.f32.mrb[0].mxu0
        %4222 = vmatprep.mubr.bf16.mxu0 0
        %4223 = vmatmul.mubr.bf16.gmra.mrb[0].mxu0 %v4067
        %v4224 = vpop.f32.mrb[0].mxu0
        %v4225 = vadd.f32 0.0, %v4224
        %v4226 = vpop.f32.mrb[0].mxu0
        %v4227 = vpop.f32.mrb[0].mxu0
        %v4228 = vadd.f32 0.0, %v4227
        %v4229 = vpop.f32.mrb[0].mxu0
        %4230 = vmatprep.mubr.bf16.mxu0 0
        %4231 = vmatmul.mubr.bf16.gmra.mrb[0].mxu0 %v4070
        %v4232 = vpop.f32.mrb[0].mxu0
        %v4233 = vadd.f32 0.0, %v4232
        %v4234 = vpop.f32.mrb[0].mxu0
        %v4235 = vpop.f32.mrb[0].mxu0
        %v4236 = vadd.f32 0.0, %v4235
        %v4237 = vpop.f32.mrb[0].mxu0
        %4238 = vmatprep.mubr.bf16.mxu0 0
        %4239 = vmatmul.mubr.bf16.gmra.mrb[0].mxu0 %v4073
        %v4240 = vpop.f32.mrb[0].mxu0
        %v4241 = vadd.f32 0.0, %v4240
        %v4242 = vpop.f32.mrb[0].mxu0
        %v4243 = vpop.f32.mrb[0].mxu0
        %v4244 = vadd.f32 0.0, %v4243
        %v4245 = vpop.f32.mrb[0].mxu0
        %4246 = vmatprep.mubr.bf16.mxu0 0
        %4247 = vmatmul.mubr.bf16.gmra.mrb[0].mxu0 %v4076
        %v4248 = vpop.f32.mrb[0].mxu0
        %v4249 = vadd.f32 0.0, %v4248
        %v4250 = vpop.f32.mrb[0].mxu0
        %v4251 = vpop.f32.mrb[0].mxu0
        %v4252 = vadd.f32 0.0, %v4251
        %v4253 = vpop.f32.mrb[0].mxu0
        %4254 = vmatprep.mubr.bf16.mxu0 0
        %4255 = vmatmul.mubr.bf16.gmra.mrb[0].mxu0 %v4079
        %v4256 = vpop.f32.mrb[0].mxu0
        %v4257 = vadd.f32 0.0, %v4256
        %v4258 = vpop.f32.mrb[0].mxu0
        %v4259 = vpop.f32.mrb[0].mxu0
        %v4260 = vadd.f32 0.0, %v4259
        %v4261 = vpop.f32.mrb[0].mxu0
        %4262 = vmatprep.mubr.bf16.mxu0 0
        %4263 = vmatmul.mubr.bf16.gmra.mrb[0].mxu0 %v4082
        %v4264 = vpop.f32.mrb[0].mxu0
        %v4265 = vadd.f32 0.0, %v4264
        %v4266 = vpop.f32.mrb[0].mxu0
        %v4267 = vpop.f32.mrb[0].mxu0
        %v4268 = vadd.f32 0.0, %v4267
        %v4269 = vpop.f32.mrb[0].mxu0
        %4270 = vmatprep.mubr.bf16.mxu0 0
        %4271 = vmatmul.mubr.bf16.gmra.mrb[0].mxu0 %v4085
        %v4272 = vpop.f32.mrb[0].mxu0
        %v4273 = vadd.f32 0.0, %v4272
        %v4274 = vpop.f32.mrb[0].mxu0
        %v4275 = vpop.f32.mrb[0].mxu0
        %v4276 = vadd.f32 0.0, %v4275
        %v4277 = vpop.f32.mrb[0].mxu0
        %4278 = vmatprep.mubr.bf16.mxu0 0
        %4279 = vmatmul.mubr.bf16.gmra.mrb[0].mxu0 %v4088
        %v4280 = vpop.f32.mrb[0].mxu0
        %v4281 = vadd.f32 0.0, %v4280
        %v4282 = vpop.f32.mrb[0].mxu0
        %v4283 = vpop.f32.mrb[0].mxu0
        %v4284 = vadd.f32 0.0, %v4283
        %v4285 = vpop.f32.mrb[0].mxu0
        %4286 = vmatprep.mubr.bf16.mxu0 0
        %4287 = vmatmul.mubr.bf16.gmra.mrb[0].mxu0 %v4091
        %v4288 = vpop.f32.mrb[0].mxu0
        %v4289 = vadd.f32 0.0, %v4288
        %v4290 = vpop.f32.mrb[0].mxu0
        %v4291 = vpop.f32.mrb[0].mxu0
        %v4292 = vadd.f32 0.0, %v4291
        %v4293 = vpop.f32.mrb[0].mxu0
        %4294 = vmatprep.mubr.bf16.mxu0 0
        %4295 = vmatmul.mubr.bf16.gmra.mrb[0].mxu0 %v4094
        %v4296 = vpop.f32.mrb[0].mxu0
        %v4297 = vadd.f32 0.0, %v4296
        %v4298 = vpop.f32.mrb[0].mxu0
        %v4299 = vpop.f32.mrb[0].mxu0
        %v4300 = vadd.f32 0.0, %v4299
        %v4301 = vpop.f32.mrb[0].mxu0
        %4302 = vmatprep.mubr.bf16.mxu0 0
        %4303 = vmatmul.mubr.bf16.gmra.mrb[0].mxu0 %v4097
        %v4304 = vpop.f32.mrb[0].mxu0
        %v4305 = vadd.f32 0.0, %v4304
        %v4306 = vpop.f32.mrb[0].mxu0
        %v4307 = vpop.f32.mrb[0].mxu0
        %v4308 = vadd.f32 0.0, %v4307
        %v4309 = vpop.f32.mrb[0].mxu0
        %4310 = vmatprep.mubr.bf16.mxu0 0
        %4311 = vmatmul.mubr.bf16.gmra.mrb[0].mxu0 %v4100
        %v4312 = vpop.f32.mrb[0].mxu0
        %v4313 = vadd.f32 0.0, %v4312
        %v4314 = vpop.f32.mrb[0].mxu0
        %v4315 = vpop.f32.mrb[0].mxu0
        %v4316 = vadd.f32 0.0, %v4315
        %v4317 = vpop.f32.mrb[0].mxu0
        %4318 = vmatprep.mubr.bf16.mxu0 0
        %4319 = vmatmul.mubr.bf16.gmra.mrb[0].mxu0 %v4103
        %v4320 = vpop.f32.mrb[0].mxu0
        %v4321 = vadd.f32 0.0, %v4320
        %v4322 = vpop.f32.mrb[0].mxu0
        %v4323 = vpop.f32.mrb[0].mxu0
        %v4324 = vadd.f32 0.0, %v4323
        %v4325 = vpop.f32.mrb[0].mxu0
        %4326 = vmatprep.mubr.bf16.mxu0 0
        %4327 = vmatmul.mubr.bf16.gmra.mrb[0].mxu0 %v4106
        %v4328 = vpop.f32.mrb[0].mxu0
        %v4329 = vadd.f32 0.0, %v4328
        %v4330 = vpop.f32.mrb[0].mxu0
        %v4331 = vpop.f32.mrb[0].mxu0
        %v4332 = vadd.f32 0.0, %v4331
        %v4333 = vpop.f32.mrb[0].mxu0
        %4334 = vmatprep.mubr.bf16.mxu0 0
        %4335 = vmatmul.mubr.bf16.gmra.mrb[0].mxu0 %v4109
        %v4336 = vpop.f32.mrb[0].mxu0
        %v4337 = vadd.f32 0.0, %v4336
        %v4338 = vpop.f32.mrb[0].mxu0
        %v4339 = vpop.f32.mrb[0].mxu0
        %v4340 = vadd.f32 0.0, %v4339
        %v4341 = vpop.f32.mrb[0].mxu0
        %4342 = vmatprep.mubr.bf16.mxu0 0
        %4343 = vmatmul.mubr.bf16.gmra.mrb[0].mxu0 %v4112
        %v4344 = vpop.f32.mrb[0].mxu0
        %v4345 = vadd.f32 0.0, %v4344
        %v4346 = vpop.f32.mrb[0].mxu0
        %v4347 = vpop.f32.mrb[0].mxu0
        %v4348 = vadd.f32 0.0, %v4347
        %v4349 = vpop.f32.mrb[0].mxu0
        %4350 = vmatprep.mubr.bf16.mxu0 0
        %4351 = vmatmul.mubr.bf16.gmra.mrb[0].mxu0 %v4115
        %v4352 = vpop.f32.mrb[0].mxu0
        %v4353 = vadd.f32 0.0, %v4352
        %v4354 = vpop.f32.mrb[0].mxu0
        %v4355 = vpop.f32.mrb[0].mxu0
        %v4356 = vadd.f32 0.0, %v4355
        %v4357 = vpop.f32.mrb[0].mxu0
        %4358 = vmatprep.mubr.bf16.mxu0 0
        %4359 = vmatmul.mubr.bf16.gmra.mrb[0].mxu0 %v4118
        %v4360 = vpop.f32.mrb[0].mxu0
        %v4361 = vadd.f32 0.0, %v4360
        %v4362 = vpop.f32.mrb[0].mxu0
        %v4363 = vpop.f32.mrb[0].mxu0
        %v4364 = vadd.f32 0.0, %v4363
        %v4365 = vpop.f32.mrb[0].mxu0
        %4366 = vmatprep.mubr.bf16.mxu0 0
        %4367 = vmatmul.mubr.bf16.gmra.mrb[0].mxu0 %v4121
        %v4368 = vpop.f32.mrb[0].mxu0
        %v4369 = vadd.f32 0.0, %v4368
        %v4370 = vpop.f32.mrb[0].mxu0
        %v4371 = vpop.f32.mrb[0].mxu0
        %v4372 = vadd.f32 0.0, %v4371
        %v4373 = vpop.f32.mrb[0].mxu0
        %4374 = vdwg.mxu0
        %v4375 = vadd.f32 %v3905, %v4161
        %v4376 = vadd.f32 %v3906, %v4164
        %v4377 = vadd.f32 %v3907, %v4169
        %v4378 = vadd.f32 %v3908, %v4172
        %v4379 = vadd.f32 %v3909, %v4177
        %v4380 = vadd.f32 %v3910, %v4180
        %v4381 = vadd.f32 %v3911, %v4185
        %v4382 = vadd.f32 %v3912, %v4188
        %v4383 = vadd.f32 %v3913, %v4193
        %v4384 = vadd.f32 %v3914, %v4196
        %v4385 = vadd.f32 %v3915, %v4201
        %v4386 = vadd.f32 %v3916, %v4204
        %v4387 = vadd.f32 %v3917, %v4209
        %v4388 = vadd.f32 %v3918, %v4212
        %v4389 = vadd.f32 %v3919, %v4217
        %v4390 = vadd.f32 %v3920, %v4220
        %v4391 = vadd.f32 %v3921, %v4225
        %v4392 = vadd.f32 %v3922, %v4228
        %v4393 = vadd.f32 %v3923, %v4233
        %v4394 = vadd.f32 %v3924, %v4236
        %v4395 = vadd.f32 %v3925, %v4241
        %v4396 = vadd.f32 %v3926, %v4244
        %v4397 = vadd.f32 %v3927, %v4249
        %v4398 = vadd.f32 %v3928, %v4252
        %v4399 = vadd.f32 %v3929, %v4257
        %v4400 = vadd.f32 %v3930, %v4260
        %v4401 = vadd.f32 %v3931, %v4265
        %v4402 = vadd.f32 %v3932, %v4268
        %v4403 = vadd.f32 %v3933, %v4273
        %v4404 = vadd.f32 %v3934, %v4276
        %v4405 = vadd.f32 %v3935, %v4281
        %v4406 = vadd.f32 %v3936, %v4284
        %v4407 = vadd.f32 %v3937, %v4289
        %v4408 = vadd.f32 %v3938, %v4292
        %v4409 = vadd.f32 %v3939, %v4297
        %v4410 = vadd.f32 %v3940, %v4300
        %v4411 = vadd.f32 %v3941, %v4305
        %v4412 = vadd.f32 %v3942, %v4308
        %v4413 = vadd.f32 %v3943, %v4313
        %v4414 = vadd.f32 %v3944, %v4316
        %v4415 = vadd.f32 %v3945, %v4321
        %v4416 = vadd.f32 %v3946, %v4324
        %v4417 = vadd.f32 %v3947, %v4329
        %v4418 = vadd.f32 %v3948, %v4332
        %v4419 = vadd.f32 %v3949, %v4337
        %v4420 = vadd.f32 %v3950, %v4340
        %v4421 = vadd.f32 %v3951, %v4345
        %v4422 = vadd.f32 %v3952, %v4348
        %v4423 = vadd.f32 %v3953, %v4353
        %v4424 = vadd.f32 %v3954, %v4356
        %v4425 = vadd.f32 %v3955, %v4361
        %v4426 = vadd.f32 %v3956, %v4364
        %v4427 = vadd.f32 %v3957, %v4369
        %v4428 = vadd.f32 %v3958, %v4372
        %v4429 = vld [vmem:[%s3] sm:$0x1]
        %v4431 = vlaneseq
        %v4432 = vshrl.u32 %v4431, 7
        %v4433 = vsub.s32 0, %v4432
        %v4434 = vrot.slane %v4429, %v4433
        %v4436 = vadd.f32 %v4375, %v4434
        %v4437 = vadd.f32 %v4376, %v4434
        %v4438 = vadd.f32 %v4377, %v4434
        %v4439 = vadd.f32 %v4378, %v4434
        %v4440 = vadd.f32 %v4379, %v4434
        %v4441 = vadd.f32 %v4380, %v4434
        %v4442 = vadd.f32 %v4381, %v4434
        %v4443 = vadd.f32 %v4382, %v4434
        %v4444 = vadd.f32 %v4383, %v4434
        %v4445 = vadd.f32 %v4384, %v4434
        %v4446 = vadd.f32 %v4385, %v4434
        %v4447 = vadd.f32 %v4386, %v4434
        %v4448 = vadd.f32 %v4387, %v4434
        %v4449 = vadd.f32 %v4388, %v4434
        %v4450 = vadd.f32 %v4389, %v4434
        %v4451 = vadd.f32 %v4390, %v4434
        %v4452 = vadd.f32 %v4391, %v4434
        %v4453 = vadd.f32 %v4392, %v4434
        %v4454 = vadd.f32 %v4393, %v4434
        %v4455 = vadd.f32 %v4394, %v4434
        %v4456 = vadd.f32 %v4395, %v4434
        %v4457 = vadd.f32 %v4396, %v4434
        %v4458 = vadd.f32 %v4397, %v4434
        %v4459 = vadd.f32 %v4398, %v4434
        %v4460 = vadd.f32 %v4399, %v4434
        %v4461 = vadd.f32 %v4400, %v4434
        %v4462 = vadd.f32 %v4401, %v4434
        %v4463 = vadd.f32 %v4402, %v4434
        %v4464 = vadd.f32 %v4403, %v4434
        %v4465 = vadd.f32 %v4404, %v4434
        %v4466 = vadd.f32 %v4405, %v4434
        %v4467 = vadd.f32 %v4406, %v4434
        %v4468 = vadd.f32 %v4407, %v4434
        %v4469 = vadd.f32 %v4408, %v4434
        %v4470 = vadd.f32 %v4409, %v4434
        %v4471 = vadd.f32 %v4410, %v4434
        %v4472 = vadd.f32 %v4411, %v4434
        %v4473 = vadd.f32 %v4412, %v4434
        %v4474 = vadd.f32 %v4413, %v4434
        %v4475 = vadd.f32 %v4414, %v4434
        %v4476 = vadd.f32 %v4415, %v4434
        %v4477 = vadd.f32 %v4416, %v4434
        %v4478 = vadd.f32 %v4417, %v4434
        %v4479 = vadd.f32 %v4418, %v4434
        %v4480 = vadd.f32 %v4419, %v4434
        %v4481 = vadd.f32 %v4420, %v4434
        %v4482 = vadd.f32 %v4421, %v4434
        %v4483 = vadd.f32 %v4422, %v4434
        %v4484 = vadd.f32 %v4423, %v4434
        %v4485 = vadd.f32 %v4424, %v4434
        %v4486 = vadd.f32 %v4425, %v4434
        %v4487 = vadd.f32 %v4426, %v4434
        %v4488 = vadd.f32 %v4427, %v4434
        %v4489 = vadd.f32 %v4428, %v4434
        %v4490 = vmax.f32 %v4436, 0.0
        %v4491 = vmax.f32 %v4437, 0.0
        %v4492 = vmax.f32 %v4438, 0.0
        %v4493 = vmax.f32 %v4439, 0.0
        %v4494 = vmax.f32 %v4440, 0.0
        %v4495 = vmax.f32 %v4441, 0.0
        %v4496 = vmax.f32 %v4442, 0.0
        %v4497 = vmax.f32 %v4443, 0.0
        %v4498 = vmax.f32 %v4444, 0.0
        %v4499 = vmax.f32 %v4445, 0.0
        %v4500 = vmax.f32 %v4446, 0.0
        %v4501 = vmax.f32 %v4447, 0.0
        %v4502 = vmax.f32 %v4448, 0.0
        %v4503 = vmax.f32 %v4449, 0.0
        %v4504 = vmax.f32 %v4450, 0.0
        %v4505 = vmax.f32 %v4451, 0.0
        %v4506 = vmax.f32 %v4452, 0.0
        %v4507 = vmax.f32 %v4453, 0.0
        %v4508 = vmax.f32 %v4454, 0.0
        %v4509 = vmax.f32 %v4455, 0.0
        %v4510 = vmax.f32 %v4456, 0.0
        %v4511 = vmax.f32 %v4457, 0.0
        %v4512 = vmax.f32 %v4458, 0.0
        %v4513 = vmax.f32 %v4459, 0.0
        %v4514 = vmax.f32 %v4460, 0.0
        %v4515 = vmax.f32 %v4461, 0.0
        %v4516 = vmax.f32 %v4462, 0.0
        %v4517 = vmax.f32 %v4463, 0.0
        %v4518 = vmax.f32 %v4464, 0.0
        %v4519 = vmax.f32 %v4465, 0.0
        %v4520 = vmax.f32 %v4466, 0.0
        %v4521 = vmax.f32 %v4467, 0.0
        %v4522 = vmax.f32 %v4468, 0.0
        %v4523 = vmax.f32 %v4469, 0.0
        %v4524 = vmax.f32 %v4470, 0.0
        %v4525 = vmax.f32 %v4471, 0.0
        %v4526 = vmax.f32 %v4472, 0.0
        %v4527 = vmax.f32 %v4473, 0.0
        %v4528 = vmax.f32 %v4474, 0.0
        %v4529 = vmax.f32 %v4475, 0.0
        %v4530 = vmax.f32 %v4476, 0.0
        %v4531 = vmax.f32 %v4477, 0.0
        %v4532 = vmax.f32 %v4478, 0.0
        %v4533 = vmax.f32 %v4479, 0.0
        %v4534 = vmax.f32 %v4480, 0.0
        %v4535 = vmax.f32 %v4481, 0.0
        %v4536 = vmax.f32 %v4482, 0.0
        %v4537 = vmax.f32 %v4483, 0.0
        %v4538 = vmax.f32 %v4484, 0.0
        %v4539 = vmax.f32 %v4485, 0.0
        %v4540 = vmax.f32 %v4486, 0.0
        %v4541 = vmax.f32 %v4487, 0.0
        %v4542 = vmax.f32 %v4488, 0.0
        %v4543 = vmax.f32 %v4489, 0.0
        %v4544 = vld [vmem:[%s1] sm:$0xff]
        %v4545 = vld [vmem:[%s1 + $0x8] sm:$0xff]
        %v4546 = vld [vmem:[%s1 + $0x10] sm:$0xff]
        %v4547 = vld [vmem:[%s1 + $0x18] sm:$0xff]
        %v4548 = vld [vmem:[%s1 + $0x20] sm:$0xff]
        %v4549 = vld [vmem:[%s1 + $0x28] sm:$0xff]
        %v4550 = vld [vmem:[%s1 + $0x30] sm:$0xff]
        %v4551 = vld [vmem:[%s1 + $0x38] sm:$0xff]
        %v4552 = vld [vmem:[%s1 + $0x40] sm:$0xff]
        %v4553 = vld [vmem:[%s1 + $0x48] sm:$0xff]
        %v4554 = vld [vmem:[%s1 + $0x50] sm:$0xff]
        %v4555 = vld [vmem:[%s1 + $0x58] sm:$0xff]
        %v4556 = vld [vmem:[%s1 + $0x60] sm:$0xff]
        %v4557 = vld [vmem:[%s1 + $0x68] sm:$0xff]
        %v4558 = vld [vmem:[%s1 + $0x70] sm:$0xff]
        %v4559 = vld [vmem:[%s1 + $0x78] sm:$0xff]
        %v4560 = vld [vmem:[%s1 + $0x80] sm:$0xff]
        %v4561 = vld [vmem:[%s1 + $0x88] sm:$0xff]
        %v4562 = vld [vmem:[%s1 + $0x90] sm:$0xff]
        %v4563 = vld [vmem:[%s1 + $0x98] sm:$0xff]
        %v4564 = vld [vmem:[%s1 + $0xa0] sm:$0xff]
        %v4565 = vld [vmem:[%s1 + $0xa8] sm:$0xff]
        %v4566 = vld [vmem:[%s1 + $0xb0] sm:$0xff]
        %v4567 = vld [vmem:[%s1 + $0xb8] sm:$0xff]
        %v4568 = vld [vmem:[%s1 + $0xc0] sm:$0xff]
        %v4569 = vld [vmem:[%s1 + $0xc8] sm:$0xff]
        %v4570 = vld [vmem:[%s1 + $0xd0] sm:$0xff]
        %v4571 = vld [vmem:[%s1 + $0xd8] sm:$0xff]
        %v4572 = vld [vmem:[%s1 + $0xe0] sm:$0xff]
        %v4573 = vld [vmem:[%s1 + $0xe8] sm:$0xff]
        %v4574 = vld [vmem:[%s1 + $0xf0] sm:$0xff]
        %v4575 = vld [vmem:[%s1 + $0xf8] sm:$0xff]
        %v4576 = vld [vmem:[%s1 + $0x100] sm:$0xff]
        %v4577 = vld [vmem:[%s1 + $0x108] sm:$0xff]
        %v4578 = vld [vmem:[%s1 + $0x110] sm:$0xff]
        %v4579 = vld [vmem:[%s1 + $0x118] sm:$0xff]
        %v4580 = vld [vmem:[%s1 + $0x120] sm:$0xff]
        %v4581 = vld [vmem:[%s1 + $0x128] sm:$0xff]
        %v4582 = vld [vmem:[%s1 + $0x130] sm:$0xff]
        %v4583 = vld [vmem:[%s1 + $0x138] sm:$0xff]
        %v4584 = vld [vmem:[%s1 + $0x140] sm:$0xff]
        %v4585 = vld [vmem:[%s1 + $0x148] sm:$0xff]
        %v4586 = vld [vmem:[%s1 + $0x150] sm:$0xff]
        %v4587 = vld [vmem:[%s1 + $0x158] sm:$0xff]
        %v4588 = vld [vmem:[%s1 + $0x160] sm:$0xff]
        %v4589 = vld [vmem:[%s1 + $0x168] sm:$0xff]
        %v4590 = vld [vmem:[%s1 + $0x170] sm:$0xff]
        %v4591 = vld [vmem:[%s1 + $0x178] sm:$0xff]
        %v4592 = vld [vmem:[%s1 + $0x180] sm:$0xff]
        %v4593 = vld [vmem:[%s1 + $0x188] sm:$0xff]
        %v4594 = vld [vmem:[%s1 + $0x190] sm:$0xff]
        %v4595 = vld [vmem:[%s1 + $0x198] sm:$0xff]
        %v4596 = vld [vmem:[%s1 + $0x1a0] sm:$0xff]
        %v4597 = vld [vmem:[%s1 + $0x1a8] sm:$0xff]
        %4599 = vset.pattern.permute.xlu0 0
        %4600 = vperm.xlu0 %4599, %v4544
        %v4601 = vpop.permute.xlu0 %4600
        %4604 = vset.pattern.permute.xlu0 0
        %4605 = vperm.xlu0 %4604, %v4545
        %v4606 = vpop.permute.xlu0 %4605
        %4609 = vset.pattern.permute.xlu0 0
        %4610 = vperm.xlu0 %4609, %v4546
        %v4611 = vpop.permute.xlu0 %4610
        %4614 = vset.pattern.permute.xlu0 0
        %4615 = vperm.xlu0 %4614, %v4547
        %v4616 = vpop.permute.xlu0 %4615
        %4619 = vset.pattern.permute.xlu0 0
        %4620 = vperm.xlu0 %4619, %v4548
        %v4621 = vpop.permute.xlu0 %4620
        %4624 = vset.pattern.permute.xlu0 0
        %4625 = vperm.xlu0 %4624, %v4549
        %v4626 = vpop.permute.xlu0 %4625
        %4629 = vset.pattern.permute.xlu0 0
        %4630 = vperm.xlu0 %4629, %v4550
        %v4631 = vpop.permute.xlu0 %4630
        %4634 = vset.pattern.permute.xlu0 0
        %4635 = vperm.xlu0 %4634, %v4551
        %v4636 = vpop.permute.xlu0 %4635
        %4639 = vset.pattern.permute.xlu0 0
        %4640 = vperm.xlu0 %4639, %v4552
        %v4641 = vpop.permute.xlu0 %4640
        %4644 = vset.pattern.permute.xlu0 0
        %4645 = vperm.xlu0 %4644, %v4553
        %v4646 = vpop.permute.xlu0 %4645
        %4649 = vset.pattern.permute.xlu0 0
        %4650 = vperm.xlu0 %4649, %v4554
        %v4651 = vpop.permute.xlu0 %4650
        %4654 = vset.pattern.permute.xlu0 0
        %4655 = vperm.xlu0 %4654, %v4555
        %v4656 = vpop.permute.xlu0 %4655
        %4659 = vset.pattern.permute.xlu0 0
        %4660 = vperm.xlu0 %4659, %v4556
        %v4661 = vpop.permute.xlu0 %4660
        %4664 = vset.pattern.permute.xlu0 0
        %4665 = vperm.xlu0 %4664, %v4557
        %v4666 = vpop.permute.xlu0 %4665
        %4669 = vset.pattern.permute.xlu0 0
        %4670 = vperm.xlu0 %4669, %v4558
        %v4671 = vpop.permute.xlu0 %4670
        %4674 = vset.pattern.permute.xlu0 0
        %4675 = vperm.xlu0 %4674, %v4559
        %v4676 = vpop.permute.xlu0 %4675
        %4679 = vset.pattern.permute.xlu0 0
        %4680 = vperm.xlu0 %4679, %v4560
        %v4681 = vpop.permute.xlu0 %4680
        %4684 = vset.pattern.permute.xlu0 0
        %4685 = vperm.xlu0 %4684, %v4561
        %v4686 = vpop.permute.xlu0 %4685
        %4689 = vset.pattern.permute.xlu0 0
        %4690 = vperm.xlu0 %4689, %v4562
        %v4691 = vpop.permute.xlu0 %4690
        %4694 = vset.pattern.permute.xlu0 0
        %4695 = vperm.xlu0 %4694, %v4563
        %v4696 = vpop.permute.xlu0 %4695
        %4699 = vset.pattern.permute.xlu0 0
        %4700 = vperm.xlu0 %4699, %v4564
        %v4701 = vpop.permute.xlu0 %4700
        %4704 = vset.pattern.permute.xlu0 0
        %4705 = vperm.xlu0 %4704, %v4565
        %v4706 = vpop.permute.xlu0 %4705
        %4709 = vset.pattern.permute.xlu0 0
        %4710 = vperm.xlu0 %4709, %v4566
        %v4711 = vpop.permute.xlu0 %4710
        %4714 = vset.pattern.permute.xlu0 0
        %4715 = vperm.xlu0 %4714, %v4567
        %v4716 = vpop.permute.xlu0 %4715
        %4719 = vset.pattern.permute.xlu0 0
        %4720 = vperm.xlu0 %4719, %v4568
        %v4721 = vpop.permute.xlu0 %4720
        %4724 = vset.pattern.permute.xlu0 0
        %4725 = vperm.xlu0 %4724, %v4569
        %v4726 = vpop.permute.xlu0 %4725
        %4729 = vset.pattern.permute.xlu0 0
        %4730 = vperm.xlu0 %4729, %v4570
        %v4731 = vpop.permute.xlu0 %4730
        %4734 = vset.pattern.permute.xlu0 0
        %4735 = vperm.xlu0 %4734, %v4571
        %v4736 = vpop.permute.xlu0 %4735
        %4739 = vset.pattern.permute.xlu0 0
        %4740 = vperm.xlu0 %4739, %v4572
        %v4741 = vpop.permute.xlu0 %4740
        %4744 = vset.pattern.permute.xlu0 0
        %4745 = vperm.xlu0 %4744, %v4573
        %v4746 = vpop.permute.xlu0 %4745
        %4749 = vset.pattern.permute.xlu0 0
        %4750 = vperm.xlu0 %4749, %v4574
        %v4751 = vpop.permute.xlu0 %4750
        %4754 = vset.pattern.permute.xlu0 0
        %4755 = vperm.xlu0 %4754, %v4575
        %v4756 = vpop.permute.xlu0 %4755
        %4759 = vset.pattern.permute.xlu0 0
        %4760 = vperm.xlu0 %4759, %v4576
        %v4761 = vpop.permute.xlu0 %4760
        %4764 = vset.pattern.permute.xlu0 0
        %4765 = vperm.xlu0 %4764, %v4577
        %v4766 = vpop.permute.xlu0 %4765
        %4769 = vset.pattern.permute.xlu0 0
        %4770 = vperm.xlu0 %4769, %v4578
        %v4771 = vpop.permute.xlu0 %4770
        %4774 = vset.pattern.permute.xlu0 0
        %4775 = vperm.xlu0 %4774, %v4579
        %v4776 = vpop.permute.xlu0 %4775
        %4779 = vset.pattern.permute.xlu0 0
        %4780 = vperm.xlu0 %4779, %v4580
        %v4781 = vpop.permute.xlu0 %4780
        %4784 = vset.pattern.permute.xlu0 0
        %4785 = vperm.xlu0 %4784, %v4581
        %v4786 = vpop.permute.xlu0 %4785
        %4789 = vset.pattern.permute.xlu0 0
        %4790 = vperm.xlu0 %4789, %v4582
        %v4791 = vpop.permute.xlu0 %4790
        %4794 = vset.pattern.permute.xlu0 0
        %4795 = vperm.xlu0 %4794, %v4583
        %v4796 = vpop.permute.xlu0 %4795
        %4799 = vset.pattern.permute.xlu0 0
        %4800 = vperm.xlu0 %4799, %v4584
        %v4801 = vpop.permute.xlu0 %4800
        %4804 = vset.pattern.permute.xlu0 0
        %4805 = vperm.xlu0 %4804, %v4585
        %v4806 = vpop.permute.xlu0 %4805
        %4809 = vset.pattern.permute.xlu0 0
        %4810 = vperm.xlu0 %4809, %v4586
        %v4811 = vpop.permute.xlu0 %4810
        %4814 = vset.pattern.permute.xlu0 0
        %4815 = vperm.xlu0 %4814, %v4587
        %v4816 = vpop.permute.xlu0 %4815
        %4819 = vset.pattern.permute.xlu0 0
        %4820 = vperm.xlu0 %4819, %v4588
        %v4821 = vpop.permute.xlu0 %4820
        %4824 = vset.pattern.permute.xlu0 0
        %4825 = vperm.xlu0 %4824, %v4589
        %v4826 = vpop.permute.xlu0 %4825
        %4829 = vset.pattern.permute.xlu0 0
        %4830 = vperm.xlu0 %4829, %v4590
        %v4831 = vpop.permute.xlu0 %4830
        %4834 = vset.pattern.permute.xlu0 0
        %4835 = vperm.xlu0 %4834, %v4591
        %v4836 = vpop.permute.xlu0 %4835
        %4839 = vset.pattern.permute.xlu0 0
        %4840 = vperm.xlu0 %4839, %v4592
        %v4841 = vpop.permute.xlu0 %4840
        %4844 = vset.pattern.permute.xlu0 0
        %4845 = vperm.xlu0 %4844, %v4593
        %v4846 = vpop.permute.xlu0 %4845
        %4849 = vset.pattern.permute.xlu0 0
        %4850 = vperm.xlu0 %4849, %v4594
        %v4851 = vpop.permute.xlu0 %4850
        %4854 = vset.pattern.permute.xlu0 0
        %4855 = vperm.xlu0 %4854, %v4595
        %v4856 = vpop.permute.xlu0 %4855
        %4859 = vset.pattern.permute.xlu0 0
        %4860 = vperm.xlu0 %4859, %v4596
        %v4861 = vpop.permute.xlu0 %4860
        %4864 = vset.pattern.permute.xlu0 0
        %4865 = vperm.xlu0 %4864, %v4597
        %v4866 = vpop.permute.xlu0 %4865
        %v4868 = vmul.f32 %v4490, %v4601
        %v4869 = vmul.f32 %v4491, %v4606
        %v4870 = vmul.f32 %v4492, %v4611
        %v4871 = vmul.f32 %v4493, %v4616
        %v4872 = vmul.f32 %v4494, %v4621
        %v4873 = vmul.f32 %v4495, %v4626
        %v4874 = vmul.f32 %v4496, %v4631
        %v4875 = vmul.f32 %v4497, %v4636
        %v4876 = vmul.f32 %v4498, %v4641
        %v4877 = vmul.f32 %v4499, %v4646
        %v4878 = vmul.f32 %v4500, %v4651
        %v4879 = vmul.f32 %v4501, %v4656
        %v4880 = vmul.f32 %v4502, %v4661
        %v4881 = vmul.f32 %v4503, %v4666
        %v4882 = vmul.f32 %v4504, %v4671
        %v4883 = vmul.f32 %v4505, %v4676
        %v4884 = vmul.f32 %v4506, %v4681
        %v4885 = vmul.f32 %v4507, %v4686
        %v4886 = vmul.f32 %v4508, %v4691
        %v4887 = vmul.f32 %v4509, %v4696
        %v4888 = vmul.f32 %v4510, %v4701
        %v4889 = vmul.f32 %v4511, %v4706
        %v4890 = vmul.f32 %v4512, %v4711
        %v4891 = vmul.f32 %v4513, %v4716
        %v4892 = vmul.f32 %v4514, %v4721
        %v4893 = vmul.f32 %v4515, %v4726
        %v4894 = vmul.f32 %v4516, %v4731
        %v4895 = vmul.f32 %v4517, %v4736
        %v4896 = vmul.f32 %v4518, %v4741
        %v4897 = vmul.f32 %v4519, %v4746
        %v4898 = vmul.f32 %v4520, %v4751
        %v4899 = vmul.f32 %v4521, %v4756
        %v4900 = vmul.f32 %v4522, %v4761
        %v4901 = vmul.f32 %v4523, %v4766
        %v4902 = vmul.f32 %v4524, %v4771
        %v4903 = vmul.f32 %v4525, %v4776
        %v4904 = vmul.f32 %v4526, %v4781
        %v4905 = vmul.f32 %v4527, %v4786
        %v4906 = vmul.f32 %v4528, %v4791
        %v4907 = vmul.f32 %v4529, %v4796
        %v4908 = vmul.f32 %v4530, %v4801
        %v4909 = vmul.f32 %v4531, %v4806
        %v4910 = vmul.f32 %v4532, %v4811
        %v4911 = vmul.f32 %v4533, %v4816
        %v4912 = vmul.f32 %v4534, %v4821
        %v4913 = vmul.f32 %v4535, %v4826
        %v4914 = vmul.f32 %v4536, %v4831
        %v4915 = vmul.f32 %v4537, %v4836
        %v4916 = vmul.f32 %v4538, %v4841
        %v4917 = vmul.f32 %v4539, %v4846
        %v4918 = vmul.f32 %v4540, %v4851
        %v4919 = vmul.f32 %v4541, %v4856
        %v4920 = vmul.f32 %v4542, %v4861
        %v4921 = vmul.f32 %v4543, %v4866
        %vm4922 = vcmask 64512
        %4923 = vst.msk [vmem:[#allocation2] sm:$0xff] %vm4922, %v4868
        %4924 = vst.msk [vmem:[#allocation2 + $0x8] sm:$0xff] %vm4922, %v4869
        %4925 = vst.msk [vmem:[#allocation2 + $0x10] sm:$0xff] %vm4922, %v4870
        %4926 = vst.msk [vmem:[#allocation2 + $0x18] sm:$0xff] %vm4922, %v4871
        %4927 = vst.msk [vmem:[#allocation2 + $0x20] sm:$0xff] %vm4922, %v4872
        %4928 = vst.msk [vmem:[#allocation2 + $0x28] sm:$0xff] %vm4922, %v4873
        %4929 = vst.msk [vmem:[#allocation2 + $0x30] sm:$0xff] %vm4922, %v4874
        %4930 = vst.msk [vmem:[#allocation2 + $0x38] sm:$0xff] %vm4922, %v4875
        %4931 = vst.msk [vmem:[#allocation2 + $0x40] sm:$0xff] %vm4922, %v4876
        %4932 = vst.msk [vmem:[#allocation2 + $0x48] sm:$0xff] %vm4922, %v4877
        %4933 = vst.msk [vmem:[#allocation2 + $0x50] sm:$0xff] %vm4922, %v4878
        %4934 = vst.msk [vmem:[#allocation2 + $0x58] sm:$0xff] %vm4922, %v4879
        %4935 = vst.msk [vmem:[#allocation2 + $0x60] sm:$0xff] %vm4922, %v4880
        %4936 = vst.msk [vmem:[#allocation2 + $0x68] sm:$0xff] %vm4922, %v4881
        %4937 = vst.msk [vmem:[#allocation2 + $0x70] sm:$0xff] %vm4922, %v4882
        %4938 = vst.msk [vmem:[#allocation2 + $0x78] sm:$0xff] %vm4922, %v4883
        %4939 = vst.msk [vmem:[#allocation2 + $0x80] sm:$0xff] %vm4922, %v4884
        %4940 = vst.msk [vmem:[#allocation2 + $0x88] sm:$0xff] %vm4922, %v4885
        %4941 = vst.msk [vmem:[#allocation2 + $0x90] sm:$0xff] %vm4922, %v4886
        %4942 = vst.msk [vmem:[#allocation2 + $0x98] sm:$0xff] %vm4922, %v4887
        %4943 = vst.msk [vmem:[#allocation2 + $0xa0] sm:$0xff] %vm4922, %v4888
        %4944 = vst.msk [vmem:[#allocation2 + $0xa8] sm:$0xff] %vm4922, %v4889
        %4945 = vst.msk [vmem:[#allocation2 + $0xb0] sm:$0xff] %vm4922, %v4890
        %4946 = vst.msk [vmem:[#allocation2 + $0xb8] sm:$0xff] %vm4922, %v4891
        %4947 = vst.msk [vmem:[#allocation2 + $0xc0] sm:$0xff] %vm4922, %v4892
        %4948 = vst.msk [vmem:[#allocation2 + $0xc8] sm:$0xff] %vm4922, %v4893
        %4949 = vst.msk [vmem:[#allocation2 + $0xd0] sm:$0xff] %vm4922, %v4894
        %4950 = vst.msk [vmem:[#allocation2 + $0xd8] sm:$0xff] %vm4922, %v4895
        %4951 = vst.msk [vmem:[#allocation2 + $0xe0] sm:$0xff] %vm4922, %v4896
        %4952 = vst.msk [vmem:[#allocation2 + $0xe8] sm:$0xff] %vm4922, %v4897
        %4953 = vst.msk [vmem:[#allocation2 + $0xf0] sm:$0xff] %vm4922, %v4898
        %4954 = vst.msk [vmem:[#allocation2 + $0xf8] sm:$0xff] %vm4922, %v4899
        %4955 = vst.msk [vmem:[#allocation2 + $0x100] sm:$0xff] %vm4922, %v4900
        %4956 = vst.msk [vmem:[#allocation2 + $0x108] sm:$0xff] %vm4922, %v4901
        %4957 = vst.msk [vmem:[#allocation2 + $0x110] sm:$0xff] %vm4922, %v4902
        %4958 = vst.msk [vmem:[#allocation2 + $0x118] sm:$0xff] %vm4922, %v4903
        %4959 = vst.msk [vmem:[#allocation2 + $0x120] sm:$0xff] %vm4922, %v4904
        %4960 = vst.msk [vmem:[#allocation2 + $0x128] sm:$0xff] %vm4922, %v4905
        %4961 = vst.msk [vmem:[#allocation2 + $0x130] sm:$0xff] %vm4922, %v4906
        %4962 = vst.msk [vmem:[#allocation2 + $0x138] sm:$0xff] %vm4922, %v4907
        %4963 = vst.msk [vmem:[#allocation2 + $0x140] sm:$0xff] %vm4922, %v4908
        %4964 = vst.msk [vmem:[#allocation2 + $0x148] sm:$0xff] %vm4922, %v4909
        %4965 = vst.msk [vmem:[#allocation2 + $0x150] sm:$0xff] %vm4922, %v4910
        %4966 = vst.msk [vmem:[#allocation2 + $0x158] sm:$0xff] %vm4922, %v4911
        %4967 = vst.msk [vmem:[#allocation2 + $0x160] sm:$0xff] %vm4922, %v4912
        %4968 = vst.msk [vmem:[#allocation2 + $0x168] sm:$0xff] %vm4922, %v4913
        %4969 = vst.msk [vmem:[#allocation2 + $0x170] sm:$0xff] %vm4922, %v4914
        %4970 = vst.msk [vmem:[#allocation2 + $0x178] sm:$0xff] %vm4922, %v4915
        %4971 = vst.msk [vmem:[#allocation2 + $0x180] sm:$0xff] %vm4922, %v4916
        %4972 = vst.msk [vmem:[#allocation2 + $0x188] sm:$0xff] %vm4922, %v4917
        %4973 = vst.msk [vmem:[#allocation2 + $0x190] sm:$0xff] %vm4922, %v4918
        %4974 = vst.msk [vmem:[#allocation2 + $0x198] sm:$0xff] %vm4922, %v4919
        %4975 = vst.msk [vmem:[#allocation2 + $0x1a0] sm:$0xff] %vm4922, %v4920
        %4976 = vst.msk [vmem:[#allocation2 + $0x1a8] sm:$0xff] %vm4922, %v4921
        %v4977 = vld [vmem:[#allocation2] sm:$0xff]
        %v4978 = vld [vmem:[#allocation2 + $0x8] sm:$0xff]
        %v4979 = vld [vmem:[#allocation2 + $0x18] sm:$0xff]
        %v4980 = vld [vmem:[#allocation2 + $0x20] sm:$0xff]
        %v4981 = vld [vmem:[#allocation2 + $0x30] sm:$0xff]
        %v4982 = vld [vmem:[#allocation2 + $0x38] sm:$0xff]
        %v4983 = vld [vmem:[#allocation2 + $0x48] sm:$0xff]
        %v4984 = vld [vmem:[#allocation2 + $0x50] sm:$0xff]
        %v4985 = vld [vmem:[#allocation2 + $0x60] sm:$0xff]
        %v4986 = vld [vmem:[#allocation2 + $0x68] sm:$0xff]
        %v4987 = vld [vmem:[#allocation2 + $0x78] sm:$0xff]
        %v4988 = vld [vmem:[#allocation2 + $0x80] sm:$0xff]
        %v4989 = vld [vmem:[#allocation2 + $0x90] sm:$0xff]
        %v4990 = vld [vmem:[#allocation2 + $0x98] sm:$0xff]
        %v4991 = vld [vmem:[#allocation2 + $0xa8] sm:$0xff]
        %v4992 = vld [vmem:[#allocation2 + $0xb0] sm:$0xff]
        %v4993 = vld [vmem:[#allocation2 + $0xc0] sm:$0xff]
        %v4994 = vld [vmem:[#allocation2 + $0xc8] sm:$0xff]
        %v4995 = vld [vmem:[#allocation2 + $0xd8] sm:$0xff]
        %v4996 = vld [vmem:[#allocation2 + $0xe0] sm:$0xff]
        %v4997 = vld [vmem:[#allocation2 + $0xf0] sm:$0xff]
        %v4998 = vld [vmem:[#allocation2 + $0xf8] sm:$0xff]
        %v4999 = vld [vmem:[#allocation2 + $0x108] sm:$0xff]
        %v5000 = vld [vmem:[#allocation2 + $0x110] sm:$0xff]
        %v5001 = vld [vmem:[#allocation2 + $0x120] sm:$0xff]
        %v5002 = vld [vmem:[#allocation2 + $0x128] sm:$0xff]
        %v5003 = vld [vmem:[#allocation2 + $0x138] sm:$0xff]
        %v5004 = vld [vmem:[#allocation2 + $0x140] sm:$0xff]
        %v5005 = vld [vmem:[#allocation2 + $0x150] sm:$0xff]
        %v5006 = vld [vmem:[#allocation2 + $0x158] sm:$0xff]
        %v5007 = vld [vmem:[#allocation2 + $0x168] sm:$0xff]
        %v5008 = vld [vmem:[#allocation2 + $0x170] sm:$0xff]
        %v5009 = vpack.c.bf16 %v4978, %v4977
        %v5010 = vpack.c.bf16 %v4980, %v4979
        %v5011 = vpack.c.bf16 %v4982, %v4981
        %v5012 = vpack.c.bf16 %v4984, %v4983
        %v5013 = vpack.c.bf16 %v4986, %v4985
        %v5014 = vpack.c.bf16 %v4988, %v4987
        %v5015 = vpack.c.bf16 %v4990, %v4989
        %v5016 = vpack.c.bf16 %v4992, %v4991
        %v5017 = vpack.c.bf16 %v4994, %v4993
        %v5018 = vpack.c.bf16 %v4996, %v4995
        %v5019 = vpack.c.bf16 %v4998, %v4997
        %v5020 = vpack.c.bf16 %v5000, %v4999
        %v5021 = vpack.c.bf16 %v5002, %v5001
        %v5022 = vpack.c.bf16 %v5004, %v5003
        %v5023 = vpack.c.bf16 %v5006, %v5005
        %v5024 = vpack.c.bf16 %v5008, %v5007
        %v5025 = vld [vmem:[%s4] sm:$0xf]
        %v5026 = vld [vmem:[#allocation2 + $0x1] sm:$0xff]
        %v5027 = vld [vmem:[#allocation2 + $0x9] sm:$0xff]
        %v5028 = vld [vmem:[#allocation2 + $0x19] sm:$0xff]
        %v5029 = vld [vmem:[#allocation2 + $0x21] sm:$0xff]
        %v5030 = vld [vmem:[#allocation2 + $0x31] sm:$0xff]
        %v5031 = vld [vmem:[#allocation2 + $0x39] sm:$0xff]
        %v5032 = vld [vmem:[#allocation2 + $0x49] sm:$0xff]
        %v5033 = vld [vmem:[#allocation2 + $0x51] sm:$0xff]
        %v5034 = vld [vmem:[#allocation2 + $0x61] sm:$0xff]
        %v5035 = vld [vmem:[#allocation2 + $0x69] sm:$0xff]
        %v5036 = vld [vmem:[#allocation2 + $0x79] sm:$0xff]
        %v5037 = vld [vmem:[#allocation2 + $0x81] sm:$0xff]
        %v5038 = vld [vmem:[#allocation2 + $0x91] sm:$0xff]
        %v5039 = vld [vmem:[#allocation2 + $0x99] sm:$0xff]
        %v5040 = vld [vmem:[#allocation2 + $0xa9] sm:$0xff]
        %v5041 = vld [vmem:[#allocation2 + $0xb1] sm:$0xff]
        %v5042 = vld [vmem:[#allocation2 + $0xc1] sm:$0xff]
        %v5043 = vld [vmem:[#allocation2 + $0xc9] sm:$0xff]
        %v5044 = vld [vmem:[#allocation2 + $0xd9] sm:$0xff]
        %v5045 = vld [vmem:[#allocation2 + $0xe1] sm:$0xff]
        %v5046 = vld [vmem:[#allocation2 + $0xf1] sm:$0xff]
        %v5047 = vld [vmem:[#allocation2 + $0xf9] sm:$0xff]
        %v5048 = vld [vmem:[#allocation2 + $0x109] sm:$0xff]
        %v5049 = vld [vmem:[#allocation2 + $0x111] sm:$0xff]
        %v5050 = vld [vmem:[#allocation2 + $0x121] sm:$0xff]
        %v5051 = vld [vmem:[#allocation2 + $0x129] sm:$0xff]
        %v5052 = vld [vmem:[#allocation2 + $0x139] sm:$0xff]
        %v5053 = vld [vmem:[#allocation2 + $0x141] sm:$0xff]
        %v5054 = vld [vmem:[#allocation2 + $0x151] sm:$0xff]
        %v5055 = vld [vmem:[#allocation2 + $0x159] sm:$0xff]
        %v5056 = vld [vmem:[#allocation2 + $0x169] sm:$0xff]
        %v5057 = vld [vmem:[#allocation2 + $0x171] sm:$0xff]
        %v5058 = vpack.c.bf16 %v5027, %v5026
        %v5059 = vpack.c.bf16 %v5029, %v5028
        %v5060 = vpack.c.bf16 %v5031, %v5030
        %v5061 = vpack.c.bf16 %v5033, %v5032
        %v5062 = vpack.c.bf16 %v5035, %v5034
        %v5063 = vpack.c.bf16 %v5037, %v5036
        %v5064 = vpack.c.bf16 %v5039, %v5038
        %v5065 = vpack.c.bf16 %v5041, %v5040
        %v5066 = vpack.c.bf16 %v5043, %v5042
        %v5067 = vpack.c.bf16 %v5045, %v5044
        %v5068 = vpack.c.bf16 %v5047, %v5046
        %v5069 = vpack.c.bf16 %v5049, %v5048
        %v5070 = vpack.c.bf16 %v5051, %v5050
        %v5071 = vpack.c.bf16 %v5053, %v5052
        %v5072 = vpack.c.bf16 %v5055, %v5054
        %v5073 = vpack.c.bf16 %v5057, %v5056
        %s5074 = scalar_lea.vmem %s4, 4
        %v5075 = vld [vmem:[%s5074] sm:$0xf]
        %v5077 = vsel %vm4922, %v5058, 0
        %v5080 = vsel %vm4922, %v5059, 0
        %v5083 = vsel %vm4922, %v5060, 0
        %v5086 = vsel %vm4922, %v5061, 0
        %v5089 = vsel %vm4922, %v5062, 0
        %v5092 = vsel %vm4922, %v5063, 0
        %v5095 = vsel %vm4922, %v5064, 0
        %v5098 = vsel %vm4922, %v5065, 0
        %v5101 = vsel %vm4922, %v5066, 0
        %v5104 = vsel %vm4922, %v5067, 0
        %v5107 = vsel %vm4922, %v5068, 0
        %v5110 = vsel %vm4922, %v5069, 0
        %v5113 = vsel %vm4922, %v5070, 0
        %v5116 = vsel %vm4922, %v5071, 0
        %v5119 = vsel %vm4922, %v5072, 0
        %v5122 = vsel %vm4922, %v5073, 0
        %vm5124 = vcmask 1043456
        %v5126 = vsel %vm5124, %v5075, 0
        %5128 = vmatprep.subr.bf16.mxu0 0
        %5129 = vmatpush1.bf16.msra.mxu0 %v5126
        %5130 = vmatprep.subr.bf16.mxu0 0
        %5131 = vmatpush1.bf16.msra.mxu0 0
        %5132 = vmatprep.subr.bf16.mxu0 0
        %5133 = vmatpush1.bf16.msra.mxu0 0
        %5134 = vmatprep.subr.bf16.mxu0 0
        %5135 = vmatpush1.bf16.msra.mxu0 0
        %5136 = vmatprep.subr.bf16.mxu0 0
        %5137 = vmatpush1.bf16.msra.mxu0 0
        %5138 = vmatprep.subr.bf16.mxu0 0
        %5139 = vmatpush1.bf16.msra.mxu0 0
        %5140 = vmatprep.subr.bf16.mxu0 0
        %5141 = vmatpush1.bf16.msra.mxu0 0
        %5142 = vmatprep.subr.bf16.mxu0 0
        %5143 = vmatpush1.bf16.msra.mxu0 0
        %5144 = vmatprep.subr.bf16.mxu0 0
        %5145 = vmatpush1.bf16.msra.mxu0 0
        %5146 = vmatprep.subr.bf16.mxu0 0
        %5147 = vmatpush1.bf16.msra.mxu0 0
        %5148 = vmatprep.subr.bf16.mxu0 0
        %5149 = vmatpush1.bf16.msra.mxu0 0
        %5150 = vmatprep.subr.bf16.mxu0 0
        %5151 = vmatpush1.bf16.msra.mxu0 0
        %5152 = vmatprep.subr.bf16.mxu0 0
        %5153 = vmatpush1.bf16.msra.mxu0 0
        %5154 = vmatprep.subr.bf16.mxu0 0
        %5155 = vmatpush1.bf16.msra.mxu0 0
        %5156 = vmatprep.subr.bf16.mxu0 0
        %5157 = vmatpush1.bf16.msra.mxu0 0
        %5158 = vmatprep.subr.bf16.mxu0 0
        %5159 = vmatpush1.bf16.msra.mxu0 0
        %5160 = vmatprep.mubr.bf16.mxu0 0
        %5161 = vmatmul.mubr.bf16.gmra.mrb[0].mxu0 %v5077
        %v5162 = vpop.f32.mrb[0].mxu0
        %v5163 = vadd.f32 0.0, %v5162
        %v5164 = vpop.f32.mrb[0].mxu0
        %v5165 = vpop.f32.mrb[0].mxu0
        %v5166 = vadd.f32 0.0, %v5165
        %v5167 = vpop.f32.mrb[0].mxu0
        %5168 = vmatprep.mubr.bf16.mxu0 0
        %5169 = vmatmul.mubr.bf16.gmra.mrb[0].mxu0 %v5080
        %v5170 = vpop.f32.mrb[0].mxu0
        %v5171 = vadd.f32 0.0, %v5170
        %v5172 = vpop.f32.mrb[0].mxu0
        %v5173 = vpop.f32.mrb[0].mxu0
        %v5174 = vadd.f32 0.0, %v5173
        %v5175 = vpop.f32.mrb[0].mxu0
        %5176 = vmatprep.mubr.bf16.mxu0 0
        %5177 = vmatmul.mubr.bf16.gmra.mrb[0].mxu0 %v5083
        %v5178 = vpop.f32.mrb[0].mxu0
        %v5179 = vadd.f32 0.0, %v5178
        %v5180 = vpop.f32.mrb[0].mxu0
        %v5181 = vpop.f32.mrb[0].mxu0
        %v5182 = vadd.f32 0.0, %v5181
        %v5183 = vpop.f32.mrb[0].mxu0
        %5184 = vmatprep.mubr.bf16.mxu0 0
        %5185 = vmatmul.mubr.bf16.gmra.mrb[0].mxu0 %v5086
        %v5186 = vpop.f32.mrb[0].mxu0
        %v5187 = vadd.f32 0.0, %v5186
        %v5188 = vpop.f32.mrb[0].mxu0
        %v5189 = vpop.f32.mrb[0].mxu0
        %v5190 = vadd.f32 0.0, %v5189
        %v5191 = vpop.f32.mrb[0].mxu0
        %5192 = vmatprep.mubr.bf16.mxu0 0
        %5193 = vmatmul.mubr.bf16.gmra.mrb[0].mxu0 %v5089
        %v5194 = vpop.f32.mrb[0].mxu0
        %v5195 = vadd.f32 0.0, %v5194
        %v5196 = vpop.f32.mrb[0].mxu0
        %v5197 = vpop.f32.mrb[0].mxu0
        %v5198 = vadd.f32 0.0, %v5197
        %v5199 = vpop.f32.mrb[0].mxu0
        %5200 = vmatprep.mubr.bf16.mxu0 0
        %5201 = vmatmul.mubr.bf16.gmra.mrb[0].mxu0 %v5092
        %v5202 = vpop.f32.mrb[0].mxu0
        %v5203 = vadd.f32 0.0, %v5202
        %v5204 = vpop.f32.mrb[0].mxu0
        %v5205 = vpop.f32.mrb[0].mxu0
        %v5206 = vadd.f32 0.0, %v5205
        %v5207 = vpop.f32.mrb[0].mxu0
        %5208 = vmatprep.mubr.bf16.mxu0 0
        %5209 = vmatmul.mubr.bf16.gmra.mrb[0].mxu0 %v5095
        %v5210 = vpop.f32.mrb[0].mxu0
        %v5211 = vadd.f32 0.0, %v5210
        %v5212 = vpop.f32.mrb[0].mxu0
        %v5213 = vpop.f32.mrb[0].mxu0
        %v5214 = vadd.f32 0.0, %v5213
        %v5215 = vpop.f32.mrb[0].mxu0
        %5216 = vmatprep.mubr.bf16.mxu0 0
        %5217 = vmatmul.mubr.bf16.gmra.mrb[0].mxu0 %v5098
        %v5218 = vpop.f32.mrb[0].mxu0
        %v5219 = vadd.f32 0.0, %v5218
        %v5220 = vpop.f32.mrb[0].mxu0
        %v5221 = vpop.f32.mrb[0].mxu0
        %v5222 = vadd.f32 0.0, %v5221
        %v5223 = vpop.f32.mrb[0].mxu0
        %5224 = vmatprep.mubr.bf16.mxu0 0
        %5225 = vmatmul.mubr.bf16.gmra.mrb[0].mxu0 %v5101
        %v5226 = vpop.f32.mrb[0].mxu0
        %v5227 = vadd.f32 0.0, %v5226
        %v5228 = vpop.f32.mrb[0].mxu0
        %v5229 = vpop.f32.mrb[0].mxu0
        %v5230 = vadd.f32 0.0, %v5229
        %v5231 = vpop.f32.mrb[0].mxu0
        %5232 = vmatprep.mubr.bf16.mxu0 0
        %5233 = vmatmul.mubr.bf16.gmra.mrb[0].mxu0 %v5104
        %v5234 = vpop.f32.mrb[0].mxu0
        %v5235 = vadd.f32 0.0, %v5234
        %v5236 = vpop.f32.mrb[0].mxu0
        %v5237 = vpop.f32.mrb[0].mxu0
        %v5238 = vadd.f32 0.0, %v5237
        %v5239 = vpop.f32.mrb[0].mxu0
        %5240 = vmatprep.mubr.bf16.mxu0 0
        %5241 = vmatmul.mubr.bf16.gmra.mrb[0].mxu0 %v5107
        %v5242 = vpop.f32.mrb[0].mxu0
        %v5243 = vadd.f32 0.0, %v5242
        %v5244 = vpop.f32.mrb[0].mxu0
        %v5245 = vpop.f32.mrb[0].mxu0
        %v5246 = vadd.f32 0.0, %v5245
        %v5247 = vpop.f32.mrb[0].mxu0
        %5248 = vmatprep.mubr.bf16.mxu0 0
        %5249 = vmatmul.mubr.bf16.gmra.mrb[0].mxu0 %v5110
        %v5250 = vpop.f32.mrb[0].mxu0
        %v5251 = vadd.f32 0.0, %v5250
        %v5252 = vpop.f32.mrb[0].mxu0
        %v5253 = vpop.f32.mrb[0].mxu0
        %v5254 = vadd.f32 0.0, %v5253
        %v5255 = vpop.f32.mrb[0].mxu0
        %5256 = vmatprep.mubr.bf16.mxu0 0
        %5257 = vmatmul.mubr.bf16.gmra.mrb[0].mxu0 %v5113
        %v5258 = vpop.f32.mrb[0].mxu0
        %v5259 = vadd.f32 0.0, %v5258
        %v5260 = vpop.f32.mrb[0].mxu0
        %v5261 = vpop.f32.mrb[0].mxu0
        %v5262 = vadd.f32 0.0, %v5261
        %v5263 = vpop.f32.mrb[0].mxu0
        %5264 = vmatprep.mubr.bf16.mxu0 0
        %5265 = vmatmul.mubr.bf16.gmra.mrb[0].mxu0 %v5116
        %v5266 = vpop.f32.mrb[0].mxu0
        %v5267 = vadd.f32 0.0, %v5266
        %v5268 = vpop.f32.mrb[0].mxu0
        %v5269 = vpop.f32.mrb[0].mxu0
        %v5270 = vadd.f32 0.0, %v5269
        %v5271 = vpop.f32.mrb[0].mxu0
        %5272 = vmatprep.mubr.bf16.mxu0 0
        %5273 = vmatmul.mubr.bf16.gmra.mrb[0].mxu0 %v5119
        %v5274 = vpop.f32.mrb[0].mxu0
        %v5275 = vadd.f32 0.0, %v5274
        %v5276 = vpop.f32.mrb[0].mxu0
        %v5277 = vpop.f32.mrb[0].mxu0
        %v5278 = vadd.f32 0.0, %v5277
        %v5279 = vpop.f32.mrb[0].mxu0
        %5280 = vmatprep.mubr.bf16.mxu0 0
        %5281 = vmatmul.mubr.bf16.gmra.mrb[0].mxu0 %v5122
        %v5282 = vpop.f32.mrb[0].mxu0
        %v5283 = vadd.f32 0.0, %v5282
        %v5284 = vpop.f32.mrb[0].mxu0
        %v5285 = vpop.f32.mrb[0].mxu0
        %v5286 = vadd.f32 0.0, %v5285
        %v5287 = vpop.f32.mrb[0].mxu0
        %5288 = vdwg.mxu0
        %v5290 = vsel %vm4922, %v5009, 0
        %v5293 = vsel %vm4922, %v5010, 0
        %v5296 = vsel %vm4922, %v5011, 0
        %v5299 = vsel %vm4922, %v5012, 0
        %v5302 = vsel %vm4922, %v5013, 0
        %v5305 = vsel %vm4922, %v5014, 0
        %v5308 = vsel %vm4922, %v5015, 0
        %v5311 = vsel %vm4922, %v5016, 0
        %v5314 = vsel %vm4922, %v5017, 0
        %v5317 = vsel %vm4922, %v5018, 0
        %v5320 = vsel %vm4922, %v5019, 0
        %v5323 = vsel %vm4922, %v5020, 0
        %v5326 = vsel %vm4922, %v5021, 0
        %v5329 = vsel %vm4922, %v5022, 0
        %v5332 = vsel %vm4922, %v5023, 0
        %v5335 = vsel %vm4922, %v5024, 0
        %v5338 = vsel %vm5124, %v5025, 0
        %5340 = vmatprep.subr.bf16.mxu0 0
        %5341 = vmatpush1.bf16.msra.mxu0 %v5338
        %5342 = vmatprep.subr.bf16.mxu0 0
        %5343 = vmatpush1.bf16.msra.mxu0 0
        %5344 = vmatprep.subr.bf16.mxu0 0
        %5345 = vmatpush1.bf16.msra.mxu0 0
        %5346 = vmatprep.subr.bf16.mxu0 0
        %5347 = vmatpush1.bf16.msra.mxu0 0
        %5348 = vmatprep.subr.bf16.mxu0 0
        %5349 = vmatpush1.bf16.msra.mxu0 0
        %5350 = vmatprep.subr.bf16.mxu0 0
        %5351 = vmatpush1.bf16.msra.mxu0 0
        %5352 = vmatprep.subr.bf16.mxu0 0
        %5353 = vmatpush1.bf16.msra.mxu0 0
        %5354 = vmatprep.subr.bf16.mxu0 0
        %5355 = vmatpush1.bf16.msra.mxu0 0
        %5356 = vmatprep.subr.bf16.mxu0 0
        %5357 = vmatpush1.bf16.msra.mxu0 0
        %5358 = vmatprep.subr.bf16.mxu0 0
        %5359 = vmatpush1.bf16.msra.mxu0 0
        %5360 = vmatprep.subr.bf16.mxu0 0
        %5361 = vmatpush1.bf16.msra.mxu0 0
        %5362 = vmatprep.subr.bf16.mxu0 0
        %5363 = vmatpush1.bf16.msra.mxu0 0
        %5364 = vmatprep.subr.bf16.mxu0 0
        %5365 = vmatpush1.bf16.msra.mxu0 0
        %5366 = vmatprep.subr.bf16.mxu0 0
        %5367 = vmatpush1.bf16.msra.mxu0 0
        %5368 = vmatprep.subr.bf16.mxu0 0
        %5369 = vmatpush1.bf16.msra.mxu0 0
        %5370 = vmatprep.subr.bf16.mxu0 0
        %5371 = vmatpush1.bf16.msra.mxu0 0
        %5372 = vmatprep.mubr.bf16.mxu0 0
        %5373 = vmatmul.mubr.bf16.gmra.mrb[0].mxu0 %v5290
        %v5374 = vpop.f32.mrb[0].mxu0
        %v5375 = vadd.f32 %v5163, %v5374
        %v5376 = vpop.f32.mrb[0].mxu0
        %v5377 = vpop.f32.mrb[0].mxu0
        %v5378 = vadd.f32 %v5166, %v5377
        %v5379 = vpop.f32.mrb[0].mxu0
        %5380 = vmatprep.mubr.bf16.mxu0 0
        %5381 = vmatmul.mubr.bf16.gmra.mrb[0].mxu0 %v5293
        %v5382 = vpop.f32.mrb[0].mxu0
        %v5383 = vadd.f32 %v5171, %v5382
        %v5384 = vpop.f32.mrb[0].mxu0
        %v5385 = vpop.f32.mrb[0].mxu0
        %v5386 = vadd.f32 %v5174, %v5385
        %v5387 = vpop.f32.mrb[0].mxu0
        %5388 = vmatprep.mubr.bf16.mxu0 0
        %5389 = vmatmul.mubr.bf16.gmra.mrb[0].mxu0 %v5296
        %v5390 = vpop.f32.mrb[0].mxu0
        %v5391 = vadd.f32 %v5179, %v5390
        %v5392 = vpop.f32.mrb[0].mxu0
        %v5393 = vpop.f32.mrb[0].mxu0
        %v5394 = vadd.f32 %v5182, %v5393
        %v5395 = vpop.f32.mrb[0].mxu0
        %5396 = vmatprep.mubr.bf16.mxu0 0
        %5397 = vmatmul.mubr.bf16.gmra.mrb[0].mxu0 %v5299
        %v5398 = vpop.f32.mrb[0].mxu0
        %v5399 = vadd.f32 %v5187, %v5398
        %v5400 = vpop.f32.mrb[0].mxu0
        %v5401 = vpop.f32.mrb[0].mxu0
        %v5402 = vadd.f32 %v5190, %v5401
        %v5403 = vpop.f32.mrb[0].mxu0
        %5404 = vmatprep.mubr.bf16.mxu0 0
        %5405 = vmatmul.mubr.bf16.gmra.mrb[0].mxu0 %v5302
        %v5406 = vpop.f32.mrb[0].mxu0
        %v5407 = vadd.f32 %v5195, %v5406
        %v5408 = vpop.f32.mrb[0].mxu0
        %v5409 = vpop.f32.mrb[0].mxu0
        %v5410 = vadd.f32 %v5198, %v5409
        %v5411 = vpop.f32.mrb[0].mxu0
        %5412 = vmatprep.mubr.bf16.mxu0 0
        %5413 = vmatmul.mubr.bf16.gmra.mrb[0].mxu0 %v5305
        %v5414 = vpop.f32.mrb[0].mxu0
        %v5415 = vadd.f32 %v5203, %v5414
        %v5416 = vpop.f32.mrb[0].mxu0
        %v5417 = vpop.f32.mrb[0].mxu0
        %v5418 = vadd.f32 %v5206, %v5417
        %v5419 = vpop.f32.mrb[0].mxu0
        %5420 = vmatprep.mubr.bf16.mxu0 0
        %5421 = vmatmul.mubr.bf16.gmra.mrb[0].mxu0 %v5308
        %v5422 = vpop.f32.mrb[0].mxu0
        %v5423 = vadd.f32 %v5211, %v5422
        %v5424 = vpop.f32.mrb[0].mxu0
        %v5425 = vpop.f32.mrb[0].mxu0
        %v5426 = vadd.f32 %v5214, %v5425
        %v5427 = vpop.f32.mrb[0].mxu0
        %5428 = vmatprep.mubr.bf16.mxu0 0
        %5429 = vmatmul.mubr.bf16.gmra.mrb[0].mxu0 %v5311
        %v5430 = vpop.f32.mrb[0].mxu0
        %v5431 = vadd.f32 %v5219, %v5430
        %v5432 = vpop.f32.mrb[0].mxu0
        %v5433 = vpop.f32.mrb[0].mxu0
        %v5434 = vadd.f32 %v5222, %v5433
        %v5435 = vpop.f32.mrb[0].mxu0
        %5436 = vmatprep.mubr.bf16.mxu0 0
        %5437 = vmatmul.mubr.bf16.gmra.mrb[0].mxu0 %v5314
        %v5438 = vpop.f32.mrb[0].mxu0
        %v5439 = vadd.f32 %v5227, %v5438
        %v5440 = vpop.f32.mrb[0].mxu0
        %v5441 = vpop.f32.mrb[0].mxu0
        %v5442 = vadd.f32 %v5230, %v5441
        %v5443 = vpop.f32.mrb[0].mxu0
        %5444 = vmatprep.mubr.bf16.mxu0 0
        %5445 = vmatmul.mubr.bf16.gmra.mrb[0].mxu0 %v5317
        %v5446 = vpop.f32.mrb[0].mxu0
        %v5447 = vadd.f32 %v5235, %v5446
        %v5448 = vpop.f32.mrb[0].mxu0
        %v5449 = vpop.f32.mrb[0].mxu0
        %v5450 = vadd.f32 %v5238, %v5449
        %v5451 = vpop.f32.mrb[0].mxu0
        %5452 = vmatprep.mubr.bf16.mxu0 0
        %5453 = vmatmul.mubr.bf16.gmra.mrb[0].mxu0 %v5320
        %v5454 = vpop.f32.mrb[0].mxu0
        %v5455 = vadd.f32 %v5243, %v5454
        %v5456 = vpop.f32.mrb[0].mxu0
        %v5457 = vpop.f32.mrb[0].mxu0
        %v5458 = vadd.f32 %v5246, %v5457
        %v5459 = vpop.f32.mrb[0].mxu0
        %5460 = vmatprep.mubr.bf16.mxu0 0
        %5461 = vmatmul.mubr.bf16.gmra.mrb[0].mxu0 %v5323
        %v5462 = vpop.f32.mrb[0].mxu0
        %v5463 = vadd.f32 %v5251, %v5462
        %v5464 = vpop.f32.mrb[0].mxu0
        %v5465 = vpop.f32.mrb[0].mxu0
        %v5466 = vadd.f32 %v5254, %v5465
        %v5467 = vpop.f32.mrb[0].mxu0
        %5468 = vmatprep.mubr.bf16.mxu0 0
        %5469 = vmatmul.mubr.bf16.gmra.mrb[0].mxu0 %v5326
        %v5470 = vpop.f32.mrb[0].mxu0
        %v5471 = vadd.f32 %v5259, %v5470
        %v5472 = vpop.f32.mrb[0].mxu0
        %v5473 = vpop.f32.mrb[0].mxu0
        %v5474 = vadd.f32 %v5262, %v5473
        %v5475 = vpop.f32.mrb[0].mxu0
        %5476 = vmatprep.mubr.bf16.mxu0 0
        %5477 = vmatmul.mubr.bf16.gmra.mrb[0].mxu0 %v5329
        %v5478 = vpop.f32.mrb[0].mxu0
        %v5479 = vadd.f32 %v5267, %v5478
        %v5480 = vpop.f32.mrb[0].mxu0
        %v5481 = vpop.f32.mrb[0].mxu0
        %v5482 = vadd.f32 %v5270, %v5481
        %v5483 = vpop.f32.mrb[0].mxu0
        %5484 = vmatprep.mubr.bf16.mxu0 0
        %5485 = vmatmul.mubr.bf16.gmra.mrb[0].mxu0 %v5332
        %v5486 = vpop.f32.mrb[0].mxu0
        %v5487 = vadd.f32 %v5275, %v5486
        %v5488 = vpop.f32.mrb[0].mxu0
        %v5489 = vpop.f32.mrb[0].mxu0
        %v5490 = vadd.f32 %v5278, %v5489
        %v5491 = vpop.f32.mrb[0].mxu0
        %5492 = vmatprep.mubr.bf16.mxu0 0
        %5493 = vmatmul.mubr.bf16.gmra.mrb[0].mxu0 %v5335
        %v5494 = vpop.f32.mrb[0].mxu0
        %v5495 = vadd.f32 %v5283, %v5494
        %v5496 = vpop.f32.mrb[0].mxu0
        %v5497 = vpop.f32.mrb[0].mxu0
        %v5498 = vadd.f32 %v5286, %v5497
        %v5499 = vpop.f32.mrb[0].mxu0
        %5500 = vdwg.mxu0
        %v5501 = vld [vmem:[#allocation2 + $0x2] sm:$0xff]
        %v5502 = vld [vmem:[#allocation2 + $0xa] sm:$0xff]
        %v5503 = vld [vmem:[#allocation2 + $0x1a] sm:$0xff]
        %v5504 = vld [vmem:[#allocation2 + $0x22] sm:$0xff]
        %v5505 = vld [vmem:[#allocation2 + $0x32] sm:$0xff]
        %v5506 = vld [vmem:[#allocation2 + $0x3a] sm:$0xff]
        %v5507 = vld [vmem:[#allocation2 + $0x4a] sm:$0xff]
        %v5508 = vld [vmem:[#allocation2 + $0x52] sm:$0xff]
        %v5509 = vld [vmem:[#allocation2 + $0x62] sm:$0xff]
        %v5510 = vld [vmem:[#allocation2 + $0x6a] sm:$0xff]
        %v5511 = vld [vmem:[#allocation2 + $0x7a] sm:$0xff]
        %v5512 = vld [vmem:[#allocation2 + $0x82] sm:$0xff]
        %v5513 = vld [vmem:[#allocation2 + $0x92] sm:$0xff]
        %v5514 = vld [vmem:[#allocation2 + $0x9a] sm:$0xff]
        %v5515 = vld [vmem:[#allocation2 + $0xaa] sm:$0xff]
        %v5516 = vld [vmem:[#allocation2 + $0xb2] sm:$0xff]
        %v5517 = vld [vmem:[#allocation2 + $0xc2] sm:$0xff]
        %v5518 = vld [vmem:[#allocation2 + $0xca] sm:$0xff]
        %v5519 = vld [vmem:[#allocation2 + $0xda] sm:$0xff]
        %v5520 = vld [vmem:[#allocation2 + $0xe2] sm:$0xff]
        %v5521 = vld [vmem:[#allocation2 + $0xf2] sm:$0xff]
        %v5522 = vld [vmem:[#allocation2 + $0xfa] sm:$0xff]
        %v5523 = vld [vmem:[#allocation2 + $0x10a] sm:$0xff]
        %v5524 = vld [vmem:[#allocation2 + $0x112] sm:$0xff]
        %v5525 = vld [vmem:[#allocation2 + $0x122] sm:$0xff]
        %v5526 = vld [vmem:[#allocation2 + $0x12a] sm:$0xff]
        %v5527 = vld [vmem:[#allocation2 + $0x13a] sm:$0xff]
        %v5528 = vld [vmem:[#allocation2 + $0x142] sm:$0xff]
        %v5529 = vld [vmem:[#allocation2 + $0x152] sm:$0xff]
        %v5530 = vld [vmem:[#allocation2 + $0x15a] sm:$0xff]
        %v5531 = vld [vmem:[#allocation2 + $0x16a] sm:$0xff]
        %v5532 = vld [vmem:[#allocation2 + $0x172] sm:$0xff]
        %v5533 = vpack.c.bf16 %v5502, %v5501
        %v5534 = vpack.c.bf16 %v5504, %v5503
        %v5535 = vpack.c.bf16 %v5506, %v5505
        %v5536 = vpack.c.bf16 %v5508, %v5507
        %v5537 = vpack.c.bf16 %v5510, %v5509
        %v5538 = vpack.c.bf16 %v5512, %v5511
        %v5539 = vpack.c.bf16 %v5514, %v5513
        %v5540 = vpack.c.bf16 %v5516, %v5515
        %v5541 = vpack.c.bf16 %v5518, %v5517
        %v5542 = vpack.c.bf16 %v5520, %v5519
        %v5543 = vpack.c.bf16 %v5522, %v5521
        %v5544 = vpack.c.bf16 %v5524, %v5523
        %v5545 = vpack.c.bf16 %v5526, %v5525
        %v5546 = vpack.c.bf16 %v5528, %v5527
        %v5547 = vpack.c.bf16 %v5530, %v5529
        %v5548 = vpack.c.bf16 %v5532, %v5531
        %s5549 = scalar_lea.vmem %s4, 8
        %v5550 = vld [vmem:[%s5549] sm:$0xf]
        %v5552 = vsel %vm4922, %v5533, 0
        %v5555 = vsel %vm4922, %v5534, 0
        %v5558 = vsel %vm4922, %v5535, 0
        %v5561 = vsel %vm4922, %v5536, 0
        %v5564 = vsel %vm4922, %v5537, 0
        %v5567 = vsel %vm4922, %v5538, 0
        %v5570 = vsel %vm4922, %v5539, 0
        %v5573 = vsel %vm4922, %v5540, 0
        %v5576 = vsel %vm4922, %v5541, 0
        %v5579 = vsel %vm4922, %v5542, 0
        %v5582 = vsel %vm4922, %v5543, 0
        %v5585 = vsel %vm4922, %v5544, 0
        %v5588 = vsel %vm4922, %v5545, 0
        %v5591 = vsel %vm4922, %v5546, 0
        %v5594 = vsel %vm4922, %v5547, 0
        %v5597 = vsel %vm4922, %v5548, 0
        %v5600 = vsel %vm5124, %v5550, 0
        %5602 = vmatprep.subr.bf16.mxu0 0
        %5603 = vmatpush1.bf16.msra.mxu0 %v5600
        %5604 = vmatprep.subr.bf16.mxu0 0
        %5605 = vmatpush1.bf16.msra.mxu0 0
        %5606 = vmatprep.subr.bf16.mxu0 0
        %5607 = vmatpush1.bf16.msra.mxu0 0
        %5608 = vmatprep.subr.bf16.mxu0 0
        %5609 = vmatpush1.bf16.msra.mxu0 0
        %5610 = vmatprep.subr.bf16.mxu0 0
        %5611 = vmatpush1.bf16.msra.mxu0 0
        %5612 = vmatprep.subr.bf16.mxu0 0
        %5613 = vmatpush1.bf16.msra.mxu0 0
        %5614 = vmatprep.subr.bf16.mxu0 0
        %5615 = vmatpush1.bf16.msra.mxu0 0
        %5616 = vmatprep.subr.bf16.mxu0 0
        %5617 = vmatpush1.bf16.msra.mxu0 0
        %5618 = vmatprep.subr.bf16.mxu0 0
        %5619 = vmatpush1.bf16.msra.mxu0 0
        %5620 = vmatprep.subr.bf16.mxu0 0
        %5621 = vmatpush1.bf16.msra.mxu0 0
        %5622 = vmatprep.subr.bf16.mxu0 0
        %5623 = vmatpush1.bf16.msra.mxu0 0
        %5624 = vmatprep.subr.bf16.mxu0 0
        %5625 = vmatpush1.bf16.msra.mxu0 0
        %5626 = vmatprep.subr.bf16.mxu0 0
        %5627 = vmatpush1.bf16.msra.mxu0 0
        %5628 = vmatprep.subr.bf16.mxu0 0
        %5629 = vmatpush1.bf16.msra.mxu0 0
        %5630 = vmatprep.subr.bf16.mxu0 0
        %5631 = vmatpush1.bf16.msra.mxu0 0
        %5632 = vmatprep.subr.bf16.mxu0 0
        %5633 = vmatpush1.bf16.msra.mxu0 0
        %5634 = vmatprep.mubr.bf16.mxu0 0
        %5635 = vmatmul.mubr.bf16.gmra.mrb[0].mxu0 %v5552
        %v5636 = vpop.f32.mrb[0].mxu0
        %v5637 = vadd.f32 0.0, %v5636
        %v5638 = vpop.f32.mrb[0].mxu0
        %v5639 = vpop.f32.mrb[0].mxu0
        %v5640 = vadd.f32 0.0, %v5639
        %v5641 = vpop.f32.mrb[0].mxu0
        %5642 = vmatprep.mubr.bf16.mxu0 0
        %5643 = vmatmul.mubr.bf16.gmra.mrb[0].mxu0 %v5555
        %v5644 = vpop.f32.mrb[0].mxu0
        %v5645 = vadd.f32 0.0, %v5644
        %v5646 = vpop.f32.mrb[0].mxu0
        %v5647 = vpop.f32.mrb[0].mxu0
        %v5648 = vadd.f32 0.0, %v5647
        %v5649 = vpop.f32.mrb[0].mxu0
        %5650 = vmatprep.mubr.bf16.mxu0 0
        %5651 = vmatmul.mubr.bf16.gmra.mrb[0].mxu0 %v5558
        %v5652 = vpop.f32.mrb[0].mxu0
        %v5653 = vadd.f32 0.0, %v5652
        %v5654 = vpop.f32.mrb[0].mxu0
        %v5655 = vpop.f32.mrb[0].mxu0
        %v5656 = vadd.f32 0.0, %v5655
        %v5657 = vpop.f32.mrb[0].mxu0
        %5658 = vmatprep.mubr.bf16.mxu0 0
        %5659 = vmatmul.mubr.bf16.gmra.mrb[0].mxu0 %v5561
        %v5660 = vpop.f32.mrb[0].mxu0
        %v5661 = vadd.f32 0.0, %v5660
        %v5662 = vpop.f32.mrb[0].mxu0
        %v5663 = vpop.f32.mrb[0].mxu0
        %v5664 = vadd.f32 0.0, %v5663
        %v5665 = vpop.f32.mrb[0].mxu0
        %5666 = vmatprep.mubr.bf16.mxu0 0
        %5667 = vmatmul.mubr.bf16.gmra.mrb[0].mxu0 %v5564
        %v5668 = vpop.f32.mrb[0].mxu0
        %v5669 = vadd.f32 0.0, %v5668
        %v5670 = vpop.f32.mrb[0].mxu0
        %v5671 = vpop.f32.mrb[0].mxu0
        %v5672 = vadd.f32 0.0, %v5671
        %v5673 = vpop.f32.mrb[0].mxu0
        %5674 = vmatprep.mubr.bf16.mxu0 0
        %5675 = vmatmul.mubr.bf16.gmra.mrb[0].mxu0 %v5567
        %v5676 = vpop.f32.mrb[0].mxu0
        %v5677 = vadd.f32 0.0, %v5676
        %v5678 = vpop.f32.mrb[0].mxu0
        %v5679 = vpop.f32.mrb[0].mxu0
        %v5680 = vadd.f32 0.0, %v5679
        %v5681 = vpop.f32.mrb[0].mxu0
        %5682 = vmatprep.mubr.bf16.mxu0 0
        %5683 = vmatmul.mubr.bf16.gmra.mrb[0].mxu0 %v5570
        %v5684 = vpop.f32.mrb[0].mxu0
        %v5685 = vadd.f32 0.0, %v5684
        %v5686 = vpop.f32.mrb[0].mxu0
        %v5687 = vpop.f32.mrb[0].mxu0
        %v5688 = vadd.f32 0.0, %v5687
        %v5689 = vpop.f32.mrb[0].mxu0
        %5690 = vmatprep.mubr.bf16.mxu0 0
        %5691 = vmatmul.mubr.bf16.gmra.mrb[0].mxu0 %v5573
        %v5692 = vpop.f32.mrb[0].mxu0
        %v5693 = vadd.f32 0.0, %v5692
        %v5694 = vpop.f32.mrb[0].mxu0
        %v5695 = vpop.f32.mrb[0].mxu0
        %v5696 = vadd.f32 0.0, %v5695
        %v5697 = vpop.f32.mrb[0].mxu0
        %5698 = vmatprep.mubr.bf16.mxu0 0
        %5699 = vmatmul.mubr.bf16.gmra.mrb[0].mxu0 %v5576
        %v5700 = vpop.f32.mrb[0].mxu0
        %v5701 = vadd.f32 0.0, %v5700
        %v5702 = vpop.f32.mrb[0].mxu0
        %v5703 = vpop.f32.mrb[0].mxu0
        %v5704 = vadd.f32 0.0, %v5703
        %v5705 = vpop.f32.mrb[0].mxu0
        %5706 = vmatprep.mubr.bf16.mxu0 0
        %5707 = vmatmul.mubr.bf16.gmra.mrb[0].mxu0 %v5579
        %v5708 = vpop.f32.mrb[0].mxu0
        %v5709 = vadd.f32 0.0, %v5708
        %v5710 = vpop.f32.mrb[0].mxu0
        %v5711 = vpop.f32.mrb[0].mxu0
        %v5712 = vadd.f32 0.0, %v5711
        %v5713 = vpop.f32.mrb[0].mxu0
        %5714 = vmatprep.mubr.bf16.mxu0 0
        %5715 = vmatmul.mubr.bf16.gmra.mrb[0].mxu0 %v5582
        %v5716 = vpop.f32.mrb[0].mxu0
        %v5717 = vadd.f32 0.0, %v5716
        %v5718 = vpop.f32.mrb[0].mxu0
        %v5719 = vpop.f32.mrb[0].mxu0
        %v5720 = vadd.f32 0.0, %v5719
        %v5721 = vpop.f32.mrb[0].mxu0
        %5722 = vmatprep.mubr.bf16.mxu0 0
        %5723 = vmatmul.mubr.bf16.gmra.mrb[0].mxu0 %v5585
        %v5724 = vpop.f32.mrb[0].mxu0
        %v5725 = vadd.f32 0.0, %v5724
        %v5726 = vpop.f32.mrb[0].mxu0
        %v5727 = vpop.f32.mrb[0].mxu0
        %v5728 = vadd.f32 0.0, %v5727
        %v5729 = vpop.f32.mrb[0].mxu0
        %5730 = vmatprep.mubr.bf16.mxu0 0
        %5731 = vmatmul.mubr.bf16.gmra.mrb[0].mxu0 %v5588
        %v5732 = vpop.f32.mrb[0].mxu0
        %v5733 = vadd.f32 0.0, %v5732
        %v5734 = vpop.f32.mrb[0].mxu0
        %v5735 = vpop.f32.mrb[0].mxu0
        %v5736 = vadd.f32 0.0, %v5735
        %v5737 = vpop.f32.mrb[0].mxu0
        %5738 = vmatprep.mubr.bf16.mxu0 0
        %5739 = vmatmul.mubr.bf16.gmra.mrb[0].mxu0 %v5591
        %v5740 = vpop.f32.mrb[0].mxu0
        %v5741 = vadd.f32 0.0, %v5740
        %v5742 = vpop.f32.mrb[0].mxu0
        %v5743 = vpop.f32.mrb[0].mxu0
        %v5744 = vadd.f32 0.0, %v5743
        %v5745 = vpop.f32.mrb[0].mxu0
        %5746 = vmatprep.mubr.bf16.mxu0 0
        %5747 = vmatmul.mubr.bf16.gmra.mrb[0].mxu0 %v5594
        %v5748 = vpop.f32.mrb[0].mxu0
        %v5749 = vadd.f32 0.0, %v5748
        %v5750 = vpop.f32.mrb[0].mxu0
        %v5751 = vpop.f32.mrb[0].mxu0
        %v5752 = vadd.f32 0.0, %v5751
        %v5753 = vpop.f32.mrb[0].mxu0
        %5754 = vmatprep.mubr.bf16.mxu0 0
        %5755 = vmatmul.mubr.bf16.gmra.mrb[0].mxu0 %v5597
        %v5756 = vpop.f32.mrb[0].mxu0
        %v5757 = vadd.f32 0.0, %v5756
        %v5758 = vpop.f32.mrb[0].mxu0
        %v5759 = vpop.f32.mrb[0].mxu0
        %v5760 = vadd.f32 0.0, %v5759
        %v5761 = vpop.f32.mrb[0].mxu0
        %5762 = vdwg.mxu0
        %v5763 = vadd.f32 %v5375, %v5637
        %v5764 = vadd.f32 %v5378, %v5640
        %v5765 = vadd.f32 %v5383, %v5645
        %v5766 = vadd.f32 %v5386, %v5648
        %v5767 = vadd.f32 %v5391, %v5653
        %v5768 = vadd.f32 %v5394, %v5656
        %v5769 = vadd.f32 %v5399, %v5661
        %v5770 = vadd.f32 %v5402, %v5664
        %v5771 = vadd.f32 %v5407, %v5669
        %v5772 = vadd.f32 %v5410, %v5672
        %v5773 = vadd.f32 %v5415, %v5677
        %v5774 = vadd.f32 %v5418, %v5680
        %v5775 = vadd.f32 %v5423, %v5685
        %v5776 = vadd.f32 %v5426, %v5688
        %v5777 = vadd.f32 %v5431, %v5693
        %v5778 = vadd.f32 %v5434, %v5696
        %v5779 = vadd.f32 %v5439, %v5701
        %v5780 = vadd.f32 %v5442, %v5704
        %v5781 = vadd.f32 %v5447, %v5709
        %v5782 = vadd.f32 %v5450, %v5712
        %v5783 = vadd.f32 %v5455, %v5717
        %v5784 = vadd.f32 %v5458, %v5720
        %v5785 = vadd.f32 %v5463, %v5725
        %v5786 = vadd.f32 %v5466, %v5728
        %v5787 = vadd.f32 %v5471, %v5733
        %v5788 = vadd.f32 %v5474, %v5736
        %v5789 = vadd.f32 %v5479, %v5741
        %v5790 = vadd.f32 %v5482, %v5744
        %v5791 = vadd.f32 %v5487, %v5749
        %v5792 = vadd.f32 %v5490, %v5752
        %v5793 = vadd.f32 %v5495, %v5757
        %v5794 = vadd.f32 %v5498, %v5760
        %s5795 = scalar_lea.vmem [#allocation2], 24
        %v5796 = vld [vmem:[%s5795] sm:$0xff]
        %v5797 = vld [vmem:[%s5795 + $0x8] sm:$0xff]
        %v5798 = vld [vmem:[%s5795 + $0x18] sm:$0xff]
        %v5799 = vld [vmem:[%s5795 + $0x20] sm:$0xff]
        %v5800 = vld [vmem:[%s5795 + $0x30] sm:$0xff]
        %v5801 = vld [vmem:[%s5795 + $0x38] sm:$0xff]
        %v5802 = vld [vmem:[%s5795 + $0x48] sm:$0xff]
        %v5803 = vld [vmem:[%s5795 + $0x50] sm:$0xff]
        %v5804 = vld [vmem:[%s5795 + $0x60] sm:$0xff]
        %v5805 = vld [vmem:[%s5795 + $0x68] sm:$0xff]
        %v5806 = vld [vmem:[%s5795 + $0x78] sm:$0xff]
        %v5807 = vld [vmem:[%s5795 + $0x80] sm:$0xff]
        %v5808 = vld [vmem:[%s5795 + $0x90] sm:$0xff]
        %v5809 = vld [vmem:[%s5795 + $0x98] sm:$0xff]
        %v5810 = vld [vmem:[%s5795 + $0xa8] sm:$0xff]
        %v5811 = vld [vmem:[%s5795 + $0xb0] sm:$0xff]
        %v5812 = vld [vmem:[%s5795 + $0xc0] sm:$0xff]
        %v5813 = vld [vmem:[%s5795 + $0xc8] sm:$0xff]
        %v5814 = vld [vmem:[%s5795 + $0xd8] sm:$0xff]
        %v5815 = vld [vmem:[%s5795 + $0xe0] sm:$0xff]
        %v5816 = vld [vmem:[%s5795 + $0xf0] sm:$0xff]
        %v5817 = vld [vmem:[%s5795 + $0xf8] sm:$0xff]
        %v5818 = vld [vmem:[%s5795 + $0x108] sm:$0xff]
        %v5819 = vld [vmem:[%s5795 + $0x110] sm:$0xff]
        %v5820 = vld [vmem:[%s5795 + $0x120] sm:$0xff]
        %v5821 = vld [vmem:[%s5795 + $0x128] sm:$0xff]
        %v5822 = vld [vmem:[%s5795 + $0x138] sm:$0xff]
        %v5823 = vld [vmem:[%s5795 + $0x140] sm:$0xff]
        %v5824 = vld [vmem:[%s5795 + $0x150] sm:$0xff]
        %v5825 = vld [vmem:[%s5795 + $0x158] sm:$0xff]
        %v5826 = vld [vmem:[%s5795 + $0x168] sm:$0xff]
        %v5827 = vld [vmem:[%s5795 + $0x170] sm:$0xff]
        %v5828 = vpack.c.bf16 %v5797, %v5796
        %v5829 = vpack.c.bf16 %v5799, %v5798
        %v5830 = vpack.c.bf16 %v5801, %v5800
        %v5831 = vpack.c.bf16 %v5803, %v5802
        %v5832 = vpack.c.bf16 %v5805, %v5804
        %v5833 = vpack.c.bf16 %v5807, %v5806
        %v5834 = vpack.c.bf16 %v5809, %v5808
        %v5835 = vpack.c.bf16 %v5811, %v5810
        %v5836 = vpack.c.bf16 %v5813, %v5812
        %v5837 = vpack.c.bf16 %v5815, %v5814
        %v5838 = vpack.c.bf16 %v5817, %v5816
        %v5839 = vpack.c.bf16 %v5819, %v5818
        %v5840 = vpack.c.bf16 %v5821, %v5820
        %v5841 = vpack.c.bf16 %v5823, %v5822
        %v5842 = vpack.c.bf16 %v5825, %v5824
        %v5843 = vpack.c.bf16 %v5827, %v5826
        %s5844 = scalar_lea.vmem %s4, 12
        %v5845 = vld [vmem:[%s5844] sm:$0xf]
        %v5847 = vsel %vm4922, %v5828, 0
        %v5850 = vsel %vm4922, %v5829, 0
        %v5853 = vsel %vm4922, %v5830, 0
        %v5856 = vsel %vm4922, %v5831, 0
        %v5859 = vsel %vm4922, %v5832, 0
        %v5862 = vsel %vm4922, %v5833, 0
        %v5865 = vsel %vm4922, %v5834, 0
        %v5868 = vsel %vm4922, %v5835, 0
        %v5871 = vsel %vm4922, %v5836, 0
        %v5874 = vsel %vm4922, %v5837, 0
        %v5877 = vsel %vm4922, %v5838, 0
        %v5880 = vsel %vm4922, %v5839, 0
        %v5883 = vsel %vm4922, %v5840, 0
        %v5886 = vsel %vm4922, %v5841, 0
        %v5889 = vsel %vm4922, %v5842, 0
        %v5892 = vsel %vm4922, %v5843, 0
        %v5895 = vsel %vm5124, %v5845, 0
        %5897 = vmatprep.subr.bf16.mxu0 0
        %5898 = vmatpush1.bf16.msra.mxu0 %v5895
        %5899 = vmatprep.subr.bf16.mxu0 0
        %5900 = vmatpush1.bf16.msra.mxu0 0
        %5901 = vmatprep.subr.bf16.mxu0 0
        %5902 = vmatpush1.bf16.msra.mxu0 0
        %5903 = vmatprep.subr.bf16.mxu0 0
        %5904 = vmatpush1.bf16.msra.mxu0 0
        %5905 = vmatprep.subr.bf16.mxu0 0
        %5906 = vmatpush1.bf16.msra.mxu0 0
        %5907 = vmatprep.subr.bf16.mxu0 0
        %5908 = vmatpush1.bf16.msra.mxu0 0
        %5909 = vmatprep.subr.bf16.mxu0 0
        %5910 = vmatpush1.bf16.msra.mxu0 0
        %5911 = vmatprep.subr.bf16.mxu0 0
        %5912 = vmatpush1.bf16.msra.mxu0 0
        %5913 = vmatprep.subr.bf16.mxu0 0
        %5914 = vmatpush1.bf16.msra.mxu0 0
        %5915 = vmatprep.subr.bf16.mxu0 0
        %5916 = vmatpush1.bf16.msra.mxu0 0
        %5917 = vmatprep.subr.bf16.mxu0 0
        %5918 = vmatpush1.bf16.msra.mxu0 0
        %5919 = vmatprep.subr.bf16.mxu0 0
        %5920 = vmatpush1.bf16.msra.mxu0 0
        %5921 = vmatprep.subr.bf16.mxu0 0
        %5922 = vmatpush1.bf16.msra.mxu0 0
        %5923 = vmatprep.subr.bf16.mxu0 0
        %5924 = vmatpush1.bf16.msra.mxu0 0
        %5925 = vmatprep.subr.bf16.mxu0 0
        %5926 = vmatpush1.bf16.msra.mxu0 0
        %5927 = vmatprep.subr.bf16.mxu0 0
        %5928 = vmatpush1.bf16.msra.mxu0 0
        %5929 = vmatprep.mubr.bf16.mxu0 0
        %5930 = vmatmul.mubr.bf16.gmra.mrb[0].mxu0 %v5847
        %v5931 = vpop.f32.mrb[0].mxu0
        %v5932 = vadd.f32 0.0, %v5931
        %v5933 = vpop.f32.mrb[0].mxu0
        %v5934 = vpop.f32.mrb[0].mxu0
        %v5935 = vadd.f32 0.0, %v5934
        %v5936 = vpop.f32.mrb[0].mxu0
        %5937 = vmatprep.mubr.bf16.mxu0 0
        %5938 = vmatmul.mubr.bf16.gmra.mrb[0].mxu0 %v5850
        %v5939 = vpop.f32.mrb[0].mxu0
        %v5940 = vadd.f32 0.0, %v5939
        %v5941 = vpop.f32.mrb[0].mxu0
        %v5942 = vpop.f32.mrb[0].mxu0
        %v5943 = vadd.f32 0.0, %v5942
        %v5944 = vpop.f32.mrb[0].mxu0
        %5945 = vmatprep.mubr.bf16.mxu0 0
        %5946 = vmatmul.mubr.bf16.gmra.mrb[0].mxu0 %v5853
        %v5947 = vpop.f32.mrb[0].mxu0
        %v5948 = vadd.f32 0.0, %v5947
        %v5949 = vpop.f32.mrb[0].mxu0
        %v5950 = vpop.f32.mrb[0].mxu0
        %v5951 = vadd.f32 0.0, %v5950
        %v5952 = vpop.f32.mrb[0].mxu0
        %5953 = vmatprep.mubr.bf16.mxu0 0
        %5954 = vmatmul.mubr.bf16.gmra.mrb[0].mxu0 %v5856
        %v5955 = vpop.f32.mrb[0].mxu0
        %v5956 = vadd.f32 0.0, %v5955
        %v5957 = vpop.f32.mrb[0].mxu0
        %v5958 = vpop.f32.mrb[0].mxu0
        %v5959 = vadd.f32 0.0, %v5958
        %v5960 = vpop.f32.mrb[0].mxu0
        %5961 = vmatprep.mubr.bf16.mxu0 0
        %5962 = vmatmul.mubr.bf16.gmra.mrb[0].mxu0 %v5859
        %v5963 = vpop.f32.mrb[0].mxu0
        %v5964 = vadd.f32 0.0, %v5963
        %v5965 = vpop.f32.mrb[0].mxu0
        %v5966 = vpop.f32.mrb[0].mxu0
        %v5967 = vadd.f32 0.0, %v5966
        %v5968 = vpop.f32.mrb[0].mxu0
        %5969 = vmatprep.mubr.bf16.mxu0 0
        %5970 = vmatmul.mubr.bf16.gmra.mrb[0].mxu0 %v5862
        %v5971 = vpop.f32.mrb[0].mxu0
        %v5972 = vadd.f32 0.0, %v5971
        %v5973 = vpop.f32.mrb[0].mxu0
        %v5974 = vpop.f32.mrb[0].mxu0
        %v5975 = vadd.f32 0.0, %v5974
        %v5976 = vpop.f32.mrb[0].mxu0
        %5977 = vmatprep.mubr.bf16.mxu0 0
        %5978 = vmatmul.mubr.bf16.gmra.mrb[0].mxu0 %v5865
        %v5979 = vpop.f32.mrb[0].mxu0
        %v5980 = vadd.f32 0.0, %v5979
        %v5981 = vpop.f32.mrb[0].mxu0
        %v5982 = vpop.f32.mrb[0].mxu0
        %v5983 = vadd.f32 0.0, %v5982
        %v5984 = vpop.f32.mrb[0].mxu0
        %5985 = vmatprep.mubr.bf16.mxu0 0
        %5986 = vmatmul.mubr.bf16.gmra.mrb[0].mxu0 %v5868
        %v5987 = vpop.f32.mrb[0].mxu0
        %v5988 = vadd.f32 0.0, %v5987
        %v5989 = vpop.f32.mrb[0].mxu0
        %v5990 = vpop.f32.mrb[0].mxu0
        %v5991 = vadd.f32 0.0, %v5990
        %v5992 = vpop.f32.mrb[0].mxu0
        %5993 = vmatprep.mubr.bf16.mxu0 0
        %5994 = vmatmul.mubr.bf16.gmra.mrb[0].mxu0 %v5871
        %v5995 = vpop.f32.mrb[0].mxu0
        %v5996 = vadd.f32 0.0, %v5995
        %v5997 = vpop.f32.mrb[0].mxu0
        %v5998 = vpop.f32.mrb[0].mxu0
        %v5999 = vadd.f32 0.0, %v5998
        %v6000 = vpop.f32.mrb[0].mxu0
        %6001 = vmatprep.mubr.bf16.mxu0 0
        %6002 = vmatmul.mubr.bf16.gmra.mrb[0].mxu0 %v5874
        %v6003 = vpop.f32.mrb[0].mxu0
        %v6004 = vadd.f32 0.0, %v6003
        %v6005 = vpop.f32.mrb[0].mxu0
        %v6006 = vpop.f32.mrb[0].mxu0
        %v6007 = vadd.f32 0.0, %v6006
        %v6008 = vpop.f32.mrb[0].mxu0
        %6009 = vmatprep.mubr.bf16.mxu0 0
        %6010 = vmatmul.mubr.bf16.gmra.mrb[0].mxu0 %v5877
        %v6011 = vpop.f32.mrb[0].mxu0
        %v6012 = vadd.f32 0.0, %v6011
        %v6013 = vpop.f32.mrb[0].mxu0
        %v6014 = vpop.f32.mrb[0].mxu0
        %v6015 = vadd.f32 0.0, %v6014
        %v6016 = vpop.f32.mrb[0].mxu0
        %6017 = vmatprep.mubr.bf16.mxu0 0
        %6018 = vmatmul.mubr.bf16.gmra.mrb[0].mxu0 %v5880
        %v6019 = vpop.f32.mrb[0].mxu0
        %v6020 = vadd.f32 0.0, %v6019
        %v6021 = vpop.f32.mrb[0].mxu0
        %v6022 = vpop.f32.mrb[0].mxu0
        %v6023 = vadd.f32 0.0, %v6022
        %v6024 = vpop.f32.mrb[0].mxu0
        %6025 = vmatprep.mubr.bf16.mxu0 0
        %6026 = vmatmul.mubr.bf16.gmra.mrb[0].mxu0 %v5883
        %v6027 = vpop.f32.mrb[0].mxu0
        %v6028 = vadd.f32 0.0, %v6027
        %v6029 = vpop.f32.mrb[0].mxu0
        %v6030 = vpop.f32.mrb[0].mxu0
        %v6031 = vadd.f32 0.0, %v6030
        %v6032 = vpop.f32.mrb[0].mxu0
        %6033 = vmatprep.mubr.bf16.mxu0 0
        %6034 = vmatmul.mubr.bf16.gmra.mrb[0].mxu0 %v5886
        %v6035 = vpop.f32.mrb[0].mxu0
        %v6036 = vadd.f32 0.0, %v6035
        %v6037 = vpop.f32.mrb[0].mxu0
        %v6038 = vpop.f32.mrb[0].mxu0
        %v6039 = vadd.f32 0.0, %v6038
        %v6040 = vpop.f32.mrb[0].mxu0
        %6041 = vmatprep.mubr.bf16.mxu0 0
        %6042 = vmatmul.mubr.bf16.gmra.mrb[0].mxu0 %v5889
        %v6043 = vpop.f32.mrb[0].mxu0
        %v6044 = vadd.f32 0.0, %v6043
        %v6045 = vpop.f32.mrb[0].mxu0
        %v6046 = vpop.f32.mrb[0].mxu0
        %v6047 = vadd.f32 0.0, %v6046
        %v6048 = vpop.f32.mrb[0].mxu0
        %6049 = vmatprep.mubr.bf16.mxu0 0
        %6050 = vmatmul.mubr.bf16.gmra.mrb[0].mxu0 %v5892
        %v6051 = vpop.f32.mrb[0].mxu0
        %v6052 = vadd.f32 0.0, %v6051
        %v6053 = vpop.f32.mrb[0].mxu0
        %v6054 = vpop.f32.mrb[0].mxu0
        %v6055 = vadd.f32 0.0, %v6054
        %v6056 = vpop.f32.mrb[0].mxu0
        %6057 = vdwg.mxu0
        %v6058 = vadd.f32 %v5763, %v5932
        %v6059 = vadd.f32 %v5764, %v5935
        %v6060 = vadd.f32 %v5765, %v5940
        %v6061 = vadd.f32 %v5766, %v5943
        %v6062 = vadd.f32 %v5767, %v5948
        %v6063 = vadd.f32 %v5768, %v5951
        %v6064 = vadd.f32 %v5769, %v5956
        %v6065 = vadd.f32 %v5770, %v5959
        %v6066 = vadd.f32 %v5771, %v5964
        %v6067 = vadd.f32 %v5772, %v5967
        %v6068 = vadd.f32 %v5773, %v5972
        %v6069 = vadd.f32 %v5774, %v5975
        %v6070 = vadd.f32 %v5775, %v5980
        %v6071 = vadd.f32 %v5776, %v5983
        %v6072 = vadd.f32 %v5777, %v5988
        %v6073 = vadd.f32 %v5778, %v5991
        %v6074 = vadd.f32 %v5779, %v5996
        %v6075 = vadd.f32 %v5780, %v5999
        %v6076 = vadd.f32 %v5781, %v6004
        %v6077 = vadd.f32 %v5782, %v6007
        %v6078 = vadd.f32 %v5783, %v6012
        %v6079 = vadd.f32 %v5784, %v6015
        %v6080 = vadd.f32 %v5785, %v6020
        %v6081 = vadd.f32 %v5786, %v6023
        %v6082 = vadd.f32 %v5787, %v6028
        %v6083 = vadd.f32 %v5788, %v6031
        %v6084 = vadd.f32 %v5789, %v6036
        %v6085 = vadd.f32 %v5790, %v6039
        %v6086 = vadd.f32 %v5791, %v6044
        %v6087 = vadd.f32 %v5792, %v6047
        %v6088 = vadd.f32 %v5793, %v6052
        %v6089 = vadd.f32 %v5794, %v6055
        %v6090 = vld [vmem:[%s5795 + $0x1] sm:$0xff]
        %v6091 = vld [vmem:[%s5795 + $0x9] sm:$0xff]
        %v6092 = vld [vmem:[%s5795 + $0x19] sm:$0xff]
        %v6093 = vld [vmem:[%s5795 + $0x21] sm:$0xff]
        %v6094 = vld [vmem:[%s5795 + $0x31] sm:$0xff]
        %v6095 = vld [vmem:[%s5795 + $0x39] sm:$0xff]
        %v6096 = vld [vmem:[%s5795 + $0x49] sm:$0xff]
        %v6097 = vld [vmem:[%s5795 + $0x51] sm:$0xff]
        %v6098 = vld [vmem:[%s5795 + $0x61] sm:$0xff]
        %v6099 = vld [vmem:[%s5795 + $0x69] sm:$0xff]
        %v6100 = vld [vmem:[%s5795 + $0x79] sm:$0xff]
        %v6101 = vld [vmem:[%s5795 + $0x81] sm:$0xff]
        %v6102 = vld [vmem:[%s5795 + $0x91] sm:$0xff]
        %v6103 = vld [vmem:[%s5795 + $0x99] sm:$0xff]
        %v6104 = vld [vmem:[%s5795 + $0xa9] sm:$0xff]
        %v6105 = vld [vmem:[%s5795 + $0xb1] sm:$0xff]
        %v6106 = vld [vmem:[%s5795 + $0xc1] sm:$0xff]
        %v6107 = vld [vmem:[%s5795 + $0xc9] sm:$0xff]
        %v6108 = vld [vmem:[%s5795 + $0xd9] sm:$0xff]
        %v6109 = vld [vmem:[%s5795 + $0xe1] sm:$0xff]
        %v6110 = vld [vmem:[%s5795 + $0xf1] sm:$0xff]
        %v6111 = vld [vmem:[%s5795 + $0xf9] sm:$0xff]
        %v6112 = vld [vmem:[%s5795 + $0x109] sm:$0xff]
        %v6113 = vld [vmem:[%s5795 + $0x111] sm:$0xff]
        %v6114 = vld [vmem:[%s5795 + $0x121] sm:$0xff]
        %v6115 = vld [vmem:[%s5795 + $0x129] sm:$0xff]
        %v6116 = vld [vmem:[%s5795 + $0x139] sm:$0xff]
        %v6117 = vld [vmem:[%s5795 + $0x141] sm:$0xff]
        %v6118 = vld [vmem:[%s5795 + $0x151] sm:$0xff]
        %v6119 = vld [vmem:[%s5795 + $0x159] sm:$0xff]
        %v6120 = vld [vmem:[%s5795 + $0x169] sm:$0xff]
        %v6121 = vld [vmem:[%s5795 + $0x171] sm:$0xff]
        %v6122 = vpack.c.bf16 %v6091, %v6090
        %v6123 = vpack.c.bf16 %v6093, %v6092
        %v6124 = vpack.c.bf16 %v6095, %v6094
        %v6125 = vpack.c.bf16 %v6097, %v6096
        %v6126 = vpack.c.bf16 %v6099, %v6098
        %v6127 = vpack.c.bf16 %v6101, %v6100
        %v6128 = vpack.c.bf16 %v6103, %v6102
        %v6129 = vpack.c.bf16 %v6105, %v6104
        %v6130 = vpack.c.bf16 %v6107, %v6106
        %v6131 = vpack.c.bf16 %v6109, %v6108
        %v6132 = vpack.c.bf16 %v6111, %v6110
        %v6133 = vpack.c.bf16 %v6113, %v6112
        %v6134 = vpack.c.bf16 %v6115, %v6114
        %v6135 = vpack.c.bf16 %v6117, %v6116
        %v6136 = vpack.c.bf16 %v6119, %v6118
        %v6137 = vpack.c.bf16 %v6121, %v6120
        %s6138 = scalar_lea.vmem %s4, 16
        %v6139 = vld [vmem:[%s6138] sm:$0xf]
        %v6141 = vsel %vm4922, %v6122, 0
        %v6144 = vsel %vm4922, %v6123, 0
        %v6147 = vsel %vm4922, %v6124, 0
        %v6150 = vsel %vm4922, %v6125, 0
        %v6153 = vsel %vm4922, %v6126, 0
        %v6156 = vsel %vm4922, %v6127, 0
        %v6159 = vsel %vm4922, %v6128, 0
        %v6162 = vsel %vm4922, %v6129, 0
        %v6165 = vsel %vm4922, %v6130, 0
        %v6168 = vsel %vm4922, %v6131, 0
        %v6171 = vsel %vm4922, %v6132, 0
        %v6174 = vsel %vm4922, %v6133, 0
        %v6177 = vsel %vm4922, %v6134, 0
        %v6180 = vsel %vm4922, %v6135, 0
        %v6183 = vsel %vm4922, %v6136, 0
        %v6186 = vsel %vm4922, %v6137, 0
        %v6189 = vsel %vm5124, %v6139, 0
        %6191 = vmatprep.subr.bf16.mxu0 0
        %6192 = vmatpush1.bf16.msra.mxu0 %v6189
        %6193 = vmatprep.subr.bf16.mxu0 0
        %6194 = vmatpush1.bf16.msra.mxu0 0
        %6195 = vmatprep.subr.bf16.mxu0 0
        %6196 = vmatpush1.bf16.msra.mxu0 0
        %6197 = vmatprep.subr.bf16.mxu0 0
        %6198 = vmatpush1.bf16.msra.mxu0 0
        %6199 = vmatprep.subr.bf16.mxu0 0
        %6200 = vmatpush1.bf16.msra.mxu0 0
        %6201 = vmatprep.subr.bf16.mxu0 0
        %6202 = vmatpush1.bf16.msra.mxu0 0
        %6203 = vmatprep.subr.bf16.mxu0 0
        %6204 = vmatpush1.bf16.msra.mxu0 0
        %6205 = vmatprep.subr.bf16.mxu0 0
        %6206 = vmatpush1.bf16.msra.mxu0 0
        %6207 = vmatprep.subr.bf16.mxu0 0
        %6208 = vmatpush1.bf16.msra.mxu0 0
        %6209 = vmatprep.subr.bf16.mxu0 0
        %6210 = vmatpush1.bf16.msra.mxu0 0
        %6211 = vmatprep.subr.bf16.mxu0 0
        %6212 = vmatpush1.bf16.msra.mxu0 0
        %6213 = vmatprep.subr.bf16.mxu0 0
        %6214 = vmatpush1.bf16.msra.mxu0 0
        %6215 = vmatprep.subr.bf16.mxu0 0
        %6216 = vmatpush1.bf16.msra.mxu0 0
        %6217 = vmatprep.subr.bf16.mxu0 0
        %6218 = vmatpush1.bf16.msra.mxu0 0
        %6219 = vmatprep.subr.bf16.mxu0 0
        %6220 = vmatpush1.bf16.msra.mxu0 0
        %6221 = vmatprep.subr.bf16.mxu0 0
        %6222 = vmatpush1.bf16.msra.mxu0 0
        %6223 = vmatprep.mubr.bf16.mxu0 0
        %6224 = vmatmul.mubr.bf16.gmra.mrb[0].mxu0 %v6141
        %v6225 = vpop.f32.mrb[0].mxu0
        %v6226 = vadd.f32 0.0, %v6225
        %v6227 = vpop.f32.mrb[0].mxu0
        %v6228 = vpop.f32.mrb[0].mxu0
        %v6229 = vadd.f32 0.0, %v6228
        %v6230 = vpop.f32.mrb[0].mxu0
        %6231 = vmatprep.mubr.bf16.mxu0 0
        %6232 = vmatmul.mubr.bf16.gmra.mrb[0].mxu0 %v6144
        %v6233 = vpop.f32.mrb[0].mxu0
        %v6234 = vadd.f32 0.0, %v6233
        %v6235 = vpop.f32.mrb[0].mxu0
        %v6236 = vpop.f32.mrb[0].mxu0
        %v6237 = vadd.f32 0.0, %v6236
        %v6238 = vpop.f32.mrb[0].mxu0
        %6239 = vmatprep.mubr.bf16.mxu0 0
        %6240 = vmatmul.mubr.bf16.gmra.mrb[0].mxu0 %v6147
        %v6241 = vpop.f32.mrb[0].mxu0
        %v6242 = vadd.f32 0.0, %v6241
        %v6243 = vpop.f32.mrb[0].mxu0
        %v6244 = vpop.f32.mrb[0].mxu0
        %v6245 = vadd.f32 0.0, %v6244
        %v6246 = vpop.f32.mrb[0].mxu0
        %6247 = vmatprep.mubr.bf16.mxu0 0
        %6248 = vmatmul.mubr.bf16.gmra.mrb[0].mxu0 %v6150
        %v6249 = vpop.f32.mrb[0].mxu0
        %v6250 = vadd.f32 0.0, %v6249
        %v6251 = vpop.f32.mrb[0].mxu0
        %v6252 = vpop.f32.mrb[0].mxu0
        %v6253 = vadd.f32 0.0, %v6252
        %v6254 = vpop.f32.mrb[0].mxu0
        %6255 = vmatprep.mubr.bf16.mxu0 0
        %6256 = vmatmul.mubr.bf16.gmra.mrb[0].mxu0 %v6153
        %v6257 = vpop.f32.mrb[0].mxu0
        %v6258 = vadd.f32 0.0, %v6257
        %v6259 = vpop.f32.mrb[0].mxu0
        %v6260 = vpop.f32.mrb[0].mxu0
        %v6261 = vadd.f32 0.0, %v6260
        %v6262 = vpop.f32.mrb[0].mxu0
        %6263 = vmatprep.mubr.bf16.mxu0 0
        %6264 = vmatmul.mubr.bf16.gmra.mrb[0].mxu0 %v6156
        %v6265 = vpop.f32.mrb[0].mxu0
        %v6266 = vadd.f32 0.0, %v6265
        %v6267 = vpop.f32.mrb[0].mxu0
        %v6268 = vpop.f32.mrb[0].mxu0
        %v6269 = vadd.f32 0.0, %v6268
        %v6270 = vpop.f32.mrb[0].mxu0
        %6271 = vmatprep.mubr.bf16.mxu0 0
        %6272 = vmatmul.mubr.bf16.gmra.mrb[0].mxu0 %v6159
        %v6273 = vpop.f32.mrb[0].mxu0
        %v6274 = vadd.f32 0.0, %v6273
        %v6275 = vpop.f32.mrb[0].mxu0
        %v6276 = vpop.f32.mrb[0].mxu0
        %v6277 = vadd.f32 0.0, %v6276
        %v6278 = vpop.f32.mrb[0].mxu0
        %6279 = vmatprep.mubr.bf16.mxu0 0
        %6280 = vmatmul.mubr.bf16.gmra.mrb[0].mxu0 %v6162
        %v6281 = vpop.f32.mrb[0].mxu0
        %v6282 = vadd.f32 0.0, %v6281
        %v6283 = vpop.f32.mrb[0].mxu0
        %v6284 = vpop.f32.mrb[0].mxu0
        %v6285 = vadd.f32 0.0, %v6284
        %v6286 = vpop.f32.mrb[0].mxu0
        %6287 = vmatprep.mubr.bf16.mxu0 0
        %6288 = vmatmul.mubr.bf16.gmra.mrb[0].mxu0 %v6165
        %v6289 = vpop.f32.mrb[0].mxu0
        %v6290 = vadd.f32 0.0, %v6289
        %v6291 = vpop.f32.mrb[0].mxu0
        %v6292 = vpop.f32.mrb[0].mxu0
        %v6293 = vadd.f32 0.0, %v6292
        %v6294 = vpop.f32.mrb[0].mxu0
        %6295 = vmatprep.mubr.bf16.mxu0 0
        %6296 = vmatmul.mubr.bf16.gmra.mrb[0].mxu0 %v6168
        %v6297 = vpop.f32.mrb[0].mxu0
        %v6298 = vadd.f32 0.0, %v6297
        %v6299 = vpop.f32.mrb[0].mxu0
        %v6300 = vpop.f32.mrb[0].mxu0
        %v6301 = vadd.f32 0.0, %v6300
        %v6302 = vpop.f32.mrb[0].mxu0
        %6303 = vmatprep.mubr.bf16.mxu0 0
        %6304 = vmatmul.mubr.bf16.gmra.mrb[0].mxu0 %v6171
        %v6305 = vpop.f32.mrb[0].mxu0
        %v6306 = vadd.f32 0.0, %v6305
        %v6307 = vpop.f32.mrb[0].mxu0
        %v6308 = vpop.f32.mrb[0].mxu0
        %v6309 = vadd.f32 0.0, %v6308
        %v6310 = vpop.f32.mrb[0].mxu0
        %6311 = vmatprep.mubr.bf16.mxu0 0
        %6312 = vmatmul.mubr.bf16.gmra.mrb[0].mxu0 %v6174
        %v6313 = vpop.f32.mrb[0].mxu0
        %v6314 = vadd.f32 0.0, %v6313
        %v6315 = vpop.f32.mrb[0].mxu0
        %v6316 = vpop.f32.mrb[0].mxu0
        %v6317 = vadd.f32 0.0, %v6316
        %v6318 = vpop.f32.mrb[0].mxu0
        %6319 = vmatprep.mubr.bf16.mxu0 0
        %6320 = vmatmul.mubr.bf16.gmra.mrb[0].mxu0 %v6177
        %v6321 = vpop.f32.mrb[0].mxu0
        %v6322 = vadd.f32 0.0, %v6321
        %v6323 = vpop.f32.mrb[0].mxu0
        %v6324 = vpop.f32.mrb[0].mxu0
        %v6325 = vadd.f32 0.0, %v6324
        %v6326 = vpop.f32.mrb[0].mxu0
        %6327 = vmatprep.mubr.bf16.mxu0 0
        %6328 = vmatmul.mubr.bf16.gmra.mrb[0].mxu0 %v6180
        %v6329 = vpop.f32.mrb[0].mxu0
        %v6330 = vadd.f32 0.0, %v6329
        %v6331 = vpop.f32.mrb[0].mxu0
        %v6332 = vpop.f32.mrb[0].mxu0
        %v6333 = vadd.f32 0.0, %v6332
        %v6334 = vpop.f32.mrb[0].mxu0
        %6335 = vmatprep.mubr.bf16.mxu0 0
        %6336 = vmatmul.mubr.bf16.gmra.mrb[0].mxu0 %v6183
        %v6337 = vpop.f32.mrb[0].mxu0
        %v6338 = vadd.f32 0.0, %v6337
        %v6339 = vpop.f32.mrb[0].mxu0
        %v6340 = vpop.f32.mrb[0].mxu0
        %v6341 = vadd.f32 0.0, %v6340
        %v6342 = vpop.f32.mrb[0].mxu0
        %6343 = vmatprep.mubr.bf16.mxu0 0
        %6344 = vmatmul.mubr.bf16.gmra.mrb[0].mxu0 %v6186
        %v6345 = vpop.f32.mrb[0].mxu0
        %v6346 = vadd.f32 0.0, %v6345
        %v6347 = vpop.f32.mrb[0].mxu0
        %v6348 = vpop.f32.mrb[0].mxu0
        %v6349 = vadd.f32 0.0, %v6348
        %v6350 = vpop.f32.mrb[0].mxu0
        %6351 = vdwg.mxu0
        %v6352 = vadd.f32 %v6058, %v6226
        %v6353 = vadd.f32 %v6059, %v6229
        %v6354 = vadd.f32 %v6060, %v6234
        %v6355 = vadd.f32 %v6061, %v6237
        %v6356 = vadd.f32 %v6062, %v6242
        %v6357 = vadd.f32 %v6063, %v6245
        %v6358 = vadd.f32 %v6064, %v6250
        %v6359 = vadd.f32 %v6065, %v6253
        %v6360 = vadd.f32 %v6066, %v6258
        %v6361 = vadd.f32 %v6067, %v6261
        %v6362 = vadd.f32 %v6068, %v6266
        %v6363 = vadd.f32 %v6069, %v6269
        %v6364 = vadd.f32 %v6070, %v6274
        %v6365 = vadd.f32 %v6071, %v6277
        %v6366 = vadd.f32 %v6072, %v6282
        %v6367 = vadd.f32 %v6073, %v6285
        %v6368 = vadd.f32 %v6074, %v6290
        %v6369 = vadd.f32 %v6075, %v6293
        %v6370 = vadd.f32 %v6076, %v6298
        %v6371 = vadd.f32 %v6077, %v6301
        %v6372 = vadd.f32 %v6078, %v6306
        %v6373 = vadd.f32 %v6079, %v6309
        %v6374 = vadd.f32 %v6080, %v6314
        %v6375 = vadd.f32 %v6081, %v6317
        %v6376 = vadd.f32 %v6082, %v6322
        %v6377 = vadd.f32 %v6083, %v6325
        %v6378 = vadd.f32 %v6084, %v6330
        %v6379 = vadd.f32 %v6085, %v6333
        %v6380 = vadd.f32 %v6086, %v6338
        %v6381 = vadd.f32 %v6087, %v6341
        %v6382 = vadd.f32 %v6088, %v6346
        %v6383 = vadd.f32 %v6089, %v6349
        %v6384 = vld [vmem:[%s5795 + $0x2] sm:$0xff]
        %v6385 = vld [vmem:[%s5795 + $0xa] sm:$0xff]
        %v6386 = vld [vmem:[%s5795 + $0x1a] sm:$0xff]
        %v6387 = vld [vmem:[%s5795 + $0x22] sm:$0xff]
        %v6388 = vld [vmem:[%s5795 + $0x32] sm:$0xff]
        %v6389 = vld [vmem:[%s5795 + $0x3a] sm:$0xff]
        %v6390 = vld [vmem:[%s5795 + $0x4a] sm:$0xff]
        %v6391 = vld [vmem:[%s5795 + $0x52] sm:$0xff]
        %v6392 = vld [vmem:[%s5795 + $0x62] sm:$0xff]
        %v6393 = vld [vmem:[%s5795 + $0x6a] sm:$0xff]
        %v6394 = vld [vmem:[%s5795 + $0x7a] sm:$0xff]
        %v6395 = vld [vmem:[%s5795 + $0x82] sm:$0xff]
        %v6396 = vld [vmem:[%s5795 + $0x92] sm:$0xff]
        %v6397 = vld [vmem:[%s5795 + $0x9a] sm:$0xff]
        %v6398 = vld [vmem:[%s5795 + $0xaa] sm:$0xff]
        %v6399 = vld [vmem:[%s5795 + $0xb2] sm:$0xff]
        %v6400 = vld [vmem:[%s5795 + $0xc2] sm:$0xff]
        %v6401 = vld [vmem:[%s5795 + $0xca] sm:$0xff]
        %v6402 = vld [vmem:[%s5795 + $0xda] sm:$0xff]
        %v6403 = vld [vmem:[%s5795 + $0xe2] sm:$0xff]
        %v6404 = vld [vmem:[%s5795 + $0xf2] sm:$0xff]
        %v6405 = vld [vmem:[%s5795 + $0xfa] sm:$0xff]
        %v6406 = vld [vmem:[%s5795 + $0x10a] sm:$0xff]
        %v6407 = vld [vmem:[%s5795 + $0x112] sm:$0xff]
        %v6408 = vld [vmem:[%s5795 + $0x122] sm:$0xff]
        %v6409 = vld [vmem:[%s5795 + $0x12a] sm:$0xff]
        %v6410 = vld [vmem:[%s5795 + $0x13a] sm:$0xff]
        %v6411 = vld [vmem:[%s5795 + $0x142] sm:$0xff]
        %v6412 = vld [vmem:[%s5795 + $0x152] sm:$0xff]
        %v6413 = vld [vmem:[%s5795 + $0x15a] sm:$0xff]
        %v6414 = vld [vmem:[%s5795 + $0x16a] sm:$0xff]
        %v6415 = vld [vmem:[%s5795 + $0x172] sm:$0xff]
        %v6416 = vpack.c.bf16 %v6385, %v6384
        %v6417 = vpack.c.bf16 %v6387, %v6386
        %v6418 = vpack.c.bf16 %v6389, %v6388
        %v6419 = vpack.c.bf16 %v6391, %v6390
        %v6420 = vpack.c.bf16 %v6393, %v6392
        %v6421 = vpack.c.bf16 %v6395, %v6394
        %v6422 = vpack.c.bf16 %v6397, %v6396
        %v6423 = vpack.c.bf16 %v6399, %v6398
        %v6424 = vpack.c.bf16 %v6401, %v6400
        %v6425 = vpack.c.bf16 %v6403, %v6402
        %v6426 = vpack.c.bf16 %v6405, %v6404
        %v6427 = vpack.c.bf16 %v6407, %v6406
        %v6428 = vpack.c.bf16 %v6409, %v6408
        %v6429 = vpack.c.bf16 %v6411, %v6410
        %v6430 = vpack.c.bf16 %v6413, %v6412
        %v6431 = vpack.c.bf16 %v6415, %v6414
        %s6432 = scalar_lea.vmem %s4, 20
        %v6433 = vld [vmem:[%s6432] sm:$0xf]
        %v6435 = vsel %vm4922, %v6416, 0
        %v6438 = vsel %vm4922, %v6417, 0
        %v6441 = vsel %vm4922, %v6418, 0
        %v6444 = vsel %vm4922, %v6419, 0
        %v6447 = vsel %vm4922, %v6420, 0
        %v6450 = vsel %vm4922, %v6421, 0
        %v6453 = vsel %vm4922, %v6422, 0
        %v6456 = vsel %vm4922, %v6423, 0
        %v6459 = vsel %vm4922, %v6424, 0
        %v6462 = vsel %vm4922, %v6425, 0
        %v6465 = vsel %vm4922, %v6426, 0
        %v6468 = vsel %vm4922, %v6427, 0
        %v6471 = vsel %vm4922, %v6428, 0
        %v6474 = vsel %vm4922, %v6429, 0
        %v6477 = vsel %vm4922, %v6430, 0
        %v6480 = vsel %vm4922, %v6431, 0
        %v6483 = vsel %vm5124, %v6433, 0
        %6485 = vmatprep.subr.bf16.mxu0 0
        %6486 = vmatpush1.bf16.msra.mxu0 %v6483
        %6487 = vmatprep.subr.bf16.mxu0 0
        %6488 = vmatpush1.bf16.msra.mxu0 0
        %6489 = vmatprep.subr.bf16.mxu0 0
        %6490 = vmatpush1.bf16.msra.mxu0 0
        %6491 = vmatprep.subr.bf16.mxu0 0
        %6492 = vmatpush1.bf16.msra.mxu0 0
        %6493 = vmatprep.subr.bf16.mxu0 0
        %6494 = vmatpush1.bf16.msra.mxu0 0
        %6495 = vmatprep.subr.bf16.mxu0 0
        %6496 = vmatpush1.bf16.msra.mxu0 0
        %6497 = vmatprep.subr.bf16.mxu0 0
        %6498 = vmatpush1.bf16.msra.mxu0 0
        %6499 = vmatprep.subr.bf16.mxu0 0
        %6500 = vmatpush1.bf16.msra.mxu0 0
        %6501 = vmatprep.subr.bf16.mxu0 0
        %6502 = vmatpush1.bf16.msra.mxu0 0
        %6503 = vmatprep.subr.bf16.mxu0 0
        %6504 = vmatpush1.bf16.msra.mxu0 0
        %6505 = vmatprep.subr.bf16.mxu0 0
        %6506 = vmatpush1.bf16.msra.mxu0 0
        %6507 = vmatprep.subr.bf16.mxu0 0
        %6508 = vmatpush1.bf16.msra.mxu0 0
        %6509 = vmatprep.subr.bf16.mxu0 0
        %6510 = vmatpush1.bf16.msra.mxu0 0
        %6511 = vmatprep.subr.bf16.mxu0 0
        %6512 = vmatpush1.bf16.msra.mxu0 0
        %6513 = vmatprep.subr.bf16.mxu0 0
        %6514 = vmatpush1.bf16.msra.mxu0 0
        %6515 = vmatprep.subr.bf16.mxu0 0
        %6516 = vmatpush1.bf16.msra.mxu0 0
        %6517 = vmatprep.mubr.bf16.mxu0 0
        %6518 = vmatmul.mubr.bf16.gmra.mrb[0].mxu0 %v6435
        %v6519 = vpop.f32.mrb[0].mxu0
        %v6520 = vadd.f32 0.0, %v6519
        %v6521 = vpop.f32.mrb[0].mxu0
        %v6522 = vpop.f32.mrb[0].mxu0
        %v6523 = vadd.f32 0.0, %v6522
        %v6524 = vpop.f32.mrb[0].mxu0
        %6525 = vmatprep.mubr.bf16.mxu0 0
        %6526 = vmatmul.mubr.bf16.gmra.mrb[0].mxu0 %v6438
        %v6527 = vpop.f32.mrb[0].mxu0
        %v6528 = vadd.f32 0.0, %v6527
        %v6529 = vpop.f32.mrb[0].mxu0
        %v6530 = vpop.f32.mrb[0].mxu0
        %v6531 = vadd.f32 0.0, %v6530
        %v6532 = vpop.f32.mrb[0].mxu0
        %6533 = vmatprep.mubr.bf16.mxu0 0
        %6534 = vmatmul.mubr.bf16.gmra.mrb[0].mxu0 %v6441
        %v6535 = vpop.f32.mrb[0].mxu0
        %v6536 = vadd.f32 0.0, %v6535
        %v6537 = vpop.f32.mrb[0].mxu0
        %v6538 = vpop.f32.mrb[0].mxu0
        %v6539 = vadd.f32 0.0, %v6538
        %v6540 = vpop.f32.mrb[0].mxu0
        %6541 = vmatprep.mubr.bf16.mxu0 0
        %6542 = vmatmul.mubr.bf16.gmra.mrb[0].mxu0 %v6444
        %v6543 = vpop.f32.mrb[0].mxu0
        %v6544 = vadd.f32 0.0, %v6543
        %v6545 = vpop.f32.mrb[0].mxu0
        %v6546 = vpop.f32.mrb[0].mxu0
        %v6547 = vadd.f32 0.0, %v6546
        %v6548 = vpop.f32.mrb[0].mxu0
        %6549 = vmatprep.mubr.bf16.mxu0 0
        %6550 = vmatmul.mubr.bf16.gmra.mrb[0].mxu0 %v6447
        %v6551 = vpop.f32.mrb[0].mxu0
        %v6552 = vadd.f32 0.0, %v6551
        %v6553 = vpop.f32.mrb[0].mxu0
        %v6554 = vpop.f32.mrb[0].mxu0
        %v6555 = vadd.f32 0.0, %v6554
        %v6556 = vpop.f32.mrb[0].mxu0
        %6557 = vmatprep.mubr.bf16.mxu0 0
        %6558 = vmatmul.mubr.bf16.gmra.mrb[0].mxu0 %v6450
        %v6559 = vpop.f32.mrb[0].mxu0
        %v6560 = vadd.f32 0.0, %v6559
        %v6561 = vpop.f32.mrb[0].mxu0
        %v6562 = vpop.f32.mrb[0].mxu0
        %v6563 = vadd.f32 0.0, %v6562
        %v6564 = vpop.f32.mrb[0].mxu0
        %6565 = vmatprep.mubr.bf16.mxu0 0
        %6566 = vmatmul.mubr.bf16.gmra.mrb[0].mxu0 %v6453
        %v6567 = vpop.f32.mrb[0].mxu0
        %v6568 = vadd.f32 0.0, %v6567
        %v6569 = vpop.f32.mrb[0].mxu0
        %v6570 = vpop.f32.mrb[0].mxu0
        %v6571 = vadd.f32 0.0, %v6570
        %v6572 = vpop.f32.mrb[0].mxu0
        %6573 = vmatprep.mubr.bf16.mxu0 0
        %6574 = vmatmul.mubr.bf16.gmra.mrb[0].mxu0 %v6456
        %v6575 = vpop.f32.mrb[0].mxu0
        %v6576 = vadd.f32 0.0, %v6575
        %v6577 = vpop.f32.mrb[0].mxu0
        %v6578 = vpop.f32.mrb[0].mxu0
        %v6579 = vadd.f32 0.0, %v6578
        %v6580 = vpop.f32.mrb[0].mxu0
        %6581 = vmatprep.mubr.bf16.mxu0 0
        %6582 = vmatmul.mubr.bf16.gmra.mrb[0].mxu0 %v6459
        %v6583 = vpop.f32.mrb[0].mxu0
        %v6584 = vadd.f32 0.0, %v6583
        %v6585 = vpop.f32.mrb[0].mxu0
        %v6586 = vpop.f32.mrb[0].mxu0
        %v6587 = vadd.f32 0.0, %v6586
        %v6588 = vpop.f32.mrb[0].mxu0
        %6589 = vmatprep.mubr.bf16.mxu0 0
        %6590 = vmatmul.mubr.bf16.gmra.mrb[0].mxu0 %v6462
        %v6591 = vpop.f32.mrb[0].mxu0
        %v6592 = vadd.f32 0.0, %v6591
        %v6593 = vpop.f32.mrb[0].mxu0
        %v6594 = vpop.f32.mrb[0].mxu0
        %v6595 = vadd.f32 0.0, %v6594
        %v6596 = vpop.f32.mrb[0].mxu0
        %6597 = vmatprep.mubr.bf16.mxu0 0
        %6598 = vmatmul.mubr.bf16.gmra.mrb[0].mxu0 %v6465
        %v6599 = vpop.f32.mrb[0].mxu0
        %v6600 = vadd.f32 0.0, %v6599
        %v6601 = vpop.f32.mrb[0].mxu0
        %v6602 = vpop.f32.mrb[0].mxu0
        %v6603 = vadd.f32 0.0, %v6602
        %v6604 = vpop.f32.mrb[0].mxu0
        %6605 = vmatprep.mubr.bf16.mxu0 0
        %6606 = vmatmul.mubr.bf16.gmra.mrb[0].mxu0 %v6468
        %v6607 = vpop.f32.mrb[0].mxu0
        %v6608 = vadd.f32 0.0, %v6607
        %v6609 = vpop.f32.mrb[0].mxu0
        %v6610 = vpop.f32.mrb[0].mxu0
        %v6611 = vadd.f32 0.0, %v6610
        %v6612 = vpop.f32.mrb[0].mxu0
        %6613 = vmatprep.mubr.bf16.mxu0 0
        %6614 = vmatmul.mubr.bf16.gmra.mrb[0].mxu0 %v6471
        %v6615 = vpop.f32.mrb[0].mxu0
        %v6616 = vadd.f32 0.0, %v6615
        %v6617 = vpop.f32.mrb[0].mxu0
        %v6618 = vpop.f32.mrb[0].mxu0
        %v6619 = vadd.f32 0.0, %v6618
        %v6620 = vpop.f32.mrb[0].mxu0
        %6621 = vmatprep.mubr.bf16.mxu0 0
        %6622 = vmatmul.mubr.bf16.gmra.mrb[0].mxu0 %v6474
        %v6623 = vpop.f32.mrb[0].mxu0
        %v6624 = vadd.f32 0.0, %v6623
        %v6625 = vpop.f32.mrb[0].mxu0
        %v6626 = vpop.f32.mrb[0].mxu0
        %v6627 = vadd.f32 0.0, %v6626
        %v6628 = vpop.f32.mrb[0].mxu0
        %6629 = vmatprep.mubr.bf16.mxu0 0
        %6630 = vmatmul.mubr.bf16.gmra.mrb[0].mxu0 %v6477
        %v6631 = vpop.f32.mrb[0].mxu0
        %v6632 = vadd.f32 0.0, %v6631
        %v6633 = vpop.f32.mrb[0].mxu0
        %v6634 = vpop.f32.mrb[0].mxu0
        %v6635 = vadd.f32 0.0, %v6634
        %v6636 = vpop.f32.mrb[0].mxu0
        %6637 = vmatprep.mubr.bf16.mxu0 0
        %6638 = vmatmul.mubr.bf16.gmra.mrb[0].mxu0 %v6480
        %v6639 = vpop.f32.mrb[0].mxu0
        %v6640 = vadd.f32 0.0, %v6639
        %v6641 = vpop.f32.mrb[0].mxu0
        %v6642 = vpop.f32.mrb[0].mxu0
        %v6643 = vadd.f32 0.0, %v6642
        %v6644 = vpop.f32.mrb[0].mxu0
        %6645 = vdwg.mxu0
        %v6646 = vadd.f32 %v6352, %v6520
        %v6647 = vadd.f32 %v6353, %v6523
        %v6648 = vadd.f32 %v6354, %v6528
        %v6649 = vadd.f32 %v6355, %v6531
        %v6650 = vadd.f32 %v6356, %v6536
        %v6651 = vadd.f32 %v6357, %v6539
        %v6652 = vadd.f32 %v6358, %v6544
        %v6653 = vadd.f32 %v6359, %v6547
        %v6654 = vadd.f32 %v6360, %v6552
        %v6655 = vadd.f32 %v6361, %v6555
        %v6656 = vadd.f32 %v6362, %v6560
        %v6657 = vadd.f32 %v6363, %v6563
        %v6658 = vadd.f32 %v6364, %v6568
        %v6659 = vadd.f32 %v6365, %v6571
        %v6660 = vadd.f32 %v6366, %v6576
        %v6661 = vadd.f32 %v6367, %v6579
        %v6662 = vadd.f32 %v6368, %v6584
        %v6663 = vadd.f32 %v6369, %v6587
        %v6664 = vadd.f32 %v6370, %v6592
        %v6665 = vadd.f32 %v6371, %v6595
        %v6666 = vadd.f32 %v6372, %v6600
        %v6667 = vadd.f32 %v6373, %v6603
        %v6668 = vadd.f32 %v6374, %v6608
        %v6669 = vadd.f32 %v6375, %v6611
        %v6670 = vadd.f32 %v6376, %v6616
        %v6671 = vadd.f32 %v6377, %v6619
        %v6672 = vadd.f32 %v6378, %v6624
        %v6673 = vadd.f32 %v6379, %v6627
        %v6674 = vadd.f32 %v6380, %v6632
        %v6675 = vadd.f32 %v6381, %v6635
        %v6676 = vadd.f32 %v6382, %v6640
        %v6677 = vadd.f32 %v6383, %v6643
        %s6678 = scalar_lea.vmem [#allocation2], 48
        %v6679 = vld [vmem:[%s6678] sm:$0xff]
        %v6680 = vld [vmem:[%s6678 + $0x8] sm:$0xff]
        %v6681 = vld [vmem:[%s6678 + $0x18] sm:$0xff]
        %v6682 = vld [vmem:[%s6678 + $0x20] sm:$0xff]
        %v6683 = vld [vmem:[%s6678 + $0x30] sm:$0xff]
        %v6684 = vld [vmem:[%s6678 + $0x38] sm:$0xff]
        %v6685 = vld [vmem:[%s6678 + $0x48] sm:$0xff]
        %v6686 = vld [vmem:[%s6678 + $0x50] sm:$0xff]
        %v6687 = vld [vmem:[%s6678 + $0x60] sm:$0xff]
        %v6688 = vld [vmem:[%s6678 + $0x68] sm:$0xff]
        %v6689 = vld [vmem:[%s6678 + $0x78] sm:$0xff]
        %v6690 = vld [vmem:[%s6678 + $0x80] sm:$0xff]
        %v6691 = vld [vmem:[%s6678 + $0x90] sm:$0xff]
        %v6692 = vld [vmem:[%s6678 + $0x98] sm:$0xff]
        %v6693 = vld [vmem:[%s6678 + $0xa8] sm:$0xff]
        %v6694 = vld [vmem:[%s6678 + $0xb0] sm:$0xff]
        %v6695 = vld [vmem:[%s6678 + $0xc0] sm:$0xff]
        %v6696 = vld [vmem:[%s6678 + $0xc8] sm:$0xff]
        %v6697 = vld [vmem:[%s6678 + $0xd8] sm:$0xff]
        %v6698 = vld [vmem:[%s6678 + $0xe0] sm:$0xff]
        %v6699 = vld [vmem:[%s6678 + $0xf0] sm:$0xff]
        %v6700 = vld [vmem:[%s6678 + $0xf8] sm:$0xff]
        %v6701 = vld [vmem:[%s6678 + $0x108] sm:$0xff]
        %v6702 = vld [vmem:[%s6678 + $0x110] sm:$0xff]
        %v6703 = vld [vmem:[%s6678 + $0x120] sm:$0xff]
        %v6704 = vld [vmem:[%s6678 + $0x128] sm:$0xff]
        %v6705 = vld [vmem:[%s6678 + $0x138] sm:$0xff]
        %v6706 = vld [vmem:[%s6678 + $0x140] sm:$0xff]
        %v6707 = vld [vmem:[%s6678 + $0x150] sm:$0xff]
        %v6708 = vld [vmem:[%s6678 + $0x158] sm:$0xff]
        %v6709 = vld [vmem:[%s6678 + $0x168] sm:$0xff]
        %v6710 = vld [vmem:[%s6678 + $0x170] sm:$0xff]
        %v6711 = vpack.c.bf16 %v6680, %v6679
        %v6712 = vpack.c.bf16 %v6682, %v6681
        %v6713 = vpack.c.bf16 %v6684, %v6683
        %v6714 = vpack.c.bf16 %v6686, %v6685
        %v6715 = vpack.c.bf16 %v6688, %v6687
        %v6716 = vpack.c.bf16 %v6690, %v6689
        %v6717 = vpack.c.bf16 %v6692, %v6691
        %v6718 = vpack.c.bf16 %v6694, %v6693
        %v6719 = vpack.c.bf16 %v6696, %v6695
        %v6720 = vpack.c.bf16 %v6698, %v6697
        %v6721 = vpack.c.bf16 %v6700, %v6699
        %v6722 = vpack.c.bf16 %v6702, %v6701
        %v6723 = vpack.c.bf16 %v6704, %v6703
        %v6724 = vpack.c.bf16 %v6706, %v6705
        %v6725 = vpack.c.bf16 %v6708, %v6707
        %v6726 = vpack.c.bf16 %v6710, %v6709
        %s6727 = scalar_lea.vmem %s4, 24
        %v6728 = vld [vmem:[%s6727] sm:$0xf]
        %v6730 = vsel %vm4922, %v6711, 0
        %v6733 = vsel %vm4922, %v6712, 0
        %v6736 = vsel %vm4922, %v6713, 0
        %v6739 = vsel %vm4922, %v6714, 0
        %v6742 = vsel %vm4922, %v6715, 0
        %v6745 = vsel %vm4922, %v6716, 0
        %v6748 = vsel %vm4922, %v6717, 0
        %v6751 = vsel %vm4922, %v6718, 0
        %v6754 = vsel %vm4922, %v6719, 0
        %v6757 = vsel %vm4922, %v6720, 0
        %v6760 = vsel %vm4922, %v6721, 0
        %v6763 = vsel %vm4922, %v6722, 0
        %v6766 = vsel %vm4922, %v6723, 0
        %v6769 = vsel %vm4922, %v6724, 0
        %v6772 = vsel %vm4922, %v6725, 0
        %v6775 = vsel %vm4922, %v6726, 0
        %v6778 = vsel %vm5124, %v6728, 0
        %6780 = vmatprep.subr.bf16.mxu0 0
        %6781 = vmatpush1.bf16.msra.mxu0 %v6778
        %6782 = vmatprep.subr.bf16.mxu0 0
        %6783 = vmatpush1.bf16.msra.mxu0 0
        %6784 = vmatprep.subr.bf16.mxu0 0
        %6785 = vmatpush1.bf16.msra.mxu0 0
        %6786 = vmatprep.subr.bf16.mxu0 0
        %6787 = vmatpush1.bf16.msra.mxu0 0
        %6788 = vmatprep.subr.bf16.mxu0 0
        %6789 = vmatpush1.bf16.msra.mxu0 0
        %6790 = vmatprep.subr.bf16.mxu0 0
        %6791 = vmatpush1.bf16.msra.mxu0 0
        %6792 = vmatprep.subr.bf16.mxu0 0
        %6793 = vmatpush1.bf16.msra.mxu0 0
        %6794 = vmatprep.subr.bf16.mxu0 0
        %6795 = vmatpush1.bf16.msra.mxu0 0
        %6796 = vmatprep.subr.bf16.mxu0 0
        %6797 = vmatpush1.bf16.msra.mxu0 0
        %6798 = vmatprep.subr.bf16.mxu0 0
        %6799 = vmatpush1.bf16.msra.mxu0 0
        %6800 = vmatprep.subr.bf16.mxu0 0
        %6801 = vmatpush1.bf16.msra.mxu0 0
        %6802 = vmatprep.subr.bf16.mxu0 0
        %6803 = vmatpush1.bf16.msra.mxu0 0
        %6804 = vmatprep.subr.bf16.mxu0 0
        %6805 = vmatpush1.bf16.msra.mxu0 0
        %6806 = vmatprep.subr.bf16.mxu0 0
        %6807 = vmatpush1.bf16.msra.mxu0 0
        %6808 = vmatprep.subr.bf16.mxu0 0
        %6809 = vmatpush1.bf16.msra.mxu0 0
        %6810 = vmatprep.subr.bf16.mxu0 0
        %6811 = vmatpush1.bf16.msra.mxu0 0
        %6812 = vmatprep.mubr.bf16.mxu0 0
        %6813 = vmatmul.mubr.bf16.gmra.mrb[0].mxu0 %v6730
        %v6814 = vpop.f32.mrb[0].mxu0
        %v6815 = vadd.f32 0.0, %v6814
        %v6816 = vpop.f32.mrb[0].mxu0
        %v6817 = vpop.f32.mrb[0].mxu0
        %v6818 = vadd.f32 0.0, %v6817
        %v6819 = vpop.f32.mrb[0].mxu0
        %6820 = vmatprep.mubr.bf16.mxu0 0
        %6821 = vmatmul.mubr.bf16.gmra.mrb[0].mxu0 %v6733
        %v6822 = vpop.f32.mrb[0].mxu0
        %v6823 = vadd.f32 0.0, %v6822
        %v6824 = vpop.f32.mrb[0].mxu0
        %v6825 = vpop.f32.mrb[0].mxu0
        %v6826 = vadd.f32 0.0, %v6825
        %v6827 = vpop.f32.mrb[0].mxu0
        %6828 = vmatprep.mubr.bf16.mxu0 0
        %6829 = vmatmul.mubr.bf16.gmra.mrb[0].mxu0 %v6736
        %v6830 = vpop.f32.mrb[0].mxu0
        %v6831 = vadd.f32 0.0, %v6830
        %v6832 = vpop.f32.mrb[0].mxu0
        %v6833 = vpop.f32.mrb[0].mxu0
        %v6834 = vadd.f32 0.0, %v6833
        %v6835 = vpop.f32.mrb[0].mxu0
        %6836 = vmatprep.mubr.bf16.mxu0 0
        %6837 = vmatmul.mubr.bf16.gmra.mrb[0].mxu0 %v6739
        %v6838 = vpop.f32.mrb[0].mxu0
        %v6839 = vadd.f32 0.0, %v6838
        %v6840 = vpop.f32.mrb[0].mxu0
        %v6841 = vpop.f32.mrb[0].mxu0
        %v6842 = vadd.f32 0.0, %v6841
        %v6843 = vpop.f32.mrb[0].mxu0
        %6844 = vmatprep.mubr.bf16.mxu0 0
        %6845 = vmatmul.mubr.bf16.gmra.mrb[0].mxu0 %v6742
        %v6846 = vpop.f32.mrb[0].mxu0
        %v6847 = vadd.f32 0.0, %v6846
        %v6848 = vpop.f32.mrb[0].mxu0
        %v6849 = vpop.f32.mrb[0].mxu0
        %v6850 = vadd.f32 0.0, %v6849
        %v6851 = vpop.f32.mrb[0].mxu0
        %6852 = vmatprep.mubr.bf16.mxu0 0
        %6853 = vmatmul.mubr.bf16.gmra.mrb[0].mxu0 %v6745
        %v6854 = vpop.f32.mrb[0].mxu0
        %v6855 = vadd.f32 0.0, %v6854
        %v6856 = vpop.f32.mrb[0].mxu0
        %v6857 = vpop.f32.mrb[0].mxu0
        %v6858 = vadd.f32 0.0, %v6857
        %v6859 = vpop.f32.mrb[0].mxu0
        %6860 = vmatprep.mubr.bf16.mxu0 0
        %6861 = vmatmul.mubr.bf16.gmra.mrb[0].mxu0 %v6748
        %v6862 = vpop.f32.mrb[0].mxu0
        %v6863 = vadd.f32 0.0, %v6862
        %v6864 = vpop.f32.mrb[0].mxu0
        %v6865 = vpop.f32.mrb[0].mxu0
        %v6866 = vadd.f32 0.0, %v6865
        %v6867 = vpop.f32.mrb[0].mxu0
        %6868 = vmatprep.mubr.bf16.mxu0 0
        %6869 = vmatmul.mubr.bf16.gmra.mrb[0].mxu0 %v6751
        %v6870 = vpop.f32.mrb[0].mxu0
        %v6871 = vadd.f32 0.0, %v6870
        %v6872 = vpop.f32.mrb[0].mxu0
        %v6873 = vpop.f32.mrb[0].mxu0
        %v6874 = vadd.f32 0.0, %v6873
        %v6875 = vpop.f32.mrb[0].mxu0
        %6876 = vmatprep.mubr.bf16.mxu0 0
        %6877 = vmatmul.mubr.bf16.gmra.mrb[0].mxu0 %v6754
        %v6878 = vpop.f32.mrb[0].mxu0
        %v6879 = vadd.f32 0.0, %v6878
        %v6880 = vpop.f32.mrb[0].mxu0
        %v6881 = vpop.f32.mrb[0].mxu0
        %v6882 = vadd.f32 0.0, %v6881
        %v6883 = vpop.f32.mrb[0].mxu0
        %6884 = vmatprep.mubr.bf16.mxu0 0
        %6885 = vmatmul.mubr.bf16.gmra.mrb[0].mxu0 %v6757
        %v6886 = vpop.f32.mrb[0].mxu0
        %v6887 = vadd.f32 0.0, %v6886
        %v6888 = vpop.f32.mrb[0].mxu0
        %v6889 = vpop.f32.mrb[0].mxu0
        %v6890 = vadd.f32 0.0, %v6889
        %v6891 = vpop.f32.mrb[0].mxu0
        %6892 = vmatprep.mubr.bf16.mxu0 0
        %6893 = vmatmul.mubr.bf16.gmra.mrb[0].mxu0 %v6760
        %v6894 = vpop.f32.mrb[0].mxu0
        %v6895 = vadd.f32 0.0, %v6894
        %v6896 = vpop.f32.mrb[0].mxu0
        %v6897 = vpop.f32.mrb[0].mxu0
        %v6898 = vadd.f32 0.0, %v6897
        %v6899 = vpop.f32.mrb[0].mxu0
        %6900 = vmatprep.mubr.bf16.mxu0 0
        %6901 = vmatmul.mubr.bf16.gmra.mrb[0].mxu0 %v6763
        %v6902 = vpop.f32.mrb[0].mxu0
        %v6903 = vadd.f32 0.0, %v6902
        %v6904 = vpop.f32.mrb[0].mxu0
        %v6905 = vpop.f32.mrb[0].mxu0
        %v6906 = vadd.f32 0.0, %v6905
        %v6907 = vpop.f32.mrb[0].mxu0
        %6908 = vmatprep.mubr.bf16.mxu0 0
        %6909 = vmatmul.mubr.bf16.gmra.mrb[0].mxu0 %v6766
        %v6910 = vpop.f32.mrb[0].mxu0
        %v6911 = vadd.f32 0.0, %v6910
        %v6912 = vpop.f32.mrb[0].mxu0
        %v6913 = vpop.f32.mrb[0].mxu0
        %v6914 = vadd.f32 0.0, %v6913
        %v6915 = vpop.f32.mrb[0].mxu0
        %6916 = vmatprep.mubr.bf16.mxu0 0
        %6917 = vmatmul.mubr.bf16.gmra.mrb[0].mxu0 %v6769
        %v6918 = vpop.f32.mrb[0].mxu0
        %v6919 = vadd.f32 0.0, %v6918
        %v6920 = vpop.f32.mrb[0].mxu0
        %v6921 = vpop.f32.mrb[0].mxu0
        %v6922 = vadd.f32 0.0, %v6921
        %v6923 = vpop.f32.mrb[0].mxu0
        %6924 = vmatprep.mubr.bf16.mxu0 0
        %6925 = vmatmul.mubr.bf16.gmra.mrb[0].mxu0 %v6772
        %v6926 = vpop.f32.mrb[0].mxu0
        %v6927 = vadd.f32 0.0, %v6926
        %v6928 = vpop.f32.mrb[0].mxu0
        %v6929 = vpop.f32.mrb[0].mxu0
        %v6930 = vadd.f32 0.0, %v6929
        %v6931 = vpop.f32.mrb[0].mxu0
        %6932 = vmatprep.mubr.bf16.mxu0 0
        %6933 = vmatmul.mubr.bf16.gmra.mrb[0].mxu0 %v6775
        %v6934 = vpop.f32.mrb[0].mxu0
        %v6935 = vadd.f32 0.0, %v6934
        %v6936 = vpop.f32.mrb[0].mxu0
        %v6937 = vpop.f32.mrb[0].mxu0
        %v6938 = vadd.f32 0.0, %v6937
        %v6939 = vpop.f32.mrb[0].mxu0
        %6940 = vdwg.mxu0
        %v6941 = vadd.f32 %v6646, %v6815
        %v6942 = vadd.f32 %v6647, %v6818
        %v6943 = vadd.f32 %v6648, %v6823
        %v6944 = vadd.f32 %v6649, %v6826
        %v6945 = vadd.f32 %v6650, %v6831
        %v6946 = vadd.f32 %v6651, %v6834
        %v6947 = vadd.f32 %v6652, %v6839
        %v6948 = vadd.f32 %v6653, %v6842
        %v6949 = vadd.f32 %v6654, %v6847
        %v6950 = vadd.f32 %v6655, %v6850
        %v6951 = vadd.f32 %v6656, %v6855
        %v6952 = vadd.f32 %v6657, %v6858
        %v6953 = vadd.f32 %v6658, %v6863
        %v6954 = vadd.f32 %v6659, %v6866
        %v6955 = vadd.f32 %v6660, %v6871
        %v6956 = vadd.f32 %v6661, %v6874
        %v6957 = vadd.f32 %v6662, %v6879
        %v6958 = vadd.f32 %v6663, %v6882
        %v6959 = vadd.f32 %v6664, %v6887
        %v6960 = vadd.f32 %v6665, %v6890
        %v6961 = vadd.f32 %v6666, %v6895
        %v6962 = vadd.f32 %v6667, %v6898
        %v6963 = vadd.f32 %v6668, %v6903
        %v6964 = vadd.f32 %v6669, %v6906
        %v6965 = vadd.f32 %v6670, %v6911
        %v6966 = vadd.f32 %v6671, %v6914
        %v6967 = vadd.f32 %v6672, %v6919
        %v6968 = vadd.f32 %v6673, %v6922
        %v6969 = vadd.f32 %v6674, %v6927
        %v6970 = vadd.f32 %v6675, %v6930
        %v6971 = vadd.f32 %v6676, %v6935
        %v6972 = vadd.f32 %v6677, %v6938
        %v6973 = vld [vmem:[%s6678 + $0x1] sm:$0xff]
        %v6974 = vld [vmem:[%s6678 + $0x9] sm:$0xff]
        %v6975 = vld [vmem:[%s6678 + $0x19] sm:$0xff]
        %v6976 = vld [vmem:[%s6678 + $0x21] sm:$0xff]
        %v6977 = vld [vmem:[%s6678 + $0x31] sm:$0xff]
        %v6978 = vld [vmem:[%s6678 + $0x39] sm:$0xff]
        %v6979 = vld [vmem:[%s6678 + $0x49] sm:$0xff]
        %v6980 = vld [vmem:[%s6678 + $0x51] sm:$0xff]
        %v6981 = vld [vmem:[%s6678 + $0x61] sm:$0xff]
        %v6982 = vld [vmem:[%s6678 + $0x69] sm:$0xff]
        %v6983 = vld [vmem:[%s6678 + $0x79] sm:$0xff]
        %v6984 = vld [vmem:[%s6678 + $0x81] sm:$0xff]
        %v6985 = vld [vmem:[%s6678 + $0x91] sm:$0xff]
        %v6986 = vld [vmem:[%s6678 + $0x99] sm:$0xff]
        %v6987 = vld [vmem:[%s6678 + $0xa9] sm:$0xff]
        %v6988 = vld [vmem:[%s6678 + $0xb1] sm:$0xff]
        %v6989 = vld [vmem:[%s6678 + $0xc1] sm:$0xff]
        %v6990 = vld [vmem:[%s6678 + $0xc9] sm:$0xff]
        %v6991 = vld [vmem:[%s6678 + $0xd9] sm:$0xff]
        %v6992 = vld [vmem:[%s6678 + $0xe1] sm:$0xff]
        %v6993 = vld [vmem:[%s6678 + $0xf1] sm:$0xff]
        %v6994 = vld [vmem:[%s6678 + $0xf9] sm:$0xff]
        %v6995 = vld [vmem:[%s6678 + $0x109] sm:$0xff]
        %v6996 = vld [vmem:[%s6678 + $0x111] sm:$0xff]
        %v6997 = vld [vmem:[%s6678 + $0x121] sm:$0xff]
        %v6998 = vld [vmem:[%s6678 + $0x129] sm:$0xff]
        %v6999 = vld [vmem:[%s6678 + $0x139] sm:$0xff]
        %v7000 = vld [vmem:[%s6678 + $0x141] sm:$0xff]
        %v7001 = vld [vmem:[%s6678 + $0x151] sm:$0xff]
        %v7002 = vld [vmem:[%s6678 + $0x159] sm:$0xff]
        %v7003 = vld [vmem:[%s6678 + $0x169] sm:$0xff]
        %v7004 = vld [vmem:[%s6678 + $0x171] sm:$0xff]
        %v7005 = vpack.c.bf16 %v6974, %v6973
        %v7006 = vpack.c.bf16 %v6976, %v6975
        %v7007 = vpack.c.bf16 %v6978, %v6977
        %v7008 = vpack.c.bf16 %v6980, %v6979
        %v7009 = vpack.c.bf16 %v6982, %v6981
        %v7010 = vpack.c.bf16 %v6984, %v6983
        %v7011 = vpack.c.bf16 %v6986, %v6985
        %v7012 = vpack.c.bf16 %v6988, %v6987
        %v7013 = vpack.c.bf16 %v6990, %v6989
        %v7014 = vpack.c.bf16 %v6992, %v6991
        %v7015 = vpack.c.bf16 %v6994, %v6993
        %v7016 = vpack.c.bf16 %v6996, %v6995
        %v7017 = vpack.c.bf16 %v6998, %v6997
        %v7018 = vpack.c.bf16 %v7000, %v6999
        %v7019 = vpack.c.bf16 %v7002, %v7001
        %v7020 = vpack.c.bf16 %v7004, %v7003
        %s7021 = scalar_lea.vmem %s4, 28
        %v7022 = vld [vmem:[%s7021] sm:$0xf]
        %v7024 = vsel %vm4922, %v7005, 0
        %v7027 = vsel %vm4922, %v7006, 0
        %v7030 = vsel %vm4922, %v7007, 0
        %v7033 = vsel %vm4922, %v7008, 0
        %v7036 = vsel %vm4922, %v7009, 0
        %v7039 = vsel %vm4922, %v7010, 0
        %v7042 = vsel %vm4922, %v7011, 0
        %v7045 = vsel %vm4922, %v7012, 0
        %v7048 = vsel %vm4922, %v7013, 0
        %v7051 = vsel %vm4922, %v7014, 0
        %v7054 = vsel %vm4922, %v7015, 0
        %v7057 = vsel %vm4922, %v7016, 0
        %v7060 = vsel %vm4922, %v7017, 0
        %v7063 = vsel %vm4922, %v7018, 0
        %v7066 = vsel %vm4922, %v7019, 0
        %v7069 = vsel %vm4922, %v7020, 0
        %v7072 = vsel %vm5124, %v7022, 0
        %7074 = vmatprep.subr.bf16.mxu0 0
        %7075 = vmatpush1.bf16.msra.mxu0 %v7072
        %7076 = vmatprep.subr.bf16.mxu0 0
        %7077 = vmatpush1.bf16.msra.mxu0 0
        %7078 = vmatprep.subr.bf16.mxu0 0
        %7079 = vmatpush1.bf16.msra.mxu0 0
        %7080 = vmatprep.subr.bf16.mxu0 0
        %7081 = vmatpush1.bf16.msra.mxu0 0
        %7082 = vmatprep.subr.bf16.mxu0 0
        %7083 = vmatpush1.bf16.msra.mxu0 0
        %7084 = vmatprep.subr.bf16.mxu0 0
        %7085 = vmatpush1.bf16.msra.mxu0 0
        %7086 = vmatprep.subr.bf16.mxu0 0
        %7087 = vmatpush1.bf16.msra.mxu0 0
        %7088 = vmatprep.subr.bf16.mxu0 0
        %7089 = vmatpush1.bf16.msra.mxu0 0
        %7090 = vmatprep.subr.bf16.mxu0 0
        %7091 = vmatpush1.bf16.msra.mxu0 0
        %7092 = vmatprep.subr.bf16.mxu0 0
        %7093 = vmatpush1.bf16.msra.mxu0 0
        %7094 = vmatprep.subr.bf16.mxu0 0
        %7095 = vmatpush1.bf16.msra.mxu0 0
        %7096 = vmatprep.subr.bf16.mxu0 0
        %7097 = vmatpush1.bf16.msra.mxu0 0
        %7098 = vmatprep.subr.bf16.mxu0 0
        %7099 = vmatpush1.bf16.msra.mxu0 0
        %7100 = vmatprep.subr.bf16.mxu0 0
        %7101 = vmatpush1.bf16.msra.mxu0 0
        %7102 = vmatprep.subr.bf16.mxu0 0
        %7103 = vmatpush1.bf16.msra.mxu0 0
        %7104 = vmatprep.subr.bf16.mxu0 0
        %7105 = vmatpush1.bf16.msra.mxu0 0
        %7106 = vmatprep.mubr.bf16.mxu0 0
        %7107 = vmatmul.mubr.bf16.gmra.mrb[0].mxu0 %v7024
        %v7108 = vpop.f32.mrb[0].mxu0
        %v7109 = vadd.f32 0.0, %v7108
        %v7110 = vpop.f32.mrb[0].mxu0
        %v7111 = vpop.f32.mrb[0].mxu0
        %v7112 = vadd.f32 0.0, %v7111
        %v7113 = vpop.f32.mrb[0].mxu0
        %7114 = vmatprep.mubr.bf16.mxu0 0
        %7115 = vmatmul.mubr.bf16.gmra.mrb[0].mxu0 %v7027
        %v7116 = vpop.f32.mrb[0].mxu0
        %v7117 = vadd.f32 0.0, %v7116
        %v7118 = vpop.f32.mrb[0].mxu0
        %v7119 = vpop.f32.mrb[0].mxu0
        %v7120 = vadd.f32 0.0, %v7119
        %v7121 = vpop.f32.mrb[0].mxu0
        %7122 = vmatprep.mubr.bf16.mxu0 0
        %7123 = vmatmul.mubr.bf16.gmra.mrb[0].mxu0 %v7030
        %v7124 = vpop.f32.mrb[0].mxu0
        %v7125 = vadd.f32 0.0, %v7124
        %v7126 = vpop.f32.mrb[0].mxu0
        %v7127 = vpop.f32.mrb[0].mxu0
        %v7128 = vadd.f32 0.0, %v7127
        %v7129 = vpop.f32.mrb[0].mxu0
        %7130 = vmatprep.mubr.bf16.mxu0 0
        %7131 = vmatmul.mubr.bf16.gmra.mrb[0].mxu0 %v7033
        %v7132 = vpop.f32.mrb[0].mxu0
        %v7133 = vadd.f32 0.0, %v7132
        %v7134 = vpop.f32.mrb[0].mxu0
        %v7135 = vpop.f32.mrb[0].mxu0
        %v7136 = vadd.f32 0.0, %v7135
        %v7137 = vpop.f32.mrb[0].mxu0
        %7138 = vmatprep.mubr.bf16.mxu0 0
        %7139 = vmatmul.mubr.bf16.gmra.mrb[0].mxu0 %v7036
        %v7140 = vpop.f32.mrb[0].mxu0
        %v7141 = vadd.f32 0.0, %v7140
        %v7142 = vpop.f32.mrb[0].mxu0
        %v7143 = vpop.f32.mrb[0].mxu0
        %v7144 = vadd.f32 0.0, %v7143
        %v7145 = vpop.f32.mrb[0].mxu0
        %7146 = vmatprep.mubr.bf16.mxu0 0
        %7147 = vmatmul.mubr.bf16.gmra.mrb[0].mxu0 %v7039
        %v7148 = vpop.f32.mrb[0].mxu0
        %v7149 = vadd.f32 0.0, %v7148
        %v7150 = vpop.f32.mrb[0].mxu0
        %v7151 = vpop.f32.mrb[0].mxu0
        %v7152 = vadd.f32 0.0, %v7151
        %v7153 = vpop.f32.mrb[0].mxu0
        %7154 = vmatprep.mubr.bf16.mxu0 0
        %7155 = vmatmul.mubr.bf16.gmra.mrb[0].mxu0 %v7042
        %v7156 = vpop.f32.mrb[0].mxu0
        %v7157 = vadd.f32 0.0, %v7156
        %v7158 = vpop.f32.mrb[0].mxu0
        %v7159 = vpop.f32.mrb[0].mxu0
        %v7160 = vadd.f32 0.0, %v7159
        %v7161 = vpop.f32.mrb[0].mxu0
        %7162 = vmatprep.mubr.bf16.mxu0 0
        %7163 = vmatmul.mubr.bf16.gmra.mrb[0].mxu0 %v7045
        %v7164 = vpop.f32.mrb[0].mxu0
        %v7165 = vadd.f32 0.0, %v7164
        %v7166 = vpop.f32.mrb[0].mxu0
        %v7167 = vpop.f32.mrb[0].mxu0
        %v7168 = vadd.f32 0.0, %v7167
        %v7169 = vpop.f32.mrb[0].mxu0
        %7170 = vmatprep.mubr.bf16.mxu0 0
        %7171 = vmatmul.mubr.bf16.gmra.mrb[0].mxu0 %v7048
        %v7172 = vpop.f32.mrb[0].mxu0
        %v7173 = vadd.f32 0.0, %v7172
        %v7174 = vpop.f32.mrb[0].mxu0
        %v7175 = vpop.f32.mrb[0].mxu0
        %v7176 = vadd.f32 0.0, %v7175
        %v7177 = vpop.f32.mrb[0].mxu0
        %7178 = vmatprep.mubr.bf16.mxu0 0
        %7179 = vmatmul.mubr.bf16.gmra.mrb[0].mxu0 %v7051
        %v7180 = vpop.f32.mrb[0].mxu0
        %v7181 = vadd.f32 0.0, %v7180
        %v7182 = vpop.f32.mrb[0].mxu0
        %v7183 = vpop.f32.mrb[0].mxu0
        %v7184 = vadd.f32 0.0, %v7183
        %v7185 = vpop.f32.mrb[0].mxu0
        %7186 = vmatprep.mubr.bf16.mxu0 0
        %7187 = vmatmul.mubr.bf16.gmra.mrb[0].mxu0 %v7054
        %v7188 = vpop.f32.mrb[0].mxu0
        %v7189 = vadd.f32 0.0, %v7188
        %v7190 = vpop.f32.mrb[0].mxu0
        %v7191 = vpop.f32.mrb[0].mxu0
        %v7192 = vadd.f32 0.0, %v7191
        %v7193 = vpop.f32.mrb[0].mxu0
        %7194 = vmatprep.mubr.bf16.mxu0 0
        %7195 = vmatmul.mubr.bf16.gmra.mrb[0].mxu0 %v7057
        %v7196 = vpop.f32.mrb[0].mxu0
        %v7197 = vadd.f32 0.0, %v7196
        %v7198 = vpop.f32.mrb[0].mxu0
        %v7199 = vpop.f32.mrb[0].mxu0
        %v7200 = vadd.f32 0.0, %v7199
        %v7201 = vpop.f32.mrb[0].mxu0
        %7202 = vmatprep.mubr.bf16.mxu0 0
        %7203 = vmatmul.mubr.bf16.gmra.mrb[0].mxu0 %v7060
        %v7204 = vpop.f32.mrb[0].mxu0
        %v7205 = vadd.f32 0.0, %v7204
        %v7206 = vpop.f32.mrb[0].mxu0
        %v7207 = vpop.f32.mrb[0].mxu0
        %v7208 = vadd.f32 0.0, %v7207
        %v7209 = vpop.f32.mrb[0].mxu0
        %7210 = vmatprep.mubr.bf16.mxu0 0
        %7211 = vmatmul.mubr.bf16.gmra.mrb[0].mxu0 %v7063
        %v7212 = vpop.f32.mrb[0].mxu0
        %v7213 = vadd.f32 0.0, %v7212
        %v7214 = vpop.f32.mrb[0].mxu0
        %v7215 = vpop.f32.mrb[0].mxu0
        %v7216 = vadd.f32 0.0, %v7215
        %v7217 = vpop.f32.mrb[0].mxu0
        %7218 = vmatprep.mubr.bf16.mxu0 0
        %7219 = vmatmul.mubr.bf16.gmra.mrb[0].mxu0 %v7066
        %v7220 = vpop.f32.mrb[0].mxu0
        %v7221 = vadd.f32 0.0, %v7220
        %v7222 = vpop.f32.mrb[0].mxu0
        %v7223 = vpop.f32.mrb[0].mxu0
        %v7224 = vadd.f32 0.0, %v7223
        %v7225 = vpop.f32.mrb[0].mxu0
        %7226 = vmatprep.mubr.bf16.mxu0 0
        %7227 = vmatmul.mubr.bf16.gmra.mrb[0].mxu0 %v7069
        %v7228 = vpop.f32.mrb[0].mxu0
        %v7229 = vadd.f32 0.0, %v7228
        %v7230 = vpop.f32.mrb[0].mxu0
        %v7231 = vpop.f32.mrb[0].mxu0
        %v7232 = vadd.f32 0.0, %v7231
        %v7233 = vpop.f32.mrb[0].mxu0
        %7234 = vdwg.mxu0
        %v7235 = vadd.f32 %v6941, %v7109
        %v7236 = vadd.f32 %v6942, %v7112
        %v7237 = vadd.f32 %v6943, %v7117
        %v7238 = vadd.f32 %v6944, %v7120
        %v7239 = vadd.f32 %v6945, %v7125
        %v7240 = vadd.f32 %v6946, %v7128
        %v7241 = vadd.f32 %v6947, %v7133
        %v7242 = vadd.f32 %v6948, %v7136
        %v7243 = vadd.f32 %v6949, %v7141
        %v7244 = vadd.f32 %v6950, %v7144
        %v7245 = vadd.f32 %v6951, %v7149
        %v7246 = vadd.f32 %v6952, %v7152
        %v7247 = vadd.f32 %v6953, %v7157
        %v7248 = vadd.f32 %v6954, %v7160
        %v7249 = vadd.f32 %v6955, %v7165
        %v7250 = vadd.f32 %v6956, %v7168
        %v7251 = vadd.f32 %v6957, %v7173
        %v7252 = vadd.f32 %v6958, %v7176
        %v7253 = vadd.f32 %v6959, %v7181
        %v7254 = vadd.f32 %v6960, %v7184
        %v7255 = vadd.f32 %v6961, %v7189
        %v7256 = vadd.f32 %v6962, %v7192
        %v7257 = vadd.f32 %v6963, %v7197
        %v7258 = vadd.f32 %v6964, %v7200
        %v7259 = vadd.f32 %v6965, %v7205
        %v7260 = vadd.f32 %v6966, %v7208
        %v7261 = vadd.f32 %v6967, %v7213
        %v7262 = vadd.f32 %v6968, %v7216
        %v7263 = vadd.f32 %v6969, %v7221
        %v7264 = vadd.f32 %v6970, %v7224
        %v7265 = vadd.f32 %v6971, %v7229
        %v7266 = vadd.f32 %v6972, %v7232
        %v7267 = vld [vmem:[%s6678 + $0x2] sm:$0xff]
        %v7268 = vld [vmem:[%s6678 + $0xa] sm:$0xff]
        %v7269 = vld [vmem:[%s6678 + $0x1a] sm:$0xff]
        %v7270 = vld [vmem:[%s6678 + $0x22] sm:$0xff]
        %v7271 = vld [vmem:[%s6678 + $0x32] sm:$0xff]
        %v7272 = vld [vmem:[%s6678 + $0x3a] sm:$0xff]
        %v7273 = vld [vmem:[%s6678 + $0x4a] sm:$0xff]
        %v7274 = vld [vmem:[%s6678 + $0x52] sm:$0xff]
        %v7275 = vld [vmem:[%s6678 + $0x62] sm:$0xff]
        %v7276 = vld [vmem:[%s6678 + $0x6a] sm:$0xff]
        %v7277 = vld [vmem:[%s6678 + $0x7a] sm:$0xff]
        %v7278 = vld [vmem:[%s6678 + $0x82] sm:$0xff]
        %v7279 = vld [vmem:[%s6678 + $0x92] sm:$0xff]
        %v7280 = vld [vmem:[%s6678 + $0x9a] sm:$0xff]
        %v7281 = vld [vmem:[%s6678 + $0xaa] sm:$0xff]
        %v7282 = vld [vmem:[%s6678 + $0xb2] sm:$0xff]
        %v7283 = vld [vmem:[%s6678 + $0xc2] sm:$0xff]
        %v7284 = vld [vmem:[%s6678 + $0xca] sm:$0xff]
        %v7285 = vld [vmem:[%s6678 + $0xda] sm:$0xff]
        %v7286 = vld [vmem:[%s6678 + $0xe2] sm:$0xff]
        %v7287 = vld [vmem:[%s6678 + $0xf2] sm:$0xff]
        %v7288 = vld [vmem:[%s6678 + $0xfa] sm:$0xff]
        %v7289 = vld [vmem:[%s6678 + $0x10a] sm:$0xff]
        %v7290 = vld [vmem:[%s6678 + $0x112] sm:$0xff]
        %v7291 = vld [vmem:[%s6678 + $0x122] sm:$0xff]
        %v7292 = vld [vmem:[%s6678 + $0x12a] sm:$0xff]
        %v7293 = vld [vmem:[%s6678 + $0x13a] sm:$0xff]
        %v7294 = vld [vmem:[%s6678 + $0x142] sm:$0xff]
        %v7295 = vld [vmem:[%s6678 + $0x152] sm:$0xff]
        %v7296 = vld [vmem:[%s6678 + $0x15a] sm:$0xff]
        %v7297 = vld [vmem:[%s6678 + $0x16a] sm:$0xff]
        %v7298 = vld [vmem:[%s6678 + $0x172] sm:$0xff]
        %v7299 = vpack.c.bf16 %v7268, %v7267
        %v7300 = vpack.c.bf16 %v7270, %v7269
        %v7301 = vpack.c.bf16 %v7272, %v7271
        %v7302 = vpack.c.bf16 %v7274, %v7273
        %v7303 = vpack.c.bf16 %v7276, %v7275
        %v7304 = vpack.c.bf16 %v7278, %v7277
        %v7305 = vpack.c.bf16 %v7280, %v7279
        %v7306 = vpack.c.bf16 %v7282, %v7281
        %v7307 = vpack.c.bf16 %v7284, %v7283
        %v7308 = vpack.c.bf16 %v7286, %v7285
        %v7309 = vpack.c.bf16 %v7288, %v7287
        %v7310 = vpack.c.bf16 %v7290, %v7289
        %v7311 = vpack.c.bf16 %v7292, %v7291
        %v7312 = vpack.c.bf16 %v7294, %v7293
        %v7313 = vpack.c.bf16 %v7296, %v7295
        %v7314 = vpack.c.bf16 %v7298, %v7297
        %s7315 = scalar_lea.vmem %s4, 32
        %v7316 = vld [vmem:[%s7315] sm:$0xf]
        %v7318 = vsel %vm4922, %v7299, 0
        %v7321 = vsel %vm4922, %v7300, 0
        %v7324 = vsel %vm4922, %v7301, 0
        %v7327 = vsel %vm4922, %v7302, 0
        %v7330 = vsel %vm4922, %v7303, 0
        %v7333 = vsel %vm4922, %v7304, 0
        %v7336 = vsel %vm4922, %v7305, 0
        %v7339 = vsel %vm4922, %v7306, 0
        %v7342 = vsel %vm4922, %v7307, 0
        %v7345 = vsel %vm4922, %v7308, 0
        %v7348 = vsel %vm4922, %v7309, 0
        %v7351 = vsel %vm4922, %v7310, 0
        %v7354 = vsel %vm4922, %v7311, 0
        %v7357 = vsel %vm4922, %v7312, 0
        %v7360 = vsel %vm4922, %v7313, 0
        %v7363 = vsel %vm4922, %v7314, 0
        %v7366 = vsel %vm5124, %v7316, 0
        %7368 = vmatprep.subr.bf16.mxu0 0
        %7369 = vmatpush1.bf16.msra.mxu0 %v7366
        %7370 = vmatprep.subr.bf16.mxu0 0
        %7371 = vmatpush1.bf16.msra.mxu0 0
        %7372 = vmatprep.subr.bf16.mxu0 0
        %7373 = vmatpush1.bf16.msra.mxu0 0
        %7374 = vmatprep.subr.bf16.mxu0 0
        %7375 = vmatpush1.bf16.msra.mxu0 0
        %7376 = vmatprep.subr.bf16.mxu0 0
        %7377 = vmatpush1.bf16.msra.mxu0 0
        %7378 = vmatprep.subr.bf16.mxu0 0
        %7379 = vmatpush1.bf16.msra.mxu0 0
        %7380 = vmatprep.subr.bf16.mxu0 0
        %7381 = vmatpush1.bf16.msra.mxu0 0
        %7382 = vmatprep.subr.bf16.mxu0 0
        %7383 = vmatpush1.bf16.msra.mxu0 0
        %7384 = vmatprep.subr.bf16.mxu0 0
        %7385 = vmatpush1.bf16.msra.mxu0 0
        %7386 = vmatprep.subr.bf16.mxu0 0
        %7387 = vmatpush1.bf16.msra.mxu0 0
        %7388 = vmatprep.subr.bf16.mxu0 0
        %7389 = vmatpush1.bf16.msra.mxu0 0
        %7390 = vmatprep.subr.bf16.mxu0 0
        %7391 = vmatpush1.bf16.msra.mxu0 0
        %7392 = vmatprep.subr.bf16.mxu0 0
        %7393 = vmatpush1.bf16.msra.mxu0 0
        %7394 = vmatprep.subr.bf16.mxu0 0
        %7395 = vmatpush1.bf16.msra.mxu0 0
        %7396 = vmatprep.subr.bf16.mxu0 0
        %7397 = vmatpush1.bf16.msra.mxu0 0
        %7398 = vmatprep.subr.bf16.mxu0 0
        %7399 = vmatpush1.bf16.msra.mxu0 0
        %7400 = vmatprep.mubr.bf16.mxu0 0
        %7401 = vmatmul.mubr.bf16.gmra.mrb[0].mxu0 %v7318
        %v7402 = vpop.f32.mrb[0].mxu0
        %v7403 = vadd.f32 0.0, %v7402
        %v7404 = vpop.f32.mrb[0].mxu0
        %v7405 = vpop.f32.mrb[0].mxu0
        %v7406 = vadd.f32 0.0, %v7405
        %v7407 = vpop.f32.mrb[0].mxu0
        %7408 = vmatprep.mubr.bf16.mxu0 0
        %7409 = vmatmul.mubr.bf16.gmra.mrb[0].mxu0 %v7321
        %v7410 = vpop.f32.mrb[0].mxu0
        %v7411 = vadd.f32 0.0, %v7410
        %v7412 = vpop.f32.mrb[0].mxu0
        %v7413 = vpop.f32.mrb[0].mxu0
        %v7414 = vadd.f32 0.0, %v7413
        %v7415 = vpop.f32.mrb[0].mxu0
        %7416 = vmatprep.mubr.bf16.mxu0 0
        %7417 = vmatmul.mubr.bf16.gmra.mrb[0].mxu0 %v7324
        %v7418 = vpop.f32.mrb[0].mxu0
        %v7419 = vadd.f32 0.0, %v7418
        %v7420 = vpop.f32.mrb[0].mxu0
        %v7421 = vpop.f32.mrb[0].mxu0
        %v7422 = vadd.f32 0.0, %v7421
        %v7423 = vpop.f32.mrb[0].mxu0
        %7424 = vmatprep.mubr.bf16.mxu0 0
        %7425 = vmatmul.mubr.bf16.gmra.mrb[0].mxu0 %v7327
        %v7426 = vpop.f32.mrb[0].mxu0
        %v7427 = vadd.f32 0.0, %v7426
        %v7428 = vpop.f32.mrb[0].mxu0
        %v7429 = vpop.f32.mrb[0].mxu0
        %v7430 = vadd.f32 0.0, %v7429
        %v7431 = vpop.f32.mrb[0].mxu0
        %7432 = vmatprep.mubr.bf16.mxu0 0
        %7433 = vmatmul.mubr.bf16.gmra.mrb[0].mxu0 %v7330
        %v7434 = vpop.f32.mrb[0].mxu0
        %v7435 = vadd.f32 0.0, %v7434
        %v7436 = vpop.f32.mrb[0].mxu0
        %v7437 = vpop.f32.mrb[0].mxu0
        %v7438 = vadd.f32 0.0, %v7437
        %v7439 = vpop.f32.mrb[0].mxu0
        %7440 = vmatprep.mubr.bf16.mxu0 0
        %7441 = vmatmul.mubr.bf16.gmra.mrb[0].mxu0 %v7333
        %v7442 = vpop.f32.mrb[0].mxu0
        %v7443 = vadd.f32 0.0, %v7442
        %v7444 = vpop.f32.mrb[0].mxu0
        %v7445 = vpop.f32.mrb[0].mxu0
        %v7446 = vadd.f32 0.0, %v7445
        %v7447 = vpop.f32.mrb[0].mxu0
        %7448 = vmatprep.mubr.bf16.mxu0 0
        %7449 = vmatmul.mubr.bf16.gmra.mrb[0].mxu0 %v7336
        %v7450 = vpop.f32.mrb[0].mxu0
        %v7451 = vadd.f32 0.0, %v7450
        %v7452 = vpop.f32.mrb[0].mxu0
        %v7453 = vpop.f32.mrb[0].mxu0
        %v7454 = vadd.f32 0.0, %v7453
        %v7455 = vpop.f32.mrb[0].mxu0
        %7456 = vmatprep.mubr.bf16.mxu0 0
        %7457 = vmatmul.mubr.bf16.gmra.mrb[0].mxu0 %v7339
        %v7458 = vpop.f32.mrb[0].mxu0
        %v7459 = vadd.f32 0.0, %v7458
        %v7460 = vpop.f32.mrb[0].mxu0
        %v7461 = vpop.f32.mrb[0].mxu0
        %v7462 = vadd.f32 0.0, %v7461
        %v7463 = vpop.f32.mrb[0].mxu0
        %7464 = vmatprep.mubr.bf16.mxu0 0
        %7465 = vmatmul.mubr.bf16.gmra.mrb[0].mxu0 %v7342
        %v7466 = vpop.f32.mrb[0].mxu0
        %v7467 = vadd.f32 0.0, %v7466
        %v7468 = vpop.f32.mrb[0].mxu0
        %v7469 = vpop.f32.mrb[0].mxu0
        %v7470 = vadd.f32 0.0, %v7469
        %v7471 = vpop.f32.mrb[0].mxu0
        %7472 = vmatprep.mubr.bf16.mxu0 0
        %7473 = vmatmul.mubr.bf16.gmra.mrb[0].mxu0 %v7345
        %v7474 = vpop.f32.mrb[0].mxu0
        %v7475 = vadd.f32 0.0, %v7474
        %v7476 = vpop.f32.mrb[0].mxu0
        %v7477 = vpop.f32.mrb[0].mxu0
        %v7478 = vadd.f32 0.0, %v7477
        %v7479 = vpop.f32.mrb[0].mxu0
        %7480 = vmatprep.mubr.bf16.mxu0 0
        %7481 = vmatmul.mubr.bf16.gmra.mrb[0].mxu0 %v7348
        %v7482 = vpop.f32.mrb[0].mxu0
        %v7483 = vadd.f32 0.0, %v7482
        %v7484 = vpop.f32.mrb[0].mxu0
        %v7485 = vpop.f32.mrb[0].mxu0
        %v7486 = vadd.f32 0.0, %v7485
        %v7487 = vpop.f32.mrb[0].mxu0
        %7488 = vmatprep.mubr.bf16.mxu0 0
        %7489 = vmatmul.mubr.bf16.gmra.mrb[0].mxu0 %v7351
        %v7490 = vpop.f32.mrb[0].mxu0
        %v7491 = vadd.f32 0.0, %v7490
        %v7492 = vpop.f32.mrb[0].mxu0
        %v7493 = vpop.f32.mrb[0].mxu0
        %v7494 = vadd.f32 0.0, %v7493
        %v7495 = vpop.f32.mrb[0].mxu0
        %7496 = vmatprep.mubr.bf16.mxu0 0
        %7497 = vmatmul.mubr.bf16.gmra.mrb[0].mxu0 %v7354
        %v7498 = vpop.f32.mrb[0].mxu0
        %v7499 = vadd.f32 0.0, %v7498
        %v7500 = vpop.f32.mrb[0].mxu0
        %v7501 = vpop.f32.mrb[0].mxu0
        %v7502 = vadd.f32 0.0, %v7501
        %v7503 = vpop.f32.mrb[0].mxu0
        %7504 = vmatprep.mubr.bf16.mxu0 0
        %7505 = vmatmul.mubr.bf16.gmra.mrb[0].mxu0 %v7357
        %v7506 = vpop.f32.mrb[0].mxu0
        %v7507 = vadd.f32 0.0, %v7506
        %v7508 = vpop.f32.mrb[0].mxu0
        %v7509 = vpop.f32.mrb[0].mxu0
        %v7510 = vadd.f32 0.0, %v7509
        %v7511 = vpop.f32.mrb[0].mxu0
        %7512 = vmatprep.mubr.bf16.mxu0 0
        %7513 = vmatmul.mubr.bf16.gmra.mrb[0].mxu0 %v7360
        %v7514 = vpop.f32.mrb[0].mxu0
        %v7515 = vadd.f32 0.0, %v7514
        %v7516 = vpop.f32.mrb[0].mxu0
        %v7517 = vpop.f32.mrb[0].mxu0
        %v7518 = vadd.f32 0.0, %v7517
        %v7519 = vpop.f32.mrb[0].mxu0
        %7520 = vmatprep.mubr.bf16.mxu0 0
        %7521 = vmatmul.mubr.bf16.gmra.mrb[0].mxu0 %v7363
        %v7522 = vpop.f32.mrb[0].mxu0
        %v7523 = vadd.f32 0.0, %v7522
        %v7524 = vpop.f32.mrb[0].mxu0
        %v7525 = vpop.f32.mrb[0].mxu0
        %v7526 = vadd.f32 0.0, %v7525
        %v7527 = vpop.f32.mrb[0].mxu0
        %7528 = vdwg.mxu0
        %v7529 = vadd.f32 %v7235, %v7403
        %v7530 = vadd.f32 %v7236, %v7406
        %v7531 = vadd.f32 %v7237, %v7411
        %v7532 = vadd.f32 %v7238, %v7414
        %v7533 = vadd.f32 %v7239, %v7419
        %v7534 = vadd.f32 %v7240, %v7422
        %v7535 = vadd.f32 %v7241, %v7427
        %v7536 = vadd.f32 %v7242, %v7430
        %v7537 = vadd.f32 %v7243, %v7435
        %v7538 = vadd.f32 %v7244, %v7438
        %v7539 = vadd.f32 %v7245, %v7443
        %v7540 = vadd.f32 %v7246, %v7446
        %v7541 = vadd.f32 %v7247, %v7451
        %v7542 = vadd.f32 %v7248, %v7454
        %v7543 = vadd.f32 %v7249, %v7459
        %v7544 = vadd.f32 %v7250, %v7462
        %v7545 = vadd.f32 %v7251, %v7467
        %v7546 = vadd.f32 %v7252, %v7470
        %v7547 = vadd.f32 %v7253, %v7475
        %v7548 = vadd.f32 %v7254, %v7478
        %v7549 = vadd.f32 %v7255, %v7483
        %v7550 = vadd.f32 %v7256, %v7486
        %v7551 = vadd.f32 %v7257, %v7491
        %v7552 = vadd.f32 %v7258, %v7494
        %v7553 = vadd.f32 %v7259, %v7499
        %v7554 = vadd.f32 %v7260, %v7502
        %v7555 = vadd.f32 %v7261, %v7507
        %v7556 = vadd.f32 %v7262, %v7510
        %v7557 = vadd.f32 %v7263, %v7515
        %v7558 = vadd.f32 %v7264, %v7518
        %v7559 = vadd.f32 %v7265, %v7523
        %v7560 = vadd.f32 %v7266, %v7526
        %v7561 = vld [vmem:[%s5] sm:$0x1]
        %v7563 = vlaneseq
        %v7564 = vshrl.u32 %v7563, 7
        %v7565 = vsub.s32 0, %v7564
        %v7566 = vrot.slane %v7561, %v7565
        %v7568 = vadd.f32 %v7529, %v7566
        %v7569 = vadd.f32 %v7530, %v7566
        %v7570 = vadd.f32 %v7531, %v7566
        %v7571 = vadd.f32 %v7532, %v7566
        %v7572 = vadd.f32 %v7533, %v7566
        %v7573 = vadd.f32 %v7534, %v7566
        %v7574 = vadd.f32 %v7535, %v7566
        %v7575 = vadd.f32 %v7536, %v7566
        %v7576 = vadd.f32 %v7537, %v7566
        %v7577 = vadd.f32 %v7538, %v7566
        %v7578 = vadd.f32 %v7539, %v7566
        %v7579 = vadd.f32 %v7540, %v7566
        %v7580 = vadd.f32 %v7541, %v7566
        %v7581 = vadd.f32 %v7542, %v7566
        %v7582 = vadd.f32 %v7543, %v7566
        %v7583 = vadd.f32 %v7544, %v7566
        %v7584 = vadd.f32 %v7545, %v7566
        %v7585 = vadd.f32 %v7546, %v7566
        %v7586 = vadd.f32 %v7547, %v7566
        %v7587 = vadd.f32 %v7548, %v7566
        %v7588 = vadd.f32 %v7549, %v7566
        %v7589 = vadd.f32 %v7550, %v7566
        %v7590 = vadd.f32 %v7551, %v7566
        %v7591 = vadd.f32 %v7552, %v7566
        %v7592 = vadd.f32 %v7553, %v7566
        %v7593 = vadd.f32 %v7554, %v7566
        %v7594 = vadd.f32 %v7555, %v7566
        %v7595 = vadd.f32 %v7556, %v7566
        %v7596 = vadd.f32 %v7557, %v7566
        %v7597 = vadd.f32 %v7558, %v7566
        %v7598 = vadd.f32 %v7559, %v7566
        %v7599 = vadd.f32 %v7560, %v7566
        %v7600 = vmax.f32 %v7568, 0.0
        %v7601 = vmax.f32 %v7569, 0.0
        %v7602 = vmax.f32 %v7570, 0.0
        %v7603 = vmax.f32 %v7571, 0.0
        %v7604 = vmax.f32 %v7572, 0.0
        %v7605 = vmax.f32 %v7573, 0.0
        %v7606 = vmax.f32 %v7574, 0.0
        %v7607 = vmax.f32 %v7575, 0.0
        %v7608 = vmax.f32 %v7576, 0.0
        %v7609 = vmax.f32 %v7577, 0.0
        %v7610 = vmax.f32 %v7578, 0.0
        %v7611 = vmax.f32 %v7579, 0.0
        %v7612 = vmax.f32 %v7580, 0.0
        %v7613 = vmax.f32 %v7581, 0.0
        %v7614 = vmax.f32 %v7582, 0.0
        %v7615 = vmax.f32 %v7583, 0.0
        %v7616 = vmax.f32 %v7584, 0.0
        %v7617 = vmax.f32 %v7585, 0.0
        %v7618 = vmax.f32 %v7586, 0.0
        %v7619 = vmax.f32 %v7587, 0.0
        %v7620 = vmax.f32 %v7588, 0.0
        %v7621 = vmax.f32 %v7589, 0.0
        %v7622 = vmax.f32 %v7590, 0.0
        %v7623 = vmax.f32 %v7591, 0.0
        %v7624 = vmax.f32 %v7592, 0.0
        %v7625 = vmax.f32 %v7593, 0.0
        %v7626 = vmax.f32 %v7594, 0.0
        %v7627 = vmax.f32 %v7595, 0.0
        %v7628 = vmax.f32 %v7596, 0.0
        %v7629 = vmax.f32 %v7597, 0.0
        %v7630 = vmax.f32 %v7598, 0.0
        %v7631 = vmax.f32 %v7599, 0.0
        %vm7632 = vcmask 130048
        %v7633 = vsel %vm7632, %v7600, 0.0
        %v7634 = vsel %vm7632, %v7601, 0.0
        %v7635 = vadd.f32 %v7633, %v7634
        %v7636 = vsel %vm7632, %v7602, 0.0
        %v7637 = vadd.f32 %v7635, %v7636
        %v7638 = vsel %vm7632, %v7603, 0.0
        %v7639 = vadd.f32 %v7637, %v7638
        %v7640 = vsel %vm7632, %v7604, 0.0
        %v7641 = vadd.f32 %v7639, %v7640
        %v7642 = vsel %vm7632, %v7605, 0.0
        %v7643 = vadd.f32 %v7641, %v7642
        %v7644 = vsel %vm7632, %v7606, 0.0
        %v7645 = vadd.f32 %v7643, %v7644
        %v7646 = vsel %vm7632, %v7607, 0.0
        %v7647 = vadd.f32 %v7645, %v7646
        %v7648 = vsel %vm7632, %v7608, 0.0
        %v7649 = vadd.f32 %v7647, %v7648
        %v7650 = vsel %vm7632, %v7609, 0.0
        %v7651 = vadd.f32 %v7649, %v7650
        %v7652 = vsel %vm7632, %v7610, 0.0
        %v7653 = vadd.f32 %v7651, %v7652
        %v7654 = vsel %vm7632, %v7611, 0.0
        %v7655 = vadd.f32 %v7653, %v7654
        %v7656 = vsel %vm7632, %v7612, 0.0
        %v7657 = vadd.f32 %v7655, %v7656
        %v7658 = vsel %vm7632, %v7613, 0.0
        %v7659 = vadd.f32 %v7657, %v7658
        %v7660 = vsel %vm7632, %v7614, 0.0
        %v7661 = vadd.f32 %v7659, %v7660
        %v7662 = vsel %vm7632, %v7615, 0.0
        %v7663 = vadd.f32 %v7661, %v7662
        %v7664 = vsel %vm7632, %v7616, 0.0
        %v7665 = vadd.f32 %v7663, %v7664
        %v7666 = vsel %vm7632, %v7617, 0.0
        %v7667 = vadd.f32 %v7665, %v7666
        %v7668 = vsel %vm7632, %v7618, 0.0
        %v7669 = vadd.f32 %v7667, %v7668
        %v7670 = vsel %vm7632, %v7619, 0.0
        %v7671 = vadd.f32 %v7669, %v7670
        %v7672 = vsel %vm7632, %v7620, 0.0
        %v7673 = vadd.f32 %v7671, %v7672
        %v7674 = vsel %vm7632, %v7621, 0.0
        %v7675 = vadd.f32 %v7673, %v7674
        %v7676 = vsel %vm7632, %v7622, 0.0
        %v7677 = vadd.f32 %v7675, %v7676
        %v7678 = vsel %vm7632, %v7623, 0.0
        %v7679 = vadd.f32 %v7677, %v7678
        %v7680 = vsel %vm7632, %v7624, 0.0
        %v7681 = vadd.f32 %v7679, %v7680
        %v7682 = vsel %vm7632, %v7625, 0.0
        %v7683 = vadd.f32 %v7681, %v7682
        %v7684 = vsel %vm7632, %v7626, 0.0
        %v7685 = vadd.f32 %v7683, %v7684
        %v7686 = vsel %vm7632, %v7627, 0.0
        %v7687 = vadd.f32 %v7685, %v7686
        %v7688 = vsel %vm7632, %v7628, 0.0
        %v7689 = vadd.f32 %v7687, %v7688
        %v7690 = vsel %vm7632, %v7629, 0.0
        %v7691 = vadd.f32 %v7689, %v7690
        %v7692 = vsel %vm7632, %v7630, 0.0
        %v7693 = vadd.f32 %v7691, %v7692
        %v7694 = vsel %vm7632, %v7631, 0.0
        %v7695 = vadd.f32 %v7693, %v7694
        %v7696 = vrot.slane %v7695, 4
        %v7697 = vadd.f32 %v7695, %v7696
        %v7698 = vrot.slane %v7697, 2
        %v7699 = vadd.f32 %v7697, %v7698
        %v7700 = vrot.slane %v7699, 1
        %v7701 = vadd.f32 %v7699, %v7700
        %v7702 = vrcp.pop 256.0
        %v7703 = vmul.f32 %v7701, %v7702
        %v7704 = vpack.c.bf16 %v7703, %v7703
        %v7705 = vld [vmem:[%s6] sm:$0xf]
        %v7706 = vld [vmem:[%s6 + $0x4] sm:$0xf]
        %v7707 = vld [vmem:[%s7] sm:$0x1]
        %v7710 = vunpack.c.l.b16 %v7705
        %v7711 = vunpack.c.l.b16 %v7706
        %v7712 = vpack.c.b16 %v7711, %v7710
        %v7715 = vsel %vm7632, %v7704, 0
        %7717 = vmatprep.subr.bf16.mxu0 0
        %7718 = vmatpush1.bf16.msra.mxu0 %v7712
        %7719 = vmatprep.subr.bf16.mxu0 0
        %7720 = vmatpush1.bf16.msra.mxu0 0
        %7721 = vmatprep.subr.bf16.mxu0 0
        %7722 = vmatpush1.bf16.msra.mxu0 0
        %7723 = vmatprep.subr.bf16.mxu0 0
        %7724 = vmatpush1.bf16.msra.mxu0 0
        %7725 = vmatprep.subr.bf16.mxu0 0
        %7726 = vmatpush1.bf16.msra.mxu0 0
        %7727 = vmatprep.subr.bf16.mxu0 0
        %7728 = vmatpush1.bf16.msra.mxu0 0
        %7729 = vmatprep.subr.bf16.mxu0 0
        %7730 = vmatpush1.bf16.msra.mxu0 0
        %7731 = vmatprep.subr.bf16.mxu0 0
        %7732 = vmatpush1.bf16.msra.mxu0 0
        %7733 = vmatprep.subr.bf16.mxu0 0
        %7734 = vmatpush1.bf16.msra.mxu0 0
        %7735 = vmatprep.subr.bf16.mxu0 0
        %7736 = vmatpush1.bf16.msra.mxu0 0
        %7737 = vmatprep.subr.bf16.mxu0 0
        %7738 = vmatpush1.bf16.msra.mxu0 0
        %7739 = vmatprep.subr.bf16.mxu0 0
        %7740 = vmatpush1.bf16.msra.mxu0 0
        %7741 = vmatprep.subr.bf16.mxu0 0
        %7742 = vmatpush1.bf16.msra.mxu0 0
        %7743 = vmatprep.subr.bf16.mxu0 0
        %7744 = vmatpush1.bf16.msra.mxu0 0
        %7745 = vmatprep.subr.bf16.mxu0 0
        %7746 = vmatpush1.bf16.msra.mxu0 0
        %7747 = vmatprep.subr.bf16.mxu0 0
        %7748 = vmatpush1.bf16.msra.mxu0 0
        %7749 = vmatprep.mubr.bf16.mxu0 0
        %7750 = vmatmul.mubr.bf16.gmra.mrb[0].mxu0 %v7715
        %v7751 = vpop.f32.mrb[0].mxu0
        %v7752 = vadd.f32 %v7707, %v7751
        %v7753 = vpop.f32.mrb[0].mxu0
        %v7754 = vpop.f32.mrb[0].mxu0
        %v7755 = vpop.f32.mrb[0].mxu0
        %7756 = vdwg.mxu0
        %7757 = vst [vmem:[%s297] sm:$0x1] %v7752
        %s7758 = sand.u32 %s203, 1
        %s7759 = scalar_lea.sflag [#allocation4], %s7758
        %s7760 = sand.u32 %s203, 1
        %s7761 = scalar_lea.vmem [#allocation3], %s7760
        // Predicated region
        $region53: #{continual_model_forward.1} parent=51 // pred_check
          %p7762 = pneg %p213
        $region54: #{continual_model_forward.1} parent=51 // pred_check_branch
          %7764 = sbr.rel (%p7762) target = $region56
        $region55: #{continual_model_forward.1} parent=51 // pred_region
          %s7766 = ssub.s32 16, 16
          %7767 = vsyncadd %s7759, %s7766
          %s7768 = smul.addr %s22, 16
          %s7769 = scalar_lea.hbm %s8, %s7768
          %s7771 = sshll.u32 %s7761, 4
          %s7772 = int_to_ptr.vmem [resolvable:$true] %s7771
          %7774 = dma.vmem_to_hbm [thread:$0]  %s7772, 16, %s7769, %s7759
        $region56: #{continual_model_forward.1} parent=51 // pred_fallthru
          _
      $region52: #{continual_model_forward.1} parent=5 // pred_fallthru
        _
      %p7775 = scmp.le.s32.totalorder 2, %s17
      // Predicated region
      $region57: #{continual_model_forward.1} parent=5 // pred_check
        %p7776 = pneg %p7775
      $region58: #{continual_model_forward.1} parent=5 // pred_check_branch
        %7778 = sbr.rel (%p7776) target = $region60
      $region59: #{continual_model_forward.1} parent=5 // pred_region
        %s7779 = ssub.s32 %s17, 2
        // Predicated region
        $region61: #{continual_model_forward.1} parent=59 // pred_check
          %p7780 = pneg %p219
        $region62: #{continual_model_forward.1} parent=59 // pred_check_branch
          %7782 = sbr.rel (%p7780) target = $region64
        $region63: #{continual_model_forward.1} parent=59 // pred_region
          %s7783 = sand.u32 %s204, 1
          %s7784 = scalar_lea.sflag [#allocation4], %s7783
          %s7785 = sand.u32 %s204, 1
          %s7786 = scalar_lea.vmem [#allocation3], %s7785
          %7787 = dma.done %s7784, 16
        $region64: #{continual_model_forward.1} parent=59 // pred_fallthru
          _
      $region60: #{continual_model_forward.1} parent=5 // pred_fallthru
        _
    $region6: #{continual_model_forward.1} parent=1 // loop_footer
      %s21 = sadd.s32 1, %s17
    $region7: #{continual_model_forward.1} parent=1 // loop_footer_branch
      %16 = sbr.rel target = $region3
    $region8: #{continual_model_forward.1} parent=1 // loop_exit
      _
    %7788 = vsyncpa [#allocation4], 1
    %s7789 = scalar_lea.sflag [#allocation4], 1
    %7790 = vsyncpa %s7789, 1

</llo_original>
